<compile_context>
chip_gen: v5e
topology: v5e:2x2
jax: 0.10.0
libtpu: 0.0.40
codegen_flags: <defaults>
</compile_context>

<pallas_src>
import functools

import jax
import jax.numpy as jnp
from jax.experimental import pallas as pl
from jax.experimental.pallas import tpu as pltpu


def _basic_block_kernel(*refs, H, W, Cin, P, stride, has_shortcut, slab_mode):
    """Fused BasicBlock forward for one batch element (NHWC, bf16/f32)."""
    n_in = 10 if has_shortcut else 7
    in_refs, o_ref, scratch = refs[:n_in], refs[n_in], refs[n_in + 1:]
    x_ref, w1_ref, s1_ref, b1_ref, w2_ref, s2_ref, b2_ref = in_refs[:7]
    if has_shortcut:
        ws_ref, ss_ref, bs_ref = in_refs[7:]
    xpad, ypad = scratch[0], scratch[1]
    xphase = scratch[2] if stride == 2 else None

    Ho, Wo = H // stride, W // stride
    M = Ho * Wo
    cdt = xpad.dtype  # compute (matmul operand) dtype, e.g. bf16

    def zero_ring(ref, h, w, c):
        # Only the 1-element halo ring; the interior is fully rewritten below.
        row = jnp.zeros((1, w + 2, c), cdt)
        col = jnp.zeros((h + 2, 1, c), cdt)
        ref[0:1, :, :] = row
        ref[h + 1:h + 2, :, :] = row
        ref[:, 0:1, :] = col
        ref[:, w + 1:w + 2, :] = col

    # --- stage x into a zero-padded VMEM halo --------------------------------
    zero_ring(xpad, H, W, Cin)
    xpad[1:1 + H, 1:1 + W, :] = x_ref[0]

    if stride == 2:
        # Split the W (sublane) axis into even/odd phases once: 2 strided
        # copies total instead of one sublane gather per conv tap.
        for p in range(2):
            xphase[p] = xpad[:, pl.ds(p, Wo + 1, stride=2), :]

    def tap_x(kh, kw):
        """(M, Cin) input patch for conv1 / shortcut at tap (kh, kw)."""
        if stride == 1:
            v = xpad[kh:kh + Ho, kw:kw + Wo, :]
        elif stride == 2:
            v = xphase[kw % 2, pl.ds(kh, Ho, stride=2),
                       kw // 2:kw // 2 + Wo, :]
        else:
            # TODO(synk): generic strides keep the per-tap strided reads.
            v = xpad[pl.ds(kh, Ho, stride=stride),
                     pl.ds(kw, Wo, stride=stride), :]
        return v.reshape(M, Cin)

    def tap_y(kh, kw):
        return ypad[kh:kh + Ho, kw:kw + Wo, :].reshape(M, P)

    def conv3x3(tap, w_ref, C):
        """3x3 conv as MXU matmul(s) with f32 accumulation."""
        if C >= 128:
            # Per-tap accumulation: contraction C already fills MXU depth, so
            # skip the (M, 9C) im2col materialisation + lane concats.
            acc = None
            for t in range(9):
                part = jnp.dot(tap(t // 3, t % 3),
                               w_ref[t * C:(t + 1) * C, :],
                               preferred_element_type=jnp.float32)
                acc = part if acc is None else acc + part
            return acc
        cols = jnp.concatenate(
            [tap(kh, kw) for kh in range(3) for kw in range(3)], axis=-1)
        return jnp.dot(cols, w_ref[...], preferred_element_type=jnp.float32)

    # --- conv1 (3x3, stride) + BN + ReLU -------------------------------------
    y1 = jnp.maximum(
        conv3x3(tap_x, w1_ref, Cin) * s1_ref[...] + b1_ref[...], 0.0)

    # out1 stays in VMEM (padded for conv2); never touches HBM.
    zero_ring(ypad, Ho, Wo, P)
    ypad[1:1 + Ho, 1:1 + Wo, :] = y1.reshape(Ho, Wo, P).astype(cdt)

    # --- conv2 (3x3, stride 1) + BN ------------------------------------------
    y2 = conv3x3(tap_y, w2_ref, P) * s2_ref[...] + b2_ref[...]

    # --- shortcut -------------------------------------------------------------
    if has_shortcut:   # 1x1 conv (stride) + BN, reuses the staged x
        sc = jnp.dot(tap_x(1, 1), ws_ref[...],
                     preferred_element_type=jnp.float32)
        sc = sc * ss_ref[...] + bs_ref[...]
    else:              # identity (stride == 1, Cin == P)
        sc = tap_x(1, 1).astype(jnp.float32)

    # Narrow to the output dtype BEFORE any relayout / store.
    out = jnp.maximum(y2 + sc, 0.0).astype(o_ref.dtype)   # (M, P)

    # --- store ----------------------------------------------------------------
    if slab_mode == "reshape":   # lane-dense (Ho, Wo*P): one packed relayout
        o_ref[0] = out.reshape(Ho, Wo * P)
    elif slab_mode == "concat":  # conservative lane-dense fallback
        o3 = out.reshape(Ho, Wo, P)
        o_ref[0] = jnp.concatenate([o3[:, w, :] for w in range(Wo)], axis=-1)
    else:                        # P >= 128 is already lane dense
        o_ref[0] = out.reshape(Ho, Wo, P)


def _init_conv_weight(key, kh, kw, cin, cout, dtype=jnp.float32):
    fan_in = cin * kh * kw
    bound = 1.0 / (fan_in ** 0.5)
    return jax.random.uniform(key, (kh, kw, cin, cout), dtype, -bound, bound)


def _init_bn_folded(key, c, dtype=jnp.float32, eps=1e-5):
    k1, k2, k3, k4 = jax.random.split(key, 4)
    gamma = jax.random.uniform(k1, (c,), dtype, 0.5, 1.5)
    beta = jax.random.uniform(k2, (c,), dtype, -0.5, 0.5)
    mean = jax.random.uniform(k3, (c,), dtype, -0.5, 0.5)
    var = jax.random.uniform(k4, (c,), dtype, 0.5, 1.5)
    scale = gamma / jnp.sqrt(var + eps)
    bias = beta - mean * scale
    return scale, bias


class BasicBlockPallas:
    expansion = 1

    def __init__(self, in_planes, planes, stride=1, *, key,
                 compute_dtype=jnp.bfloat16):
        ks = jax.random.split(key, 6)
        self.in_planes = in_planes
        self.planes = planes
        self.stride = stride
        self.compute_dtype = compute_dtype
        self.w1 = _init_conv_weight(ks[0], 3, 3, in_planes, planes)
        self.s1, self.b1 = _init_bn_folded(ks[1], planes)
        self.w2 = _init_conv_weight(ks[2], 3, 3, planes, planes)
        self.s2, self.b2 = _init_bn_folded(ks[3], planes)
        self.has_shortcut = stride != 1 or in_planes != self.expansion * planes
        if self.has_shortcut:
            self.ws = _init_conv_weight(ks[4], 1, 1, in_planes,
                                        self.expansion * planes)
            self.ss, self.bs = _init_bn_folded(ks[5], self.expansion * planes)
        # Feature-probe order; collapses to the first variant that lowers on
        # the current jax/libtpu build.
        self._variants = ("fast", "safe")

    # ---------------------------------------------------------------- helpers
    def _vmem_limit(self, H, W, Cin, Ho, Wo, P, out_dtype):
        itm = jnp.dtype(self.compute_dtype).itemsize
        m = Ho * Wo
        est = 2 * H * W * Cin * itm                           # dbl-buf input
        est += 2 * Ho * Wo * P * jnp.dtype(out_dtype).itemsize
        est += (9 * Cin * P + 9 * P * P + Cin * P) * itm + 6 * P * 4  # consts
        est += (H + 2) * (W + 2) * Cin * itm                  # xpad halo
        est += (Ho + 2) * (Wo + 2) * P * itm                  # ypad halo
        if self.stride == 2:
            est += 2 * (H + 2) * (Wo + 1) * Cin * itm         # W-phase planes
        if Cin < 128:
            est += m * 9 * Cin * itm                          # conv1 im2col
        if P < 128:
            est += m * 9 * P * itm                            # conv2 im2col
        est += 4 * m * P * 4                                  # f32 acc / epilogue
        return int(min(100 * 2 ** 20, max(32 * 2 ** 20, 2 * est)))

    def _forward(self, x_nhwc, out_dtype, variant):
        N, H, W, Cin = x_nhwc.shape
        s, P = self.stride, self.planes
        Ho, Wo = H // s, W // s
        cdt = self.compute_dtype
        f32 = jnp.float32
        fast = variant == "fast"

        # Lane-dense output slab when Cout < 128 but a row of Wo*Cout fills
        # whole 128-lane vregs (avoids masked vst.msk partial stores).
        slab = (P < 128) and ((Wo * P) % 128 == 0)
        slab_mode = ("reshape" if fast else "concat") if slab else "none"

        def const_spec(shape):
            idx = lambda n, _nd=len(shape): (0,) * _nd
            if fast:  # constant index_map -> one resident copy is enough
                return pl.BlockSpec(shape, idx, pipeline_mode=pl.Buffered(1))
            return pl.BlockSpec(shape, idx)

        w1f = self.w1.reshape(9 * Cin, P).astype(cdt)
        w2f = self.w2.reshape(9 * P, P).astype(cdt)
        inputs = [x_nhwc, w1f,
                  self.s1.reshape(1, P).astype(f32),
                  self.b1.reshape(1, P).astype(f32),
                  w2f,
                  self.s2.reshape(1, P).astype(f32),
                  self.b2.reshape(1, P).astype(f32)]
        in_specs = [pl.BlockSpec((1, H, W, Cin), lambda n: (n, 0, 0, 0)),
                    const_spec((9 * Cin, P)),
                    const_spec((1, P)), const_spec((1, P)),
                    const_spec((9 * P, P)),
                    const_spec((1, P)), const_spec((1, P))]
        if self.has_shortcut:
            inputs += [self.ws.reshape(Cin, P).astype(cdt),
                       self.ss.reshape(1, P).astype(f32),
                       self.bs.reshape(1, P).astype(f32)]
            in_specs += [const_spec((Cin, P)),
                         const_spec((1, P)), const_spec((1, P))]

        if slab:
            out_shape = jax.ShapeDtypeStruct((N, Ho, Wo * P), out_dtype)
            out_spec = pl.BlockSpec((1, Ho, Wo * P), lambda n: (n, 0, 0))
        else:
            out_shape = jax.ShapeDtypeStruct((N, Ho, Wo, P), out_dtype)
            out_spec = pl.BlockSpec((1, Ho, Wo, P), lambda n: (n, 0, 0, 0))

        scratch = [pltpu.VMEM((H + 2, W + 2, Cin), cdt),    # padded x halo
                   pltpu.VMEM((Ho + 2, Wo + 2, P), cdt)]    # padded conv1 out
        if s == 2:
            scratch.append(pltpu.VMEM((2, H + 2, Wo + 1, Cin), cdt))

        if fast:
            cp = pltpu.CompilerParams(
                dimension_semantics=("parallel",),
                vmem_limit_bytes=self._vmem_limit(H, W, Cin, Ho, Wo, P,
                                                  out_dtype))
        else:
            cp = pltpu.CompilerParams(dimension_semantics=("parallel",))

        kernel = functools.partial(
            _basic_block_kernel, H=H, W=W, Cin=Cin, P=P, stride=s,
            has_shortcut=self.has_shortcut, slab_mode=slab_mode)

        out = pl.pallas_call(
            kernel,
            out_shape=out_shape,
            grid_spec=pltpu.PrefetchScalarGridSpec(
                num_scalar_prefetch=0,
                grid=(N,),
                in_specs=in_specs,
                out_specs=out_spec,
                scratch_shapes=scratch),
            compiler_params=cp,
        )(*inputs)

        if slab:
            out = out.reshape(N, Ho, Wo, P)  # free metadata reshape
        return out

    def __call__(self, x_nchw):
        N, Cin, H, W = x_nchw.shape
        assert Cin == self.in_planes
        s = self.stride
        assert H % s == 0 and W % s == 0, "H, W must be divisible by stride"

        # NCHW -> NHWC (one XLA pass) + bf16 cast of the matmul operand.
        x = jnp.transpose(x_nchw, (0, 2, 3, 1)).astype(self.compute_dtype)

        errs = []
        out = None
        for variant in self._variants:
            try:
                out = self._forward(x, x_nchw.dtype, variant)
                if len(self._variants) > 1:
                    # Probing: surface any lowering/runtime issue right here so
                    # we can fall back; afterwards the winning variant is cached.
                    out = jax.block_until_ready(out)
                self._variants = (variant,)
                break
            except Exception as e:  # lowering support differs across builds
                errs.append(e)
        else:
            raise errs[-1]
        return jnp.transpose(out, (0, 3, 1, 2))  # NHWC -> NCHW (PyTorch conv.)


# -------------------- pure-JAX reference for verification --------------------
def _ref_conv_bn(x, w, s, b, stride, relu=False, residual=None):
    pad = (w.shape[0] - 1) // 2
    y = jax.lax.conv_general_dilated(
        x, w, window_strides=(stride, stride),
        padding=[(pad, pad), (pad, pad)],
        dimension_numbers=("NHWC", "HWIO", "NHWC"),
        preferred_element_type=jnp.float32)
    y = y * s + b
    if residual is not None:
        y = y + residual
    if relu:
        y = jnp.maximum(y, 0.0)
    return y


def _ref_block(block, x_nchw):
    """Mirrors the kernel's bf16 staging (bf16 operands, f32 accumulation)."""
    cdt = block.compute_dtype
    x = jnp.transpose(x_nchw, (0, 2, 3, 1)).astype(cdt)
    o1 = _ref_conv_bn(x, block.w1.astype(cdt), block.s1, block.b1,
                      block.stride, relu=True).astype(cdt)
    if block.has_shortcut:
        sc = _ref_conv_bn(x, block.ws.astype(cdt), block.ss, block.bs,
                          block.stride)
    else:
        sc = x.astype(jnp.float32)
    o = _ref_conv_bn(o1, block.w2.astype(cdt), block.s2, block.b2, 1,
                     relu=True, residual=sc)
    return jnp.transpose(o, (0, 3, 1, 2)).astype(x_nchw.dtype)


if __name__ == "__main__":
    key = jax.random.PRNGKey(0)
    kx1, kx2, kx3, kp1, kp2, kp3 = jax.random.split(key, 6)

    # Case 1: in_planes != planes -> 1x1 conv + BN shortcut; exercises the
    #         lane-dense slab store (Wo*Cout = 16*8 = 128).
    x1 = jax.random.normal(kx1, (2, 4, 16, 16), jnp.float32)
    blk1 = BasicBlockPallas(in_planes=4, planes=8, stride=1, key=kp1)
    out1 = jax.block_until_ready(blk1(x1))
    ref1 = jax.block_until_ready(_ref_block(blk1, x1))
    assert out1.shape == (2, 8, 16, 16), out1.shape
    assert jnp.allclose(out1, ref1, atol=2e-2, rtol=2e-2), \
        float(jnp.max(jnp.abs(out1 - ref1)))

    # Case 2: identity shortcut (stride=1, in_planes == planes).
    x2 = jax.random.normal(kx2, (2, 8, 16, 16), jnp.float32)
    blk2 = BasicBlockPallas(in_planes=8, planes=8, stride=1, key=kp2)
    out2 = jax.block_until_ready(blk2(x2))
    ref2 = jax.block_until_ready(_ref_block(blk2, x2))
    assert out2.shape == (2, 8, 16, 16), out2.shape
    assert jnp.allclose(out2, ref2, atol=2e-2, rtol=2e-2), \
        float(jnp.max(jnp.abs(out2 - ref2)))

    # Case 3: Cin = planes = 128 (small 8x8 spatial): exercises the per-tap
    #         matmul-accumulation path (no im2col) and the lane-dense 4D store.
    x3 = jax.random.normal(kx3, (1, 128, 8, 8), jnp.float32)
    blk3 = BasicBlockPallas(in_planes=128, planes=128, stride=1, key=kp3)
    out3 = jax.block_until_ready(blk3(x3))
    ref3 = jax.block_until_ready(_ref_block(blk3, x3))
    assert out3.shape == (1, 128, 8, 8), out3.shape
    assert jnp.allclose(out3, ref3, atol=2e-2, rtol=2e-2), \
        float(jnp.max(jnp.abs(out3 - ref3)))

    print("KERNEL_OK")
</pallas_src>

<mosaic_0001>
module attributes {stable_mosaic.version = 11 : i64} {
  func.func @_basic_block_kernel(%arg0: i32, %arg1: memref<1x16x16x4xbf16, #tpu.memory_space<vmem>>, %arg2: memref<36x8xbf16, #tpu.memory_space<vmem>>, %arg3: memref<1x8xf32, #tpu.memory_space<vmem>>, %arg4: memref<1x8xf32, #tpu.memory_space<vmem>>, %arg5: memref<72x8xbf16, #tpu.memory_space<vmem>>, %arg6: memref<1x8xf32, #tpu.memory_space<vmem>>, %arg7: memref<1x8xf32, #tpu.memory_space<vmem>>, %arg8: memref<4x8xbf16, #tpu.memory_space<vmem>>, %arg9: memref<1x8xf32, #tpu.memory_space<vmem>>, %arg10: memref<1x8xf32, #tpu.memory_space<vmem>>, %arg11: memref<1x16x128xf32, #tpu.memory_space<vmem>>, %arg12: memref<18x18x4xbf16, #tpu.memory_space<vmem>>, %arg13: memref<18x18x8xbf16, #tpu.memory_space<vmem>>) attributes {dimension_semantics = [#tpu.dimension_semantics<parallel>], iteration_bounds = array<i64: 2>, scalar_prefetch = 0 : i64, scratch_operands = 2 : i64, tpu.core_type = #tpu.core_type<tc>, window_params = [{transform_indices = @transform_0, window_bounds = array<i64: 1, 16, 16, 4>}, {pipeline_mode = #tpu.pipeline_mode<synchronous>, transform_indices = @transform_1, window_bounds = array<i64: 36, 8>}, {pipeline_mode = #tpu.pipeline_mode<synchronous>, transform_indices = @transform_2, window_bounds = array<i64: 1, 8>}, {pipeline_mode = #tpu.pipeline_mode<synchronous>, transform_indices = @transform_3, window_bounds = array<i64: 1, 8>}, {pipeline_mode = #tpu.pipeline_mode<synchronous>, transform_indices = @transform_4, window_bounds = array<i64: 72, 8>}, {pipeline_mode = #tpu.pipeline_mode<synchronous>, transform_indices = @transform_5, window_bounds = array<i64: 1, 8>}, {pipeline_mode = #tpu.pipeline_mode<synchronous>, transform_indices = @transform_6, window_bounds = array<i64: 1, 8>}, {pipeline_mode = #tpu.pipeline_mode<synchronous>, transform_indices = @transform_7, window_bounds = array<i64: 4, 8>}, {pipeline_mode = #tpu.pipeline_mode<synchronous>, transform_indices = @transform_8, window_bounds = array<i64: 1, 8>}, {pipeline_mode = #tpu.pipeline_mode<synchronous>, transform_indices = @transform_9, window_bounds = array<i64: 1, 8>}, {transform_indices = @transform_10, window_bounds = array<i64: 1, 16, 128>}]} {
    %cst = arith.constant 0.000000e+00 : bf16
    %0 = vector.broadcast %cst : bf16 to vector<1x18x4xbf16>
    %cst_0 = arith.constant 0.000000e+00 : bf16
    %1 = vector.broadcast %cst_0 : bf16 to vector<18x1x4xbf16>
    %c0 = arith.constant 0 : index
    %c0_1 = arith.constant 0 : index
    %c0_2 = arith.constant 0 : index
    %2 = vector.load %arg12[%c0, %c0_1, %c0_2] : memref<18x18x4xbf16, #tpu.memory_space<vmem>>, vector<1x18x4xbf16>
    tpu.vector_store %arg12[%c0, %c0_1, %c0_2], %0 {strides = array<i32>} : memref<18x18x4xbf16, #tpu.memory_space<vmem>>, vector<1x18x4xbf16>,
    %c17 = arith.constant 17 : index
    %c0_3 = arith.constant 0 : index
    %c0_4 = arith.constant 0 : index
    %3 = vector.load %arg12[%c17, %c0_3, %c0_4] : memref<18x18x4xbf16, #tpu.memory_space<vmem>>, vector<1x18x4xbf16>
    tpu.vector_store %arg12[%c17, %c0_3, %c0_4], %0 {strides = array<i32>} : memref<18x18x4xbf16, #tpu.memory_space<vmem>>, vector<1x18x4xbf16>,
    %c0_5 = arith.constant 0 : index
    %c0_6 = arith.constant 0 : index
    %c0_7 = arith.constant 0 : index
    %4 = vector.load %arg12[%c0_5, %c0_6, %c0_7] : memref<18x18x4xbf16, #tpu.memory_space<vmem>>, vector<18x1x4xbf16>
    tpu.vector_store %arg12[%c0_5, %c0_6, %c0_7], %1 {strides = array<i32>} : memref<18x18x4xbf16, #tpu.memory_space<vmem>>, vector<18x1x4xbf16>,
    %c0_8 = arith.constant 0 : index
    %c17_9 = arith.constant 17 : index
    %c0_10 = arith.constant 0 : index
    %5 = vector.load %arg12[%c0_8, %c17_9, %c0_10] : memref<18x18x4xbf16, #tpu.memory_space<vmem>>, vector<18x1x4xbf16>
    tpu.vector_store %arg12[%c0_8, %c17_9, %c0_10], %1 {strides = array<i32>} : memref<18x18x4xbf16, #tpu.memory_space<vmem>>, vector<18x1x4xbf16>,
    %c0_11 = arith.constant 0 : index
    %c0_12 = arith.constant 0 : index
    %c0_13 = arith.constant 0 : index
    %c0_14 = arith.constant 0 : index
    %6 = vector.load %arg1[%c0_11, %c0_12, %c0_13, %c0_14] : memref<1x16x16x4xbf16, #tpu.memory_space<vmem>>, vector<1x16x16x4xbf16>
    %7 = vector.shape_cast %6 : vector<1x16x16x4xbf16> to vector<16x16x4xbf16>
    %c1 = arith.constant 1 : index
    %c1_15 = arith.constant 1 : index
    %c0_16 = arith.constant 0 : index
    %8 = vector.load %arg12[%c1, %c1_15, %c0_16] : memref<18x18x4xbf16, #tpu.memory_space<vmem>>, vector<16x16x4xbf16>
    tpu.vector_store %arg12[%c1, %c1_15, %c0_16], %7 {strides = array<i32>} : memref<18x18x4xbf16, #tpu.memory_space<vmem>>, vector<16x16x4xbf16>,
    %c0_17 = arith.constant 0 : index
    %c0_18 = arith.constant 0 : index
    %c0_19 = arith.constant 0 : index
    %9 = vector.load %arg12[%c0_17, %c0_18, %c0_19] : memref<18x18x4xbf16, #tpu.memory_space<vmem>>, vector<16x16x4xbf16>
    %10 = vector.shape_cast %9 : vector<16x16x4xbf16> to vector<256x4xbf16>
    %c0_20 = arith.constant 0 : index
    %c1_21 = arith.constant 1 : index
    %c0_22 = arith.constant 0 : index
    %11 = vector.load %arg12[%c0_20, %c1_21, %c0_22] : memref<18x18x4xbf16, #tpu.memory_space<vmem>>, vector<16x16x4xbf16>
    %12 = vector.shape_cast %11 : vector<16x16x4xbf16> to vector<256x4xbf16>
    %c0_23 = arith.constant 0 : index
    %c2 = arith.constant 2 : index
    %c0_24 = arith.constant 0 : index
    %13 = vector.load %arg12[%c0_23, %c2, %c0_24] : memref<18x18x4xbf16, #tpu.memory_space<vmem>>, vector<16x16x4xbf16>
    %14 = vector.shape_cast %13 : vector<16x16x4xbf16> to vector<256x4xbf16>
    %c1_25 = arith.constant 1 : index
    %c0_26 = arith.constant 0 : index
    %c0_27 = arith.constant 0 : index
    %15 = vector.load %arg12[%c1_25, %c0_26, %c0_27] : memref<18x18x4xbf16, #tpu.memory_space<vmem>>, vector<16x16x4xbf16>
    %16 = vector.shape_cast %15 : vector<16x16x4xbf16> to vector<256x4xbf16>
    %c1_28 = arith.constant 1 : index
    %c1_29 = arith.constant 1 : index
    %c0_30 = arith.constant 0 : index
    %17 = vector.load %arg12[%c1_28, %c1_29, %c0_30] : memref<18x18x4xbf16, #tpu.memory_space<vmem>>, vector<16x16x4xbf16>
    %18 = vector.shape_cast %17 : vector<16x16x4xbf16> to vector<256x4xbf16>
    %c1_31 = arith.constant 1 : index
    %c2_32 = arith.constant 2 : index
    %c0_33 = arith.constant 0 : index
    %19 = vector.load %arg12[%c1_31, %c2_32, %c0_33] : memref<18x18x4xbf16, #tpu.memory_space<vmem>>, vector<16x16x4xbf16>
    %20 = vector.shape_cast %19 : vector<16x16x4xbf16> to vector<256x4xbf16>
    %c2_34 = arith.constant 2 : index
    %c0_35 = arith.constant 0 : index
    %c0_36 = arith.constant 0 : index
    %21 = vector.load %arg12[%c2_34, %c0_35, %c0_36] : memref<18x18x4xbf16, #tpu.memory_space<vmem>>, vector<16x16x4xbf16>
    %22 = vector.shape_cast %21 : vector<16x16x4xbf16> to vector<256x4xbf16>
    %c2_37 = arith.constant 2 : index
    %c1_38 = arith.constant 1 : index
    %c0_39 = arith.constant 0 : index
    %23 = vector.load %arg12[%c2_37, %c1_38, %c0_39] : memref<18x18x4xbf16, #tpu.memory_space<vmem>>, vector<16x16x4xbf16>
    %24 = vector.shape_cast %23 : vector<16x16x4xbf16> to vector<256x4xbf16>
    %c2_40 = arith.constant 2 : index
    %c2_41 = arith.constant 2 : index
    %c0_42 = arith.constant 0 : index
    %25 = vector.load %arg12[%c2_40, %c2_41, %c0_42] : memref<18x18x4xbf16, #tpu.memory_space<vmem>>, vector<16x16x4xbf16>
    %26 = vector.shape_cast %25 : vector<16x16x4xbf16> to vector<256x4xbf16>
    %27 = tpu.concatenate %10, %12, %14, %16, %18, %20, %22, %24, %26 in 1 : vector<256x4xbf16>, vector<256x4xbf16>, vector<256x4xbf16>, vector<256x4xbf16>, vector<256x4xbf16>, vector<256x4xbf16>, vector<256x4xbf16>, vector<256x4xbf16>, vector<256x4xbf16> -> vector<256x36xbf16>
    %c0_43 = arith.constant 0 : index
    %c0_44 = arith.constant 0 : index
    %28 = vector.load %arg2[%c0_43, %c0_44] : memref<36x8xbf16, #tpu.memory_space<vmem>>, vector<36x8xbf16>
    %cst_45 = arith.constant dense<0.000000e+00> : vector<256x8xf32>
    %29 = tpu.matmul %27, %28, %cst_45 {dimension_numbers = #tpu.dot_dimension_numbers<[1], [0], [0], [1], [0, 0, 1, 1], [], []>} : vector<256x36xbf16>, vector<36x8xbf16>, vector<256x8xf32> -> vector<256x8xf32>
    %c0_46 = arith.constant 0 : index
    %c0_47 = arith.constant 0 : index
    %30 = vector.load %arg3[%c0_46, %c0_47] : memref<1x8xf32, #tpu.memory_space<vmem>>, vector<1x8xf32>
    %31 = vector.broadcast %30 : vector<1x8xf32> to vector<256x8xf32>
    %32 = arith.mulf %29, %31 : vector<256x8xf32>
    %c0_48 = arith.constant 0 : index
    %c0_49 = arith.constant 0 : index
    %33 = vector.load %arg4[%c0_48, %c0_49] : memref<1x8xf32, #tpu.memory_space<vmem>>, vector<1x8xf32>
    %34 = vector.broadcast %33 : vector<1x8xf32> to vector<256x8xf32>
    %35 = arith.addf %32, %34 : vector<256x8xf32>
    %cst_50 = arith.constant 0.000000e+00 : f32
    %36 = vector.broadcast %cst_50 : f32 to vector<256x8xf32>
    %37 = arith.maximumf %35, %36 : vector<256x8xf32>
    %cst_51 = arith.constant 0.000000e+00 : bf16
    %38 = vector.broadcast %cst_51 : bf16 to vector<1x18x8xbf16>
    %cst_52 = arith.constant 0.000000e+00 : bf16
    %39 = vector.broadcast %cst_52 : bf16 to vector<18x1x8xbf16>
    %c0_53 = arith.constant 0 : index
    %c0_54 = arith.constant 0 : index
    %c0_55 = arith.constant 0 : index
    %40 = vector.load %arg13[%c0_53, %c0_54, %c0_55] : memref<18x18x8xbf16, #tpu.memory_space<vmem>>, vector<1x18x8xbf16>
    tpu.vector_store %arg13[%c0_53, %c0_54, %c0_55], %38 {strides = array<i32>} : memref<18x18x8xbf16, #tpu.memory_space<vmem>>, vector<1x18x8xbf16>,
    %c17_56 = arith.constant 17 : index
    %c0_57 = arith.constant 0 : index
    %c0_58 = arith.constant 0 : index
    %41 = vector.load %arg13[%c17_56, %c0_57, %c0_58] : memref<18x18x8xbf16, #tpu.memory_space<vmem>>, vector<1x18x8xbf16>
    tpu.vector_store %arg13[%c17_56, %c0_57, %c0_58], %38 {strides = array<i32>} : memref<18x18x8xbf16, #tpu.memory_space<vmem>>, vector<1x18x8xbf16>,
    %c0_59 = arith.constant 0 : index
    %c0_60 = arith.constant 0 : index
    %c0_61 = arith.constant 0 : index
    %42 = vector.load %arg13[%c0_59, %c0_60, %c0_61] : memref<18x18x8xbf16, #tpu.memory_space<vmem>>, vector<18x1x8xbf16>
    tpu.vector_store %arg13[%c0_59, %c0_60, %c0_61], %39 {strides = array<i32>} : memref<18x18x8xbf16, #tpu.memory_space<vmem>>, vector<18x1x8xbf16>,
    %c0_62 = arith.constant 0 : index
    %c17_63 = arith.constant 17 : index
    %c0_64 = arith.constant 0 : index
    %43 = vector.load %arg13[%c0_62, %c17_63, %c0_64] : memref<18x18x8xbf16, #tpu.memory_space<vmem>>, vector<18x1x8xbf16>
    tpu.vector_store %arg13[%c0_62, %c17_63, %c0_64], %39 {strides = array<i32>} : memref<18x18x8xbf16, #tpu.memory_space<vmem>>, vector<18x1x8xbf16>,
    %44 = vector.shape_cast %37 : vector<256x8xf32> to vector<16x16x8xf32>
    %45 = arith.truncf %44 : vector<16x16x8xf32> to vector<16x16x8xbf16>
    %c1_65 = arith.constant 1 : index
    %c1_66 = arith.constant 1 : index
    %c0_67 = arith.constant 0 : index
    %46 = vector.load %arg13[%c1_65, %c1_66, %c0_67] : memref<18x18x8xbf16, #tpu.memory_space<vmem>>, vector<16x16x8xbf16>
    tpu.vector_store %arg13[%c1_65, %c1_66, %c0_67], %45 {strides = array<i32>} : memref<18x18x8xbf16, #tpu.memory_space<vmem>>, vector<16x16x8xbf16>,
    %c0_68 = arith.constant 0 : index
    %c0_69 = arith.constant 0 : index
    %c0_70 = arith.constant 0 : index
    %47 = vector.load %arg13[%c0_68, %c0_69, %c0_70] : memref<18x18x8xbf16, #tpu.memory_space<vmem>>, vector<16x16x8xbf16>
    %48 = vector.shape_cast %47 : vector<16x16x8xbf16> to vector<256x8xbf16>
    %c0_71 = arith.constant 0 : index
    %c1_72 = arith.constant 1 : index
    %c0_73 = arith.constant 0 : index
    %49 = vector.load %arg13[%c0_71, %c1_72, %c0_73] : memref<18x18x8xbf16, #tpu.memory_space<vmem>>, vector<16x16x8xbf16>
    %50 = vector.shape_cast %49 : vector<16x16x8xbf16> to vector<256x8xbf16>
    %c0_74 = arith.constant 0 : index
    %c2_75 = arith.constant 2 : index
    %c0_76 = arith.constant 0 : index
    %51 = vector.load %arg13[%c0_74, %c2_75, %c0_76] : memref<18x18x8xbf16, #tpu.memory_space<vmem>>, vector<16x16x8xbf16>
    %52 = vector.shape_cast %51 : vector<16x16x8xbf16> to vector<256x8xbf16>
    %c1_77 = arith.constant 1 : index
    %c0_78 = arith.constant 0 : index
    %c0_79 = arith.constant 0 : index
    %53 = vector.load %arg13[%c1_77, %c0_78, %c0_79] : memref<18x18x8xbf16, #tpu.memory_space<vmem>>, vector<16x16x8xbf16>
    %54 = vector.shape_cast %53 : vector<16x16x8xbf16> to vector<256x8xbf16>
    %c1_80 = arith.constant 1 : index
    %c1_81 = arith.constant 1 : index
    %c0_82 = arith.constant 0 : index
    %55 = vector.load %arg13[%c1_80, %c1_81, %c0_82] : memref<18x18x8xbf16, #tpu.memory_space<vmem>>, vector<16x16x8xbf16>
    %56 = vector.shape_cast %55 : vector<16x16x8xbf16> to vector<256x8xbf16>
    %c1_83 = arith.constant 1 : index
    %c2_84 = arith.constant 2 : index
    %c0_85 = arith.constant 0 : index
    %57 = vector.load %arg13[%c1_83, %c2_84, %c0_85] : memref<18x18x8xbf16, #tpu.memory_space<vmem>>, vector<16x16x8xbf16>
    %58 = vector.shape_cast %57 : vector<16x16x8xbf16> to vector<256x8xbf16>
    %c2_86 = arith.constant 2 : index
    %c0_87 = arith.constant 0 : index
    %c0_88 = arith.constant 0 : index
    %59 = vector.load %arg13[%c2_86, %c0_87, %c0_88] : memref<18x18x8xbf16, #tpu.memory_space<vmem>>, vector<16x16x8xbf16>
    %60 = vector.shape_cast %59 : vector<16x16x8xbf16> to vector<256x8xbf16>
    %c2_89 = arith.constant 2 : index
    %c1_90 = arith.constant 1 : index
    %c0_91 = arith.constant 0 : index
    %61 = vector.load %arg13[%c2_89, %c1_90, %c0_91] : memref<18x18x8xbf16, #tpu.memory_space<vmem>>, vector<16x16x8xbf16>
    %62 = vector.shape_cast %61 : vector<16x16x8xbf16> to vector<256x8xbf16>
    %c2_92 = arith.constant 2 : index
    %c2_93 = arith.constant 2 : index
    %c0_94 = arith.constant 0 : index
    %63 = vector.load %arg13[%c2_92, %c2_93, %c0_94] : memref<18x18x8xbf16, #tpu.memory_space<vmem>>, vector<16x16x8xbf16>
    %64 = vector.shape_cast %63 : vector<16x16x8xbf16> to vector<256x8xbf16>
    %65 = tpu.concatenate %48, %50, %52, %54, %56, %58, %60, %62, %64 in 1 : vector<256x8xbf16>, vector<256x8xbf16>, vector<256x8xbf16>, vector<256x8xbf16>, vector<256x8xbf16>, vector<256x8xbf16>, vector<256x8xbf16>, vector<256x8xbf16>, vector<256x8xbf16> -> vector<256x72xbf16>
    %c0_95 = arith.constant 0 : index
    %c0_96 = arith.constant 0 : index
    %66 = vector.load %arg5[%c0_95, %c0_96] : memref<72x8xbf16, #tpu.memory_space<vmem>>, vector<72x8xbf16>
    %cst_97 = arith.constant dense<0.000000e+00> : vector<256x8xf32>
    %67 = tpu.matmul %65, %66, %cst_97 {dimension_numbers = #tpu.dot_dimension_numbers<[1], [0], [0], [1], [0, 0, 1, 1], [], []>} : vector<256x72xbf16>, vector<72x8xbf16>, vector<256x8xf32> -> vector<256x8xf32>
    %c0_98 = arith.constant 0 : index
    %c0_99 = arith.constant 0 : index
    %68 = vector.load %arg6[%c0_98, %c0_99] : memref<1x8xf32, #tpu.memory_space<vmem>>, vector<1x8xf32>
    %69 = vector.broadcast %68 : vector<1x8xf32> to vector<256x8xf32>
    %70 = arith.mulf %67, %69 : vector<256x8xf32>
    %c0_100 = arith.constant 0 : index
    %c0_101 = arith.constant 0 : index
    %71 = vector.load %arg7[%c0_100, %c0_101] : memref<1x8xf32, #tpu.memory_space<vmem>>, vector<1x8xf32>
    %72 = vector.broadcast %71 : vector<1x8xf32> to vector<256x8xf32>
    %73 = arith.addf %70, %72 : vector<256x8xf32>
    %c1_102 = arith.constant 1 : index
    %c1_103 = arith.constant 1 : index
    %c0_104 = arith.constant 0 : index
    %74 = vector.load %arg12[%c1_102, %c1_103, %c0_104] : memref<18x18x4xbf16, #tpu.memory_space<vmem>>, vector<16x16x4xbf16>
    %75 = vector.shape_cast %74 : vector<16x16x4xbf16> to vector<256x4xbf16>
    %c0_105 = arith.constant 0 : index
    %c0_106 = arith.constant 0 : index
    %76 = vector.load %arg8[%c0_105, %c0_106] : memref<4x8xbf16, #tpu.memory_space<vmem>>, vector<4x8xbf16>
    %cst_107 = arith.constant dense<0.000000e+00> : vector<256x8xf32>
    %77 = tpu.matmul %75, %76, %cst_107 {dimension_numbers = #tpu.dot_dimension_numbers<[1], [0], [0], [1], [0, 0, 1, 1], [], []>} : vector<256x4xbf16>, vector<4x8xbf16>, vector<256x8xf32> -> vector<256x8xf32>
    %c0_108 = arith.constant 0 : index
    %c0_109 = arith.constant 0 : index
    %78 = vector.load %arg9[%c0_108, %c0_109] : memref<1x8xf32, #tpu.memory_space<vmem>>, vector<1x8xf32>
    %79 = vector.broadcast %78 : vector<1x8xf32> to vector<256x8xf32>
    %80 = arith.mulf %77, %79 : vector<256x8xf32>
    %c0_110 = arith.constant 0 : index
    %c0_111 = arith.constant 0 : index
    %81 = vector.load %arg10[%c0_110, %c0_111] : memref<1x8xf32, #tpu.memory_space<vmem>>, vector<1x8xf32>
    %82 = vector.broadcast %81 : vector<1x8xf32> to vector<256x8xf32>
    %83 = arith.addf %80, %82 : vector<256x8xf32>
    %84 = arith.addf %73, %83 : vector<256x8xf32>
    %cst_112 = arith.constant 0.000000e+00 : f32
    %85 = vector.broadcast %cst_112 : f32 to vector<256x8xf32>
    %86 = arith.maximumf %84, %85 : vector<256x8xf32>
    %87 = vector.shape_cast %86 : vector<256x8xf32> to vector<16x128xf32>
    %c0_113 = arith.constant 0 : index
    %c0_114 = arith.constant 0 : index
    %c0_115 = arith.constant 0 : index
    %88 = vector.load %arg11[%c0_113, %c0_114, %c0_115] : memref<1x16x128xf32, #tpu.memory_space<vmem>>, vector<1x16x128xf32>
    %89 = vector.shape_cast %88 : vector<1x16x128xf32> to vector<16x128xf32>
    %90 = vector.shape_cast %87 : vector<16x128xf32> to vector<1x16x128xf32>
    tpu.vector_store %arg11[%c0_113, %c0_114, %c0_115], %90 {strides = array<i32>} : memref<1x16x128xf32, #tpu.memory_space<vmem>>, vector<1x16x128xf32>,
    return
  }
  func.func @transform_0(%arg0: i32) -> (i32, i32, i32, i32) {
    %c0_i32 = arith.constant 0 : i32
    %c0_i32_0 = arith.constant 0 : i32
    %c0_i32_1 = arith.constant 0 : i32
    %c0_i32_2 = arith.constant 0 : i32
    return %arg0, %c0_i32, %c0_i32_0, %c0_i32_1 : i32, i32, i32, i32
  }
  func.func @transform_1(%arg0: i32) -> (i32, i32) {
    %c0_i32 = arith.constant 0 : i32
    %c0_i32_0 = arith.constant 0 : i32
    %c0_i32_1 = arith.constant 0 : i32
    return %c0_i32, %c0_i32_0 : i32, i32
  }
  func.func @transform_2(%arg0: i32) -> (i32, i32) {
    %c0_i32 = arith.constant 0 : i32
    %c0_i32_0 = arith.constant 0 : i32
    %c0_i32_1 = arith.constant 0 : i32
    return %c0_i32, %c0_i32_0 : i32, i32
  }
  func.func @transform_3(%arg0: i32) -> (i32, i32) {
    %c0_i32 = arith.constant 0 : i32
    %c0_i32_0 = arith.constant 0 : i32
    %c0_i32_1 = arith.constant 0 : i32
    return %c0_i32, %c0_i32_0 : i32, i32
  }
  func.func @transform_4(%arg0: i32) -> (i32, i32) {
    %c0_i32 = arith.constant 0 : i32
    %c0_i32_0 = arith.constant 0 : i32
    %c0_i32_1 = arith.constant 0 : i32
    return %c0_i32, %c0_i32_0 : i32, i32
  }
  func.func @transform_5(%arg0: i32) -> (i32, i32) {
    %c0_i32 = arith.constant 0 : i32
    %c0_i32_0 = arith.constant 0 : i32
    %c0_i32_1 = arith.constant 0 : i32
    return %c0_i32, %c0_i32_0 : i32, i32
  }
  func.func @transform_6(%arg0: i32) -> (i32, i32) {
    %c0_i32 = arith.constant 0 : i32
    %c0_i32_0 = arith.constant 0 : i32
    %c0_i32_1 = arith.constant 0 : i32
    return %c0_i32, %c0_i32_0 : i32, i32
  }
  func.func @transform_7(%arg0: i32) -> (i32, i32) {
    %c0_i32 = arith.constant 0 : i32
    %c0_i32_0 = arith.constant 0 : i32
    %c0_i32_1 = arith.constant 0 : i32
    return %c0_i32, %c0_i32_0 : i32, i32
  }
  func.func @transform_8(%arg0: i32) -> (i32, i32) {
    %c0_i32 = arith.constant 0 : i32
    %c0_i32_0 = arith.constant 0 : i32
    %c0_i32_1 = arith.constant 0 : i32
    return %c0_i32, %c0_i32_0 : i32, i32
  }
  func.func @transform_9(%arg0: i32) -> (i32, i32) {
    %c0_i32 = arith.constant 0 : i32
    %c0_i32_0 = arith.constant 0 : i32
    %c0_i32_1 = arith.constant 0 : i32
    return %c0_i32, %c0_i32_0 : i32, i32
  }
  func.func @transform_10(%arg0: i32) -> (i32, i32, i32) {
    %c0_i32 = arith.constant 0 : i32
    %c0_i32_0 = arith.constant 0 : i32
    %c0_i32_1 = arith.constant 0 : i32
    return %arg0, %c0_i32, %c0_i32_0 : i32, i32, i32
  }
}

module attributes {stable_mosaic.version = 11 : i64} {
  func.func @_basic_block_kernel(%arg0: i32, %arg1: memref<1x16x16x4xbf16, #tpu.memory_space<vmem>>, %arg2: memref<36x8xbf16, #tpu.memory_space<vmem>>, %arg3: memref<1x8xf32, #tpu.memory_space<vmem>>, %arg4: memref<1x8xf32, #tpu.memory_space<vmem>>, %arg5: memref<72x8xbf16, #tpu.memory_space<vmem>>, %arg6: memref<1x8xf32, #tpu.memory_space<vmem>>, %arg7: memref<1x8xf32, #tpu.memory_space<vmem>>, %arg8: memref<4x8xbf16, #tpu.memory_space<vmem>>, %arg9: memref<1x8xf32, #tpu.memory_space<vmem>>, %arg10: memref<1x8xf32, #tpu.memory_space<vmem>>, %arg11: memref<1x16x128xf32, #tpu.memory_space<vmem>>, %arg12: memref<18x18x4xbf16, #tpu.memory_space<vmem>>, %arg13: memref<18x18x8xbf16, #tpu.memory_space<vmem>>) attributes {dimension_semantics = [#tpu.dimension_semantics<parallel>], iteration_bounds = array<i64: 2>, scalar_prefetch = 0 : i64, scratch_operands = 2 : i64, tpu.core_type = #tpu.core_type<tc>, window_params = [{transform_indices = @transform_0, window_bounds = array<i64: 1, 16, 16, 4>}, {pipeline_mode = #tpu.pipeline_mode<synchronous>, transform_indices = @transform_1, window_bounds = array<i64: 36, 8>}, {pipeline_mode = #tpu.pipeline_mode<synchronous>, transform_indices = @transform_2, window_bounds = array<i64: 1, 8>}, {pipeline_mode = #tpu.pipeline_mode<synchronous>, transform_indices = @transform_3, window_bounds = array<i64: 1, 8>}, {pipeline_mode = #tpu.pipeline_mode<synchronous>, transform_indices = @transform_4, window_bounds = array<i64: 72, 8>}, {pipeline_mode = #tpu.pipeline_mode<synchronous>, transform_indices = @transform_5, window_bounds = array<i64: 1, 8>}, {pipeline_mode = #tpu.pipeline_mode<synchronous>, transform_indices = @transform_6, window_bounds = array<i64: 1, 8>}, {pipeline_mode = #tpu.pipeline_mode<synchronous>, transform_indices = @transform_7, window_bounds = array<i64: 4, 8>}, {pipeline_mode = #tpu.pipeline_mode<synchronous>, transform_indices = @transform_8, window_bounds = array<i64: 1, 8>}, {pipeline_mode = #tpu.pipeline_mode<synchronous>, transform_indices = @transform_9, window_bounds = array<i64: 1, 8>}, {transform_indices = @transform_10, window_bounds = array<i64: 1, 16, 128>}]} {
    %cst = arith.constant 0.000000e+00 : bf16
    %0 = vector.broadcast %cst : bf16 to vector<1x18x4xbf16>
    %cst_0 = arith.constant 0.000000e+00 : bf16
    %1 = vector.broadcast %cst_0 : bf16 to vector<18x1x4xbf16>
    %c0 = arith.constant 0 : index
    %c0_1 = arith.constant 0 : index
    %c0_2 = arith.constant 0 : index
    %2 = vector.load %arg12[%c0, %c0_1, %c0_2] : memref<18x18x4xbf16, #tpu.memory_space<vmem>>, vector<1x18x4xbf16>
    tpu.vector_store %arg12[%c0, %c0_1, %c0_2], %0 {strides = array<i32>} : memref<18x18x4xbf16, #tpu.memory_space<vmem>>, vector<1x18x4xbf16>,
    %c17 = arith.constant 17 : index
    %c0_3 = arith.constant 0 : index
    %c0_4 = arith.constant 0 : index
    %3 = vector.load %arg12[%c17, %c0_3, %c0_4] : memref<18x18x4xbf16, #tpu.memory_space<vmem>>, vector<1x18x4xbf16>
    tpu.vector_store %arg12[%c17, %c0_3, %c0_4], %0 {strides = array<i32>} : memref<18x18x4xbf16, #tpu.memory_space<vmem>>, vector<1x18x4xbf16>,
    %c0_5 = arith.constant 0 : index
    %c0_6 = arith.constant 0 : index
    %c0_7 = arith.constant 0 : index
    %4 = vector.load %arg12[%c0_5, %c0_6, %c0_7] : memref<18x18x4xbf16, #tpu.memory_space<vmem>>, vector<18x1x4xbf16>
    tpu.vector_store %arg12[%c0_5, %c0_6, %c0_7], %1 {strides = array<i32>} : memref<18x18x4xbf16, #tpu.memory_space<vmem>>, vector<18x1x4xbf16>,
    %c0_8 = arith.constant 0 : index
    %c17_9 = arith.constant 17 : index
    %c0_10 = arith.constant 0 : index
    %5 = vector.load %arg12[%c0_8, %c17_9, %c0_10] : memref<18x18x4xbf16, #tpu.memory_space<vmem>>, vector<18x1x4xbf16>
    tpu.vector_store %arg12[%c0_8, %c17_9, %c0_10], %1 {strides = array<i32>} : memref<18x18x4xbf16, #tpu.memory_space<vmem>>, vector<18x1x4xbf16>,
    %c0_11 = arith.constant 0 : index
    %c0_12 = arith.constant 0 : index
    %c0_13 = arith.constant 0 : index
    %c0_14 = arith.constant 0 : index
    %6 = vector.load %arg1[%c0_11, %c0_12, %c0_13, %c0_14] : memref<1x16x16x4xbf16, #tpu.memory_space<vmem>>, vector<1x16x16x4xbf16>
    %7 = vector.shape_cast %6 : vector<1x16x16x4xbf16> to vector<16x16x4xbf16>
    %c1 = arith.constant 1 : index
    %c1_15 = arith.constant 1 : index
    %c0_16 = arith.constant 0 : index
    %8 = vector.load %arg12[%c1, %c1_15, %c0_16] : memref<18x18x4xbf16, #tpu.memory_space<vmem>>, vector<16x16x4xbf16>
    tpu.vector_store %arg12[%c1, %c1_15, %c0_16], %7 {strides = array<i32>} : memref<18x18x4xbf16, #tpu.memory_space<vmem>>, vector<16x16x4xbf16>,
    %c0_17 = arith.constant 0 : index
    %c0_18 = arith.constant 0 : index
    %c0_19 = arith.constant 0 : index
    %9 = vector.load %arg12[%c0_17, %c0_18, %c0_19] : memref<18x18x4xbf16, #tpu.memory_space<vmem>>, vector<16x16x4xbf16>
    %10 = vector.shape_cast %9 : vector<16x16x4xbf16> to vector<256x4xbf16>
    %c0_20 = arith.constant 0 : index
    %c1_21 = arith.constant 1 : index
    %c0_22 = arith.constant 0 : index
    %11 = vector.load %arg12[%c0_20, %c1_21, %c0_22] : memref<18x18x4xbf16, #tpu.memory_space<vmem>>, vector<16x16x4xbf16>
    %12 = vector.shape_cast %11 : vector<16x16x4xbf16> to vector<256x4xbf16>
    %c0_23 = arith.constant 0 : index
    %c2 = arith.constant 2 : index
    %c0_24 = arith.constant 0 : index
    %13 = vector.load %arg12[%c0_23, %c2, %c0_24] : memref<18x18x4xbf16, #tpu.memory_space<vmem>>, vector<16x16x4xbf16>
    %14 = vector.shape_cast %13 : vector<16x16x4xbf16> to vector<256x4xbf16>
    %c1_25 = arith.constant 1 : index
    %c0_26 = arith.constant 0 : index
    %c0_27 = arith.constant 0 : index
    %15 = vector.load %arg12[%c1_25, %c0_26, %c0_27] : memref<18x18x4xbf16, #tpu.memory_space<vmem>>, vector<16x16x4xbf16>
    %16 = vector.shape_cast %15 : vector<16x16x4xbf16> to vector<256x4xbf16>
    %c1_28 = arith.constant 1 : index
    %c1_29 = arith.constant 1 : index
    %c0_30 = arith.constant 0 : index
    %17 = vector.load %arg12[%c1_28, %c1_29, %c0_30] : memref<18x18x4xbf16, #tpu.memory_space<vmem>>, vector<16x16x4xbf16>
    %18 = vector.shape_cast %17 : vector<16x16x4xbf16> to vector<256x4xbf16>
    %c1_31 = arith.constant 1 : index
    %c2_32 = arith.constant 2 : index
    %c0_33 = arith.constant 0 : index
    %19 = vector.load %arg12[%c1_31, %c2_32, %c0_33] : memref<18x18x4xbf16, #tpu.memory_space<vmem>>, vector<16x16x4xbf16>
    %20 = vector.shape_cast %19 : vector<16x16x4xbf16> to vector<256x4xbf16>
    %c2_34 = arith.constant 2 : index
    %c0_35 = arith.constant 0 : index
    %c0_36 = arith.constant 0 : index
    %21 = vector.load %arg12[%c2_34, %c0_35, %c0_36] : memref<18x18x4xbf16, #tpu.memory_space<vmem>>, vector<16x16x4xbf16>
    %22 = vector.shape_cast %21 : vector<16x16x4xbf16> to vector<256x4xbf16>
    %c2_37 = arith.constant 2 : index
    %c1_38 = arith.constant 1 : index
    %c0_39 = arith.constant 0 : index
    %23 = vector.load %arg12[%c2_37, %c1_38, %c0_39] : memref<18x18x4xbf16, #tpu.memory_space<vmem>>, vector<16x16x4xbf16>
    %24 = vector.shape_cast %23 : vector<16x16x4xbf16> to vector<256x4xbf16>
    %c2_40 = arith.constant 2 : index
    %c2_41 = arith.constant 2 : index
    %c0_42 = arith.constant 0 : index
    %25 = vector.load %arg12[%c2_40, %c2_41, %c0_42] : memref<18x18x4xbf16, #tpu.memory_space<vmem>>, vector<16x16x4xbf16>
    %26 = vector.shape_cast %25 : vector<16x16x4xbf16> to vector<256x4xbf16>
    %27 = tpu.concatenate %10, %12, %14, %16, %18, %20, %22, %24, %26 in 1 : vector<256x4xbf16>, vector<256x4xbf16>, vector<256x4xbf16>, vector<256x4xbf16>, vector<256x4xbf16>, vector<256x4xbf16>, vector<256x4xbf16>, vector<256x4xbf16>, vector<256x4xbf16> -> vector<256x36xbf16>
    %c0_43 = arith.constant 0 : index
    %c0_44 = arith.constant 0 : index
    %28 = vector.load %arg2[%c0_43, %c0_44] : memref<36x8xbf16, #tpu.memory_space<vmem>>, vector<36x8xbf16>
    %cst_45 = arith.constant dense<0.000000e+00> : vector<256x8xf32>
    %29 = tpu.matmul %27, %28, %cst_45 {dimension_numbers = #tpu.dot_dimension_numbers<[1], [0], [0], [1], [0, 0, 1, 1], [], []>} : vector<256x36xbf16>, vector<36x8xbf16>, vector<256x8xf32> -> vector<256x8xf32>
    %c0_46 = arith.constant 0 : index
    %c0_47 = arith.constant 0 : index
    %30 = vector.load %arg3[%c0_46, %c0_47] : memref<1x8xf32, #tpu.memory_space<vmem>>, vector<1x8xf32>
    %31 = vector.broadcast %30 : vector<1x8xf32> to vector<256x8xf32>
    %32 = arith.mulf %29, %31 : vector<256x8xf32>
    %c0_48 = arith.constant 0 : index
    %c0_49 = arith.constant 0 : index
    %33 = vector.load %arg4[%c0_48, %c0_49] : memref<1x8xf32, #tpu.memory_space<vmem>>, vector<1x8xf32>
    %34 = vector.broadcast %33 : vector<1x8xf32> to vector<256x8xf32>
    %35 = arith.addf %32, %34 : vector<256x8xf32>
    %cst_50 = arith.constant 0.000000e+00 : f32
    %36 = vector.broadcast %cst_50 : f32 to vector<256x8xf32>
    %37 = arith.maximumf %35, %36 : vector<256x8xf32>
    %cst_51 = arith.constant 0.000000e+00 : bf16
    %38 = vector.broadcast %cst_51 : bf16 to vector<1x18x8xbf16>
    %cst_52 = arith.constant 0.000000e+00 : bf16
    %39 = vector.broadcast %cst_52 : bf16 to vector<18x1x8xbf16>
    %c0_53 = arith.constant 0 : index
    %c0_54 = arith.constant 0 : index
    %c0_55 = arith.constant 0 : index
    %40 = vector.load %arg13[%c0_53, %c0_54, %c0_55] : memref<18x18x8xbf16, #tpu.memory_space<vmem>>, vector<1x18x8xbf16>
    tpu.vector_store %arg13[%c0_53, %c0_54, %c0_55], %38 {strides = array<i32>} : memref<18x18x8xbf16, #tpu.memory_space<vmem>>, vector<1x18x8xbf16>,
    %c17_56 = arith.constant 17 : index
    %c0_57 = arith.constant 0 : index
    %c0_58 = arith.constant 0 : index
    %41 = vector.load %arg13[%c17_56, %c0_57, %c0_58] : memref<18x18x8xbf16, #tpu.memory_space<vmem>>, vector<1x18x8xbf16>
    tpu.vector_store %arg13[%c17_56, %c0_57, %c0_58], %38 {strides = array<i32>} : memref<18x18x8xbf16, #tpu.memory_space<vmem>>, vector<1x18x8xbf16>,
    %c0_59 = arith.constant 0 : index
    %c0_60 = arith.constant 0 : index
    %c0_61 = arith.constant 0 : index
    %42 = vector.load %arg13[%c0_59, %c0_60, %c0_61] : memref<18x18x8xbf16, #tpu.memory_space<vmem>>, vector<18x1x8xbf16>
    tpu.vector_store %arg13[%c0_59, %c0_60, %c0_61], %39 {strides = array<i32>} : memref<18x18x8xbf16, #tpu.memory_space<vmem>>, vector<18x1x8xbf16>,
    %c0_62 = arith.constant 0 : index
    %c17_63 = arith.constant 17 : index
    %c0_64 = arith.constant 0 : index
    %43 = vector.load %arg13[%c0_62, %c17_63, %c0_64] : memref<18x18x8xbf16, #tpu.memory_space<vmem>>, vector<18x1x8xbf16>
    tpu.vector_store %arg13[%c0_62, %c17_63, %c0_64], %39 {strides = array<i32>} : memref<18x18x8xbf16, #tpu.memory_space<vmem>>, vector<18x1x8xbf16>,
    %44 = vector.shape_cast %37 : vector<256x8xf32> to vector<16x16x8xf32>
    %45 = arith.truncf %44 : vector<16x16x8xf32> to vector<16x16x8xbf16>
    %c1_65 = arith.constant 1 : index
    %c1_66 = arith.constant 1 : index
    %c0_67 = arith.constant 0 : index
    %46 = vector.load %arg13[%c1_65, %c1_66, %c0_67] : memref<18x18x8xbf16, #tpu.memory_space<vmem>>, vector<16x16x8xbf16>
    tpu.vector_store %arg13[%c1_65, %c1_66, %c0_67], %45 {strides = array<i32>} : memref<18x18x8xbf16, #tpu.memory_space<vmem>>, vector<16x16x8xbf16>,
    %c0_68 = arith.constant 0 : index
    %c0_69 = arith.constant 0 : index
    %c0_70 = arith.constant 0 : index
    %47 = vector.load %arg13[%c0_68, %c0_69, %c0_70] : memref<18x18x8xbf16, #tpu.memory_space<vmem>>, vector<16x16x8xbf16>
    %48 = vector.shape_cast %47 : vector<16x16x8xbf16> to vector<256x8xbf16>
    %c0_71 = arith.constant 0 : index
    %c1_72 = arith.constant 1 : index
    %c0_73 = arith.constant 0 : index
    %49 = vector.load %arg13[%c0_71, %c1_72, %c0_73] : memref<18x18x8xbf16, #tpu.memory_space<vmem>>, vector<16x16x8xbf16>
    %50 = vector.shape_cast %49 : vector<16x16x8xbf16> to vector<256x8xbf16>
    %c0_74 = arith.constant 0 : index
    %c2_75 = arith.constant 2 : index
    %c0_76 = arith.constant 0 : index
    %51 = vector.load %arg13[%c0_74, %c2_75, %c0_76] : memref<18x18x8xbf16, #tpu.memory_space<vmem>>, vector<16x16x8xbf16>
    %52 = vector.shape_cast %51 : vector<16x16x8xbf16> to vector<256x8xbf16>
    %c1_77 = arith.constant 1 : index
    %c0_78 = arith.constant 0 : index
    %c0_79 = arith.constant 0 : index
    %53 = vector.load %arg13[%c1_77, %c0_78, %c0_79] : memref<18x18x8xbf16, #tpu.memory_space<vmem>>, vector<16x16x8xbf16>
    %54 = vector.shape_cast %53 : vector<16x16x8xbf16> to vector<256x8xbf16>
    %c1_80 = arith.constant 1 : index
    %c1_81 = arith.constant 1 : index
    %c0_82 = arith.constant 0 : index
    %55 = vector.load %arg13[%c1_80, %c1_81, %c0_82] : memref<18x18x8xbf16, #tpu.memory_space<vmem>>, vector<16x16x8xbf16>
    %56 = vector.shape_cast %55 : vector<16x16x8xbf16> to vector<256x8xbf16>
    %c1_83 = arith.constant 1 : index
    %c2_84 = arith.constant 2 : index
    %c0_85 = arith.constant 0 : index
    %57 = vector.load %arg13[%c1_83, %c2_84, %c0_85] : memref<18x18x8xbf16, #tpu.memory_space<vmem>>, vector<16x16x8xbf16>
    %58 = vector.shape_cast %57 : vector<16x16x8xbf16> to vector<256x8xbf16>
    %c2_86 = arith.constant 2 : index
    %c0_87 = arith.constant 0 : index
    %c0_88 = arith.constant 0 : index
    %59 = vector.load %arg13[%c2_86, %c0_87, %c0_88] : memref<18x18x8xbf16, #tpu.memory_space<vmem>>, vector<16x16x8xbf16>
    %60 = vector.shape_cast %59 : vector<16x16x8xbf16> to vector<256x8xbf16>
    %c2_89 = arith.constant 2 : index
    %c1_90 = arith.constant 1 : index
    %c0_91 = arith.constant 0 : index
    %61 = vector.load %arg13[%c2_89, %c1_90, %c0_91] : memref<18x18x8xbf16, #tpu.memory_space<vmem>>, vector<16x16x8xbf16>
    %62 = vector.shape_cast %61 : vector<16x16x8xbf16> to vector<256x8xbf16>
    %c2_92 = arith.constant 2 : index
    %c2_93 = arith.constant 2 : index
    %c0_94 = arith.constant 0 : index
    %63 = vector.load %arg13[%c2_92, %c2_93, %c0_94] : memref<18x18x8xbf16, #tpu.memory_space<vmem>>, vector<16x16x8xbf16>
    %64 = vector.shape_cast %63 : vector<16x16x8xbf16> to vector<256x8xbf16>
    %65 = tpu.concatenate %48, %50, %52, %54, %56, %58, %60, %62, %64 in 1 : vector<256x8xbf16>, vector<256x8xbf16>, vector<256x8xbf16>, vector<256x8xbf16>, vector<256x8xbf16>, vector<256x8xbf16>, vector<256x8xbf16>, vector<256x8xbf16>, vector<256x8xbf16> -> vector<256x72xbf16>
    %c0_95 = arith.constant 0 : index
    %c0_96 = arith.constant 0 : index
    %66 = vector.load %arg5[%c0_95, %c0_96] : memref<72x8xbf16, #tpu.memory_space<vmem>>, vector<72x8xbf16>
    %cst_97 = arith.constant dense<0.000000e+00> : vector<256x8xf32>
    %67 = tpu.matmul %65, %66, %cst_97 {dimension_numbers = #tpu.dot_dimension_numbers<[1], [0], [0], [1], [0, 0, 1, 1], [], []>} : vector<256x72xbf16>, vector<72x8xbf16>, vector<256x8xf32> -> vector<256x8xf32>
    %c0_98 = arith.constant 0 : index
    %c0_99 = arith.constant 0 : index
    %68 = vector.load %arg6[%c0_98, %c0_99] : memref<1x8xf32, #tpu.memory_space<vmem>>, vector<1x8xf32>
    %69 = vector.broadcast %68 : vector<1x8xf32> to vector<256x8xf32>
    %70 = arith.mulf %67, %69 : vector<256x8xf32>
    %c0_100 = arith.constant 0 : index
    %c0_101 = arith.constant 0 : index
    %71 = vector.load %arg7[%c0_100, %c0_101] : memref<1x8xf32, #tpu.memory_space<vmem>>, vector<1x8xf32>
    %72 = vector.broadcast %71 : vector<1x8xf32> to vector<256x8xf32>
    %73 = arith.addf %70, %72 : vector<256x8xf32>
    %c1_102 = arith.constant 1 : index
    %c1_103 = arith.constant 1 : index
    %c0_104 = arith.constant 0 : index
    %74 = vector.load %arg12[%c1_102, %c1_103, %c0_104] : memref<18x18x4xbf16, #tpu.memory_space<vmem>>, vector<16x16x4xbf16>
    %75 = vector.shape_cast %74 : vector<16x16x4xbf16> to vector<256x4xbf16>
    %c0_105 = arith.constant 0 : index
    %c0_106 = arith.constant 0 : index
    %76 = vector.load %arg8[%c0_105, %c0_106] : memref<4x8xbf16, #tpu.memory_space<vmem>>, vector<4x8xbf16>
    %cst_107 = arith.constant dense<0.000000e+00> : vector<256x8xf32>
    %77 = tpu.matmul %75, %76, %cst_107 {dimension_numbers = #tpu.dot_dimension_numbers<[1], [0], [0], [1], [0, 0, 1, 1], [], []>} : vector<256x4xbf16>, vector<4x8xbf16>, vector<256x8xf32> -> vector<256x8xf32>
    %c0_108 = arith.constant 0 : index
    %c0_109 = arith.constant 0 : index
    %78 = vector.load %arg9[%c0_108, %c0_109] : memref<1x8xf32, #tpu.memory_space<vmem>>, vector<1x8xf32>
    %79 = vector.broadcast %78 : vector<1x8xf32> to vector<256x8xf32>
    %80 = arith.mulf %77, %79 : vector<256x8xf32>
    %c0_110 = arith.constant 0 : index
    %c0_111 = arith.constant 0 : index
    %81 = vector.load %arg10[%c0_110, %c0_111] : memref<1x8xf32, #tpu.memory_space<vmem>>, vector<1x8xf32>
    %82 = vector.broadcast %81 : vector<1x8xf32> to vector<256x8xf32>
    %83 = arith.addf %80, %82 : vector<256x8xf32>
    %84 = arith.addf %73, %83 : vector<256x8xf32>
    %cst_112 = arith.constant 0.000000e+00 : f32
    %85 = vector.broadcast %cst_112 : f32 to vector<256x8xf32>
    %86 = arith.maximumf %84, %85 : vector<256x8xf32>
    %87 = vector.shape_cast %86 : vector<256x8xf32> to vector<16x16x8xf32>
    %88 = vector.extract_strided_slice %87 {offsets = [0, 0, 0], sizes = [16, 1, 8], strides = [1, 1, 1]} : vector<16x16x8xf32> to vector<16x1x8xf32>
    %89 = vector.shape_cast %88 : vector<16x1x8xf32> to vector<16x8xf32>
    %90 = vector.extract_strided_slice %87 {offsets = [0, 1, 0], sizes = [16, 1, 8], strides = [1, 1, 1]} : vector<16x16x8xf32> to vector<16x1x8xf32>
    %91 = vector.shape_cast %90 : vector<16x1x8xf32> to vector<16x8xf32>
    %92 = vector.extract_strided_slice %87 {offsets = [0, 2, 0], sizes = [16, 1, 8], strides = [1, 1, 1]} : vector<16x16x8xf32> to vector<16x1x8xf32>
    %93 = vector.shape_cast %92 : vector<16x1x8xf32> to vector<16x8xf32>
    %94 = vector.extract_strided_slice %87 {offsets = [0, 3, 0], sizes = [16, 1, 8], strides = [1, 1, 1]} : vector<16x16x8xf32> to vector<16x1x8xf32>
    %95 = vector.shape_cast %94 : vector<16x1x8xf32> to vector<16x8xf32>
    %96 = vector.extract_strided_slice %87 {offsets = [0, 4, 0], sizes = [16, 1, 8], strides = [1, 1, 1]} : vector<16x16x8xf32> to vector<16x1x8xf32>
    %97 = vector.shape_cast %96 : vector<16x1x8xf32> to vector<16x8xf32>
    %98 = vector.extract_strided_slice %87 {offsets = [0, 5, 0], sizes = [16, 1, 8], strides = [1, 1, 1]} : vector<16x16x8xf32> to vector<16x1x8xf32>
    %99 = vector.shape_cast %98 : vector<16x1x8xf32> to vector<16x8xf32>
    %100 = vector.extract_strided_slice %87 {offsets = [0, 6, 0], sizes = [16, 1, 8], strides = [1, 1, 1]} : vector<16x16x8xf32> to vector<16x1x8xf32>
    %101 = vector.shape_cast %100 : vector<16x1x8xf32> to vector<16x8xf32>
    %102 = vector.extract_strided_slice %87 {offsets = [0, 7, 0], sizes = [16, 1, 8], strides = [1, 1, 1]} : vector<16x16x8xf32> to vector<16x1x8xf32>
    %103 = vector.shape_cast %102 : vector<16x1x8xf32> to vector<16x8xf32>
    %104 = vector.extract_strided_slice %87 {offsets = [0, 8, 0], sizes = [16, 1, 8], strides = [1, 1, 1]} : vector<16x16x8xf32> to vector<16x1x8xf32>
    %105 = vector.shape_cast %104 : vector<16x1x8xf32> to vector<16x8xf32>
    %106 = vector.extract_strided_slice %87 {offsets = [0, 9, 0], sizes = [16, 1, 8], strides = [1, 1, 1]} : vector<16x16x8xf32> to vector<16x1x8xf32>
    %107 = vector.shape_cast %106 : vector<16x1x8xf32> to vector<16x8xf32>
    %108 = vector.extract_strided_slice %87 {offsets = [0, 10, 0], sizes = [16, 1, 8], strides = [1, 1, 1]} : vector<16x16x8xf32> to vector<16x1x8xf32>
    %109 = vector.shape_cast %108 : vector<16x1x8xf32> to vector<16x8xf32>
    %110 = vector.extract_strided_slice %87 {offsets = [0, 11, 0], sizes = [16, 1, 8], strides = [1, 1, 1]} : vector<16x16x8xf32> to vector<16x1x8xf32>
    %111 = vector.shape_cast %110 : vector<16x1x8xf32> to vector<16x8xf32>
    %112 = vector.extract_strided_slice %87 {offsets = [0, 12, 0], sizes = [16, 1, 8], strides = [1, 1, 1]} : vector<16x16x8xf32> to vector<16x1x8xf32>
    %113 = vector.shape_cast %112 : vector<16x1x8xf32> to vector<16x8xf32>
    %114 = vector.extract_strided_slice %87 {offsets = [0, 13, 0], sizes = [16, 1, 8], strides = [1, 1, 1]} : vector<16x16x8xf32> to vector<16x1x8xf32>
    %115 = vector.shape_cast %114 : vector<16x1x8xf32> to vector<16x8xf32>
    %116 = vector.extract_strided_slice %87 {offsets = [0, 14, 0], sizes = [16, 1, 8], strides = [1, 1, 1]} : vector<16x16x8xf32> to vector<16x1x8xf32>
    %117 = vector.shape_cast %116 : vector<16x1x8xf32> to vector<16x8xf32>
    %118 = vector.extract_strided_slice %87 {offsets = [0, 15, 0], sizes = [16, 1, 8], strides = [1, 1, 1]} : vector<16x16x8xf32> to vector<16x1x8xf32>
    %119 = vector.shape_cast %118 : vector<16x1x8xf32> to vector<16x8xf32>
    %120 = tpu.concatenate %89, %91, %93, %95, %97, %99, %101, %103, %105, %107, %109, %111, %113, %115, %117, %119 in 1 : vector<16x8xf32>, vector<16x8xf32>, vector<16x8xf32>, vector<16x8xf32>, vector<16x8xf32>, vector<16x8xf32>, vector<16x8xf32>, vector<16x8xf32>, vector<16x8xf32>, vector<16x8xf32>, vector<16x8xf32>, vector<16x8xf32>, vector<16x8xf32>, vector<16x8xf32>, vector<16x8xf32>, vector<16x8xf32> -> vector<16x128xf32>
    %c0_113 = arith.constant 0 : index
    %c0_114 = arith.constant 0 : index
    %c0_115 = arith.constant 0 : index
    %121 = vector.load %arg11[%c0_113, %c0_114, %c0_115] : memref<1x16x128xf32, #tpu.memory_space<vmem>>, vector<1x16x128xf32>
    %122 = vector.shape_cast %121 : vector<1x16x128xf32> to vector<16x128xf32>
    %123 = vector.shape_cast %120 : vector<16x128xf32> to vector<1x16x128xf32>
    tpu.vector_store %arg11[%c0_113, %c0_114, %c0_115], %123 {strides = array<i32>} : memref<1x16x128xf32, #tpu.memory_space<vmem>>, vector<1x16x128xf32>,
    return
  }
  func.func @transform_0(%arg0: i32) -> (i32, i32, i32, i32) {
    %c0_i32 = arith.constant 0 : i32
    %c0_i32_0 = arith.constant 0 : i32
    %c0_i32_1 = arith.constant 0 : i32
    %c0_i32_2 = arith.constant 0 : i32
    return %arg0, %c0_i32, %c0_i32_0, %c0_i32_1 : i32, i32, i32, i32
  }
  func.func @transform_1(%arg0: i32) -> (i32, i32) {
    %c0_i32 = arith.constant 0 : i32
    %c0_i32_0 = arith.constant 0 : i32
    %c0_i32_1 = arith.constant 0 : i32
    return %c0_i32, %c0_i32_0 : i32, i32
  }
  func.func @transform_2(%arg0: i32) -> (i32, i32) {
    %c0_i32 = arith.constant 0 : i32
    %c0_i32_0 = arith.constant 0 : i32
    %c0_i32_1 = arith.constant 0 : i32
    return %c0_i32, %c0_i32_0 : i32, i32
  }
  func.func @transform_3(%arg0: i32) -> (i32, i32) {
    %c0_i32 = arith.constant 0 : i32
    %c0_i32_0 = arith.constant 0 : i32
    %c0_i32_1 = arith.constant 0 : i32
    return %c0_i32, %c0_i32_0 : i32, i32
  }
  func.func @transform_4(%arg0: i32) -> (i32, i32) {
    %c0_i32 = arith.constant 0 : i32
    %c0_i32_0 = arith.constant 0 : i32
    %c0_i32_1 = arith.constant 0 : i32
    return %c0_i32, %c0_i32_0 : i32, i32
  }
  func.func @transform_5(%arg0: i32) -> (i32, i32) {
    %c0_i32 = arith.constant 0 : i32
    %c0_i32_0 = arith.constant 0 : i32
    %c0_i32_1 = arith.constant 0 : i32
    return %c0_i32, %c0_i32_0 : i32, i32
  }
  func.func @transform_6(%arg0: i32) -> (i32, i32) {
    %c0_i32 = arith.constant 0 : i32
    %c0_i32_0 = arith.constant 0 : i32
    %c0_i32_1 = arith.constant 0 : i32
    return %c0_i32, %c0_i32_0 : i32, i32
  }
  func.func @transform_7(%arg0: i32) -> (i32, i32) {
    %c0_i32 = arith.constant 0 : i32
    %c0_i32_0 = arith.constant 0 : i32
    %c0_i32_1 = arith.constant 0 : i32
    return %c0_i32, %c0_i32_0 : i32, i32
  }
  func.func @transform_8(%arg0: i32) -> (i32, i32) {
    %c0_i32 = arith.constant 0 : i32
    %c0_i32_0 = arith.constant 0 : i32
    %c0_i32_1 = arith.constant 0 : i32
    return %c0_i32, %c0_i32_0 : i32, i32
  }
  func.func @transform_9(%arg0: i32) -> (i32, i32) {
    %c0_i32 = arith.constant 0 : i32
    %c0_i32_0 = arith.constant 0 : i32
    %c0_i32_1 = arith.constant 0 : i32
    return %c0_i32, %c0_i32_0 : i32, i32
  }
  func.func @transform_10(%arg0: i32) -> (i32, i32, i32) {
    %c0_i32 = arith.constant 0 : i32
    %c0_i32_0 = arith.constant 0 : i32
    %c0_i32_1 = arith.constant 0 : i32
    return %arg0, %c0_i32, %c0_i32_0 : i32, i32, i32
  }
}

</mosaic_0001>

<llo_original>
// kernel: tpu_custom_call.1
$region0: #{tpu_custom_call.1}
  #allocation0 [shape = 'u32[]', space=smem, size = 0x4, offset = 0x4, fixed_abs, tag = 'smem constant byte address 0x4 - core index']
  #allocation1 [shape = 'u32[72,128]{1,0:T(1,128)}', space=vmem, size = 0x9000, scoped, tag = 'internal scratch']
  #allocation2 [shape = 'bf16[18,18,4]{2,1,0:T(8,128)(2,1)}', space=vmem, size = 0x1b000, scoped, tag = 'scratch operand']
  #allocation3 [shape = 'bf16[18,18,8]{2,1,0:T(8,128)(2,1)}', space=vmem, size = 0x1b000, scoped, tag = 'scratch operand']
  %s0 = inlined_call_operand.vmem [shape: bf16[2,16,16,4], index: 0, kind: input, shape index: {}]
  %s1 = inlined_call_operand.vmem [shape: bf16[36,8], index: 1, kind: input, shape index: {}]
  %s2 = inlined_call_operand.vmem [shape: f32[1,8], index: 2, kind: input, shape index: {}]
  %s3 = inlined_call_operand.vmem [shape: f32[1,8], index: 3, kind: input, shape index: {}]
  %s4 = inlined_call_operand.vmem [shape: bf16[72,8], index: 4, kind: input, shape index: {}]
  %s5 = inlined_call_operand.vmem [shape: f32[1,8], index: 5, kind: input, shape index: {}]
  %s6 = inlined_call_operand.vmem [shape: f32[1,8], index: 6, kind: input, shape index: {}]
  %s7 = inlined_call_operand.vmem [shape: bf16[4,8], index: 7, kind: input, shape index: {}]
  %s8 = inlined_call_operand.vmem [shape: f32[1,8], index: 8, kind: input, shape index: {}]
  %s9 = inlined_call_operand.vmem [shape: f32[1,8], index: 9, kind: input, shape index: {}]
  %s10 = inlined_call_operand.hbm [shape: f32[2,16,128], index: 10, kind: output, shape index: {}]
  %s11 = sld [smem:[#allocation0]]
  $region73: #{tpu_custom_call.1} parent=0
    _
  %s13 = ssub.s32 1, %s11
  %s14 = scalar_select 0, %s13, %s11
  $region1: #{tpu_custom_call.1} parent=0
    #allocation4 [shape = 'u8[16384]{0}', space=vmem, size = 0x4000, scoped, tag = 'output window, operand 0']
    #allocation5 [shape = 's32[2]{0}', space=sflag, size = 0x8, scoped, tag = 'scoped memory for tpu_custom_call.1']
    %15 = vsyncpa [#allocation5], 0
    %s16 = scalar_lea.sflag [#allocation5], 1
    %17 = vsyncpa %s16, 0
    loop: start=0, step=1, limit=4
    $region2: #{tpu_custom_call.1} parent=1 // loop_pre_header
      _
    $region3: #{tpu_custom_call.1} parent=1 // loop_header
      %s19 = sphi 0, %s23
      %p20 = scmp.ge.s32.totalorder %s19, 4
      %s29 = sphi 0, %s31
      %s32 = sphi 0, %s29
      %s33 = sphi 0, %s32
      %s49 = sphi 0, %s33
      %s53 = sphi 0, %s53
      %s55 = sphi 0, %s53
      %s56 = sphi 0, %s55
      %s70 = sphi 0, %s56
      %s74 = sphi 0, %s74
      %s76 = sphi 0, %s74
      %s77 = sphi 0, %s76
      %s91 = sphi 0, %s77
      %s95 = sphi 0, %s95
      %s97 = sphi 0, %s95
      %s98 = sphi 0, %s97
      %s112 = sphi 0, %s98
      %s116 = sphi 0, %s116
      %s118 = sphi 0, %s116
      %s119 = sphi 0, %s118
      %s133 = sphi 0, %s119
      %s137 = sphi 0, %s137
      %s139 = sphi 0, %s137
      %s140 = sphi 0, %s139
      %s154 = sphi 0, %s140
      %s158 = sphi 0, %s158
      %s160 = sphi 0, %s158
      %s161 = sphi 0, %s160
      %s175 = sphi 0, %s161
      %s179 = sphi 0, %s179
      %s181 = sphi 0, %s179
      %s182 = sphi 0, %s181
      %s196 = sphi 0, %s182
      %s200 = sphi 0, %s200
      %s202 = sphi 0, %s200
      %s203 = sphi 0, %s202
      %s217 = sphi 0, %s203
      %s221 = sphi 0, %s221
      %s223 = sphi 0, %s221
      %s224 = sphi 0, %s223
      %s238 = sphi 0, %s224
      %s244 = sphi 0, %s246
      %s247 = sphi 0, %s244
      %s248 = sphi 0, %s247
      %s264 = sphi 0, %s248
    $region4: #{tpu_custom_call.1} parent=1 // loop_header_branch
      %22 = sbr.rel (%p20) target = $region8
    $region5: #{tpu_custom_call.1} parent=1 // loop_body
      %s24 = ssub.s32 %s19, 1
      %s25 = ssub.s32 %s19, 2
      %s26 = sadd.s32 %s19, 1
      %s27 = ssub.s32 %s19, %s26
      %p28 = scmp.eq.s32.totalorder %s27, 0
      %s30 = sadd.s32 %s29, 1
      %s31 = scalar_select %p28, %s29, %s30
      %p34 = pneg %p28
      %p35 = scmp.eq.s32.totalorder %s19, 1
      %p36 = por %p34, %p35
      %p37 = scmp.ne.s32.totalorder %s29, %s32
      %p38 = scmp.eq.s32.totalorder %s19, 0
      %p39 = por %p37, %p38
      %p40 = scmp.ne.s32.totalorder %s29, %s32
      %p41 = scmp.eq.s32.totalorder %s24, 1
      %p42 = por %p40, %p41
      %p43 = scmp.ne.s32.totalorder %s32, %s33
      %p44 = scmp.eq.s32.totalorder %s24, 0
      %p45 = por %p43, %p44
      %p46 = scmp.ne.s32.totalorder %s32, %s33
      %p47 = scmp.eq.s32.totalorder %s25, 1
      %p48 = por %p46, %p47
      %p50 = scmp.ne.s32.totalorder %s33, %s49
      %p51 = scmp.eq.s32.totalorder %s25, 0
      %p52 = por %p50, %p51
      %s54 = sadd.s32 %s53, 1
      %p57 = scmp.eq.s32.totalorder %s19, 1
      %p58 = scmp.ne.s32.totalorder %s53, %s55
      %p59 = scmp.eq.s32.totalorder %s19, 0
      %p60 = por %p58, %p59
      %p61 = scmp.ne.s32.totalorder %s53, %s55
      %p62 = scmp.eq.s32.totalorder %s24, 1
      %p63 = por %p61, %p62
      %p64 = scmp.ne.s32.totalorder %s55, %s56
      %p65 = scmp.eq.s32.totalorder %s24, 0
      %p66 = por %p64, %p65
      %p67 = scmp.ne.s32.totalorder %s55, %s56
      %p68 = scmp.eq.s32.totalorder %s25, 1
      %p69 = por %p67, %p68
      %p71 = scmp.ne.s32.totalorder %s56, %s70
      %p72 = scmp.eq.s32.totalorder %s25, 0
      %p73 = por %p71, %p72
      %s75 = sadd.s32 %s74, 1
      %p78 = scmp.eq.s32.totalorder %s19, 1
      %p79 = scmp.ne.s32.totalorder %s74, %s76
      %p80 = scmp.eq.s32.totalorder %s19, 0
      %p81 = por %p79, %p80
      %p82 = scmp.ne.s32.totalorder %s74, %s76
      %p83 = scmp.eq.s32.totalorder %s24, 1
      %p84 = por %p82, %p83
      %p85 = scmp.ne.s32.totalorder %s76, %s77
      %p86 = scmp.eq.s32.totalorder %s24, 0
      %p87 = por %p85, %p86
      %p88 = scmp.ne.s32.totalorder %s76, %s77
      %p89 = scmp.eq.s32.totalorder %s25, 1
      %p90 = por %p88, %p89
      %p92 = scmp.ne.s32.totalorder %s77, %s91
      %p93 = scmp.eq.s32.totalorder %s25, 0
      %p94 = por %p92, %p93
      %s96 = sadd.s32 %s95, 1
      %p99 = scmp.eq.s32.totalorder %s19, 1
      %p100 = scmp.ne.s32.totalorder %s95, %s97
      %p101 = scmp.eq.s32.totalorder %s19, 0
      %p102 = por %p100, %p101
      %p103 = scmp.ne.s32.totalorder %s95, %s97
      %p104 = scmp.eq.s32.totalorder %s24, 1
      %p105 = por %p103, %p104
      %p106 = scmp.ne.s32.totalorder %s97, %s98
      %p107 = scmp.eq.s32.totalorder %s24, 0
      %p108 = por %p106, %p107
      %p109 = scmp.ne.s32.totalorder %s97, %s98
      %p110 = scmp.eq.s32.totalorder %s25, 1
      %p111 = por %p109, %p110
      %p113 = scmp.ne.s32.totalorder %s98, %s112
      %p114 = scmp.eq.s32.totalorder %s25, 0
      %p115 = por %p113, %p114
      %s117 = sadd.s32 %s116, 1
      %p120 = scmp.eq.s32.totalorder %s19, 1
      %p121 = scmp.ne.s32.totalorder %s116, %s118
      %p122 = scmp.eq.s32.totalorder %s19, 0
      %p123 = por %p121, %p122
      %p124 = scmp.ne.s32.totalorder %s116, %s118
      %p125 = scmp.eq.s32.totalorder %s24, 1
      %p126 = por %p124, %p125
      %p127 = scmp.ne.s32.totalorder %s118, %s119
      %p128 = scmp.eq.s32.totalorder %s24, 0
      %p129 = por %p127, %p128
      %p130 = scmp.ne.s32.totalorder %s118, %s119
      %p131 = scmp.eq.s32.totalorder %s25, 1
      %p132 = por %p130, %p131
      %p134 = scmp.ne.s32.totalorder %s119, %s133
      %p135 = scmp.eq.s32.totalorder %s25, 0
      %p136 = por %p134, %p135
      %s138 = sadd.s32 %s137, 1
      %p141 = scmp.eq.s32.totalorder %s19, 1
      %p142 = scmp.ne.s32.totalorder %s137, %s139
      %p143 = scmp.eq.s32.totalorder %s19, 0
      %p144 = por %p142, %p143
      %p145 = scmp.ne.s32.totalorder %s137, %s139
      %p146 = scmp.eq.s32.totalorder %s24, 1
      %p147 = por %p145, %p146
      %p148 = scmp.ne.s32.totalorder %s139, %s140
      %p149 = scmp.eq.s32.totalorder %s24, 0
      %p150 = por %p148, %p149
      %p151 = scmp.ne.s32.totalorder %s139, %s140
      %p152 = scmp.eq.s32.totalorder %s25, 1
      %p153 = por %p151, %p152
      %p155 = scmp.ne.s32.totalorder %s140, %s154
      %p156 = scmp.eq.s32.totalorder %s25, 0
      %p157 = por %p155, %p156
      %s159 = sadd.s32 %s158, 1
      %p162 = scmp.eq.s32.totalorder %s19, 1
      %p163 = scmp.ne.s32.totalorder %s158, %s160
      %p164 = scmp.eq.s32.totalorder %s19, 0
      %p165 = por %p163, %p164
      %p166 = scmp.ne.s32.totalorder %s158, %s160
      %p167 = scmp.eq.s32.totalorder %s24, 1
      %p168 = por %p166, %p167
      %p169 = scmp.ne.s32.totalorder %s160, %s161
      %p170 = scmp.eq.s32.totalorder %s24, 0
      %p171 = por %p169, %p170
      %p172 = scmp.ne.s32.totalorder %s160, %s161
      %p173 = scmp.eq.s32.totalorder %s25, 1
      %p174 = por %p172, %p173
      %p176 = scmp.ne.s32.totalorder %s161, %s175
      %p177 = scmp.eq.s32.totalorder %s25, 0
      %p178 = por %p176, %p177
      %s180 = sadd.s32 %s179, 1
      %p183 = scmp.eq.s32.totalorder %s19, 1
      %p184 = scmp.ne.s32.totalorder %s179, %s181
      %p185 = scmp.eq.s32.totalorder %s19, 0
      %p186 = por %p184, %p185
      %p187 = scmp.ne.s32.totalorder %s179, %s181
      %p188 = scmp.eq.s32.totalorder %s24, 1
      %p189 = por %p187, %p188
      %p190 = scmp.ne.s32.totalorder %s181, %s182
      %p191 = scmp.eq.s32.totalorder %s24, 0
      %p192 = por %p190, %p191
      %p193 = scmp.ne.s32.totalorder %s181, %s182
      %p194 = scmp.eq.s32.totalorder %s25, 1
      %p195 = por %p193, %p194
      %p197 = scmp.ne.s32.totalorder %s182, %s196
      %p198 = scmp.eq.s32.totalorder %s25, 0
      %p199 = por %p197, %p198
      %s201 = sadd.s32 %s200, 1
      %p204 = scmp.eq.s32.totalorder %s19, 1
      %p205 = scmp.ne.s32.totalorder %s200, %s202
      %p206 = scmp.eq.s32.totalorder %s19, 0
      %p207 = por %p205, %p206
      %p208 = scmp.ne.s32.totalorder %s200, %s202
      %p209 = scmp.eq.s32.totalorder %s24, 1
      %p210 = por %p208, %p209
      %p211 = scmp.ne.s32.totalorder %s202, %s203
      %p212 = scmp.eq.s32.totalorder %s24, 0
      %p213 = por %p211, %p212
      %p214 = scmp.ne.s32.totalorder %s202, %s203
      %p215 = scmp.eq.s32.totalorder %s25, 1
      %p216 = por %p214, %p215
      %p218 = scmp.ne.s32.totalorder %s203, %s217
      %p219 = scmp.eq.s32.totalorder %s25, 0
      %p220 = por %p218, %p219
      %s222 = sadd.s32 %s221, 1
      %p225 = scmp.eq.s32.totalorder %s19, 1
      %p226 = scmp.ne.s32.totalorder %s221, %s223
      %p227 = scmp.eq.s32.totalorder %s19, 0
      %p228 = por %p226, %p227
      %p229 = scmp.ne.s32.totalorder %s221, %s223
      %p230 = scmp.eq.s32.totalorder %s24, 1
      %p231 = por %p229, %p230
      %p232 = scmp.ne.s32.totalorder %s223, %s224
      %p233 = scmp.eq.s32.totalorder %s24, 0
      %p234 = por %p232, %p233
      %p235 = scmp.ne.s32.totalorder %s223, %s224
      %p236 = scmp.eq.s32.totalorder %s25, 1
      %p237 = por %p235, %p236
      %p239 = scmp.ne.s32.totalorder %s224, %s238
      %p240 = scmp.eq.s32.totalorder %s25, 0
      %p241 = por %p239, %p240
      %s242 = ssub.s32 %s19, %s26
      %p243 = scmp.eq.s32.totalorder %s242, 0
      %s245 = sadd.s32 %s244, 1
      %s246 = scalar_select %p243, %s244, %s245
      %p249 = pneg %p243
      %p250 = scmp.eq.s32.totalorder %s19, 1
      %p251 = por %p249, %p250
      %p252 = scmp.ne.s32.totalorder %s244, %s247
      %p253 = scmp.eq.s32.totalorder %s19, 0
      %p254 = por %p252, %p253
      %p255 = scmp.ne.s32.totalorder %s244, %s247
      %p256 = scmp.eq.s32.totalorder %s24, 1
      %p257 = por %p255, %p256
      %p258 = scmp.ne.s32.totalorder %s247, %s248
      %p259 = scmp.eq.s32.totalorder %s24, 0
      %p260 = por %p258, %p259
      %p261 = scmp.ne.s32.totalorder %s247, %s248
      %p262 = scmp.eq.s32.totalorder %s25, 1
      %p263 = por %p261, %p262
      %p265 = scmp.ne.s32.totalorder %s248, %s264
      %p266 = scmp.eq.s32.totalorder %s25, 0
      %p267 = por %p265, %p266
      %p268 = scmp.le.s32.totalorder 1, %s19
      %p269 = scmp.lt.s32.totalorder %s19, 3
      %p270 = pnand %p268, %p269
      %p271 = pneg %p270
      // Predicated region
      $region9: #{tpu_custom_call.1} parent=5 // pred_check
        _
      $region10: #{tpu_custom_call.1} parent=5 // pred_check_branch
        %273 = sbr.rel (%p270) target = $region12
      $region11: #{tpu_custom_call.1} parent=5 // pred_region
        %s274 = ssub.s32 %s19, 1
        // Predicated region
        $region13: #{tpu_custom_call.1} parent=11 // pred_check
          %p275 = pneg %p66
        $region14: #{tpu_custom_call.1} parent=11 // pred_check_branch
          %277 = sbr.rel (%p275) target = $region16
        $region15: #{tpu_custom_call.1} parent=11 // pred_region
          _
        $region16: #{tpu_custom_call.1} parent=11 // pred_fallthru
          _
        // Predicated region
        $region17: #{tpu_custom_call.1} parent=11 // pred_check
          %p278 = pneg %p87
        $region18: #{tpu_custom_call.1} parent=11 // pred_check_branch
          %280 = sbr.rel (%p278) target = $region20
        $region19: #{tpu_custom_call.1} parent=11 // pred_region
          _
        $region20: #{tpu_custom_call.1} parent=11 // pred_fallthru
          _
        // Predicated region
        $region21: #{tpu_custom_call.1} parent=11 // pred_check
          %p281 = pneg %p108
        $region22: #{tpu_custom_call.1} parent=11 // pred_check_branch
          %283 = sbr.rel (%p281) target = $region24
        $region23: #{tpu_custom_call.1} parent=11 // pred_region
          _
        $region24: #{tpu_custom_call.1} parent=11 // pred_fallthru
          _
        // Predicated region
        $region25: #{tpu_custom_call.1} parent=11 // pred_check
          %p284 = pneg %p129
        $region26: #{tpu_custom_call.1} parent=11 // pred_check_branch
          %286 = sbr.rel (%p284) target = $region28
        $region27: #{tpu_custom_call.1} parent=11 // pred_region
          _
        $region28: #{tpu_custom_call.1} parent=11 // pred_fallthru
          _
        // Predicated region
        $region29: #{tpu_custom_call.1} parent=11 // pred_check
          %p287 = pneg %p150
        $region30: #{tpu_custom_call.1} parent=11 // pred_check_branch
          %289 = sbr.rel (%p287) target = $region32
        $region31: #{tpu_custom_call.1} parent=11 // pred_region
          _
        $region32: #{tpu_custom_call.1} parent=11 // pred_fallthru
          _
        // Predicated region
        $region33: #{tpu_custom_call.1} parent=11 // pred_check
          %p290 = pneg %p171
        $region34: #{tpu_custom_call.1} parent=11 // pred_check_branch
          %292 = sbr.rel (%p290) target = $region36
        $region35: #{tpu_custom_call.1} parent=11 // pred_region
          _
        $region36: #{tpu_custom_call.1} parent=11 // pred_fallthru
          _
        // Predicated region
        $region37: #{tpu_custom_call.1} parent=11 // pred_check
          %p293 = pneg %p192
        $region38: #{tpu_custom_call.1} parent=11 // pred_check_branch
          %295 = sbr.rel (%p293) target = $region40
        $region39: #{tpu_custom_call.1} parent=11 // pred_region
          _
        $region40: #{tpu_custom_call.1} parent=11 // pred_fallthru
          _
        // Predicated region
        $region41: #{tpu_custom_call.1} parent=11 // pred_check
          %p296 = pneg %p213
        $region42: #{tpu_custom_call.1} parent=11 // pred_check_branch
          %298 = sbr.rel (%p296) target = $region44
        $region43: #{tpu_custom_call.1} parent=11 // pred_region
          _
        $region44: #{tpu_custom_call.1} parent=11 // pred_fallthru
          _
        // Predicated region
        $region45: #{tpu_custom_call.1} parent=11 // pred_check
          %p299 = pneg %p234
        $region46: #{tpu_custom_call.1} parent=11 // pred_check_branch
          %301 = sbr.rel (%p299) target = $region48
        $region47: #{tpu_custom_call.1} parent=11 // pred_region
          _
        $region48: #{tpu_custom_call.1} parent=11 // pred_fallthru
          _
      $region12: #{tpu_custom_call.1} parent=5 // pred_fallthru
        _
      %p302 = scmp.lt.s32.totalorder %s19, 2
      // Predicated region
      $region49: #{tpu_custom_call.1} parent=5 // pred_check
        %p303 = pneg %p302
      $region50: #{tpu_custom_call.1} parent=5 // pred_check_branch
        %305 = sbr.rel (%p303) target = $region52
      $region51: #{tpu_custom_call.1} parent=5 // pred_region
        // Predicated region
        $region53: #{tpu_custom_call.1} parent=51 // pred_check
          %p306 = pneg %p39
        $region54: #{tpu_custom_call.1} parent=51 // pred_check_branch
          %308 = sbr.rel (%p306) target = $region56
        $region55: #{tpu_custom_call.1} parent=51 // pred_region
          %p309 = scmp.lt.s32.totalorder %s19, 1
          %s310 = scalar_select %p309, %s19, 1
          %s311 = smul.addr %s310, 32
          %s312 = smul.addr %s311, 4
          %s313 = scalar_lea.vmem %s0, %s312
        $region56: #{tpu_custom_call.1} parent=51 // pred_fallthru
          _
      $region52: #{tpu_custom_call.1} parent=5 // pred_fallthru
        _
      %p314 = scmp.le.s32.totalorder 1, %s19
      %p315 = scmp.lt.s32.totalorder %s19, 3
      %p316 = pnand %p314, %p315
      %p317 = pneg %p316
      // Predicated region
      $region57: #{tpu_custom_call.1} parent=5 // pred_check
        _
      $region58: #{tpu_custom_call.1} parent=5 // pred_check_branch
        %319 = sbr.rel (%p316) target = $region60
      $region59: #{tpu_custom_call.1} parent=5 // pred_region
        %s320 = ssub.s32 %s19, 1
        %p321 = scmp.lt.s32.totalorder %s24, 1
        %s322 = scalar_select %p321, %s24, 1
        %s323 = smul.addr %s322, 32
        %s324 = smul.addr %s323, 4
        %s325 = scalar_lea.vmem %s0, %s324
        %p326 = pneg %p45
        %p327 = pneg %p42
        %p328 = pneg %p66
        %p329 = pneg %p63
        %p330 = pneg %p87
        %p331 = pneg %p84
        %p332 = pneg %p108
        %p333 = pneg %p105
        %p334 = pneg %p129
        %p335 = pneg %p126
        %p336 = pneg %p150
        %p337 = pneg %p147
        %p338 = pneg %p171
        %p339 = pneg %p168
        %p340 = pneg %p192
        %p341 = pneg %p189
        %p342 = pneg %p213
        %p343 = pneg %p210
        %p344 = pneg %p234
        %p345 = pneg %p231
        %p346 = pneg %p260
        %p347 = pneg %p257
        %s348 = sand.u32 %s247, 1
        %s349 = scalar_lea.sflag [#allocation5], %s348
        %s350 = sand.u32 %s247, 1
        %s351 = smul.addr %s350, 16
        %s352 = scalar_lea.vmem [#allocation4], %s351
        %p353 = scmp.lt.s32.totalorder %s24, 1
        %s354 = scalar_select %p353, %s24, 1
        %s355 = smul.addr %s354, 32
        %s356 = smul.addr %s355, 4
        %s357 = scalar_lea.vmem %s0, %s356
        %vm359 = vcmask 27648
        %360 = vst.msk [vmem:[#allocation2] sm:$0xf] %vm359, 0
        %361 = vst.msk [vmem:[#allocation2 + $0x4] sm:$0xf] %vm359, 0
        %vm362 = vcmask 24576
        %363 = vst.msk [vmem:[#allocation2 + $0x8] sm:$0x1] %vm362, 0
        %s364 = scalar_lea.vmem [#allocation2], 204
        %365 = vst.msk [vmem:[%s364] sm:$0xf] %vm359, 0
        %366 = vst.msk [vmem:[%s364 + $0x4] sm:$0xf] %vm359, 0
        %367 = vst.msk [vmem:[%s364 + $0x8] sm:$0x1] %vm362, 0
        %vm368 = vcmask 24576
        %vm369 = vsmask.f32 256
        %vm370 = vmand %vm368, %vm369
        %v371 = vld [vmem:[#allocation2] sm:$0x1]
        %v372 = vsel %vm370, 0, %v371
        %373 = vst [vmem:[#allocation2] sm:$0x1] %v372
        %v374 = vld [vmem:[#allocation2 + $0xc] sm:$0x1]
        %v375 = vsel %vm370, 0, %v374
        %376 = vst [vmem:[#allocation2 + $0xc] sm:$0x1] %v375
        %v377 = vld [vmem:[#allocation2 + $0x18] sm:$0x1]
        %v378 = vsel %vm370, 0, %v377
        %379 = vst [vmem:[#allocation2 + $0x18] sm:$0x1] %v378
        %v380 = vld [vmem:[#allocation2 + $0x24] sm:$0x1]
        %v381 = vsel %vm370, 0, %v380
        %382 = vst [vmem:[#allocation2 + $0x24] sm:$0x1] %v381
        %v383 = vld [vmem:[#allocation2 + $0x30] sm:$0x1]
        %v384 = vsel %vm370, 0, %v383
        %385 = vst [vmem:[#allocation2 + $0x30] sm:$0x1] %v384
        %v386 = vld [vmem:[#allocation2 + $0x3c] sm:$0x1]
        %v387 = vsel %vm370, 0, %v386
        %388 = vst [vmem:[#allocation2 + $0x3c] sm:$0x1] %v387
        %v389 = vld [vmem:[#allocation2 + $0x48] sm:$0x1]
        %v390 = vsel %vm370, 0, %v389
        %391 = vst [vmem:[#allocation2 + $0x48] sm:$0x1] %v390
        %v392 = vld [vmem:[#allocation2 + $0x54] sm:$0x1]
        %v393 = vsel %vm370, 0, %v392
        %394 = vst [vmem:[#allocation2 + $0x54] sm:$0x1] %v393
        %v395 = vld [vmem:[#allocation2 + $0x60] sm:$0x1]
        %v396 = vsel %vm370, 0, %v395
        %397 = vst [vmem:[#allocation2 + $0x60] sm:$0x1] %v396
        %v398 = vld [vmem:[#allocation2 + $0x6c] sm:$0x1]
        %v399 = vsel %vm370, 0, %v398
        %400 = vst [vmem:[#allocation2 + $0x6c] sm:$0x1] %v399
        %v401 = vld [vmem:[#allocation2 + $0x78] sm:$0x1]
        %v402 = vsel %vm370, 0, %v401
        %403 = vst [vmem:[#allocation2 + $0x78] sm:$0x1] %v402
        %v404 = vld [vmem:[#allocation2 + $0x84] sm:$0x1]
        %v405 = vsel %vm370, 0, %v404
        %406 = vst [vmem:[#allocation2 + $0x84] sm:$0x1] %v405
        %v407 = vld [vmem:[#allocation2 + $0x90] sm:$0x1]
        %v408 = vsel %vm370, 0, %v407
        %409 = vst [vmem:[#allocation2 + $0x90] sm:$0x1] %v408
        %v410 = vld [vmem:[#allocation2 + $0x9c] sm:$0x1]
        %v411 = vsel %vm370, 0, %v410
        %412 = vst [vmem:[#allocation2 + $0x9c] sm:$0x1] %v411
        %v413 = vld [vmem:[#allocation2 + $0xa8] sm:$0x1]
        %v414 = vsel %vm370, 0, %v413
        %415 = vst [vmem:[#allocation2 + $0xa8] sm:$0x1] %v414
        %v416 = vld [vmem:[#allocation2 + $0xb4] sm:$0x1]
        %v417 = vsel %vm370, 0, %v416
        %418 = vst [vmem:[#allocation2 + $0xb4] sm:$0x1] %v417
        %v419 = vld [vmem:[#allocation2 + $0xc0] sm:$0x1]
        %v420 = vsel %vm370, 0, %v419
        %421 = vst [vmem:[#allocation2 + $0xc0] sm:$0x1] %v420
        %v422 = vld [vmem:[#allocation2 + $0xcc] sm:$0x1]
        %v423 = vsel %vm370, 0, %v422
        %424 = vst [vmem:[#allocation2 + $0xcc] sm:$0x1] %v423
        %vm425 = vsmask.f32 7938
        %vm426 = vmand %vm368, %vm425
        %v427 = vld [vmem:[#allocation2 + $0x8] sm:$0x1]
        %v428 = vsel %vm426, 0, %v427
        %429 = vst [vmem:[#allocation2 + $0x8] sm:$0x1] %v428
        %v430 = vld [vmem:[#allocation2 + $0x14] sm:$0x1]
        %v431 = vsel %vm426, 0, %v430
        %432 = vst [vmem:[#allocation2 + $0x14] sm:$0x1] %v431
        %v433 = vld [vmem:[#allocation2 + $0x20] sm:$0x1]
        %v434 = vsel %vm426, 0, %v433
        %435 = vst [vmem:[#allocation2 + $0x20] sm:$0x1] %v434
        %v436 = vld [vmem:[#allocation2 + $0x2c] sm:$0x1]
        %v437 = vsel %vm426, 0, %v436
        %438 = vst [vmem:[#allocation2 + $0x2c] sm:$0x1] %v437
        %v439 = vld [vmem:[#allocation2 + $0x38] sm:$0x1]
        %v440 = vsel %vm426, 0, %v439
        %441 = vst [vmem:[#allocation2 + $0x38] sm:$0x1] %v440
        %v442 = vld [vmem:[#allocation2 + $0x44] sm:$0x1]
        %v443 = vsel %vm426, 0, %v442
        %444 = vst [vmem:[#allocation2 + $0x44] sm:$0x1] %v443
        %v445 = vld [vmem:[#allocation2 + $0x50] sm:$0x1]
        %v446 = vsel %vm426, 0, %v445
        %447 = vst [vmem:[#allocation2 + $0x50] sm:$0x1] %v446
        %v448 = vld [vmem:[#allocation2 + $0x5c] sm:$0x1]
        %v449 = vsel %vm426, 0, %v448
        %450 = vst [vmem:[#allocation2 + $0x5c] sm:$0x1] %v449
        %v451 = vld [vmem:[#allocation2 + $0x68] sm:$0x1]
        %v452 = vsel %vm426, 0, %v451
        %453 = vst [vmem:[#allocation2 + $0x68] sm:$0x1] %v452
        %v454 = vld [vmem:[#allocation2 + $0x74] sm:$0x1]
        %v455 = vsel %vm426, 0, %v454
        %456 = vst [vmem:[#allocation2 + $0x74] sm:$0x1] %v455
        %v457 = vld [vmem:[#allocation2 + $0x80] sm:$0x1]
        %v458 = vsel %vm426, 0, %v457
        %459 = vst [vmem:[#allocation2 + $0x80] sm:$0x1] %v458
        %v460 = vld [vmem:[#allocation2 + $0x8c] sm:$0x1]
        %v461 = vsel %vm426, 0, %v460
        %462 = vst [vmem:[#allocation2 + $0x8c] sm:$0x1] %v461
        %v463 = vld [vmem:[#allocation2 + $0x98] sm:$0x1]
        %v464 = vsel %vm426, 0, %v463
        %465 = vst [vmem:[#allocation2 + $0x98] sm:$0x1] %v464
        %v466 = vld [vmem:[#allocation2 + $0xa4] sm:$0x1]
        %v467 = vsel %vm426, 0, %v466
        %468 = vst [vmem:[#allocation2 + $0xa4] sm:$0x1] %v467
        %v469 = vld [vmem:[#allocation2 + $0xb0] sm:$0x1]
        %v470 = vsel %vm426, 0, %v469
        %471 = vst [vmem:[#allocation2 + $0xb0] sm:$0x1] %v470
        %v472 = vld [vmem:[#allocation2 + $0xbc] sm:$0x1]
        %v473 = vsel %vm426, 0, %v472
        %474 = vst [vmem:[#allocation2 + $0xbc] sm:$0x1] %v473
        %v475 = vld [vmem:[#allocation2 + $0xc8] sm:$0x1]
        %v476 = vsel %vm426, 0, %v475
        %477 = vst [vmem:[#allocation2 + $0xc8] sm:$0x1] %v476
        %v478 = vld [vmem:[#allocation2 + $0xd4] sm:$0x1]
        %v479 = vsel %vm426, 0, %v478
        %480 = vst [vmem:[#allocation2 + $0xd4] sm:$0x1] %v479
        %v481 = vld [vmem:[%s357] sm:$0xf]
        %v482 = vld [vmem:[%s357 + $0x4] sm:$0xf]
        %v483 = vld [vmem:[%s357 + $0x8] sm:$0xf]
        %v484 = vld [vmem:[%s357 + $0xc] sm:$0xf]
        %v485 = vld [vmem:[%s357 + $0x10] sm:$0xf]
        %v486 = vld [vmem:[%s357 + $0x14] sm:$0xf]
        %v487 = vld [vmem:[%s357 + $0x18] sm:$0xf]
        %v488 = vld [vmem:[%s357 + $0x1c] sm:$0xf]
        %v489 = vld [vmem:[%s357 + $0x20] sm:$0xf]
        %v490 = vld [vmem:[%s357 + $0x24] sm:$0xf]
        %v491 = vld [vmem:[%s357 + $0x28] sm:$0xf]
        %v492 = vld [vmem:[%s357 + $0x2c] sm:$0xf]
        %v493 = vld [vmem:[%s357 + $0x30] sm:$0xf]
        %v494 = vld [vmem:[%s357 + $0x34] sm:$0xf]
        %v495 = vld [vmem:[%s357 + $0x38] sm:$0xf]
        %v496 = vld [vmem:[%s357 + $0x3c] sm:$0xf]
        %v497 = vld [vmem:[%s357 + $0x40] sm:$0xf]
        %v498 = vld [vmem:[%s357 + $0x44] sm:$0xf]
        %v499 = vld [vmem:[%s357 + $0x48] sm:$0xf]
        %v500 = vld [vmem:[%s357 + $0x4c] sm:$0xf]
        %v501 = vld [vmem:[%s357 + $0x50] sm:$0xf]
        %v502 = vld [vmem:[%s357 + $0x54] sm:$0xf]
        %v503 = vld [vmem:[%s357 + $0x58] sm:$0xf]
        %v504 = vld [vmem:[%s357 + $0x5c] sm:$0xf]
        %v505 = vld [vmem:[%s357 + $0x60] sm:$0xf]
        %v506 = vld [vmem:[%s357 + $0x64] sm:$0xf]
        %v507 = vld [vmem:[%s357 + $0x68] sm:$0xf]
        %v508 = vld [vmem:[%s357 + $0x6c] sm:$0xf]
        %v509 = vld [vmem:[%s357 + $0x70] sm:$0xf]
        %v510 = vld [vmem:[%s357 + $0x74] sm:$0xf]
        %v511 = vld [vmem:[%s357 + $0x78] sm:$0xf]
        %v512 = vld [vmem:[%s357 + $0x7c] sm:$0xf]
        %vm513 = vsmask.f32 4368
        %vm514 = vmor %vm369, %vm513
        %v516 = vshrl.u32 %v481, 16
        %v518 = vrot.slane %v516, 7
        %v519 = vshll.u32 %v481, 16
        %v521 = vor.u32 %v518, %v519
        %v522 = vrot.slane %v518, 4
        %v524 = vshrl.u32 %v482, 16
        %v526 = vrot.slane %v524, 7
        %v527 = vshll.u32 %v482, 16
        %v529 = vor.u32 %v526, %v527
        %v530 = vsel %vm514, %v522, %v529
        %v531 = vrot.slane %v526, 4
        %v533 = vshrl.u32 %v483, 16
        %v535 = vrot.slane %v533, 7
        %v536 = vshll.u32 %v483, 16
        %v538 = vor.u32 %v535, %v536
        %v539 = vrot.slane %v535, 4
        %v541 = vshrl.u32 %v484, 16
        %v543 = vrot.slane %v541, 7
        %v544 = vshll.u32 %v484, 16
        %v546 = vor.u32 %v543, %v544
        %v547 = vsel %vm514, %v539, %v546
        %v548 = vrot.slane %v543, 4
        %v550 = vshrl.u32 %v485, 16
        %v552 = vrot.slane %v550, 7
        %v553 = vshll.u32 %v485, 16
        %v555 = vor.u32 %v552, %v553
        %v556 = vrot.slane %v552, 4
        %v558 = vshrl.u32 %v486, 16
        %v560 = vrot.slane %v558, 7
        %v561 = vshll.u32 %v486, 16
        %v563 = vor.u32 %v560, %v561
        %v564 = vsel %vm514, %v556, %v563
        %v565 = vrot.slane %v560, 4
        %v567 = vshrl.u32 %v487, 16
        %v569 = vrot.slane %v567, 7
        %v570 = vshll.u32 %v487, 16
        %v572 = vor.u32 %v569, %v570
        %v573 = vrot.slane %v569, 4
        %v575 = vshrl.u32 %v488, 16
        %v577 = vrot.slane %v575, 7
        %v578 = vshll.u32 %v488, 16
        %v580 = vor.u32 %v577, %v578
        %v581 = vsel %vm514, %v573, %v580
        %v582 = vrot.slane %v577, 4
        %v584 = vshrl.u32 %v489, 16
        %v586 = vrot.slane %v584, 7
        %v587 = vshll.u32 %v489, 16
        %v589 = vor.u32 %v586, %v587
        %v590 = vrot.slane %v586, 4
        %v592 = vshrl.u32 %v490, 16
        %v594 = vrot.slane %v592, 7
        %v595 = vshll.u32 %v490, 16
        %v597 = vor.u32 %v594, %v595
        %v598 = vsel %vm514, %v590, %v597
        %v599 = vrot.slane %v594, 4
        %v601 = vshrl.u32 %v491, 16
        %v603 = vrot.slane %v601, 7
        %v604 = vshll.u32 %v491, 16
        %v606 = vor.u32 %v603, %v604
        %v607 = vrot.slane %v603, 4
        %v609 = vshrl.u32 %v492, 16
        %v611 = vrot.slane %v609, 7
        %v612 = vshll.u32 %v492, 16
        %v614 = vor.u32 %v611, %v612
        %v615 = vsel %vm514, %v607, %v614
        %v616 = vrot.slane %v611, 4
        %v618 = vshrl.u32 %v493, 16
        %v620 = vrot.slane %v618, 7
        %v621 = vshll.u32 %v493, 16
        %v623 = vor.u32 %v620, %v621
        %v624 = vrot.slane %v620, 4
        %v626 = vshrl.u32 %v494, 16
        %v628 = vrot.slane %v626, 7
        %v629 = vshll.u32 %v494, 16
        %v631 = vor.u32 %v628, %v629
        %v632 = vsel %vm514, %v624, %v631
        %v633 = vrot.slane %v628, 4
        %v635 = vshrl.u32 %v495, 16
        %v637 = vrot.slane %v635, 7
        %v638 = vshll.u32 %v495, 16
        %v640 = vor.u32 %v637, %v638
        %v641 = vrot.slane %v637, 4
        %v643 = vshrl.u32 %v496, 16
        %v645 = vrot.slane %v643, 7
        %v646 = vshll.u32 %v496, 16
        %v648 = vor.u32 %v645, %v646
        %v649 = vsel %vm514, %v641, %v648
        %v650 = vrot.slane %v645, 4
        %v652 = vshrl.u32 %v497, 16
        %v654 = vrot.slane %v652, 7
        %v655 = vshll.u32 %v497, 16
        %v657 = vor.u32 %v654, %v655
        %v658 = vrot.slane %v654, 4
        %v660 = vshrl.u32 %v498, 16
        %v662 = vrot.slane %v660, 7
        %v663 = vshll.u32 %v498, 16
        %v665 = vor.u32 %v662, %v663
        %v666 = vsel %vm514, %v658, %v665
        %v667 = vrot.slane %v662, 4
        %v669 = vshrl.u32 %v499, 16
        %v671 = vrot.slane %v669, 7
        %v672 = vshll.u32 %v499, 16
        %v674 = vor.u32 %v671, %v672
        %v675 = vrot.slane %v671, 4
        %v677 = vshrl.u32 %v500, 16
        %v679 = vrot.slane %v677, 7
        %v680 = vshll.u32 %v500, 16
        %v682 = vor.u32 %v679, %v680
        %v683 = vsel %vm514, %v675, %v682
        %v684 = vrot.slane %v679, 4
        %v686 = vshrl.u32 %v501, 16
        %v688 = vrot.slane %v686, 7
        %v689 = vshll.u32 %v501, 16
        %v691 = vor.u32 %v688, %v689
        %v692 = vrot.slane %v688, 4
        %v694 = vshrl.u32 %v502, 16
        %v696 = vrot.slane %v694, 7
        %v697 = vshll.u32 %v502, 16
        %v699 = vor.u32 %v696, %v697
        %v700 = vsel %vm514, %v692, %v699
        %v701 = vrot.slane %v696, 4
        %v703 = vshrl.u32 %v503, 16
        %v705 = vrot.slane %v703, 7
        %v706 = vshll.u32 %v503, 16
        %v708 = vor.u32 %v705, %v706
        %v709 = vrot.slane %v705, 4
        %v711 = vshrl.u32 %v504, 16
        %v713 = vrot.slane %v711, 7
        %v714 = vshll.u32 %v504, 16
        %v716 = vor.u32 %v713, %v714
        %v717 = vsel %vm514, %v709, %v716
        %v718 = vrot.slane %v713, 4
        %v720 = vshrl.u32 %v505, 16
        %v722 = vrot.slane %v720, 7
        %v723 = vshll.u32 %v505, 16
        %v725 = vor.u32 %v722, %v723
        %v726 = vrot.slane %v722, 4
        %v728 = vshrl.u32 %v506, 16
        %v730 = vrot.slane %v728, 7
        %v731 = vshll.u32 %v506, 16
        %v733 = vor.u32 %v730, %v731
        %v734 = vsel %vm514, %v726, %v733
        %v735 = vrot.slane %v730, 4
        %v737 = vshrl.u32 %v507, 16
        %v739 = vrot.slane %v737, 7
        %v740 = vshll.u32 %v507, 16
        %v742 = vor.u32 %v739, %v740
        %v743 = vrot.slane %v739, 4
        %v745 = vshrl.u32 %v508, 16
        %v747 = vrot.slane %v745, 7
        %v748 = vshll.u32 %v508, 16
        %v750 = vor.u32 %v747, %v748
        %v751 = vsel %vm514, %v743, %v750
        %v752 = vrot.slane %v747, 4
        %v754 = vshrl.u32 %v509, 16
        %v756 = vrot.slane %v754, 7
        %v757 = vshll.u32 %v509, 16
        %v759 = vor.u32 %v756, %v757
        %v760 = vrot.slane %v756, 4
        %v762 = vshrl.u32 %v510, 16
        %v764 = vrot.slane %v762, 7
        %v765 = vshll.u32 %v510, 16
        %v767 = vor.u32 %v764, %v765
        %v768 = vsel %vm514, %v760, %v767
        %v769 = vrot.slane %v764, 4
        %v771 = vshrl.u32 %v511, 16
        %v773 = vrot.slane %v771, 7
        %v774 = vshll.u32 %v511, 16
        %v776 = vor.u32 %v773, %v774
        %v777 = vrot.slane %v773, 4
        %v779 = vshrl.u32 %v512, 16
        %v781 = vrot.slane %v779, 7
        %v782 = vshll.u32 %v512, 16
        %v784 = vor.u32 %v781, %v782
        %v785 = vsel %vm514, %v777, %v784
        %v786 = vrot.slane %v781, 4
        %s835 = scalar_lea.vmem [#allocation2], 12
        %vm836 = vcmask 27648
        %vm837 = vmand %vm836, %vm425
        %v838 = vld [vmem:[%s835] sm:$0xf]
        %v839 = vsel %vm837, %v521, %v838
        %840 = vst [vmem:[%s835] sm:$0xf] %v839
        %841 = vst.msk [vmem:[%s835 + $0x4] sm:$0xf] %vm359, %v530
        %v842 = vld [vmem:[%s835 + $0x8] sm:$0x1]
        %v843 = vsel %vm370, %v531, %v842
        %844 = vst [vmem:[%s835 + $0x8] sm:$0x1] %v843
        %v845 = vld [vmem:[%s835 + $0xc] sm:$0xf]
        %v846 = vsel %vm837, %v538, %v845
        %847 = vst [vmem:[%s835 + $0xc] sm:$0xf] %v846
        %848 = vst.msk [vmem:[%s835 + $0x10] sm:$0xf] %vm359, %v547
        %v849 = vld [vmem:[%s835 + $0x14] sm:$0x1]
        %v850 = vsel %vm370, %v548, %v849
        %851 = vst [vmem:[%s835 + $0x14] sm:$0x1] %v850
        %v852 = vld [vmem:[%s835 + $0x18] sm:$0xf]
        %v853 = vsel %vm837, %v555, %v852
        %854 = vst [vmem:[%s835 + $0x18] sm:$0xf] %v853
        %855 = vst.msk [vmem:[%s835 + $0x1c] sm:$0xf] %vm359, %v564
        %v856 = vld [vmem:[%s835 + $0x20] sm:$0x1]
        %v857 = vsel %vm370, %v565, %v856
        %858 = vst [vmem:[%s835 + $0x20] sm:$0x1] %v857
        %v859 = vld [vmem:[%s835 + $0x24] sm:$0xf]
        %v860 = vsel %vm837, %v572, %v859
        %861 = vst [vmem:[%s835 + $0x24] sm:$0xf] %v860
        %862 = vst.msk [vmem:[%s835 + $0x28] sm:$0xf] %vm359, %v581
        %v863 = vld [vmem:[%s835 + $0x2c] sm:$0x1]
        %v864 = vsel %vm370, %v582, %v863
        %865 = vst [vmem:[%s835 + $0x2c] sm:$0x1] %v864
        %v866 = vld [vmem:[%s835 + $0x30] sm:$0xf]
        %v867 = vsel %vm837, %v589, %v866
        %868 = vst [vmem:[%s835 + $0x30] sm:$0xf] %v867
        %869 = vst.msk [vmem:[%s835 + $0x34] sm:$0xf] %vm359, %v598
        %v870 = vld [vmem:[%s835 + $0x38] sm:$0x1]
        %v871 = vsel %vm370, %v599, %v870
        %872 = vst [vmem:[%s835 + $0x38] sm:$0x1] %v871
        %v873 = vld [vmem:[%s835 + $0x3c] sm:$0xf]
        %v874 = vsel %vm837, %v606, %v873
        %875 = vst [vmem:[%s835 + $0x3c] sm:$0xf] %v874
        %876 = vst.msk [vmem:[%s835 + $0x40] sm:$0xf] %vm359, %v615
        %v877 = vld [vmem:[%s835 + $0x44] sm:$0x1]
        %v878 = vsel %vm370, %v616, %v877
        %879 = vst [vmem:[%s835 + $0x44] sm:$0x1] %v878
        %v880 = vld [vmem:[%s835 + $0x48] sm:$0xf]
        %v881 = vsel %vm837, %v623, %v880
        %882 = vst [vmem:[%s835 + $0x48] sm:$0xf] %v881
        %883 = vst.msk [vmem:[%s835 + $0x4c] sm:$0xf] %vm359, %v632
        %v884 = vld [vmem:[%s835 + $0x50] sm:$0x1]
        %v885 = vsel %vm370, %v633, %v884
        %886 = vst [vmem:[%s835 + $0x50] sm:$0x1] %v885
        %v887 = vld [vmem:[%s835 + $0x54] sm:$0xf]
        %v888 = vsel %vm837, %v640, %v887
        %889 = vst [vmem:[%s835 + $0x54] sm:$0xf] %v888
        %890 = vst.msk [vmem:[%s835 + $0x58] sm:$0xf] %vm359, %v649
        %v891 = vld [vmem:[%s835 + $0x5c] sm:$0x1]
        %v892 = vsel %vm370, %v650, %v891
        %893 = vst [vmem:[%s835 + $0x5c] sm:$0x1] %v892
        %v894 = vld [vmem:[%s835 + $0x60] sm:$0xf]
        %v895 = vsel %vm837, %v657, %v894
        %896 = vst [vmem:[%s835 + $0x60] sm:$0xf] %v895
        %897 = vst.msk [vmem:[%s835 + $0x64] sm:$0xf] %vm359, %v666
        %v898 = vld [vmem:[%s835 + $0x68] sm:$0x1]
        %v899 = vsel %vm370, %v667, %v898
        %900 = vst [vmem:[%s835 + $0x68] sm:$0x1] %v899
        %v901 = vld [vmem:[%s835 + $0x6c] sm:$0xf]
        %v902 = vsel %vm837, %v674, %v901
        %903 = vst [vmem:[%s835 + $0x6c] sm:$0xf] %v902
        %904 = vst.msk [vmem:[%s835 + $0x70] sm:$0xf] %vm359, %v683
        %v905 = vld [vmem:[%s835 + $0x74] sm:$0x1]
        %v906 = vsel %vm370, %v684, %v905
        %907 = vst [vmem:[%s835 + $0x74] sm:$0x1] %v906
        %v908 = vld [vmem:[%s835 + $0x78] sm:$0xf]
        %v909 = vsel %vm837, %v691, %v908
        %910 = vst [vmem:[%s835 + $0x78] sm:$0xf] %v909
        %911 = vst.msk [vmem:[%s835 + $0x7c] sm:$0xf] %vm359, %v700
        %v912 = vld [vmem:[%s835 + $0x80] sm:$0x1]
        %v913 = vsel %vm370, %v701, %v912
        %914 = vst [vmem:[%s835 + $0x80] sm:$0x1] %v913
        %v915 = vld [vmem:[%s835 + $0x84] sm:$0xf]
        %v916 = vsel %vm837, %v708, %v915
        %917 = vst [vmem:[%s835 + $0x84] sm:$0xf] %v916
        %918 = vst.msk [vmem:[%s835 + $0x88] sm:$0xf] %vm359, %v717
        %v919 = vld [vmem:[%s835 + $0x8c] sm:$0x1]
        %v920 = vsel %vm370, %v718, %v919
        %921 = vst [vmem:[%s835 + $0x8c] sm:$0x1] %v920
        %v922 = vld [vmem:[%s835 + $0x90] sm:$0xf]
        %v923 = vsel %vm837, %v725, %v922
        %924 = vst [vmem:[%s835 + $0x90] sm:$0xf] %v923
        %925 = vst.msk [vmem:[%s835 + $0x94] sm:$0xf] %vm359, %v734
        %v926 = vld [vmem:[%s835 + $0x98] sm:$0x1]
        %v927 = vsel %vm370, %v735, %v926
        %928 = vst [vmem:[%s835 + $0x98] sm:$0x1] %v927
        %v929 = vld [vmem:[%s835 + $0x9c] sm:$0xf]
        %v930 = vsel %vm837, %v742, %v929
        %931 = vst [vmem:[%s835 + $0x9c] sm:$0xf] %v930
        %932 = vst.msk [vmem:[%s835 + $0xa0] sm:$0xf] %vm359, %v751
        %v933 = vld [vmem:[%s835 + $0xa4] sm:$0x1]
        %v934 = vsel %vm370, %v752, %v933
        %935 = vst [vmem:[%s835 + $0xa4] sm:$0x1] %v934
        %v936 = vld [vmem:[%s835 + $0xa8] sm:$0xf]
        %v937 = vsel %vm837, %v759, %v936
        %938 = vst [vmem:[%s835 + $0xa8] sm:$0xf] %v937
        %939 = vst.msk [vmem:[%s835 + $0xac] sm:$0xf] %vm359, %v768
        %v940 = vld [vmem:[%s835 + $0xb0] sm:$0x1]
        %v941 = vsel %vm370, %v769, %v940
        %942 = vst [vmem:[%s835 + $0xb0] sm:$0x1] %v941
        %v943 = vld [vmem:[%s835 + $0xb4] sm:$0xf]
        %v944 = vsel %vm837, %v776, %v943
        %945 = vst [vmem:[%s835 + $0xb4] sm:$0xf] %v944
        %946 = vst.msk [vmem:[%s835 + $0xb8] sm:$0xf] %vm359, %v785
        %v947 = vld [vmem:[%s835 + $0xbc] sm:$0x1]
        %v948 = vsel %vm370, %v786, %v947
        %949 = vst [vmem:[%s835 + $0xbc] sm:$0x1] %v948
        %v950 = vld [vmem:[#allocation2] sm:$0xf]
        %v951 = vld [vmem:[#allocation2 + $0x4] sm:$0xf]
        %v952 = vld [vmem:[#allocation2 + $0xc] sm:$0xf]
        %v953 = vld [vmem:[#allocation2 + $0x10] sm:$0xf]
        %v954 = vld [vmem:[#allocation2 + $0x18] sm:$0xf]
        %v955 = vld [vmem:[#allocation2 + $0x1c] sm:$0xf]
        %v956 = vld [vmem:[#allocation2 + $0x24] sm:$0xf]
        %v957 = vld [vmem:[#allocation2 + $0x28] sm:$0xf]
        %v958 = vld [vmem:[#allocation2 + $0x30] sm:$0xf]
        %v959 = vld [vmem:[#allocation2 + $0x34] sm:$0xf]
        %v960 = vld [vmem:[#allocation2 + $0x3c] sm:$0xf]
        %v961 = vld [vmem:[#allocation2 + $0x40] sm:$0xf]
        %v962 = vld [vmem:[#allocation2 + $0x48] sm:$0xf]
        %v963 = vld [vmem:[#allocation2 + $0x4c] sm:$0xf]
        %v964 = vld [vmem:[#allocation2 + $0x54] sm:$0xf]
        %v965 = vld [vmem:[#allocation2 + $0x58] sm:$0xf]
        %v966 = vld [vmem:[#allocation2 + $0x60] sm:$0xf]
        %v967 = vld [vmem:[#allocation2 + $0x64] sm:$0xf]
        %v968 = vld [vmem:[#allocation2 + $0x6c] sm:$0xf]
        %v969 = vld [vmem:[#allocation2 + $0x70] sm:$0xf]
        %v970 = vld [vmem:[#allocation2 + $0x78] sm:$0xf]
        %v971 = vld [vmem:[#allocation2 + $0x7c] sm:$0xf]
        %v972 = vld [vmem:[#allocation2 + $0x84] sm:$0xf]
        %v973 = vld [vmem:[#allocation2 + $0x88] sm:$0xf]
        %v974 = vld [vmem:[#allocation2 + $0x90] sm:$0xf]
        %v975 = vld [vmem:[#allocation2 + $0x94] sm:$0xf]
        %v976 = vld [vmem:[#allocation2 + $0x9c] sm:$0xf]
        %v977 = vld [vmem:[#allocation2 + $0xa0] sm:$0xf]
        %v978 = vld [vmem:[#allocation2 + $0xa8] sm:$0xf]
        %v979 = vld [vmem:[#allocation2 + $0xac] sm:$0xf]
        %v980 = vld [vmem:[#allocation2 + $0xb4] sm:$0xf]
        %v981 = vld [vmem:[#allocation2 + $0xb8] sm:$0xf]
        %v982 = vld [vmem:[#allocation2 + $0x8] sm:$0x1]
        %v983 = vld [vmem:[#allocation2 + $0x14] sm:$0x1]
        %v984 = vld [vmem:[#allocation2 + $0x20] sm:$0x1]
        %v985 = vld [vmem:[#allocation2 + $0x2c] sm:$0x1]
        %v986 = vld [vmem:[#allocation2 + $0x38] sm:$0x1]
        %v987 = vld [vmem:[#allocation2 + $0x44] sm:$0x1]
        %v988 = vld [vmem:[#allocation2 + $0x50] sm:$0x1]
        %v989 = vld [vmem:[#allocation2 + $0x5c] sm:$0x1]
        %v990 = vld [vmem:[#allocation2 + $0x68] sm:$0x1]
        %v991 = vld [vmem:[#allocation2 + $0x74] sm:$0x1]
        %v992 = vld [vmem:[#allocation2 + $0x80] sm:$0x1]
        %v993 = vld [vmem:[#allocation2 + $0x8c] sm:$0x1]
        %v994 = vld [vmem:[#allocation2 + $0x98] sm:$0x1]
        %v995 = vld [vmem:[#allocation2 + $0xa4] sm:$0x1]
        %v996 = vld [vmem:[#allocation2 + $0xb0] sm:$0x1]
        %v997 = vld [vmem:[#allocation2 + $0xbc] sm:$0x1]
        %vm998 = vsmask.f32 3328
        %vm999 = vsmask.f32 7440
        %vm1000 = vmor %vm998, %vm999
        %v1002 = vshrl.u32 %v950, 16
        %v1004 = vrot.slane %v1002, 4
        %v1005 = vshll.u32 %v950, 16
        %v1007 = vrot.slane %v1005, 5
        %v1008 = vor.u32 %v1004, %v1007
        %v1009 = vrot.slane %v1008, 4
        %v1011 = vshll.u32 %v951, 16
        %v1013 = vrot.slane %v1011, 5
        %v1014 = vsel %vm1000, %v1009, %v1013
        %v1015 = vshrl.u32 %v951, 16
        %v1017 = vrot.slane %v1015, 4
        %v1018 = vor.u32 %v1017, %v1013
        %v1019 = vrot.slane %v1018, 4
        %v1021 = vshll.u32 %v982, 16
        %v1023 = vrot.slane %v1021, 5
        %v1024 = vsel %vm1000, %v1019, %v1023
        %v1026 = vshrl.u32 %v952, 16
        %v1028 = vrot.slane %v1026, 4
        %v1029 = vshll.u32 %v952, 16
        %v1031 = vrot.slane %v1029, 5
        %v1032 = vor.u32 %v1028, %v1031
        %v1033 = vrot.slane %v1032, 4
        %v1035 = vshll.u32 %v953, 16
        %v1037 = vrot.slane %v1035, 5
        %v1038 = vsel %vm1000, %v1033, %v1037
        %v1039 = vshrl.u32 %v953, 16
        %v1041 = vrot.slane %v1039, 4
        %v1042 = vor.u32 %v1041, %v1037
        %v1043 = vrot.slane %v1042, 4
        %v1045 = vshll.u32 %v983, 16
        %v1047 = vrot.slane %v1045, 5
        %v1048 = vsel %vm1000, %v1043, %v1047
        %v1050 = vshrl.u32 %v954, 16
        %v1052 = vrot.slane %v1050, 4
        %v1053 = vshll.u32 %v954, 16
        %v1055 = vrot.slane %v1053, 5
        %v1056 = vor.u32 %v1052, %v1055
        %v1057 = vrot.slane %v1056, 4
        %v1059 = vshll.u32 %v955, 16
        %v1061 = vrot.slane %v1059, 5
        %v1062 = vsel %vm1000, %v1057, %v1061
        %v1063 = vshrl.u32 %v955, 16
        %v1065 = vrot.slane %v1063, 4
        %v1066 = vor.u32 %v1065, %v1061
        %v1067 = vrot.slane %v1066, 4
        %v1069 = vshll.u32 %v984, 16
        %v1071 = vrot.slane %v1069, 5
        %v1072 = vsel %vm1000, %v1067, %v1071
        %v1074 = vshrl.u32 %v956, 16
        %v1076 = vrot.slane %v1074, 4
        %v1077 = vshll.u32 %v956, 16
        %v1079 = vrot.slane %v1077, 5
        %v1080 = vor.u32 %v1076, %v1079
        %v1081 = vrot.slane %v1080, 4
        %v1083 = vshll.u32 %v957, 16
        %v1085 = vrot.slane %v1083, 5
        %v1086 = vsel %vm1000, %v1081, %v1085
        %v1087 = vshrl.u32 %v957, 16
        %v1089 = vrot.slane %v1087, 4
        %v1090 = vor.u32 %v1089, %v1085
        %v1091 = vrot.slane %v1090, 4
        %v1093 = vshll.u32 %v985, 16
        %v1095 = vrot.slane %v1093, 5
        %v1096 = vsel %vm1000, %v1091, %v1095
        %v1098 = vshrl.u32 %v958, 16
        %v1100 = vrot.slane %v1098, 4
        %v1101 = vshll.u32 %v958, 16
        %v1103 = vrot.slane %v1101, 5
        %v1104 = vor.u32 %v1100, %v1103
        %v1105 = vrot.slane %v1104, 4
        %v1107 = vshll.u32 %v959, 16
        %v1109 = vrot.slane %v1107, 5
        %v1110 = vsel %vm1000, %v1105, %v1109
        %v1111 = vshrl.u32 %v959, 16
        %v1113 = vrot.slane %v1111, 4
        %v1114 = vor.u32 %v1113, %v1109
        %v1115 = vrot.slane %v1114, 4
        %v1117 = vshll.u32 %v986, 16
        %v1119 = vrot.slane %v1117, 5
        %v1120 = vsel %vm1000, %v1115, %v1119
        %v1122 = vshrl.u32 %v960, 16
        %v1124 = vrot.slane %v1122, 4
        %v1125 = vshll.u32 %v960, 16
        %v1127 = vrot.slane %v1125, 5
        %v1128 = vor.u32 %v1124, %v1127
        %v1129 = vrot.slane %v1128, 4
        %v1131 = vshll.u32 %v961, 16
        %v1133 = vrot.slane %v1131, 5
        %v1134 = vsel %vm1000, %v1129, %v1133
        %v1135 = vshrl.u32 %v961, 16
        %v1137 = vrot.slane %v1135, 4
        %v1138 = vor.u32 %v1137, %v1133
        %v1139 = vrot.slane %v1138, 4
        %v1141 = vshll.u32 %v987, 16
        %v1143 = vrot.slane %v1141, 5
        %v1144 = vsel %vm1000, %v1139, %v1143
        %v1146 = vshrl.u32 %v962, 16
        %v1148 = vrot.slane %v1146, 4
        %v1149 = vshll.u32 %v962, 16
        %v1151 = vrot.slane %v1149, 5
        %v1152 = vor.u32 %v1148, %v1151
        %v1153 = vrot.slane %v1152, 4
        %v1155 = vshll.u32 %v963, 16
        %v1157 = vrot.slane %v1155, 5
        %v1158 = vsel %vm1000, %v1153, %v1157
        %v1159 = vshrl.u32 %v963, 16
        %v1161 = vrot.slane %v1159, 4
        %v1162 = vor.u32 %v1161, %v1157
        %v1163 = vrot.slane %v1162, 4
        %v1165 = vshll.u32 %v988, 16
        %v1167 = vrot.slane %v1165, 5
        %v1168 = vsel %vm1000, %v1163, %v1167
        %v1170 = vshrl.u32 %v964, 16
        %v1172 = vrot.slane %v1170, 4
        %v1173 = vshll.u32 %v964, 16
        %v1175 = vrot.slane %v1173, 5
        %v1176 = vor.u32 %v1172, %v1175
        %v1177 = vrot.slane %v1176, 4
        %v1179 = vshll.u32 %v965, 16
        %v1181 = vrot.slane %v1179, 5
        %v1182 = vsel %vm1000, %v1177, %v1181
        %v1183 = vshrl.u32 %v965, 16
        %v1185 = vrot.slane %v1183, 4
        %v1186 = vor.u32 %v1185, %v1181
        %v1187 = vrot.slane %v1186, 4
        %v1189 = vshll.u32 %v989, 16
        %v1191 = vrot.slane %v1189, 5
        %v1192 = vsel %vm1000, %v1187, %v1191
        %v1194 = vshrl.u32 %v966, 16
        %v1196 = vrot.slane %v1194, 4
        %v1197 = vshll.u32 %v966, 16
        %v1199 = vrot.slane %v1197, 5
        %v1200 = vor.u32 %v1196, %v1199
        %v1201 = vrot.slane %v1200, 4
        %v1203 = vshll.u32 %v967, 16
        %v1205 = vrot.slane %v1203, 5
        %v1206 = vsel %vm1000, %v1201, %v1205
        %v1207 = vshrl.u32 %v967, 16
        %v1209 = vrot.slane %v1207, 4
        %v1210 = vor.u32 %v1209, %v1205
        %v1211 = vrot.slane %v1210, 4
        %v1213 = vshll.u32 %v990, 16
        %v1215 = vrot.slane %v1213, 5
        %v1216 = vsel %vm1000, %v1211, %v1215
        %v1218 = vshrl.u32 %v968, 16
        %v1220 = vrot.slane %v1218, 4
        %v1221 = vshll.u32 %v968, 16
        %v1223 = vrot.slane %v1221, 5
        %v1224 = vor.u32 %v1220, %v1223
        %v1225 = vrot.slane %v1224, 4
        %v1227 = vshll.u32 %v969, 16
        %v1229 = vrot.slane %v1227, 5
        %v1230 = vsel %vm1000, %v1225, %v1229
        %v1231 = vshrl.u32 %v969, 16
        %v1233 = vrot.slane %v1231, 4
        %v1234 = vor.u32 %v1233, %v1229
        %v1235 = vrot.slane %v1234, 4
        %v1237 = vshll.u32 %v991, 16
        %v1239 = vrot.slane %v1237, 5
        %v1240 = vsel %vm1000, %v1235, %v1239
        %v1242 = vshrl.u32 %v970, 16
        %v1244 = vrot.slane %v1242, 4
        %v1245 = vshll.u32 %v970, 16
        %v1247 = vrot.slane %v1245, 5
        %v1248 = vor.u32 %v1244, %v1247
        %v1249 = vrot.slane %v1248, 4
        %v1251 = vshll.u32 %v971, 16
        %v1253 = vrot.slane %v1251, 5
        %v1254 = vsel %vm1000, %v1249, %v1253
        %v1255 = vshrl.u32 %v971, 16
        %v1257 = vrot.slane %v1255, 4
        %v1258 = vor.u32 %v1257, %v1253
        %v1259 = vrot.slane %v1258, 4
        %v1261 = vshll.u32 %v992, 16
        %v1263 = vrot.slane %v1261, 5
        %v1264 = vsel %vm1000, %v1259, %v1263
        %v1266 = vshrl.u32 %v972, 16
        %v1268 = vrot.slane %v1266, 4
        %v1269 = vshll.u32 %v972, 16
        %v1271 = vrot.slane %v1269, 5
        %v1272 = vor.u32 %v1268, %v1271
        %v1273 = vrot.slane %v1272, 4
        %v1275 = vshll.u32 %v973, 16
        %v1277 = vrot.slane %v1275, 5
        %v1278 = vsel %vm1000, %v1273, %v1277
        %v1279 = vshrl.u32 %v973, 16
        %v1281 = vrot.slane %v1279, 4
        %v1282 = vor.u32 %v1281, %v1277
        %v1283 = vrot.slane %v1282, 4
        %v1285 = vshll.u32 %v993, 16
        %v1287 = vrot.slane %v1285, 5
        %v1288 = vsel %vm1000, %v1283, %v1287
        %v1290 = vshrl.u32 %v974, 16
        %v1292 = vrot.slane %v1290, 4
        %v1293 = vshll.u32 %v974, 16
        %v1295 = vrot.slane %v1293, 5
        %v1296 = vor.u32 %v1292, %v1295
        %v1297 = vrot.slane %v1296, 4
        %v1299 = vshll.u32 %v975, 16
        %v1301 = vrot.slane %v1299, 5
        %v1302 = vsel %vm1000, %v1297, %v1301
        %v1303 = vshrl.u32 %v975, 16
        %v1305 = vrot.slane %v1303, 4
        %v1306 = vor.u32 %v1305, %v1301
        %v1307 = vrot.slane %v1306, 4
        %v1309 = vshll.u32 %v994, 16
        %v1311 = vrot.slane %v1309, 5
        %v1312 = vsel %vm1000, %v1307, %v1311
        %v1314 = vshrl.u32 %v976, 16
        %v1316 = vrot.slane %v1314, 4
        %v1317 = vshll.u32 %v976, 16
        %v1319 = vrot.slane %v1317, 5
        %v1320 = vor.u32 %v1316, %v1319
        %v1321 = vrot.slane %v1320, 4
        %v1323 = vshll.u32 %v977, 16
        %v1325 = vrot.slane %v1323, 5
        %v1326 = vsel %vm1000, %v1321, %v1325
        %v1327 = vshrl.u32 %v977, 16
        %v1329 = vrot.slane %v1327, 4
        %v1330 = vor.u32 %v1329, %v1325
        %v1331 = vrot.slane %v1330, 4
        %v1333 = vshll.u32 %v995, 16
        %v1335 = vrot.slane %v1333, 5
        %v1336 = vsel %vm1000, %v1331, %v1335
        %v1338 = vshrl.u32 %v978, 16
        %v1340 = vrot.slane %v1338, 4
        %v1341 = vshll.u32 %v978, 16
        %v1343 = vrot.slane %v1341, 5
        %v1344 = vor.u32 %v1340, %v1343
        %v1345 = vrot.slane %v1344, 4
        %v1347 = vshll.u32 %v979, 16
        %v1349 = vrot.slane %v1347, 5
        %v1350 = vsel %vm1000, %v1345, %v1349
        %v1351 = vshrl.u32 %v979, 16
        %v1353 = vrot.slane %v1351, 4
        %v1354 = vor.u32 %v1353, %v1349
        %v1355 = vrot.slane %v1354, 4
        %v1357 = vshll.u32 %v996, 16
        %v1359 = vrot.slane %v1357, 5
        %v1360 = vsel %vm1000, %v1355, %v1359
        %v1362 = vshrl.u32 %v980, 16
        %v1364 = vrot.slane %v1362, 4
        %v1365 = vshll.u32 %v980, 16
        %v1367 = vrot.slane %v1365, 5
        %v1368 = vor.u32 %v1364, %v1367
        %v1369 = vrot.slane %v1368, 4
        %v1371 = vshll.u32 %v981, 16
        %v1373 = vrot.slane %v1371, 5
        %v1374 = vsel %vm1000, %v1369, %v1373
        %v1375 = vshrl.u32 %v981, 16
        %v1377 = vrot.slane %v1375, 4
        %v1378 = vor.u32 %v1377, %v1373
        %v1379 = vrot.slane %v1378, 4
        %v1381 = vshll.u32 %v997, 16
        %v1383 = vrot.slane %v1381, 5
        %v1384 = vsel %vm1000, %v1379, %v1383
        %v1385 = vld [vmem:[#allocation2] sm:$0xe]
        %v1386 = vld [vmem:[#allocation2 + $0xc] sm:$0xe]
        %v1387 = vld [vmem:[#allocation2 + $0x18] sm:$0xe]
        %v1388 = vld [vmem:[#allocation2 + $0x24] sm:$0xe]
        %v1389 = vld [vmem:[#allocation2 + $0x30] sm:$0xe]
        %v1390 = vld [vmem:[#allocation2 + $0x3c] sm:$0xe]
        %v1391 = vld [vmem:[#allocation2 + $0x48] sm:$0xe]
        %v1392 = vld [vmem:[#allocation2 + $0x54] sm:$0xe]
        %v1393 = vld [vmem:[#allocation2 + $0x60] sm:$0xe]
        %v1394 = vld [vmem:[#allocation2 + $0x6c] sm:$0xe]
        %v1395 = vld [vmem:[#allocation2 + $0x78] sm:$0xe]
        %v1396 = vld [vmem:[#allocation2 + $0x84] sm:$0xe]
        %v1397 = vld [vmem:[#allocation2 + $0x90] sm:$0xe]
        %v1398 = vld [vmem:[#allocation2 + $0x9c] sm:$0xe]
        %v1399 = vld [vmem:[#allocation2 + $0xa8] sm:$0xe]
        %v1400 = vld [vmem:[#allocation2 + $0xb4] sm:$0xe]
        %vm1449 = vcmask 1042432
        %vm1450 = vcmask 1046532
        %vm1451 = vmor %vm1449, %vm1450
        %v1452 = vrot.slane %v1385, 5
        %v1453 = vrot.slane %v1452, 4
        %v1454 = vrot.slane %v951, 5
        %v1455 = vsel %vm1451, %v1453, %v1454
        %v1456 = vrot.slane %v1454, 4
        %v1457 = vrot.slane %v982, 5
        %v1458 = vsel %vm1451, %v1456, %v1457
        %v1459 = vrot.slane %v1386, 5
        %v1460 = vrot.slane %v1459, 4
        %v1461 = vrot.slane %v953, 5
        %v1462 = vsel %vm1451, %v1460, %v1461
        %v1463 = vrot.slane %v1461, 4
        %v1464 = vrot.slane %v983, 5
        %v1465 = vsel %vm1451, %v1463, %v1464
        %v1466 = vrot.slane %v1387, 5
        %v1467 = vrot.slane %v1466, 4
        %v1468 = vrot.slane %v955, 5
        %v1469 = vsel %vm1451, %v1467, %v1468
        %v1470 = vrot.slane %v1468, 4
        %v1471 = vrot.slane %v984, 5
        %v1472 = vsel %vm1451, %v1470, %v1471
        %v1473 = vrot.slane %v1388, 5
        %v1474 = vrot.slane %v1473, 4
        %v1475 = vrot.slane %v957, 5
        %v1476 = vsel %vm1451, %v1474, %v1475
        %v1477 = vrot.slane %v1475, 4
        %v1478 = vrot.slane %v985, 5
        %v1479 = vsel %vm1451, %v1477, %v1478
        %v1480 = vrot.slane %v1389, 5
        %v1481 = vrot.slane %v1480, 4
        %v1482 = vrot.slane %v959, 5
        %v1483 = vsel %vm1451, %v1481, %v1482
        %v1484 = vrot.slane %v1482, 4
        %v1485 = vrot.slane %v986, 5
        %v1486 = vsel %vm1451, %v1484, %v1485
        %v1487 = vrot.slane %v1390, 5
        %v1488 = vrot.slane %v1487, 4
        %v1489 = vrot.slane %v961, 5
        %v1490 = vsel %vm1451, %v1488, %v1489
        %v1491 = vrot.slane %v1489, 4
        %v1492 = vrot.slane %v987, 5
        %v1493 = vsel %vm1451, %v1491, %v1492
        %v1494 = vrot.slane %v1391, 5
        %v1495 = vrot.slane %v1494, 4
        %v1496 = vrot.slane %v963, 5
        %v1497 = vsel %vm1451, %v1495, %v1496
        %v1498 = vrot.slane %v1496, 4
        %v1499 = vrot.slane %v988, 5
        %v1500 = vsel %vm1451, %v1498, %v1499
        %v1501 = vrot.slane %v1392, 5
        %v1502 = vrot.slane %v1501, 4
        %v1503 = vrot.slane %v965, 5
        %v1504 = vsel %vm1451, %v1502, %v1503
        %v1505 = vrot.slane %v1503, 4
        %v1506 = vrot.slane %v989, 5
        %v1507 = vsel %vm1451, %v1505, %v1506
        %v1508 = vrot.slane %v1393, 5
        %v1509 = vrot.slane %v1508, 4
        %v1510 = vrot.slane %v967, 5
        %v1511 = vsel %vm1451, %v1509, %v1510
        %v1512 = vrot.slane %v1510, 4
        %v1513 = vrot.slane %v990, 5
        %v1514 = vsel %vm1451, %v1512, %v1513
        %v1515 = vrot.slane %v1394, 5
        %v1516 = vrot.slane %v1515, 4
        %v1517 = vrot.slane %v969, 5
        %v1518 = vsel %vm1451, %v1516, %v1517
        %v1519 = vrot.slane %v1517, 4
        %v1520 = vrot.slane %v991, 5
        %v1521 = vsel %vm1451, %v1519, %v1520
        %v1522 = vrot.slane %v1395, 5
        %v1523 = vrot.slane %v1522, 4
        %v1524 = vrot.slane %v971, 5
        %v1525 = vsel %vm1451, %v1523, %v1524
        %v1526 = vrot.slane %v1524, 4
        %v1527 = vrot.slane %v992, 5
        %v1528 = vsel %vm1451, %v1526, %v1527
        %v1529 = vrot.slane %v1396, 5
        %v1530 = vrot.slane %v1529, 4
        %v1531 = vrot.slane %v973, 5
        %v1532 = vsel %vm1451, %v1530, %v1531
        %v1533 = vrot.slane %v1531, 4
        %v1534 = vrot.slane %v993, 5
        %v1535 = vsel %vm1451, %v1533, %v1534
        %v1536 = vrot.slane %v1397, 5
        %v1537 = vrot.slane %v1536, 4
        %v1538 = vrot.slane %v975, 5
        %v1539 = vsel %vm1451, %v1537, %v1538
        %v1540 = vrot.slane %v1538, 4
        %v1541 = vrot.slane %v994, 5
        %v1542 = vsel %vm1451, %v1540, %v1541
        %v1543 = vrot.slane %v1398, 5
        %v1544 = vrot.slane %v1543, 4
        %v1545 = vrot.slane %v977, 5
        %v1546 = vsel %vm1451, %v1544, %v1545
        %v1547 = vrot.slane %v1545, 4
        %v1548 = vrot.slane %v995, 5
        %v1549 = vsel %vm1451, %v1547, %v1548
        %v1550 = vrot.slane %v1399, 5
        %v1551 = vrot.slane %v1550, 4
        %v1552 = vrot.slane %v979, 5
        %v1553 = vsel %vm1451, %v1551, %v1552
        %v1554 = vrot.slane %v1552, 4
        %v1555 = vrot.slane %v996, 5
        %v1556 = vsel %vm1451, %v1554, %v1555
        %v1557 = vrot.slane %v1400, 5
        %v1558 = vrot.slane %v1557, 4
        %v1559 = vrot.slane %v981, 5
        %v1560 = vsel %vm1451, %v1558, %v1559
        %v1561 = vrot.slane %v1559, 4
        %v1562 = vrot.slane %v997, 5
        %v1563 = vsel %vm1451, %v1561, %v1562
        %v1564 = vld [vmem:[%s835] sm:$0xf]
        %v1565 = vld [vmem:[%s835 + $0x4] sm:$0xf]
        %v1566 = vld [vmem:[%s835 + $0xc] sm:$0xf]
        %v1567 = vld [vmem:[%s835 + $0x10] sm:$0xf]
        %v1568 = vld [vmem:[%s835 + $0x18] sm:$0xf]
        %v1569 = vld [vmem:[%s835 + $0x1c] sm:$0xf]
        %v1570 = vld [vmem:[%s835 + $0x24] sm:$0xf]
        %v1571 = vld [vmem:[%s835 + $0x28] sm:$0xf]
        %v1572 = vld [vmem:[%s835 + $0x30] sm:$0xf]
        %v1573 = vld [vmem:[%s835 + $0x34] sm:$0xf]
        %v1574 = vld [vmem:[%s835 + $0x3c] sm:$0xf]
        %v1575 = vld [vmem:[%s835 + $0x40] sm:$0xf]
        %v1576 = vld [vmem:[%s835 + $0x48] sm:$0xf]
        %v1577 = vld [vmem:[%s835 + $0x4c] sm:$0xf]
        %v1578 = vld [vmem:[%s835 + $0x54] sm:$0xf]
        %v1579 = vld [vmem:[%s835 + $0x58] sm:$0xf]
        %v1580 = vld [vmem:[%s835 + $0x60] sm:$0xf]
        %v1581 = vld [vmem:[%s835 + $0x64] sm:$0xf]
        %v1582 = vld [vmem:[%s835 + $0x6c] sm:$0xf]
        %v1583 = vld [vmem:[%s835 + $0x70] sm:$0xf]
        %v1584 = vld [vmem:[%s835 + $0x78] sm:$0xf]
        %v1585 = vld [vmem:[%s835 + $0x7c] sm:$0xf]
        %v1586 = vld [vmem:[%s835 + $0x84] sm:$0xf]
        %v1587 = vld [vmem:[%s835 + $0x88] sm:$0xf]
        %v1588 = vld [vmem:[%s835 + $0x90] sm:$0xf]
        %v1589 = vld [vmem:[%s835 + $0x94] sm:$0xf]
        %v1590 = vld [vmem:[%s835 + $0x9c] sm:$0xf]
        %v1591 = vld [vmem:[%s835 + $0xa0] sm:$0xf]
        %v1592 = vld [vmem:[%s835 + $0xa8] sm:$0xf]
        %v1593 = vld [vmem:[%s835 + $0xac] sm:$0xf]
        %v1594 = vld [vmem:[%s835 + $0xb4] sm:$0xf]
        %v1595 = vld [vmem:[%s835 + $0xb8] sm:$0xf]
        %v1596 = vld [vmem:[%s835 + $0x8] sm:$0x1]
        %v1597 = vld [vmem:[%s835 + $0x14] sm:$0x1]
        %v1598 = vld [vmem:[%s835 + $0x20] sm:$0x1]
        %v1599 = vld [vmem:[%s835 + $0x2c] sm:$0x1]
        %v1600 = vld [vmem:[%s835 + $0x38] sm:$0x1]
        %v1601 = vld [vmem:[%s835 + $0x44] sm:$0x1]
        %v1602 = vld [vmem:[%s835 + $0x50] sm:$0x1]
        %v1603 = vld [vmem:[%s835 + $0x5c] sm:$0x1]
        %v1604 = vld [vmem:[%s835 + $0x68] sm:$0x1]
        %v1605 = vld [vmem:[%s835 + $0x74] sm:$0x1]
        %v1606 = vld [vmem:[%s835 + $0x80] sm:$0x1]
        %v1607 = vld [vmem:[%s835 + $0x8c] sm:$0x1]
        %v1608 = vld [vmem:[%s835 + $0x98] sm:$0x1]
        %v1609 = vld [vmem:[%s835 + $0xa4] sm:$0x1]
        %v1610 = vld [vmem:[%s835 + $0xb0] sm:$0x1]
        %v1611 = vld [vmem:[%s835 + $0xbc] sm:$0x1]
        %v1613 = vshrl.u32 %v1564, 16
        %v1615 = vrot.slane %v1613, 4
        %v1616 = vshll.u32 %v1564, 16
        %v1618 = vrot.slane %v1616, 5
        %v1619 = vor.u32 %v1615, %v1618
        %v1620 = vrot.slane %v1619, 4
        %v1622 = vshll.u32 %v1565, 16
        %v1624 = vrot.slane %v1622, 5
        %v1625 = vsel %vm1000, %v1620, %v1624
        %v1626 = vshrl.u32 %v1565, 16
        %v1628 = vrot.slane %v1626, 4
        %v1629 = vor.u32 %v1628, %v1624
        %v1630 = vrot.slane %v1629, 4
        %v1632 = vshll.u32 %v1596, 16
        %v1634 = vrot.slane %v1632, 5
        %v1635 = vsel %vm1000, %v1630, %v1634
        %v1637 = vshrl.u32 %v1566, 16
        %v1639 = vrot.slane %v1637, 4
        %v1640 = vshll.u32 %v1566, 16
        %v1642 = vrot.slane %v1640, 5
        %v1643 = vor.u32 %v1639, %v1642
        %v1644 = vrot.slane %v1643, 4
        %v1646 = vshll.u32 %v1567, 16
        %v1648 = vrot.slane %v1646, 5
        %v1649 = vsel %vm1000, %v1644, %v1648
        %v1650 = vshrl.u32 %v1567, 16
        %v1652 = vrot.slane %v1650, 4
        %v1653 = vor.u32 %v1652, %v1648
        %v1654 = vrot.slane %v1653, 4
        %v1656 = vshll.u32 %v1597, 16
        %v1658 = vrot.slane %v1656, 5
        %v1659 = vsel %vm1000, %v1654, %v1658
        %v1661 = vshrl.u32 %v1568, 16
        %v1663 = vrot.slane %v1661, 4
        %v1664 = vshll.u32 %v1568, 16
        %v1666 = vrot.slane %v1664, 5
        %v1667 = vor.u32 %v1663, %v1666
        %v1668 = vrot.slane %v1667, 4
        %v1670 = vshll.u32 %v1569, 16
        %v1672 = vrot.slane %v1670, 5
        %v1673 = vsel %vm1000, %v1668, %v1672
        %v1674 = vshrl.u32 %v1569, 16
        %v1676 = vrot.slane %v1674, 4
        %v1677 = vor.u32 %v1676, %v1672
        %v1678 = vrot.slane %v1677, 4
        %v1680 = vshll.u32 %v1598, 16
        %v1682 = vrot.slane %v1680, 5
        %v1683 = vsel %vm1000, %v1678, %v1682
        %v1685 = vshrl.u32 %v1570, 16
        %v1687 = vrot.slane %v1685, 4
        %v1688 = vshll.u32 %v1570, 16
        %v1690 = vrot.slane %v1688, 5
        %v1691 = vor.u32 %v1687, %v1690
        %v1692 = vrot.slane %v1691, 4
        %v1694 = vshll.u32 %v1571, 16
        %v1696 = vrot.slane %v1694, 5
        %v1697 = vsel %vm1000, %v1692, %v1696
        %v1698 = vshrl.u32 %v1571, 16
        %v1700 = vrot.slane %v1698, 4
        %v1701 = vor.u32 %v1700, %v1696
        %v1702 = vrot.slane %v1701, 4
        %v1704 = vshll.u32 %v1599, 16
        %v1706 = vrot.slane %v1704, 5
        %v1707 = vsel %vm1000, %v1702, %v1706
        %v1709 = vshrl.u32 %v1572, 16
        %v1711 = vrot.slane %v1709, 4
        %v1712 = vshll.u32 %v1572, 16
        %v1714 = vrot.slane %v1712, 5
        %v1715 = vor.u32 %v1711, %v1714
        %v1716 = vrot.slane %v1715, 4
        %v1718 = vshll.u32 %v1573, 16
        %v1720 = vrot.slane %v1718, 5
        %v1721 = vsel %vm1000, %v1716, %v1720
        %v1722 = vshrl.u32 %v1573, 16
        %v1724 = vrot.slane %v1722, 4
        %v1725 = vor.u32 %v1724, %v1720
        %v1726 = vrot.slane %v1725, 4
        %v1728 = vshll.u32 %v1600, 16
        %v1730 = vrot.slane %v1728, 5
        %v1731 = vsel %vm1000, %v1726, %v1730
        %v1733 = vshrl.u32 %v1574, 16
        %v1735 = vrot.slane %v1733, 4
        %v1736 = vshll.u32 %v1574, 16
        %v1738 = vrot.slane %v1736, 5
        %v1739 = vor.u32 %v1735, %v1738
        %v1740 = vrot.slane %v1739, 4
        %v1742 = vshll.u32 %v1575, 16
        %v1744 = vrot.slane %v1742, 5
        %v1745 = vsel %vm1000, %v1740, %v1744
        %v1746 = vshrl.u32 %v1575, 16
        %v1748 = vrot.slane %v1746, 4
        %v1749 = vor.u32 %v1748, %v1744
        %v1750 = vrot.slane %v1749, 4
        %v1752 = vshll.u32 %v1601, 16
        %v1754 = vrot.slane %v1752, 5
        %v1755 = vsel %vm1000, %v1750, %v1754
        %v1757 = vshrl.u32 %v1576, 16
        %v1759 = vrot.slane %v1757, 4
        %v1760 = vshll.u32 %v1576, 16
        %v1762 = vrot.slane %v1760, 5
        %v1763 = vor.u32 %v1759, %v1762
        %v1764 = vrot.slane %v1763, 4
        %v1766 = vshll.u32 %v1577, 16
        %v1768 = vrot.slane %v1766, 5
        %v1769 = vsel %vm1000, %v1764, %v1768
        %v1770 = vshrl.u32 %v1577, 16
        %v1772 = vrot.slane %v1770, 4
        %v1773 = vor.u32 %v1772, %v1768
        %v1774 = vrot.slane %v1773, 4
        %v1776 = vshll.u32 %v1602, 16
        %v1778 = vrot.slane %v1776, 5
        %v1779 = vsel %vm1000, %v1774, %v1778
        %v1781 = vshrl.u32 %v1578, 16
        %v1783 = vrot.slane %v1781, 4
        %v1784 = vshll.u32 %v1578, 16
        %v1786 = vrot.slane %v1784, 5
        %v1787 = vor.u32 %v1783, %v1786
        %v1788 = vrot.slane %v1787, 4
        %v1790 = vshll.u32 %v1579, 16
        %v1792 = vrot.slane %v1790, 5
        %v1793 = vsel %vm1000, %v1788, %v1792
        %v1794 = vshrl.u32 %v1579, 16
        %v1796 = vrot.slane %v1794, 4
        %v1797 = vor.u32 %v1796, %v1792
        %v1798 = vrot.slane %v1797, 4
        %v1800 = vshll.u32 %v1603, 16
        %v1802 = vrot.slane %v1800, 5
        %v1803 = vsel %vm1000, %v1798, %v1802
        %v1805 = vshrl.u32 %v1580, 16
        %v1807 = vrot.slane %v1805, 4
        %v1808 = vshll.u32 %v1580, 16
        %v1810 = vrot.slane %v1808, 5
        %v1811 = vor.u32 %v1807, %v1810
        %v1812 = vrot.slane %v1811, 4
        %v1814 = vshll.u32 %v1581, 16
        %v1816 = vrot.slane %v1814, 5
        %v1817 = vsel %vm1000, %v1812, %v1816
        %v1818 = vshrl.u32 %v1581, 16
        %v1820 = vrot.slane %v1818, 4
        %v1821 = vor.u32 %v1820, %v1816
        %v1822 = vrot.slane %v1821, 4
        %v1824 = vshll.u32 %v1604, 16
        %v1826 = vrot.slane %v1824, 5
        %v1827 = vsel %vm1000, %v1822, %v1826
        %v1829 = vshrl.u32 %v1582, 16
        %v1831 = vrot.slane %v1829, 4
        %v1832 = vshll.u32 %v1582, 16
        %v1834 = vrot.slane %v1832, 5
        %v1835 = vor.u32 %v1831, %v1834
        %v1836 = vrot.slane %v1835, 4
        %v1838 = vshll.u32 %v1583, 16
        %v1840 = vrot.slane %v1838, 5
        %v1841 = vsel %vm1000, %v1836, %v1840
        %v1842 = vshrl.u32 %v1583, 16
        %v1844 = vrot.slane %v1842, 4
        %v1845 = vor.u32 %v1844, %v1840
        %v1846 = vrot.slane %v1845, 4
        %v1848 = vshll.u32 %v1605, 16
        %v1850 = vrot.slane %v1848, 5
        %v1851 = vsel %vm1000, %v1846, %v1850
        %v1853 = vshrl.u32 %v1584, 16
        %v1855 = vrot.slane %v1853, 4
        %v1856 = vshll.u32 %v1584, 16
        %v1858 = vrot.slane %v1856, 5
        %v1859 = vor.u32 %v1855, %v1858
        %v1860 = vrot.slane %v1859, 4
        %v1862 = vshll.u32 %v1585, 16
        %v1864 = vrot.slane %v1862, 5
        %v1865 = vsel %vm1000, %v1860, %v1864
        %v1866 = vshrl.u32 %v1585, 16
        %v1868 = vrot.slane %v1866, 4
        %v1869 = vor.u32 %v1868, %v1864
        %v1870 = vrot.slane %v1869, 4
        %v1872 = vshll.u32 %v1606, 16
        %v1874 = vrot.slane %v1872, 5
        %v1875 = vsel %vm1000, %v1870, %v1874
        %v1877 = vshrl.u32 %v1586, 16
        %v1879 = vrot.slane %v1877, 4
        %v1880 = vshll.u32 %v1586, 16
        %v1882 = vrot.slane %v1880, 5
        %v1883 = vor.u32 %v1879, %v1882
        %v1884 = vrot.slane %v1883, 4
        %v1886 = vshll.u32 %v1587, 16
        %v1888 = vrot.slane %v1886, 5
        %v1889 = vsel %vm1000, %v1884, %v1888
        %v1890 = vshrl.u32 %v1587, 16
        %v1892 = vrot.slane %v1890, 4
        %v1893 = vor.u32 %v1892, %v1888
        %v1894 = vrot.slane %v1893, 4
        %v1896 = vshll.u32 %v1607, 16
        %v1898 = vrot.slane %v1896, 5
        %v1899 = vsel %vm1000, %v1894, %v1898
        %v1901 = vshrl.u32 %v1588, 16
        %v1903 = vrot.slane %v1901, 4
        %v1904 = vshll.u32 %v1588, 16
        %v1906 = vrot.slane %v1904, 5
        %v1907 = vor.u32 %v1903, %v1906
        %v1908 = vrot.slane %v1907, 4
        %v1910 = vshll.u32 %v1589, 16
        %v1912 = vrot.slane %v1910, 5
        %v1913 = vsel %vm1000, %v1908, %v1912
        %v1914 = vshrl.u32 %v1589, 16
        %v1916 = vrot.slane %v1914, 4
        %v1917 = vor.u32 %v1916, %v1912
        %v1918 = vrot.slane %v1917, 4
        %v1920 = vshll.u32 %v1608, 16
        %v1922 = vrot.slane %v1920, 5
        %v1923 = vsel %vm1000, %v1918, %v1922
        %v1925 = vshrl.u32 %v1590, 16
        %v1927 = vrot.slane %v1925, 4
        %v1928 = vshll.u32 %v1590, 16
        %v1930 = vrot.slane %v1928, 5
        %v1931 = vor.u32 %v1927, %v1930
        %v1932 = vrot.slane %v1931, 4
        %v1934 = vshll.u32 %v1591, 16
        %v1936 = vrot.slane %v1934, 5
        %v1937 = vsel %vm1000, %v1932, %v1936
        %v1938 = vshrl.u32 %v1591, 16
        %v1940 = vrot.slane %v1938, 4
        %v1941 = vor.u32 %v1940, %v1936
        %v1942 = vrot.slane %v1941, 4
        %v1944 = vshll.u32 %v1609, 16
        %v1946 = vrot.slane %v1944, 5
        %v1947 = vsel %vm1000, %v1942, %v1946
        %v1949 = vshrl.u32 %v1592, 16
        %v1951 = vrot.slane %v1949, 4
        %v1952 = vshll.u32 %v1592, 16
        %v1954 = vrot.slane %v1952, 5
        %v1955 = vor.u32 %v1951, %v1954
        %v1956 = vrot.slane %v1955, 4
        %v1958 = vshll.u32 %v1593, 16
        %v1960 = vrot.slane %v1958, 5
        %v1961 = vsel %vm1000, %v1956, %v1960
        %v1962 = vshrl.u32 %v1593, 16
        %v1964 = vrot.slane %v1962, 4
        %v1965 = vor.u32 %v1964, %v1960
        %v1966 = vrot.slane %v1965, 4
        %v1968 = vshll.u32 %v1610, 16
        %v1970 = vrot.slane %v1968, 5
        %v1971 = vsel %vm1000, %v1966, %v1970
        %v1973 = vshrl.u32 %v1594, 16
        %v1975 = vrot.slane %v1973, 4
        %v1976 = vshll.u32 %v1594, 16
        %v1978 = vrot.slane %v1976, 5
        %v1979 = vor.u32 %v1975, %v1978
        %v1980 = vrot.slane %v1979, 4
        %v1982 = vshll.u32 %v1595, 16
        %v1984 = vrot.slane %v1982, 5
        %v1985 = vsel %vm1000, %v1980, %v1984
        %v1986 = vshrl.u32 %v1595, 16
        %v1988 = vrot.slane %v1986, 4
        %v1989 = vor.u32 %v1988, %v1984
        %v1990 = vrot.slane %v1989, 4
        %v1992 = vshll.u32 %v1611, 16
        %v1994 = vrot.slane %v1992, 5
        %v1995 = vsel %vm1000, %v1990, %v1994
        %v1996 = vld [vmem:[%s835] sm:$0xe]
        %v1997 = vld [vmem:[%s835 + $0xc] sm:$0xe]
        %v1998 = vld [vmem:[%s835 + $0x18] sm:$0xe]
        %v1999 = vld [vmem:[%s835 + $0x24] sm:$0xe]
        %v2000 = vld [vmem:[%s835 + $0x30] sm:$0xe]
        %v2001 = vld [vmem:[%s835 + $0x3c] sm:$0xe]
        %v2002 = vld [vmem:[%s835 + $0x48] sm:$0xe]
        %v2003 = vld [vmem:[%s835 + $0x54] sm:$0xe]
        %v2004 = vld [vmem:[%s835 + $0x60] sm:$0xe]
        %v2005 = vld [vmem:[%s835 + $0x6c] sm:$0xe]
        %v2006 = vld [vmem:[%s835 + $0x78] sm:$0xe]
        %v2007 = vld [vmem:[%s835 + $0x84] sm:$0xe]
        %v2008 = vld [vmem:[%s835 + $0x90] sm:$0xe]
        %v2009 = vld [vmem:[%s835 + $0x9c] sm:$0xe]
        %v2010 = vld [vmem:[%s835 + $0xa8] sm:$0xe]
        %v2011 = vld [vmem:[%s835 + $0xb4] sm:$0xe]
        %v2060 = vrot.slane %v1996, 5
        %v2061 = vrot.slane %v2060, 4
        %v2062 = vrot.slane %v1565, 5
        %v2063 = vsel %vm1451, %v2061, %v2062
        %v2064 = vrot.slane %v2062, 4
        %v2065 = vrot.slane %v1596, 5
        %v2066 = vsel %vm1451, %v2064, %v2065
        %v2067 = vrot.slane %v1997, 5
        %v2068 = vrot.slane %v2067, 4
        %v2069 = vrot.slane %v1567, 5
        %v2070 = vsel %vm1451, %v2068, %v2069
        %v2071 = vrot.slane %v2069, 4
        %v2072 = vrot.slane %v1597, 5
        %v2073 = vsel %vm1451, %v2071, %v2072
        %v2074 = vrot.slane %v1998, 5
        %v2075 = vrot.slane %v2074, 4
        %v2076 = vrot.slane %v1569, 5
        %v2077 = vsel %vm1451, %v2075, %v2076
        %v2078 = vrot.slane %v2076, 4
        %v2079 = vrot.slane %v1598, 5
        %v2080 = vsel %vm1451, %v2078, %v2079
        %v2081 = vrot.slane %v1999, 5
        %v2082 = vrot.slane %v2081, 4
        %v2083 = vrot.slane %v1571, 5
        %v2084 = vsel %vm1451, %v2082, %v2083
        %v2085 = vrot.slane %v2083, 4
        %v2086 = vrot.slane %v1599, 5
        %v2087 = vsel %vm1451, %v2085, %v2086
        %v2088 = vrot.slane %v2000, 5
        %v2089 = vrot.slane %v2088, 4
        %v2090 = vrot.slane %v1573, 5
        %v2091 = vsel %vm1451, %v2089, %v2090
        %v2092 = vrot.slane %v2090, 4
        %v2093 = vrot.slane %v1600, 5
        %v2094 = vsel %vm1451, %v2092, %v2093
        %v2095 = vrot.slane %v2001, 5
        %v2096 = vrot.slane %v2095, 4
        %v2097 = vrot.slane %v1575, 5
        %v2098 = vsel %vm1451, %v2096, %v2097
        %v2099 = vrot.slane %v2097, 4
        %v2100 = vrot.slane %v1601, 5
        %v2101 = vsel %vm1451, %v2099, %v2100
        %v2102 = vrot.slane %v2002, 5
        %v2103 = vrot.slane %v2102, 4
        %v2104 = vrot.slane %v1577, 5
        %v2105 = vsel %vm1451, %v2103, %v2104
        %v2106 = vrot.slane %v2104, 4
        %v2107 = vrot.slane %v1602, 5
        %v2108 = vsel %vm1451, %v2106, %v2107
        %v2109 = vrot.slane %v2003, 5
        %v2110 = vrot.slane %v2109, 4
        %v2111 = vrot.slane %v1579, 5
        %v2112 = vsel %vm1451, %v2110, %v2111
        %v2113 = vrot.slane %v2111, 4
        %v2114 = vrot.slane %v1603, 5
        %v2115 = vsel %vm1451, %v2113, %v2114
        %v2116 = vrot.slane %v2004, 5
        %v2117 = vrot.slane %v2116, 4
        %v2118 = vrot.slane %v1581, 5
        %v2119 = vsel %vm1451, %v2117, %v2118
        %v2120 = vrot.slane %v2118, 4
        %v2121 = vrot.slane %v1604, 5
        %v2122 = vsel %vm1451, %v2120, %v2121
        %v2123 = vrot.slane %v2005, 5
        %v2124 = vrot.slane %v2123, 4
        %v2125 = vrot.slane %v1583, 5
        %v2126 = vsel %vm1451, %v2124, %v2125
        %v2127 = vrot.slane %v2125, 4
        %v2128 = vrot.slane %v1605, 5
        %v2129 = vsel %vm1451, %v2127, %v2128
        %v2130 = vrot.slane %v2006, 5
        %v2131 = vrot.slane %v2130, 4
        %v2132 = vrot.slane %v1585, 5
        %v2133 = vsel %vm1451, %v2131, %v2132
        %v2134 = vrot.slane %v2132, 4
        %v2135 = vrot.slane %v1606, 5
        %v2136 = vsel %vm1451, %v2134, %v2135
        %v2137 = vrot.slane %v2007, 5
        %v2138 = vrot.slane %v2137, 4
        %v2139 = vrot.slane %v1587, 5
        %v2140 = vsel %vm1451, %v2138, %v2139
        %v2141 = vrot.slane %v2139, 4
        %v2142 = vrot.slane %v1607, 5
        %v2143 = vsel %vm1451, %v2141, %v2142
        %v2144 = vrot.slane %v2008, 5
        %v2145 = vrot.slane %v2144, 4
        %v2146 = vrot.slane %v1589, 5
        %v2147 = vsel %vm1451, %v2145, %v2146
        %v2148 = vrot.slane %v2146, 4
        %v2149 = vrot.slane %v1608, 5
        %v2150 = vsel %vm1451, %v2148, %v2149
        %v2151 = vrot.slane %v2009, 5
        %v2152 = vrot.slane %v2151, 4
        %v2153 = vrot.slane %v1591, 5
        %v2154 = vsel %vm1451, %v2152, %v2153
        %v2155 = vrot.slane %v2153, 4
        %v2156 = vrot.slane %v1609, 5
        %v2157 = vsel %vm1451, %v2155, %v2156
        %v2158 = vrot.slane %v2010, 5
        %v2159 = vrot.slane %v2158, 4
        %v2160 = vrot.slane %v1593, 5
        %v2161 = vsel %vm1451, %v2159, %v2160
        %v2162 = vrot.slane %v2160, 4
        %v2163 = vrot.slane %v1610, 5
        %v2164 = vsel %vm1451, %v2162, %v2163
        %v2165 = vrot.slane %v2011, 5
        %v2166 = vrot.slane %v2165, 4
        %v2167 = vrot.slane %v1595, 5
        %v2168 = vsel %vm1451, %v2166, %v2167
        %v2169 = vrot.slane %v2167, 4
        %v2170 = vrot.slane %v1611, 5
        %v2171 = vsel %vm1451, %v2169, %v2170
        %s2172 = scalar_lea.vmem [#allocation2], 24
        %v2173 = vld [vmem:[%s2172] sm:$0xf]
        %v2174 = vld [vmem:[%s2172 + $0x4] sm:$0xf]
        %v2175 = vld [vmem:[%s2172 + $0xc] sm:$0xf]
        %v2176 = vld [vmem:[%s2172 + $0x10] sm:$0xf]
        %v2177 = vld [vmem:[%s2172 + $0x18] sm:$0xf]
        %v2178 = vld [vmem:[%s2172 + $0x1c] sm:$0xf]
        %v2179 = vld [vmem:[%s2172 + $0x24] sm:$0xf]
        %v2180 = vld [vmem:[%s2172 + $0x28] sm:$0xf]
        %v2181 = vld [vmem:[%s2172 + $0x30] sm:$0xf]
        %v2182 = vld [vmem:[%s2172 + $0x34] sm:$0xf]
        %v2183 = vld [vmem:[%s2172 + $0x3c] sm:$0xf]
        %v2184 = vld [vmem:[%s2172 + $0x40] sm:$0xf]
        %v2185 = vld [vmem:[%s2172 + $0x48] sm:$0xf]
        %v2186 = vld [vmem:[%s2172 + $0x4c] sm:$0xf]
        %v2187 = vld [vmem:[%s2172 + $0x54] sm:$0xf]
        %v2188 = vld [vmem:[%s2172 + $0x58] sm:$0xf]
        %v2189 = vld [vmem:[%s2172 + $0x60] sm:$0xf]
        %v2190 = vld [vmem:[%s2172 + $0x64] sm:$0xf]
        %v2191 = vld [vmem:[%s2172 + $0x6c] sm:$0xf]
        %v2192 = vld [vmem:[%s2172 + $0x70] sm:$0xf]
        %v2193 = vld [vmem:[%s2172 + $0x78] sm:$0xf]
        %v2194 = vld [vmem:[%s2172 + $0x7c] sm:$0xf]
        %v2195 = vld [vmem:[%s2172 + $0x84] sm:$0xf]
        %v2196 = vld [vmem:[%s2172 + $0x88] sm:$0xf]
        %v2197 = vld [vmem:[%s2172 + $0x90] sm:$0xf]
        %v2198 = vld [vmem:[%s2172 + $0x94] sm:$0xf]
        %v2199 = vld [vmem:[%s2172 + $0x9c] sm:$0xf]
        %v2200 = vld [vmem:[%s2172 + $0xa0] sm:$0xf]
        %v2201 = vld [vmem:[%s2172 + $0xa8] sm:$0xf]
        %v2202 = vld [vmem:[%s2172 + $0xac] sm:$0xf]
        %v2203 = vld [vmem:[%s2172 + $0xb4] sm:$0xf]
        %v2204 = vld [vmem:[%s2172 + $0xb8] sm:$0xf]
        %v2205 = vld [vmem:[%s2172 + $0x8] sm:$0x1]
        %v2206 = vld [vmem:[%s2172 + $0x14] sm:$0x1]
        %v2207 = vld [vmem:[%s2172 + $0x20] sm:$0x1]
        %v2208 = vld [vmem:[%s2172 + $0x2c] sm:$0x1]
        %v2209 = vld [vmem:[%s2172 + $0x38] sm:$0x1]
        %v2210 = vld [vmem:[%s2172 + $0x44] sm:$0x1]
        %v2211 = vld [vmem:[%s2172 + $0x50] sm:$0x1]
        %v2212 = vld [vmem:[%s2172 + $0x5c] sm:$0x1]
        %v2213 = vld [vmem:[%s2172 + $0x68] sm:$0x1]
        %v2214 = vld [vmem:[%s2172 + $0x74] sm:$0x1]
        %v2215 = vld [vmem:[%s2172 + $0x80] sm:$0x1]
        %v2216 = vld [vmem:[%s2172 + $0x8c] sm:$0x1]
        %v2217 = vld [vmem:[%s2172 + $0x98] sm:$0x1]
        %v2218 = vld [vmem:[%s2172 + $0xa4] sm:$0x1]
        %v2219 = vld [vmem:[%s2172 + $0xb0] sm:$0x1]
        %v2220 = vld [vmem:[%s2172 + $0xbc] sm:$0x1]
        %v2222 = vshrl.u32 %v2173, 16
        %v2224 = vrot.slane %v2222, 4
        %v2225 = vshll.u32 %v2173, 16
        %v2227 = vrot.slane %v2225, 5
        %v2228 = vor.u32 %v2224, %v2227
        %v2229 = vrot.slane %v2228, 4
        %v2231 = vshll.u32 %v2174, 16
        %v2233 = vrot.slane %v2231, 5
        %v2234 = vsel %vm1000, %v2229, %v2233
        %v2235 = vshrl.u32 %v2174, 16
        %v2237 = vrot.slane %v2235, 4
        %v2238 = vor.u32 %v2237, %v2233
        %v2239 = vrot.slane %v2238, 4
        %v2241 = vshll.u32 %v2205, 16
        %v2243 = vrot.slane %v2241, 5
        %v2244 = vsel %vm1000, %v2239, %v2243
        %v2246 = vshrl.u32 %v2175, 16
        %v2248 = vrot.slane %v2246, 4
        %v2249 = vshll.u32 %v2175, 16
        %v2251 = vrot.slane %v2249, 5
        %v2252 = vor.u32 %v2248, %v2251
        %v2253 = vrot.slane %v2252, 4
        %v2255 = vshll.u32 %v2176, 16
        %v2257 = vrot.slane %v2255, 5
        %v2258 = vsel %vm1000, %v2253, %v2257
        %v2259 = vshrl.u32 %v2176, 16
        %v2261 = vrot.slane %v2259, 4
        %v2262 = vor.u32 %v2261, %v2257
        %v2263 = vrot.slane %v2262, 4
        %v2265 = vshll.u32 %v2206, 16
        %v2267 = vrot.slane %v2265, 5
        %v2268 = vsel %vm1000, %v2263, %v2267
        %v2270 = vshrl.u32 %v2177, 16
        %v2272 = vrot.slane %v2270, 4
        %v2273 = vshll.u32 %v2177, 16
        %v2275 = vrot.slane %v2273, 5
        %v2276 = vor.u32 %v2272, %v2275
        %v2277 = vrot.slane %v2276, 4
        %v2279 = vshll.u32 %v2178, 16
        %v2281 = vrot.slane %v2279, 5
        %v2282 = vsel %vm1000, %v2277, %v2281
        %v2283 = vshrl.u32 %v2178, 16
        %v2285 = vrot.slane %v2283, 4
        %v2286 = vor.u32 %v2285, %v2281
        %v2287 = vrot.slane %v2286, 4
        %v2289 = vshll.u32 %v2207, 16
        %v2291 = vrot.slane %v2289, 5
        %v2292 = vsel %vm1000, %v2287, %v2291
        %v2294 = vshrl.u32 %v2179, 16
        %v2296 = vrot.slane %v2294, 4
        %v2297 = vshll.u32 %v2179, 16
        %v2299 = vrot.slane %v2297, 5
        %v2300 = vor.u32 %v2296, %v2299
        %v2301 = vrot.slane %v2300, 4
        %v2303 = vshll.u32 %v2180, 16
        %v2305 = vrot.slane %v2303, 5
        %v2306 = vsel %vm1000, %v2301, %v2305
        %v2307 = vshrl.u32 %v2180, 16
        %v2309 = vrot.slane %v2307, 4
        %v2310 = vor.u32 %v2309, %v2305
        %v2311 = vrot.slane %v2310, 4
        %v2313 = vshll.u32 %v2208, 16
        %v2315 = vrot.slane %v2313, 5
        %v2316 = vsel %vm1000, %v2311, %v2315
        %v2318 = vshrl.u32 %v2181, 16
        %v2320 = vrot.slane %v2318, 4
        %v2321 = vshll.u32 %v2181, 16
        %v2323 = vrot.slane %v2321, 5
        %v2324 = vor.u32 %v2320, %v2323
        %v2325 = vrot.slane %v2324, 4
        %v2327 = vshll.u32 %v2182, 16
        %v2329 = vrot.slane %v2327, 5
        %v2330 = vsel %vm1000, %v2325, %v2329
        %v2331 = vshrl.u32 %v2182, 16
        %v2333 = vrot.slane %v2331, 4
        %v2334 = vor.u32 %v2333, %v2329
        %v2335 = vrot.slane %v2334, 4
        %v2337 = vshll.u32 %v2209, 16
        %v2339 = vrot.slane %v2337, 5
        %v2340 = vsel %vm1000, %v2335, %v2339
        %v2342 = vshrl.u32 %v2183, 16
        %v2344 = vrot.slane %v2342, 4
        %v2345 = vshll.u32 %v2183, 16
        %v2347 = vrot.slane %v2345, 5
        %v2348 = vor.u32 %v2344, %v2347
        %v2349 = vrot.slane %v2348, 4
        %v2351 = vshll.u32 %v2184, 16
        %v2353 = vrot.slane %v2351, 5
        %v2354 = vsel %vm1000, %v2349, %v2353
        %v2355 = vshrl.u32 %v2184, 16
        %v2357 = vrot.slane %v2355, 4
        %v2358 = vor.u32 %v2357, %v2353
        %v2359 = vrot.slane %v2358, 4
        %v2361 = vshll.u32 %v2210, 16
        %v2363 = vrot.slane %v2361, 5
        %v2364 = vsel %vm1000, %v2359, %v2363
        %v2366 = vshrl.u32 %v2185, 16
        %v2368 = vrot.slane %v2366, 4
        %v2369 = vshll.u32 %v2185, 16
        %v2371 = vrot.slane %v2369, 5
        %v2372 = vor.u32 %v2368, %v2371
        %v2373 = vrot.slane %v2372, 4
        %v2375 = vshll.u32 %v2186, 16
        %v2377 = vrot.slane %v2375, 5
        %v2378 = vsel %vm1000, %v2373, %v2377
        %v2379 = vshrl.u32 %v2186, 16
        %v2381 = vrot.slane %v2379, 4
        %v2382 = vor.u32 %v2381, %v2377
        %v2383 = vrot.slane %v2382, 4
        %v2385 = vshll.u32 %v2211, 16
        %v2387 = vrot.slane %v2385, 5
        %v2388 = vsel %vm1000, %v2383, %v2387
        %v2390 = vshrl.u32 %v2187, 16
        %v2392 = vrot.slane %v2390, 4
        %v2393 = vshll.u32 %v2187, 16
        %v2395 = vrot.slane %v2393, 5
        %v2396 = vor.u32 %v2392, %v2395
        %v2397 = vrot.slane %v2396, 4
        %v2399 = vshll.u32 %v2188, 16
        %v2401 = vrot.slane %v2399, 5
        %v2402 = vsel %vm1000, %v2397, %v2401
        %v2403 = vshrl.u32 %v2188, 16
        %v2405 = vrot.slane %v2403, 4
        %v2406 = vor.u32 %v2405, %v2401
        %v2407 = vrot.slane %v2406, 4
        %v2409 = vshll.u32 %v2212, 16
        %v2411 = vrot.slane %v2409, 5
        %v2412 = vsel %vm1000, %v2407, %v2411
        %v2414 = vshrl.u32 %v2189, 16
        %v2416 = vrot.slane %v2414, 4
        %v2417 = vshll.u32 %v2189, 16
        %v2419 = vrot.slane %v2417, 5
        %v2420 = vor.u32 %v2416, %v2419
        %v2421 = vrot.slane %v2420, 4
        %v2423 = vshll.u32 %v2190, 16
        %v2425 = vrot.slane %v2423, 5
        %v2426 = vsel %vm1000, %v2421, %v2425
        %v2427 = vshrl.u32 %v2190, 16
        %v2429 = vrot.slane %v2427, 4
        %v2430 = vor.u32 %v2429, %v2425
        %v2431 = vrot.slane %v2430, 4
        %v2433 = vshll.u32 %v2213, 16
        %v2435 = vrot.slane %v2433, 5
        %v2436 = vsel %vm1000, %v2431, %v2435
        %v2438 = vshrl.u32 %v2191, 16
        %v2440 = vrot.slane %v2438, 4
        %v2441 = vshll.u32 %v2191, 16
        %v2443 = vrot.slane %v2441, 5
        %v2444 = vor.u32 %v2440, %v2443
        %v2445 = vrot.slane %v2444, 4
        %v2447 = vshll.u32 %v2192, 16
        %v2449 = vrot.slane %v2447, 5
        %v2450 = vsel %vm1000, %v2445, %v2449
        %v2451 = vshrl.u32 %v2192, 16
        %v2453 = vrot.slane %v2451, 4
        %v2454 = vor.u32 %v2453, %v2449
        %v2455 = vrot.slane %v2454, 4
        %v2457 = vshll.u32 %v2214, 16
        %v2459 = vrot.slane %v2457, 5
        %v2460 = vsel %vm1000, %v2455, %v2459
        %v2462 = vshrl.u32 %v2193, 16
        %v2464 = vrot.slane %v2462, 4
        %v2465 = vshll.u32 %v2193, 16
        %v2467 = vrot.slane %v2465, 5
        %v2468 = vor.u32 %v2464, %v2467
        %v2469 = vrot.slane %v2468, 4
        %v2471 = vshll.u32 %v2194, 16
        %v2473 = vrot.slane %v2471, 5
        %v2474 = vsel %vm1000, %v2469, %v2473
        %v2475 = vshrl.u32 %v2194, 16
        %v2477 = vrot.slane %v2475, 4
        %v2478 = vor.u32 %v2477, %v2473
        %v2479 = vrot.slane %v2478, 4
        %v2481 = vshll.u32 %v2215, 16
        %v2483 = vrot.slane %v2481, 5
        %v2484 = vsel %vm1000, %v2479, %v2483
        %v2486 = vshrl.u32 %v2195, 16
        %v2488 = vrot.slane %v2486, 4
        %v2489 = vshll.u32 %v2195, 16
        %v2491 = vrot.slane %v2489, 5
        %v2492 = vor.u32 %v2488, %v2491
        %v2493 = vrot.slane %v2492, 4
        %v2495 = vshll.u32 %v2196, 16
        %v2497 = vrot.slane %v2495, 5
        %v2498 = vsel %vm1000, %v2493, %v2497
        %v2499 = vshrl.u32 %v2196, 16
        %v2501 = vrot.slane %v2499, 4
        %v2502 = vor.u32 %v2501, %v2497
        %v2503 = vrot.slane %v2502, 4
        %v2505 = vshll.u32 %v2216, 16
        %v2507 = vrot.slane %v2505, 5
        %v2508 = vsel %vm1000, %v2503, %v2507
        %v2510 = vshrl.u32 %v2197, 16
        %v2512 = vrot.slane %v2510, 4
        %v2513 = vshll.u32 %v2197, 16
        %v2515 = vrot.slane %v2513, 5
        %v2516 = vor.u32 %v2512, %v2515
        %v2517 = vrot.slane %v2516, 4
        %v2519 = vshll.u32 %v2198, 16
        %v2521 = vrot.slane %v2519, 5
        %v2522 = vsel %vm1000, %v2517, %v2521
        %v2523 = vshrl.u32 %v2198, 16
        %v2525 = vrot.slane %v2523, 4
        %v2526 = vor.u32 %v2525, %v2521
        %v2527 = vrot.slane %v2526, 4
        %v2529 = vshll.u32 %v2217, 16
        %v2531 = vrot.slane %v2529, 5
        %v2532 = vsel %vm1000, %v2527, %v2531
        %v2534 = vshrl.u32 %v2199, 16
        %v2536 = vrot.slane %v2534, 4
        %v2537 = vshll.u32 %v2199, 16
        %v2539 = vrot.slane %v2537, 5
        %v2540 = vor.u32 %v2536, %v2539
        %v2541 = vrot.slane %v2540, 4
        %v2543 = vshll.u32 %v2200, 16
        %v2545 = vrot.slane %v2543, 5
        %v2546 = vsel %vm1000, %v2541, %v2545
        %v2547 = vshrl.u32 %v2200, 16
        %v2549 = vrot.slane %v2547, 4
        %v2550 = vor.u32 %v2549, %v2545
        %v2551 = vrot.slane %v2550, 4
        %v2553 = vshll.u32 %v2218, 16
        %v2555 = vrot.slane %v2553, 5
        %v2556 = vsel %vm1000, %v2551, %v2555
        %v2558 = vshrl.u32 %v2201, 16
        %v2560 = vrot.slane %v2558, 4
        %v2561 = vshll.u32 %v2201, 16
        %v2563 = vrot.slane %v2561, 5
        %v2564 = vor.u32 %v2560, %v2563
        %v2565 = vrot.slane %v2564, 4
        %v2567 = vshll.u32 %v2202, 16
        %v2569 = vrot.slane %v2567, 5
        %v2570 = vsel %vm1000, %v2565, %v2569
        %v2571 = vshrl.u32 %v2202, 16
        %v2573 = vrot.slane %v2571, 4
        %v2574 = vor.u32 %v2573, %v2569
        %v2575 = vrot.slane %v2574, 4
        %v2577 = vshll.u32 %v2219, 16
        %v2579 = vrot.slane %v2577, 5
        %v2580 = vsel %vm1000, %v2575, %v2579
        %v2582 = vshrl.u32 %v2203, 16
        %v2584 = vrot.slane %v2582, 4
        %v2585 = vshll.u32 %v2203, 16
        %v2587 = vrot.slane %v2585, 5
        %v2588 = vor.u32 %v2584, %v2587
        %v2589 = vrot.slane %v2588, 4
        %v2591 = vshll.u32 %v2204, 16
        %v2593 = vrot.slane %v2591, 5
        %v2594 = vsel %vm1000, %v2589, %v2593
        %v2595 = vshrl.u32 %v2204, 16
        %v2597 = vrot.slane %v2595, 4
        %v2598 = vor.u32 %v2597, %v2593
        %v2599 = vrot.slane %v2598, 4
        %v2601 = vshll.u32 %v2220, 16
        %v2603 = vrot.slane %v2601, 5
        %v2604 = vsel %vm1000, %v2599, %v2603
        %v2605 = vld [vmem:[%s2172] sm:$0xe]
        %v2606 = vld [vmem:[%s2172 + $0xc] sm:$0xe]
        %v2607 = vld [vmem:[%s2172 + $0x18] sm:$0xe]
        %v2608 = vld [vmem:[%s2172 + $0x24] sm:$0xe]
        %v2609 = vld [vmem:[%s2172 + $0x30] sm:$0xe]
        %v2610 = vld [vmem:[%s2172 + $0x3c] sm:$0xe]
        %v2611 = vld [vmem:[%s2172 + $0x48] sm:$0xe]
        %v2612 = vld [vmem:[%s2172 + $0x54] sm:$0xe]
        %v2613 = vld [vmem:[%s2172 + $0x60] sm:$0xe]
        %v2614 = vld [vmem:[%s2172 + $0x6c] sm:$0xe]
        %v2615 = vld [vmem:[%s2172 + $0x78] sm:$0xe]
        %v2616 = vld [vmem:[%s2172 + $0x84] sm:$0xe]
        %v2617 = vld [vmem:[%s2172 + $0x90] sm:$0xe]
        %v2618 = vld [vmem:[%s2172 + $0x9c] sm:$0xe]
        %v2619 = vld [vmem:[%s2172 + $0xa8] sm:$0xe]
        %v2620 = vld [vmem:[%s2172 + $0xb4] sm:$0xe]
        %v2669 = vrot.slane %v2605, 5
        %v2670 = vrot.slane %v2669, 4
        %v2671 = vrot.slane %v2174, 5
        %v2672 = vsel %vm1451, %v2670, %v2671
        %v2673 = vrot.slane %v2671, 4
        %v2674 = vrot.slane %v2205, 5
        %v2675 = vsel %vm1451, %v2673, %v2674
        %v2676 = vrot.slane %v2606, 5
        %v2677 = vrot.slane %v2676, 4
        %v2678 = vrot.slane %v2176, 5
        %v2679 = vsel %vm1451, %v2677, %v2678
        %v2680 = vrot.slane %v2678, 4
        %v2681 = vrot.slane %v2206, 5
        %v2682 = vsel %vm1451, %v2680, %v2681
        %v2683 = vrot.slane %v2607, 5
        %v2684 = vrot.slane %v2683, 4
        %v2685 = vrot.slane %v2178, 5
        %v2686 = vsel %vm1451, %v2684, %v2685
        %v2687 = vrot.slane %v2685, 4
        %v2688 = vrot.slane %v2207, 5
        %v2689 = vsel %vm1451, %v2687, %v2688
        %v2690 = vrot.slane %v2608, 5
        %v2691 = vrot.slane %v2690, 4
        %v2692 = vrot.slane %v2180, 5
        %v2693 = vsel %vm1451, %v2691, %v2692
        %v2694 = vrot.slane %v2692, 4
        %v2695 = vrot.slane %v2208, 5
        %v2696 = vsel %vm1451, %v2694, %v2695
        %v2697 = vrot.slane %v2609, 5
        %v2698 = vrot.slane %v2697, 4
        %v2699 = vrot.slane %v2182, 5
        %v2700 = vsel %vm1451, %v2698, %v2699
        %v2701 = vrot.slane %v2699, 4
        %v2702 = vrot.slane %v2209, 5
        %v2703 = vsel %vm1451, %v2701, %v2702
        %v2704 = vrot.slane %v2610, 5
        %v2705 = vrot.slane %v2704, 4
        %v2706 = vrot.slane %v2184, 5
        %v2707 = vsel %vm1451, %v2705, %v2706
        %v2708 = vrot.slane %v2706, 4
        %v2709 = vrot.slane %v2210, 5
        %v2710 = vsel %vm1451, %v2708, %v2709
        %v2711 = vrot.slane %v2611, 5
        %v2712 = vrot.slane %v2711, 4
        %v2713 = vrot.slane %v2186, 5
        %v2714 = vsel %vm1451, %v2712, %v2713
        %v2715 = vrot.slane %v2713, 4
        %v2716 = vrot.slane %v2211, 5
        %v2717 = vsel %vm1451, %v2715, %v2716
        %v2718 = vrot.slane %v2612, 5
        %v2719 = vrot.slane %v2718, 4
        %v2720 = vrot.slane %v2188, 5
        %v2721 = vsel %vm1451, %v2719, %v2720
        %v2722 = vrot.slane %v2720, 4
        %v2723 = vrot.slane %v2212, 5
        %v2724 = vsel %vm1451, %v2722, %v2723
        %v2725 = vrot.slane %v2613, 5
        %v2726 = vrot.slane %v2725, 4
        %v2727 = vrot.slane %v2190, 5
        %v2728 = vsel %vm1451, %v2726, %v2727
        %v2729 = vrot.slane %v2727, 4
        %v2730 = vrot.slane %v2213, 5
        %v2731 = vsel %vm1451, %v2729, %v2730
        %v2732 = vrot.slane %v2614, 5
        %v2733 = vrot.slane %v2732, 4
        %v2734 = vrot.slane %v2192, 5
        %v2735 = vsel %vm1451, %v2733, %v2734
        %v2736 = vrot.slane %v2734, 4
        %v2737 = vrot.slane %v2214, 5
        %v2738 = vsel %vm1451, %v2736, %v2737
        %v2739 = vrot.slane %v2615, 5
        %v2740 = vrot.slane %v2739, 4
        %v2741 = vrot.slane %v2194, 5
        %v2742 = vsel %vm1451, %v2740, %v2741
        %v2743 = vrot.slane %v2741, 4
        %v2744 = vrot.slane %v2215, 5
        %v2745 = vsel %vm1451, %v2743, %v2744
        %v2746 = vrot.slane %v2616, 5
        %v2747 = vrot.slane %v2746, 4
        %v2748 = vrot.slane %v2196, 5
        %v2749 = vsel %vm1451, %v2747, %v2748
        %v2750 = vrot.slane %v2748, 4
        %v2751 = vrot.slane %v2216, 5
        %v2752 = vsel %vm1451, %v2750, %v2751
        %v2753 = vrot.slane %v2617, 5
        %v2754 = vrot.slane %v2753, 4
        %v2755 = vrot.slane %v2198, 5
        %v2756 = vsel %vm1451, %v2754, %v2755
        %v2757 = vrot.slane %v2755, 4
        %v2758 = vrot.slane %v2217, 5
        %v2759 = vsel %vm1451, %v2757, %v2758
        %v2760 = vrot.slane %v2618, 5
        %v2761 = vrot.slane %v2760, 4
        %v2762 = vrot.slane %v2200, 5
        %v2763 = vsel %vm1451, %v2761, %v2762
        %v2764 = vrot.slane %v2762, 4
        %v2765 = vrot.slane %v2218, 5
        %v2766 = vsel %vm1451, %v2764, %v2765
        %v2767 = vrot.slane %v2619, 5
        %v2768 = vrot.slane %v2767, 4
        %v2769 = vrot.slane %v2202, 5
        %v2770 = vsel %vm1451, %v2768, %v2769
        %v2771 = vrot.slane %v2769, 4
        %v2772 = vrot.slane %v2219, 5
        %v2773 = vsel %vm1451, %v2771, %v2772
        %v2774 = vrot.slane %v2620, 5
        %v2775 = vrot.slane %v2774, 4
        %v2776 = vrot.slane %v2204, 5
        %v2777 = vsel %vm1451, %v2775, %v2776
        %v2778 = vrot.slane %v2776, 4
        %v2779 = vrot.slane %v2220, 5
        %v2780 = vsel %vm1451, %v2778, %v2779
        %v2797 = vunpack.c.l.b16 %v950
        %v2798 = vunpack.c.l.b16 %v951
        %v2799 = vunpack.c.l.b16 %v952
        %v2800 = vunpack.c.l.b16 %v953
        %v2801 = vunpack.c.l.b16 %v954
        %v2802 = vunpack.c.l.b16 %v955
        %v2803 = vunpack.c.l.b16 %v956
        %v2804 = vunpack.c.l.b16 %v957
        %v2805 = vunpack.c.l.b16 %v958
        %v2806 = vunpack.c.l.b16 %v959
        %v2807 = vunpack.c.l.b16 %v960
        %v2808 = vunpack.c.l.b16 %v961
        %v2809 = vunpack.c.l.b16 %v962
        %v2810 = vunpack.c.l.b16 %v963
        %v2811 = vunpack.c.l.b16 %v964
        %v2812 = vunpack.c.l.b16 %v965
        %v2813 = vunpack.c.l.b16 %v966
        %v2814 = vunpack.c.l.b16 %v967
        %v2815 = vunpack.c.l.b16 %v968
        %v2816 = vunpack.c.l.b16 %v969
        %v2817 = vunpack.c.l.b16 %v970
        %v2818 = vunpack.c.l.b16 %v971
        %v2819 = vunpack.c.l.b16 %v972
        %v2820 = vunpack.c.l.b16 %v973
        %v2821 = vunpack.c.l.b16 %v974
        %v2822 = vunpack.c.l.b16 %v975
        %v2823 = vunpack.c.l.b16 %v976
        %v2824 = vunpack.c.l.b16 %v977
        %v2825 = vunpack.c.l.b16 %v978
        %v2826 = vunpack.c.l.b16 %v979
        %v2827 = vunpack.c.l.b16 %v980
        %v2828 = vunpack.c.l.b16 %v981
        %v2829 = vpack.c.b16 %v2798, %v2797
        %v2830 = vpack.c.b16 %v2800, %v2799
        %v2831 = vpack.c.b16 %v2802, %v2801
        %v2832 = vpack.c.b16 %v2804, %v2803
        %v2833 = vpack.c.b16 %v2806, %v2805
        %v2834 = vpack.c.b16 %v2808, %v2807
        %v2835 = vpack.c.b16 %v2810, %v2809
        %v2836 = vpack.c.b16 %v2812, %v2811
        %v2837 = vpack.c.b16 %v2814, %v2813
        %v2838 = vpack.c.b16 %v2816, %v2815
        %v2839 = vpack.c.b16 %v2818, %v2817
        %v2840 = vpack.c.b16 %v2820, %v2819
        %v2841 = vpack.c.b16 %v2822, %v2821
        %v2842 = vpack.c.b16 %v2824, %v2823
        %v2843 = vpack.c.b16 %v2826, %v2825
        %v2844 = vpack.c.b16 %v2828, %v2827
        %v2845 = vunpack.c.l.b16 %v1014
        %v2846 = vunpack.c.l.b16 %v1024
        %v2847 = vunpack.c.l.b16 %v1038
        %v2848 = vunpack.c.l.b16 %v1048
        %v2849 = vunpack.c.l.b16 %v1062
        %v2850 = vunpack.c.l.b16 %v1072
        %v2851 = vunpack.c.l.b16 %v1086
        %v2852 = vunpack.c.l.b16 %v1096
        %v2853 = vunpack.c.l.b16 %v1110
        %v2854 = vunpack.c.l.b16 %v1120
        %v2855 = vunpack.c.l.b16 %v1134
        %v2856 = vunpack.c.l.b16 %v1144
        %v2857 = vunpack.c.l.b16 %v1158
        %v2858 = vunpack.c.l.b16 %v1168
        %v2859 = vunpack.c.l.b16 %v1182
        %v2860 = vunpack.c.l.b16 %v1192
        %v2861 = vunpack.c.l.b16 %v1206
        %v2862 = vunpack.c.l.b16 %v1216
        %v2863 = vunpack.c.l.b16 %v1230
        %v2864 = vunpack.c.l.b16 %v1240
        %v2865 = vunpack.c.l.b16 %v1254
        %v2866 = vunpack.c.l.b16 %v1264
        %v2867 = vunpack.c.l.b16 %v1278
        %v2868 = vunpack.c.l.b16 %v1288
        %v2869 = vunpack.c.l.b16 %v1302
        %v2870 = vunpack.c.l.b16 %v1312
        %v2871 = vunpack.c.l.b16 %v1326
        %v2872 = vunpack.c.l.b16 %v1336
        %v2873 = vunpack.c.l.b16 %v1350
        %v2874 = vunpack.c.l.b16 %v1360
        %v2875 = vunpack.c.l.b16 %v1374
        %v2876 = vunpack.c.l.b16 %v1384
        %v2877 = vpack.c.b16 %v2846, %v2845
        %v2878 = vpack.c.b16 %v2848, %v2847
        %v2879 = vpack.c.b16 %v2850, %v2849
        %v2880 = vpack.c.b16 %v2852, %v2851
        %v2881 = vpack.c.b16 %v2854, %v2853
        %v2882 = vpack.c.b16 %v2856, %v2855
        %v2883 = vpack.c.b16 %v2858, %v2857
        %v2884 = vpack.c.b16 %v2860, %v2859
        %v2885 = vpack.c.b16 %v2862, %v2861
        %v2886 = vpack.c.b16 %v2864, %v2863
        %v2887 = vpack.c.b16 %v2866, %v2865
        %v2888 = vpack.c.b16 %v2868, %v2867
        %v2889 = vpack.c.b16 %v2870, %v2869
        %v2890 = vpack.c.b16 %v2872, %v2871
        %v2891 = vpack.c.b16 %v2874, %v2873
        %v2892 = vpack.c.b16 %v2876, %v2875
        %2893 = vrot.lane.b32.xlu0 %v2877, 4
        %v2894 = vpop.permute.xlu0 %2893
        %2895 = vrot.lane.b32.xlu0 %v2878, 4
        %v2896 = vpop.permute.xlu0 %2895
        %2897 = vrot.lane.b32.xlu0 %v2879, 4
        %v2898 = vpop.permute.xlu0 %2897
        %2899 = vrot.lane.b32.xlu0 %v2880, 4
        %v2900 = vpop.permute.xlu0 %2899
        %2901 = vrot.lane.b32.xlu0 %v2881, 4
        %v2902 = vpop.permute.xlu0 %2901
        %2903 = vrot.lane.b32.xlu0 %v2882, 4
        %v2904 = vpop.permute.xlu0 %2903
        %2905 = vrot.lane.b32.xlu0 %v2883, 4
        %v2906 = vpop.permute.xlu0 %2905
        %2907 = vrot.lane.b32.xlu0 %v2884, 4
        %v2908 = vpop.permute.xlu0 %2907
        %2909 = vrot.lane.b32.xlu0 %v2885, 4
        %v2910 = vpop.permute.xlu0 %2909
        %2911 = vrot.lane.b32.xlu0 %v2886, 4
        %v2912 = vpop.permute.xlu0 %2911
        %2913 = vrot.lane.b32.xlu0 %v2887, 4
        %v2914 = vpop.permute.xlu0 %2913
        %2915 = vrot.lane.b32.xlu0 %v2888, 4
        %v2916 = vpop.permute.xlu0 %2915
        %2917 = vrot.lane.b32.xlu0 %v2889, 4
        %v2918 = vpop.permute.xlu0 %2917
        %2919 = vrot.lane.b32.xlu0 %v2890, 4
        %v2920 = vpop.permute.xlu0 %2919
        %2921 = vrot.lane.b32.xlu0 %v2891, 4
        %v2922 = vpop.permute.xlu0 %2921
        %2923 = vrot.lane.b32.xlu0 %v2892, 4
        %v2924 = vpop.permute.xlu0 %2923
        %v2925 = vunpack.c.l.b16 %v1455
        %v2926 = vunpack.c.l.b16 %v1458
        %v2927 = vunpack.c.l.b16 %v1462
        %v2928 = vunpack.c.l.b16 %v1465
        %v2929 = vunpack.c.l.b16 %v1469
        %v2930 = vunpack.c.l.b16 %v1472
        %v2931 = vunpack.c.l.b16 %v1476
        %v2932 = vunpack.c.l.b16 %v1479
        %v2933 = vunpack.c.l.b16 %v1483
        %v2934 = vunpack.c.l.b16 %v1486
        %v2935 = vunpack.c.l.b16 %v1490
        %v2936 = vunpack.c.l.b16 %v1493
        %v2937 = vunpack.c.l.b16 %v1497
        %v2938 = vunpack.c.l.b16 %v1500
        %v2939 = vunpack.c.l.b16 %v1504
        %v2940 = vunpack.c.l.b16 %v1507
        %v2941 = vunpack.c.l.b16 %v1511
        %v2942 = vunpack.c.l.b16 %v1514
        %v2943 = vunpack.c.l.b16 %v1518
        %v2944 = vunpack.c.l.b16 %v1521
        %v2945 = vunpack.c.l.b16 %v1525
        %v2946 = vunpack.c.l.b16 %v1528
        %v2947 = vunpack.c.l.b16 %v1532
        %v2948 = vunpack.c.l.b16 %v1535
        %v2949 = vunpack.c.l.b16 %v1539
        %v2950 = vunpack.c.l.b16 %v1542
        %v2951 = vunpack.c.l.b16 %v1546
        %v2952 = vunpack.c.l.b16 %v1549
        %v2953 = vunpack.c.l.b16 %v1553
        %v2954 = vunpack.c.l.b16 %v1556
        %v2955 = vunpack.c.l.b16 %v1560
        %v2956 = vunpack.c.l.b16 %v1563
        %v2957 = vpack.c.b16 %v2926, %v2925
        %v2958 = vpack.c.b16 %v2928, %v2927
        %v2959 = vpack.c.b16 %v2930, %v2929
        %v2960 = vpack.c.b16 %v2932, %v2931
        %v2961 = vpack.c.b16 %v2934, %v2933
        %v2962 = vpack.c.b16 %v2936, %v2935
        %v2963 = vpack.c.b16 %v2938, %v2937
        %v2964 = vpack.c.b16 %v2940, %v2939
        %v2965 = vpack.c.b16 %v2942, %v2941
        %v2966 = vpack.c.b16 %v2944, %v2943
        %v2967 = vpack.c.b16 %v2946, %v2945
        %v2968 = vpack.c.b16 %v2948, %v2947
        %v2969 = vpack.c.b16 %v2950, %v2949
        %v2970 = vpack.c.b16 %v2952, %v2951
        %v2971 = vpack.c.b16 %v2954, %v2953
        %v2972 = vpack.c.b16 %v2956, %v2955
        %2973 = vrot.lane.b32.xlu0 %v2957, 8
        %v2974 = vpop.permute.xlu0 %2973
        %2975 = vrot.lane.b32.xlu0 %v2958, 8
        %v2976 = vpop.permute.xlu0 %2975
        %2977 = vrot.lane.b32.xlu0 %v2959, 8
        %v2978 = vpop.permute.xlu0 %2977
        %2979 = vrot.lane.b32.xlu0 %v2960, 8
        %v2980 = vpop.permute.xlu0 %2979
        %2981 = vrot.lane.b32.xlu0 %v2961, 8
        %v2982 = vpop.permute.xlu0 %2981
        %2983 = vrot.lane.b32.xlu0 %v2962, 8
        %v2984 = vpop.permute.xlu0 %2983
        %2985 = vrot.lane.b32.xlu0 %v2963, 8
        %v2986 = vpop.permute.xlu0 %2985
        %2987 = vrot.lane.b32.xlu0 %v2964, 8
        %v2988 = vpop.permute.xlu0 %2987
        %2989 = vrot.lane.b32.xlu0 %v2965, 8
        %v2990 = vpop.permute.xlu0 %2989
        %2991 = vrot.lane.b32.xlu0 %v2966, 8
        %v2992 = vpop.permute.xlu0 %2991
        %2993 = vrot.lane.b32.xlu0 %v2967, 8
        %v2994 = vpop.permute.xlu0 %2993
        %2995 = vrot.lane.b32.xlu0 %v2968, 8
        %v2996 = vpop.permute.xlu0 %2995
        %2997 = vrot.lane.b32.xlu0 %v2969, 8
        %v2998 = vpop.permute.xlu0 %2997
        %2999 = vrot.lane.b32.xlu0 %v2970, 8
        %v3000 = vpop.permute.xlu0 %2999
        %3001 = vrot.lane.b32.xlu0 %v2971, 8
        %v3002 = vpop.permute.xlu0 %3001
        %3003 = vrot.lane.b32.xlu0 %v2972, 8
        %v3004 = vpop.permute.xlu0 %3003
        %v3021 = vunpack.c.l.b16 %v1564
        %v3022 = vunpack.c.l.b16 %v1565
        %v3023 = vunpack.c.l.b16 %v1566
        %v3024 = vunpack.c.l.b16 %v1567
        %v3025 = vunpack.c.l.b16 %v1568
        %v3026 = vunpack.c.l.b16 %v1569
        %v3027 = vunpack.c.l.b16 %v1570
        %v3028 = vunpack.c.l.b16 %v1571
        %v3029 = vunpack.c.l.b16 %v1572
        %v3030 = vunpack.c.l.b16 %v1573
        %v3031 = vunpack.c.l.b16 %v1574
        %v3032 = vunpack.c.l.b16 %v1575
        %v3033 = vunpack.c.l.b16 %v1576
        %v3034 = vunpack.c.l.b16 %v1577
        %v3035 = vunpack.c.l.b16 %v1578
        %v3036 = vunpack.c.l.b16 %v1579
        %v3037 = vunpack.c.l.b16 %v1580
        %v3038 = vunpack.c.l.b16 %v1581
        %v3039 = vunpack.c.l.b16 %v1582
        %v3040 = vunpack.c.l.b16 %v1583
        %v3041 = vunpack.c.l.b16 %v1584
        %v3042 = vunpack.c.l.b16 %v1585
        %v3043 = vunpack.c.l.b16 %v1586
        %v3044 = vunpack.c.l.b16 %v1587
        %v3045 = vunpack.c.l.b16 %v1588
        %v3046 = vunpack.c.l.b16 %v1589
        %v3047 = vunpack.c.l.b16 %v1590
        %v3048 = vunpack.c.l.b16 %v1591
        %v3049 = vunpack.c.l.b16 %v1592
        %v3050 = vunpack.c.l.b16 %v1593
        %v3051 = vunpack.c.l.b16 %v1594
        %v3052 = vunpack.c.l.b16 %v1595
        %v3053 = vpack.c.b16 %v3022, %v3021
        %v3054 = vpack.c.b16 %v3024, %v3023
        %v3055 = vpack.c.b16 %v3026, %v3025
        %v3056 = vpack.c.b16 %v3028, %v3027
        %v3057 = vpack.c.b16 %v3030, %v3029
        %v3058 = vpack.c.b16 %v3032, %v3031
        %v3059 = vpack.c.b16 %v3034, %v3033
        %v3060 = vpack.c.b16 %v3036, %v3035
        %v3061 = vpack.c.b16 %v3038, %v3037
        %v3062 = vpack.c.b16 %v3040, %v3039
        %v3063 = vpack.c.b16 %v3042, %v3041
        %v3064 = vpack.c.b16 %v3044, %v3043
        %v3065 = vpack.c.b16 %v3046, %v3045
        %v3066 = vpack.c.b16 %v3048, %v3047
        %v3067 = vpack.c.b16 %v3050, %v3049
        %v3068 = vpack.c.b16 %v3052, %v3051
        %3069 = vrot.lane.b32.xlu0 %v3053, 12
        %v3070 = vpop.permute.xlu0 %3069
        %3071 = vrot.lane.b32.xlu0 %v3054, 12
        %v3072 = vpop.permute.xlu0 %3071
        %3073 = vrot.lane.b32.xlu0 %v3055, 12
        %v3074 = vpop.permute.xlu0 %3073
        %3075 = vrot.lane.b32.xlu0 %v3056, 12
        %v3076 = vpop.permute.xlu0 %3075
        %3077 = vrot.lane.b32.xlu0 %v3057, 12
        %v3078 = vpop.permute.xlu0 %3077
        %3079 = vrot.lane.b32.xlu0 %v3058, 12
        %v3080 = vpop.permute.xlu0 %3079
        %3081 = vrot.lane.b32.xlu0 %v3059, 12
        %v3082 = vpop.permute.xlu0 %3081
        %3083 = vrot.lane.b32.xlu0 %v3060, 12
        %v3084 = vpop.permute.xlu0 %3083
        %3085 = vrot.lane.b32.xlu0 %v3061, 12
        %v3086 = vpop.permute.xlu0 %3085
        %3087 = vrot.lane.b32.xlu0 %v3062, 12
        %v3088 = vpop.permute.xlu0 %3087
        %3089 = vrot.lane.b32.xlu0 %v3063, 12
        %v3090 = vpop.permute.xlu0 %3089
        %3091 = vrot.lane.b32.xlu0 %v3064, 12
        %v3092 = vpop.permute.xlu0 %3091
        %3093 = vrot.lane.b32.xlu0 %v3065, 12
        %v3094 = vpop.permute.xlu0 %3093
        %3095 = vrot.lane.b32.xlu0 %v3066, 12
        %v3096 = vpop.permute.xlu0 %3095
        %3097 = vrot.lane.b32.xlu0 %v3067, 12
        %v3098 = vpop.permute.xlu0 %3097
        %3099 = vrot.lane.b32.xlu0 %v3068, 12
        %v3100 = vpop.permute.xlu0 %3099
        %v3101 = vunpack.c.l.b16 %v1625
        %v3102 = vunpack.c.l.b16 %v1635
        %v3103 = vunpack.c.l.b16 %v1649
        %v3104 = vunpack.c.l.b16 %v1659
        %v3105 = vunpack.c.l.b16 %v1673
        %v3106 = vunpack.c.l.b16 %v1683
        %v3107 = vunpack.c.l.b16 %v1697
        %v3108 = vunpack.c.l.b16 %v1707
        %v3109 = vunpack.c.l.b16 %v1721
        %v3110 = vunpack.c.l.b16 %v1731
        %v3111 = vunpack.c.l.b16 %v1745
        %v3112 = vunpack.c.l.b16 %v1755
        %v3113 = vunpack.c.l.b16 %v1769
        %v3114 = vunpack.c.l.b16 %v1779
        %v3115 = vunpack.c.l.b16 %v1793
        %v3116 = vunpack.c.l.b16 %v1803
        %v3117 = vunpack.c.l.b16 %v1817
        %v3118 = vunpack.c.l.b16 %v1827
        %v3119 = vunpack.c.l.b16 %v1841
        %v3120 = vunpack.c.l.b16 %v1851
        %v3121 = vunpack.c.l.b16 %v1865
        %v3122 = vunpack.c.l.b16 %v1875
        %v3123 = vunpack.c.l.b16 %v1889
        %v3124 = vunpack.c.l.b16 %v1899
        %v3125 = vunpack.c.l.b16 %v1913
        %v3126 = vunpack.c.l.b16 %v1923
        %v3127 = vunpack.c.l.b16 %v1937
        %v3128 = vunpack.c.l.b16 %v1947
        %v3129 = vunpack.c.l.b16 %v1961
        %v3130 = vunpack.c.l.b16 %v1971
        %v3131 = vunpack.c.l.b16 %v1985
        %v3132 = vunpack.c.l.b16 %v1995
        %v3133 = vpack.c.b16 %v3102, %v3101
        %v3134 = vpack.c.b16 %v3104, %v3103
        %v3135 = vpack.c.b16 %v3106, %v3105
        %v3136 = vpack.c.b16 %v3108, %v3107
        %v3137 = vpack.c.b16 %v3110, %v3109
        %v3138 = vpack.c.b16 %v3112, %v3111
        %v3139 = vpack.c.b16 %v3114, %v3113
        %v3140 = vpack.c.b16 %v3116, %v3115
        %v3141 = vpack.c.b16 %v3118, %v3117
        %v3142 = vpack.c.b16 %v3120, %v3119
        %v3143 = vpack.c.b16 %v3122, %v3121
        %v3144 = vpack.c.b16 %v3124, %v3123
        %v3145 = vpack.c.b16 %v3126, %v3125
        %v3146 = vpack.c.b16 %v3128, %v3127
        %v3147 = vpack.c.b16 %v3130, %v3129
        %v3148 = vpack.c.b16 %v3132, %v3131
        %3149 = vrot.lane.b32.xlu0 %v3133, 16
        %v3150 = vpop.permute.xlu0 %3149
        %3151 = vrot.lane.b32.xlu0 %v3134, 16
        %v3152 = vpop.permute.xlu0 %3151
        %3153 = vrot.lane.b32.xlu0 %v3135, 16
        %v3154 = vpop.permute.xlu0 %3153
        %3155 = vrot.lane.b32.xlu0 %v3136, 16
        %v3156 = vpop.permute.xlu0 %3155
        %3157 = vrot.lane.b32.xlu0 %v3137, 16
        %v3158 = vpop.permute.xlu0 %3157
        %3159 = vrot.lane.b32.xlu0 %v3138, 16
        %v3160 = vpop.permute.xlu0 %3159
        %3161 = vrot.lane.b32.xlu0 %v3139, 16
        %v3162 = vpop.permute.xlu0 %3161
        %3163 = vrot.lane.b32.xlu0 %v3140, 16
        %v3164 = vpop.permute.xlu0 %3163
        %3165 = vrot.lane.b32.xlu0 %v3141, 16
        %v3166 = vpop.permute.xlu0 %3165
        %3167 = vrot.lane.b32.xlu0 %v3142, 16
        %v3168 = vpop.permute.xlu0 %3167
        %3169 = vrot.lane.b32.xlu0 %v3143, 16
        %v3170 = vpop.permute.xlu0 %3169
        %3171 = vrot.lane.b32.xlu0 %v3144, 16
        %v3172 = vpop.permute.xlu0 %3171
        %3173 = vrot.lane.b32.xlu0 %v3145, 16
        %v3174 = vpop.permute.xlu0 %3173
        %3175 = vrot.lane.b32.xlu0 %v3146, 16
        %v3176 = vpop.permute.xlu0 %3175
        %3177 = vrot.lane.b32.xlu0 %v3147, 16
        %v3178 = vpop.permute.xlu0 %3177
        %3179 = vrot.lane.b32.xlu0 %v3148, 16
        %v3180 = vpop.permute.xlu0 %3179
        %v3181 = vunpack.c.l.b16 %v2063
        %v3182 = vunpack.c.l.b16 %v2066
        %v3183 = vunpack.c.l.b16 %v2070
        %v3184 = vunpack.c.l.b16 %v2073
        %v3185 = vunpack.c.l.b16 %v2077
        %v3186 = vunpack.c.l.b16 %v2080
        %v3187 = vunpack.c.l.b16 %v2084
        %v3188 = vunpack.c.l.b16 %v2087
        %v3189 = vunpack.c.l.b16 %v2091
        %v3190 = vunpack.c.l.b16 %v2094
        %v3191 = vunpack.c.l.b16 %v2098
        %v3192 = vunpack.c.l.b16 %v2101
        %v3193 = vunpack.c.l.b16 %v2105
        %v3194 = vunpack.c.l.b16 %v2108
        %v3195 = vunpack.c.l.b16 %v2112
        %v3196 = vunpack.c.l.b16 %v2115
        %v3197 = vunpack.c.l.b16 %v2119
        %v3198 = vunpack.c.l.b16 %v2122
        %v3199 = vunpack.c.l.b16 %v2126
        %v3200 = vunpack.c.l.b16 %v2129
        %v3201 = vunpack.c.l.b16 %v2133
        %v3202 = vunpack.c.l.b16 %v2136
        %v3203 = vunpack.c.l.b16 %v2140
        %v3204 = vunpack.c.l.b16 %v2143
        %v3205 = vunpack.c.l.b16 %v2147
        %v3206 = vunpack.c.l.b16 %v2150
        %v3207 = vunpack.c.l.b16 %v2154
        %v3208 = vunpack.c.l.b16 %v2157
        %v3209 = vunpack.c.l.b16 %v2161
        %v3210 = vunpack.c.l.b16 %v2164
        %v3211 = vunpack.c.l.b16 %v2168
        %v3212 = vunpack.c.l.b16 %v2171
        %v3213 = vpack.c.b16 %v3182, %v3181
        %v3214 = vpack.c.b16 %v3184, %v3183
        %v3215 = vpack.c.b16 %v3186, %v3185
        %v3216 = vpack.c.b16 %v3188, %v3187
        %v3217 = vpack.c.b16 %v3190, %v3189
        %v3218 = vpack.c.b16 %v3192, %v3191
        %v3219 = vpack.c.b16 %v3194, %v3193
        %v3220 = vpack.c.b16 %v3196, %v3195
        %v3221 = vpack.c.b16 %v3198, %v3197
        %v3222 = vpack.c.b16 %v3200, %v3199
        %v3223 = vpack.c.b16 %v3202, %v3201
        %v3224 = vpack.c.b16 %v3204, %v3203
        %v3225 = vpack.c.b16 %v3206, %v3205
        %v3226 = vpack.c.b16 %v3208, %v3207
        %v3227 = vpack.c.b16 %v3210, %v3209
        %v3228 = vpack.c.b16 %v3212, %v3211
        %3229 = vrot.lane.b32.xlu0 %v3213, 20
        %v3230 = vpop.permute.xlu0 %3229
        %3231 = vrot.lane.b32.xlu0 %v3214, 20
        %v3232 = vpop.permute.xlu0 %3231
        %3233 = vrot.lane.b32.xlu0 %v3215, 20
        %v3234 = vpop.permute.xlu0 %3233
        %3235 = vrot.lane.b32.xlu0 %v3216, 20
        %v3236 = vpop.permute.xlu0 %3235
        %3237 = vrot.lane.b32.xlu0 %v3217, 20
        %v3238 = vpop.permute.xlu0 %3237
        %3239 = vrot.lane.b32.xlu0 %v3218, 20
        %v3240 = vpop.permute.xlu0 %3239
        %3241 = vrot.lane.b32.xlu0 %v3219, 20
        %v3242 = vpop.permute.xlu0 %3241
        %3243 = vrot.lane.b32.xlu0 %v3220, 20
        %v3244 = vpop.permute.xlu0 %3243
        %3245 = vrot.lane.b32.xlu0 %v3221, 20
        %v3246 = vpop.permute.xlu0 %3245
        %3247 = vrot.lane.b32.xlu0 %v3222, 20
        %v3248 = vpop.permute.xlu0 %3247
        %3249 = vrot.lane.b32.xlu0 %v3223, 20
        %v3250 = vpop.permute.xlu0 %3249
        %3251 = vrot.lane.b32.xlu0 %v3224, 20
        %v3252 = vpop.permute.xlu0 %3251
        %3253 = vrot.lane.b32.xlu0 %v3225, 20
        %v3254 = vpop.permute.xlu0 %3253
        %3255 = vrot.lane.b32.xlu0 %v3226, 20
        %v3256 = vpop.permute.xlu0 %3255
        %3257 = vrot.lane.b32.xlu0 %v3227, 20
        %v3258 = vpop.permute.xlu0 %3257
        %3259 = vrot.lane.b32.xlu0 %v3228, 20
        %v3260 = vpop.permute.xlu0 %3259
        %v3277 = vunpack.c.l.b16 %v2173
        %v3278 = vunpack.c.l.b16 %v2174
        %v3279 = vunpack.c.l.b16 %v2175
        %v3280 = vunpack.c.l.b16 %v2176
        %v3281 = vunpack.c.l.b16 %v2177
        %v3282 = vunpack.c.l.b16 %v2178
        %v3283 = vunpack.c.l.b16 %v2179
        %v3284 = vunpack.c.l.b16 %v2180
        %v3285 = vunpack.c.l.b16 %v2181
        %v3286 = vunpack.c.l.b16 %v2182
        %v3287 = vunpack.c.l.b16 %v2183
        %v3288 = vunpack.c.l.b16 %v2184
        %v3289 = vunpack.c.l.b16 %v2185
        %v3290 = vunpack.c.l.b16 %v2186
        %v3291 = vunpack.c.l.b16 %v2187
        %v3292 = vunpack.c.l.b16 %v2188
        %v3293 = vunpack.c.l.b16 %v2189
        %v3294 = vunpack.c.l.b16 %v2190
        %v3295 = vunpack.c.l.b16 %v2191
        %v3296 = vunpack.c.l.b16 %v2192
        %v3297 = vunpack.c.l.b16 %v2193
        %v3298 = vunpack.c.l.b16 %v2194
        %v3299 = vunpack.c.l.b16 %v2195
        %v3300 = vunpack.c.l.b16 %v2196
        %v3301 = vunpack.c.l.b16 %v2197
        %v3302 = vunpack.c.l.b16 %v2198
        %v3303 = vunpack.c.l.b16 %v2199
        %v3304 = vunpack.c.l.b16 %v2200
        %v3305 = vunpack.c.l.b16 %v2201
        %v3306 = vunpack.c.l.b16 %v2202
        %v3307 = vunpack.c.l.b16 %v2203
        %v3308 = vunpack.c.l.b16 %v2204
        %v3309 = vpack.c.b16 %v3278, %v3277
        %v3310 = vpack.c.b16 %v3280, %v3279
        %v3311 = vpack.c.b16 %v3282, %v3281
        %v3312 = vpack.c.b16 %v3284, %v3283
        %v3313 = vpack.c.b16 %v3286, %v3285
        %v3314 = vpack.c.b16 %v3288, %v3287
        %v3315 = vpack.c.b16 %v3290, %v3289
        %v3316 = vpack.c.b16 %v3292, %v3291
        %v3317 = vpack.c.b16 %v3294, %v3293
        %v3318 = vpack.c.b16 %v3296, %v3295
        %v3319 = vpack.c.b16 %v3298, %v3297
        %v3320 = vpack.c.b16 %v3300, %v3299
        %v3321 = vpack.c.b16 %v3302, %v3301
        %v3322 = vpack.c.b16 %v3304, %v3303
        %v3323 = vpack.c.b16 %v3306, %v3305
        %v3324 = vpack.c.b16 %v3308, %v3307
        %3325 = vrot.lane.b32.xlu0 %v3309, 24
        %v3326 = vpop.permute.xlu0 %3325
        %3327 = vrot.lane.b32.xlu0 %v3310, 24
        %v3328 = vpop.permute.xlu0 %3327
        %3329 = vrot.lane.b32.xlu0 %v3311, 24
        %v3330 = vpop.permute.xlu0 %3329
        %3331 = vrot.lane.b32.xlu0 %v3312, 24
        %v3332 = vpop.permute.xlu0 %3331
        %3333 = vrot.lane.b32.xlu0 %v3313, 24
        %v3334 = vpop.permute.xlu0 %3333
        %3335 = vrot.lane.b32.xlu0 %v3314, 24
        %v3336 = vpop.permute.xlu0 %3335
        %3337 = vrot.lane.b32.xlu0 %v3315, 24
        %v3338 = vpop.permute.xlu0 %3337
        %3339 = vrot.lane.b32.xlu0 %v3316, 24
        %v3340 = vpop.permute.xlu0 %3339
        %3341 = vrot.lane.b32.xlu0 %v3317, 24
        %v3342 = vpop.permute.xlu0 %3341
        %3343 = vrot.lane.b32.xlu0 %v3318, 24
        %v3344 = vpop.permute.xlu0 %3343
        %3345 = vrot.lane.b32.xlu0 %v3319, 24
        %v3346 = vpop.permute.xlu0 %3345
        %3347 = vrot.lane.b32.xlu0 %v3320, 24
        %v3348 = vpop.permute.xlu0 %3347
        %3349 = vrot.lane.b32.xlu0 %v3321, 24
        %v3350 = vpop.permute.xlu0 %3349
        %3351 = vrot.lane.b32.xlu0 %v3322, 24
        %v3352 = vpop.permute.xlu0 %3351
        %3353 = vrot.lane.b32.xlu0 %v3323, 24
        %v3354 = vpop.permute.xlu0 %3353
        %3355 = vrot.lane.b32.xlu0 %v3324, 24
        %v3356 = vpop.permute.xlu0 %3355
        %v3357 = vunpack.c.l.b16 %v2234
        %v3358 = vunpack.c.l.b16 %v2244
        %v3359 = vunpack.c.l.b16 %v2258
        %v3360 = vunpack.c.l.b16 %v2268
        %v3361 = vunpack.c.l.b16 %v2282
        %v3362 = vunpack.c.l.b16 %v2292
        %v3363 = vunpack.c.l.b16 %v2306
        %v3364 = vunpack.c.l.b16 %v2316
        %v3365 = vunpack.c.l.b16 %v2330
        %v3366 = vunpack.c.l.b16 %v2340
        %v3367 = vunpack.c.l.b16 %v2354
        %v3368 = vunpack.c.l.b16 %v2364
        %v3369 = vunpack.c.l.b16 %v2378
        %v3370 = vunpack.c.l.b16 %v2388
        %v3371 = vunpack.c.l.b16 %v2402
        %v3372 = vunpack.c.l.b16 %v2412
        %v3373 = vunpack.c.l.b16 %v2426
        %v3374 = vunpack.c.l.b16 %v2436
        %v3375 = vunpack.c.l.b16 %v2450
        %v3376 = vunpack.c.l.b16 %v2460
        %v3377 = vunpack.c.l.b16 %v2474
        %v3378 = vunpack.c.l.b16 %v2484
        %v3379 = vunpack.c.l.b16 %v2498
        %v3380 = vunpack.c.l.b16 %v2508
        %v3381 = vunpack.c.l.b16 %v2522
        %v3382 = vunpack.c.l.b16 %v2532
        %v3383 = vunpack.c.l.b16 %v2546
        %v3384 = vunpack.c.l.b16 %v2556
        %v3385 = vunpack.c.l.b16 %v2570
        %v3386 = vunpack.c.l.b16 %v2580
        %v3387 = vunpack.c.l.b16 %v2594
        %v3388 = vunpack.c.l.b16 %v2604
        %v3389 = vpack.c.b16 %v3358, %v3357
        %v3390 = vpack.c.b16 %v3360, %v3359
        %v3391 = vpack.c.b16 %v3362, %v3361
        %v3392 = vpack.c.b16 %v3364, %v3363
        %v3393 = vpack.c.b16 %v3366, %v3365
        %v3394 = vpack.c.b16 %v3368, %v3367
        %v3395 = vpack.c.b16 %v3370, %v3369
        %v3396 = vpack.c.b16 %v3372, %v3371
        %v3397 = vpack.c.b16 %v3374, %v3373
        %v3398 = vpack.c.b16 %v3376, %v3375
        %v3399 = vpack.c.b16 %v3378, %v3377
        %v3400 = vpack.c.b16 %v3380, %v3379
        %v3401 = vpack.c.b16 %v3382, %v3381
        %v3402 = vpack.c.b16 %v3384, %v3383
        %v3403 = vpack.c.b16 %v3386, %v3385
        %v3404 = vpack.c.b16 %v3388, %v3387
        %3405 = vrot.lane.b32.xlu0 %v3389, 28
        %v3406 = vpop.permute.xlu0 %3405
        %3407 = vrot.lane.b32.xlu0 %v3390, 28
        %v3408 = vpop.permute.xlu0 %3407
        %3409 = vrot.lane.b32.xlu0 %v3391, 28
        %v3410 = vpop.permute.xlu0 %3409
        %3411 = vrot.lane.b32.xlu0 %v3392, 28
        %v3412 = vpop.permute.xlu0 %3411
        %3413 = vrot.lane.b32.xlu0 %v3393, 28
        %v3414 = vpop.permute.xlu0 %3413
        %3415 = vrot.lane.b32.xlu0 %v3394, 28
        %v3416 = vpop.permute.xlu0 %3415
        %3417 = vrot.lane.b32.xlu0 %v3395, 28
        %v3418 = vpop.permute.xlu0 %3417
        %3419 = vrot.lane.b32.xlu0 %v3396, 28
        %v3420 = vpop.permute.xlu0 %3419
        %3421 = vrot.lane.b32.xlu0 %v3397, 28
        %v3422 = vpop.permute.xlu0 %3421
        %3423 = vrot.lane.b32.xlu0 %v3398, 28
        %v3424 = vpop.permute.xlu0 %3423
        %3425 = vrot.lane.b32.xlu0 %v3399, 28
        %v3426 = vpop.permute.xlu0 %3425
        %3427 = vrot.lane.b32.xlu0 %v3400, 28
        %v3428 = vpop.permute.xlu0 %3427
        %3429 = vrot.lane.b32.xlu0 %v3401, 28
        %v3430 = vpop.permute.xlu0 %3429
        %3431 = vrot.lane.b32.xlu0 %v3402, 28
        %v3432 = vpop.permute.xlu0 %3431
        %3433 = vrot.lane.b32.xlu0 %v3403, 28
        %v3434 = vpop.permute.xlu0 %3433
        %3435 = vrot.lane.b32.xlu0 %v3404, 28
        %v3436 = vpop.permute.xlu0 %3435
        %v3437 = vunpack.c.l.b16 %v2672
        %v3438 = vunpack.c.l.b16 %v2675
        %v3439 = vunpack.c.l.b16 %v2679
        %v3440 = vunpack.c.l.b16 %v2682
        %v3441 = vunpack.c.l.b16 %v2686
        %v3442 = vunpack.c.l.b16 %v2689
        %v3443 = vunpack.c.l.b16 %v2693
        %v3444 = vunpack.c.l.b16 %v2696
        %v3445 = vunpack.c.l.b16 %v2700
        %v3446 = vunpack.c.l.b16 %v2703
        %v3447 = vunpack.c.l.b16 %v2707
        %v3448 = vunpack.c.l.b16 %v2710
        %v3449 = vunpack.c.l.b16 %v2714
        %v3450 = vunpack.c.l.b16 %v2717
        %v3451 = vunpack.c.l.b16 %v2721
        %v3452 = vunpack.c.l.b16 %v2724
        %v3453 = vunpack.c.l.b16 %v2728
        %v3454 = vunpack.c.l.b16 %v2731
        %v3455 = vunpack.c.l.b16 %v2735
        %v3456 = vunpack.c.l.b16 %v2738
        %v3457 = vunpack.c.l.b16 %v2742
        %v3458 = vunpack.c.l.b16 %v2745
        %v3459 = vunpack.c.l.b16 %v2749
        %v3460 = vunpack.c.l.b16 %v2752
        %v3461 = vunpack.c.l.b16 %v2756
        %v3462 = vunpack.c.l.b16 %v2759
        %v3463 = vunpack.c.l.b16 %v2763
        %v3464 = vunpack.c.l.b16 %v2766
        %v3465 = vunpack.c.l.b16 %v2770
        %v3466 = vunpack.c.l.b16 %v2773
        %v3467 = vunpack.c.l.b16 %v2777
        %v3468 = vunpack.c.l.b16 %v2780
        %v3469 = vpack.c.b16 %v3438, %v3437
        %v3470 = vpack.c.b16 %v3440, %v3439
        %v3471 = vpack.c.b16 %v3442, %v3441
        %v3472 = vpack.c.b16 %v3444, %v3443
        %v3473 = vpack.c.b16 %v3446, %v3445
        %v3474 = vpack.c.b16 %v3448, %v3447
        %v3475 = vpack.c.b16 %v3450, %v3449
        %v3476 = vpack.c.b16 %v3452, %v3451
        %v3477 = vpack.c.b16 %v3454, %v3453
        %v3478 = vpack.c.b16 %v3456, %v3455
        %v3479 = vpack.c.b16 %v3458, %v3457
        %v3480 = vpack.c.b16 %v3460, %v3459
        %v3481 = vpack.c.b16 %v3462, %v3461
        %v3482 = vpack.c.b16 %v3464, %v3463
        %v3483 = vpack.c.b16 %v3466, %v3465
        %v3484 = vpack.c.b16 %v3468, %v3467
        %3485 = vrot.lane.b32.xlu0 %v3469, 32
        %v3486 = vpop.permute.xlu0 %3485
        %3487 = vrot.lane.b32.xlu0 %v3470, 32
        %v3488 = vpop.permute.xlu0 %3487
        %3489 = vrot.lane.b32.xlu0 %v3471, 32
        %v3490 = vpop.permute.xlu0 %3489
        %3491 = vrot.lane.b32.xlu0 %v3472, 32
        %v3492 = vpop.permute.xlu0 %3491
        %3493 = vrot.lane.b32.xlu0 %v3473, 32
        %v3494 = vpop.permute.xlu0 %3493
        %3495 = vrot.lane.b32.xlu0 %v3474, 32
        %v3496 = vpop.permute.xlu0 %3495
        %3497 = vrot.lane.b32.xlu0 %v3475, 32
        %v3498 = vpop.permute.xlu0 %3497
        %3499 = vrot.lane.b32.xlu0 %v3476, 32
        %v3500 = vpop.permute.xlu0 %3499
        %3501 = vrot.lane.b32.xlu0 %v3477, 32
        %v3502 = vpop.permute.xlu0 %3501
        %3503 = vrot.lane.b32.xlu0 %v3478, 32
        %v3504 = vpop.permute.xlu0 %3503
        %3505 = vrot.lane.b32.xlu0 %v3479, 32
        %v3506 = vpop.permute.xlu0 %3505
        %3507 = vrot.lane.b32.xlu0 %v3480, 32
        %v3508 = vpop.permute.xlu0 %3507
        %3509 = vrot.lane.b32.xlu0 %v3481, 32
        %v3510 = vpop.permute.xlu0 %3509
        %3511 = vrot.lane.b32.xlu0 %v3482, 32
        %v3512 = vpop.permute.xlu0 %3511
        %3513 = vrot.lane.b32.xlu0 %v3483, 32
        %v3514 = vpop.permute.xlu0 %3513
        %3515 = vrot.lane.b32.xlu0 %v3484, 32
        %v3516 = vpop.permute.xlu0 %3515
        %vm3517 = vcmask 31744
        %v3520 = vsel %vm3517, %v2829, %v2894
        %v3523 = vsel %vm3517, %v2830, %v2896
        %v3526 = vsel %vm3517, %v2831, %v2898
        %v3529 = vsel %vm3517, %v2832, %v2900
        %v3532 = vsel %vm3517, %v2833, %v2902
        %v3535 = vsel %vm3517, %v2834, %v2904
        %v3538 = vsel %vm3517, %v2835, %v2906
        %v3541 = vsel %vm3517, %v2836, %v2908
        %v3544 = vsel %vm3517, %v2837, %v2910
        %v3547 = vsel %vm3517, %v2838, %v2912
        %v3550 = vsel %vm3517, %v2839, %v2914
        %v3553 = vsel %vm3517, %v2840, %v2916
        %v3556 = vsel %vm3517, %v2841, %v2918
        %v3559 = vsel %vm3517, %v2842, %v2920
        %v3562 = vsel %vm3517, %v2843, %v2922
        %v3565 = vsel %vm3517, %v2844, %v2924
        %vm3566 = vcmask 64512
        %v3568 = vsel %vm3566, %v3520, %v2974
        %v3570 = vsel %vm3566, %v3523, %v2976
        %v3572 = vsel %vm3566, %v3526, %v2978
        %v3574 = vsel %vm3566, %v3529, %v2980
        %v3576 = vsel %vm3566, %v3532, %v2982
        %v3578 = vsel %vm3566, %v3535, %v2984
        %v3580 = vsel %vm3566, %v3538, %v2986
        %v3582 = vsel %vm3566, %v3541, %v2988
        %v3584 = vsel %vm3566, %v3544, %v2990
        %v3586 = vsel %vm3566, %v3547, %v2992
        %v3588 = vsel %vm3566, %v3550, %v2994
        %v3590 = vsel %vm3566, %v3553, %v2996
        %v3592 = vsel %vm3566, %v3556, %v2998
        %v3594 = vsel %vm3566, %v3559, %v3000
        %v3596 = vsel %vm3566, %v3562, %v3002
        %v3598 = vsel %vm3566, %v3565, %v3004
        %vm3599 = vcmask 97280
        %v3601 = vsel %vm3599, %v3568, %v3070
        %v3603 = vsel %vm3599, %v3570, %v3072
        %v3605 = vsel %vm3599, %v3572, %v3074
        %v3607 = vsel %vm3599, %v3574, %v3076
        %v3609 = vsel %vm3599, %v3576, %v3078
        %v3611 = vsel %vm3599, %v3578, %v3080
        %v3613 = vsel %vm3599, %v3580, %v3082
        %v3615 = vsel %vm3599, %v3582, %v3084
        %v3617 = vsel %vm3599, %v3584, %v3086
        %v3619 = vsel %vm3599, %v3586, %v3088
        %v3621 = vsel %vm3599, %v3588, %v3090
        %v3623 = vsel %vm3599, %v3590, %v3092
        %v3625 = vsel %vm3599, %v3592, %v3094
        %v3627 = vsel %vm3599, %v3594, %v3096
        %v3629 = vsel %vm3599, %v3596, %v3098
        %v3631 = vsel %vm3599, %v3598, %v3100
        %vm3632 = vcmask 130048
        %v3634 = vsel %vm3632, %v3601, %v3150
        %v3636 = vsel %vm3632, %v3603, %v3152
        %v3638 = vsel %vm3632, %v3605, %v3154
        %v3640 = vsel %vm3632, %v3607, %v3156
        %v3642 = vsel %vm3632, %v3609, %v3158
        %v3644 = vsel %vm3632, %v3611, %v3160
        %v3646 = vsel %vm3632, %v3613, %v3162
        %v3648 = vsel %vm3632, %v3615, %v3164
        %v3650 = vsel %vm3632, %v3617, %v3166
        %v3652 = vsel %vm3632, %v3619, %v3168
        %v3654 = vsel %vm3632, %v3621, %v3170
        %v3656 = vsel %vm3632, %v3623, %v3172
        %v3658 = vsel %vm3632, %v3625, %v3174
        %v3660 = vsel %vm3632, %v3627, %v3176
        %v3662 = vsel %vm3632, %v3629, %v3178
        %v3664 = vsel %vm3632, %v3631, %v3180
        %vm3665 = vcmask 162816
        %v3667 = vsel %vm3665, %v3634, %v3230
        %v3669 = vsel %vm3665, %v3636, %v3232
        %v3671 = vsel %vm3665, %v3638, %v3234
        %v3673 = vsel %vm3665, %v3640, %v3236
        %v3675 = vsel %vm3665, %v3642, %v3238
        %v3677 = vsel %vm3665, %v3644, %v3240
        %v3679 = vsel %vm3665, %v3646, %v3242
        %v3681 = vsel %vm3665, %v3648, %v3244
        %v3683 = vsel %vm3665, %v3650, %v3246
        %v3685 = vsel %vm3665, %v3652, %v3248
        %v3687 = vsel %vm3665, %v3654, %v3250
        %v3689 = vsel %vm3665, %v3656, %v3252
        %v3691 = vsel %vm3665, %v3658, %v3254
        %v3693 = vsel %vm3665, %v3660, %v3256
        %v3695 = vsel %vm3665, %v3662, %v3258
        %v3697 = vsel %vm3665, %v3664, %v3260
        %vm3698 = vcmask 195584
        %v3700 = vsel %vm3698, %v3667, %v3326
        %v3702 = vsel %vm3698, %v3669, %v3328
        %v3704 = vsel %vm3698, %v3671, %v3330
        %v3706 = vsel %vm3698, %v3673, %v3332
        %v3708 = vsel %vm3698, %v3675, %v3334
        %v3710 = vsel %vm3698, %v3677, %v3336
        %v3712 = vsel %vm3698, %v3679, %v3338
        %v3714 = vsel %vm3698, %v3681, %v3340
        %v3716 = vsel %vm3698, %v3683, %v3342
        %v3718 = vsel %vm3698, %v3685, %v3344
        %v3720 = vsel %vm3698, %v3687, %v3346
        %v3722 = vsel %vm3698, %v3689, %v3348
        %v3724 = vsel %vm3698, %v3691, %v3350
        %v3726 = vsel %vm3698, %v3693, %v3352
        %v3728 = vsel %vm3698, %v3695, %v3354
        %v3730 = vsel %vm3698, %v3697, %v3356
        %vm3731 = vcmask 228352
        %v3733 = vsel %vm3731, %v3700, %v3406
        %v3735 = vsel %vm3731, %v3702, %v3408
        %v3737 = vsel %vm3731, %v3704, %v3410
        %v3739 = vsel %vm3731, %v3706, %v3412
        %v3741 = vsel %vm3731, %v3708, %v3414
        %v3743 = vsel %vm3731, %v3710, %v3416
        %v3745 = vsel %vm3731, %v3712, %v3418
        %v3747 = vsel %vm3731, %v3714, %v3420
        %v3749 = vsel %vm3731, %v3716, %v3422
        %v3751 = vsel %vm3731, %v3718, %v3424
        %v3753 = vsel %vm3731, %v3720, %v3426
        %v3755 = vsel %vm3731, %v3722, %v3428
        %v3757 = vsel %vm3731, %v3724, %v3430
        %v3759 = vsel %vm3731, %v3726, %v3432
        %v3761 = vsel %vm3731, %v3728, %v3434
        %v3763 = vsel %vm3731, %v3730, %v3436
        %vm3764 = vcmask 261120
        %v3766 = vsel %vm3764, %v3733, %v3486
        %v3768 = vsel %vm3764, %v3735, %v3488
        %v3770 = vsel %vm3764, %v3737, %v3490
        %v3772 = vsel %vm3764, %v3739, %v3492
        %v3774 = vsel %vm3764, %v3741, %v3494
        %v3776 = vsel %vm3764, %v3743, %v3496
        %v3778 = vsel %vm3764, %v3745, %v3498
        %v3780 = vsel %vm3764, %v3747, %v3500
        %v3782 = vsel %vm3764, %v3749, %v3502
        %v3784 = vsel %vm3764, %v3751, %v3504
        %v3786 = vsel %vm3764, %v3753, %v3506
        %v3788 = vsel %vm3764, %v3755, %v3508
        %v3790 = vsel %vm3764, %v3757, %v3510
        %v3792 = vsel %vm3764, %v3759, %v3512
        %v3794 = vsel %vm3764, %v3761, %v3514
        %v3796 = vsel %vm3764, %v3763, %v3516
        %v3797 = vld [vmem:[%s1] sm:$0xf]
        %v3798 = vld [vmem:[%s1 + $0x4] sm:$0xf]
        %v3799 = vld [vmem:[%s1 + $0x8] sm:$0xf]
        %v3800 = vld [vmem:[%s1 + $0xc] sm:$0xf]
        %v3801 = vld [vmem:[%s1 + $0x10] sm:$0x3]
        %v3807 = vunpack.c.l.b16 %v3797
        %v3808 = vunpack.c.l.b16 %v3798
        %v3809 = vunpack.c.l.b16 %v3799
        %v3810 = vunpack.c.l.b16 %v3800
        %v3811 = vunpack.c.l.b16 %v3801
        %v3812 = vpack.c.b16 %v3808, %v3807
        %v3813 = vpack.c.b16 %v3810, %v3809
        %v3814 = vpack.c.b16 %v3811, %v3811
        %vm3817 = vcmask 293888
        %v3818 = vsel %vm3817, %v3766, 0
        %v3820 = vsel %vm3817, %v3768, 0
        %v3822 = vsel %vm3817, %v3770, 0
        %v3824 = vsel %vm3817, %v3772, 0
        %v3826 = vsel %vm3817, %v3774, 0
        %v3828 = vsel %vm3817, %v3776, 0
        %v3830 = vsel %vm3817, %v3778, 0
        %v3832 = vsel %vm3817, %v3780, 0
        %v3834 = vsel %vm3817, %v3782, 0
        %v3836 = vsel %vm3817, %v3784, 0
        %v3838 = vsel %vm3817, %v3786, 0
        %v3840 = vsel %vm3817, %v3788, 0
        %v3842 = vsel %vm3817, %v3790, 0
        %v3844 = vsel %vm3817, %v3792, 0
        %v3846 = vsel %vm3817, %v3794, 0
        %v3848 = vsel %vm3817, %v3796, 0
        %vm3850 = vcmask 1041408
        %v3852 = vsel %vm3850, %v3814, 0
        %3854 = vmatpush.bf16.msra.mxu0 0
        %3855 = vmatpush.bf16.msra.mxu0 0
        %3856 = vmatpush.bf16.msra.mxu0 0
        %3857 = vmatpush.bf16.msra.mxu0 0
        %3858 = vmatpush.bf16.msra.mxu0 0
        %3859 = vmatpush.bf16.msra.mxu0 %v3852
        %3860 = vmatpush.bf16.msra.mxu0 %v3813
        %3861 = vmatpush.bf16.msra.mxu0 %v3812
        %3862 = vmatmul.bf16.gmra.mxu0 %v3818
        %v3863 = vpop.f32.mrf.mxu0
        %v3864 = vadd.f32 0.0, %v3863
        %v3865 = vpop.f32.mrf.mxu0
        %v3866 = vadd.f32 0.0, %v3865
        %3867 = vmatmul.bf16.gmra.mxu0 %v3820
        %v3868 = vpop.f32.mrf.mxu0
        %v3869 = vadd.f32 0.0, %v3868
        %v3870 = vpop.f32.mrf.mxu0
        %v3871 = vadd.f32 0.0, %v3870
        %3872 = vmatmul.bf16.gmra.mxu0 %v3822
        %v3873 = vpop.f32.mrf.mxu0
        %v3874 = vadd.f32 0.0, %v3873
        %v3875 = vpop.f32.mrf.mxu0
        %v3876 = vadd.f32 0.0, %v3875
        %3877 = vmatmul.bf16.gmra.mxu0 %v3824
        %v3878 = vpop.f32.mrf.mxu0
        %v3879 = vadd.f32 0.0, %v3878
        %v3880 = vpop.f32.mrf.mxu0
        %v3881 = vadd.f32 0.0, %v3880
        %3882 = vmatmul.bf16.gmra.mxu0 %v3826
        %v3883 = vpop.f32.mrf.mxu0
        %v3884 = vadd.f32 0.0, %v3883
        %v3885 = vpop.f32.mrf.mxu0
        %v3886 = vadd.f32 0.0, %v3885
        %3887 = vmatmul.bf16.gmra.mxu0 %v3828
        %v3888 = vpop.f32.mrf.mxu0
        %v3889 = vadd.f32 0.0, %v3888
        %v3890 = vpop.f32.mrf.mxu0
        %v3891 = vadd.f32 0.0, %v3890
        %3892 = vmatmul.bf16.gmra.mxu0 %v3830
        %v3893 = vpop.f32.mrf.mxu0
        %v3894 = vadd.f32 0.0, %v3893
        %v3895 = vpop.f32.mrf.mxu0
        %v3896 = vadd.f32 0.0, %v3895
        %3897 = vmatmul.bf16.gmra.mxu0 %v3832
        %v3898 = vpop.f32.mrf.mxu0
        %v3899 = vadd.f32 0.0, %v3898
        %v3900 = vpop.f32.mrf.mxu0
        %v3901 = vadd.f32 0.0, %v3900
        %3902 = vmatmul.bf16.gmra.mxu0 %v3834
        %v3903 = vpop.f32.mrf.mxu0
        %v3904 = vadd.f32 0.0, %v3903
        %v3905 = vpop.f32.mrf.mxu0
        %v3906 = vadd.f32 0.0, %v3905
        %3907 = vmatmul.bf16.gmra.mxu0 %v3836
        %v3908 = vpop.f32.mrf.mxu0
        %v3909 = vadd.f32 0.0, %v3908
        %v3910 = vpop.f32.mrf.mxu0
        %v3911 = vadd.f32 0.0, %v3910
        %3912 = vmatmul.bf16.gmra.mxu0 %v3838
        %v3913 = vpop.f32.mrf.mxu0
        %v3914 = vadd.f32 0.0, %v3913
        %v3915 = vpop.f32.mrf.mxu0
        %v3916 = vadd.f32 0.0, %v3915
        %3917 = vmatmul.bf16.gmra.mxu0 %v3840
        %v3918 = vpop.f32.mrf.mxu0
        %v3919 = vadd.f32 0.0, %v3918
        %v3920 = vpop.f32.mrf.mxu0
        %v3921 = vadd.f32 0.0, %v3920
        %3922 = vmatmul.bf16.gmra.mxu0 %v3842
        %v3923 = vpop.f32.mrf.mxu0
        %v3924 = vadd.f32 0.0, %v3923
        %v3925 = vpop.f32.mrf.mxu0
        %v3926 = vadd.f32 0.0, %v3925
        %3927 = vmatmul.bf16.gmra.mxu0 %v3844
        %v3928 = vpop.f32.mrf.mxu0
        %v3929 = vadd.f32 0.0, %v3928
        %v3930 = vpop.f32.mrf.mxu0
        %v3931 = vadd.f32 0.0, %v3930
        %3932 = vmatmul.bf16.gmra.mxu0 %v3846
        %v3933 = vpop.f32.mrf.mxu0
        %v3934 = vadd.f32 0.0, %v3933
        %v3935 = vpop.f32.mrf.mxu0
        %v3936 = vadd.f32 0.0, %v3935
        %3937 = vmatmul.bf16.gmra.mxu0 %v3848
        %v3938 = vpop.f32.mrf.mxu0
        %v3939 = vadd.f32 0.0, %v3938
        %v3940 = vpop.f32.mrf.mxu0
        %v3941 = vadd.f32 0.0, %v3940
        %3942 = vdwg.mxu0
        %v3943 = vld [vmem:[%s2] sm:$0x1]
        %v3945 = vperm.slane %v3943, 0
        %v3947 = vmul.f32 %v3864, %v3945
        %v3948 = vmul.f32 %v3866, %v3945
        %v3949 = vmul.f32 %v3869, %v3945
        %v3950 = vmul.f32 %v3871, %v3945
        %v3951 = vmul.f32 %v3874, %v3945
        %v3952 = vmul.f32 %v3876, %v3945
        %v3953 = vmul.f32 %v3879, %v3945
        %v3954 = vmul.f32 %v3881, %v3945
        %v3955 = vmul.f32 %v3884, %v3945
        %v3956 = vmul.f32 %v3886, %v3945
        %v3957 = vmul.f32 %v3889, %v3945
        %v3958 = vmul.f32 %v3891, %v3945
        %v3959 = vmul.f32 %v3894, %v3945
        %v3960 = vmul.f32 %v3896, %v3945
        %v3961 = vmul.f32 %v3899, %v3945
        %v3962 = vmul.f32 %v3901, %v3945
        %v3963 = vmul.f32 %v3904, %v3945
        %v3964 = vmul.f32 %v3906, %v3945
        %v3965 = vmul.f32 %v3909, %v3945
        %v3966 = vmul.f32 %v3911, %v3945
        %v3967 = vmul.f32 %v3914, %v3945
        %v3968 = vmul.f32 %v3916, %v3945
        %v3969 = vmul.f32 %v3919, %v3945
        %v3970 = vmul.f32 %v3921, %v3945
        %v3971 = vmul.f32 %v3924, %v3945
        %v3972 = vmul.f32 %v3926, %v3945
        %v3973 = vmul.f32 %v3929, %v3945
        %v3974 = vmul.f32 %v3931, %v3945
        %v3975 = vmul.f32 %v3934, %v3945
        %v3976 = vmul.f32 %v3936, %v3945
        %v3977 = vmul.f32 %v3939, %v3945
        %v3978 = vmul.f32 %v3941, %v3945
        %v3979 = vld [vmem:[%s3] sm:$0x1]
        %v3981 = vperm.slane %v3979, 0
        %v3983 = vadd.f32 %v3947, %v3981
        %v3984 = vadd.f32 %v3948, %v3981
        %v3985 = vadd.f32 %v3949, %v3981
        %v3986 = vadd.f32 %v3950, %v3981
        %v3987 = vadd.f32 %v3951, %v3981
        %v3988 = vadd.f32 %v3952, %v3981
        %v3989 = vadd.f32 %v3953, %v3981
        %v3990 = vadd.f32 %v3954, %v3981
        %v3991 = vadd.f32 %v3955, %v3981
        %v3992 = vadd.f32 %v3956, %v3981
        %v3993 = vadd.f32 %v3957, %v3981
        %v3994 = vadd.f32 %v3958, %v3981
        %v3995 = vadd.f32 %v3959, %v3981
        %v3996 = vadd.f32 %v3960, %v3981
        %v3997 = vadd.f32 %v3961, %v3981
        %v3998 = vadd.f32 %v3962, %v3981
        %v3999 = vadd.f32 %v3963, %v3981
        %v4000 = vadd.f32 %v3964, %v3981
        %v4001 = vadd.f32 %v3965, %v3981
        %v4002 = vadd.f32 %v3966, %v3981
        %v4003 = vadd.f32 %v3967, %v3981
        %v4004 = vadd.f32 %v3968, %v3981
        %v4005 = vadd.f32 %v3969, %v3981
        %v4006 = vadd.f32 %v3970, %v3981
        %v4007 = vadd.f32 %v3971, %v3981
        %v4008 = vadd.f32 %v3972, %v3981
        %v4009 = vadd.f32 %v3973, %v3981
        %v4010 = vadd.f32 %v3974, %v3981
        %v4011 = vadd.f32 %v3975, %v3981
        %v4012 = vadd.f32 %v3976, %v3981
        %v4013 = vadd.f32 %v3977, %v3981
        %v4014 = vadd.f32 %v3978, %v3981
        %v4015 = vmax.f32 %v3983, 0.0
        %v4016 = vmax.f32 %v3984, 0.0
        %v4017 = vmax.f32 %v3985, 0.0
        %v4018 = vmax.f32 %v3986, 0.0
        %v4019 = vmax.f32 %v3987, 0.0
        %v4020 = vmax.f32 %v3988, 0.0
        %v4021 = vmax.f32 %v3989, 0.0
        %v4022 = vmax.f32 %v3990, 0.0
        %v4023 = vmax.f32 %v3991, 0.0
        %v4024 = vmax.f32 %v3992, 0.0
        %v4025 = vmax.f32 %v3993, 0.0
        %v4026 = vmax.f32 %v3994, 0.0
        %v4027 = vmax.f32 %v3995, 0.0
        %v4028 = vmax.f32 %v3996, 0.0
        %v4029 = vmax.f32 %v3997, 0.0
        %v4030 = vmax.f32 %v3998, 0.0
        %v4031 = vmax.f32 %v3999, 0.0
        %v4032 = vmax.f32 %v4000, 0.0
        %v4033 = vmax.f32 %v4001, 0.0
        %v4034 = vmax.f32 %v4002, 0.0
        %v4035 = vmax.f32 %v4003, 0.0
        %v4036 = vmax.f32 %v4004, 0.0
        %v4037 = vmax.f32 %v4005, 0.0
        %v4038 = vmax.f32 %v4006, 0.0
        %v4039 = vmax.f32 %v4007, 0.0
        %v4040 = vmax.f32 %v4008, 0.0
        %v4041 = vmax.f32 %v4009, 0.0
        %v4042 = vmax.f32 %v4010, 0.0
        %v4043 = vmax.f32 %v4011, 0.0
        %v4044 = vmax.f32 %v4012, 0.0
        %v4045 = vmax.f32 %v4013, 0.0
        %v4046 = vmax.f32 %v4014, 0.0
        %vm4047 = vcmask 60416
        %4048 = vst.msk [vmem:[#allocation3] sm:$0xf] %vm4047, 0
        %4049 = vst.msk [vmem:[#allocation3 + $0x4] sm:$0xf] %vm4047, 0
        %vm4050 = vcmask 57344
        %4051 = vst.msk [vmem:[#allocation3 + $0x8] sm:$0x1] %vm4050, 0
        %s4052 = scalar_lea.vmem [#allocation3], 204
        %4053 = vst.msk [vmem:[%s4052] sm:$0xf] %vm4047, 0
        %4054 = vst.msk [vmem:[%s4052 + $0x4] sm:$0xf] %vm4047, 0
        %4055 = vst.msk [vmem:[%s4052 + $0x8] sm:$0x1] %vm4050, 0
        %vm4056 = vcmask 57344
        %vm4057 = vmand %vm4056, %vm369
        %v4058 = vld [vmem:[#allocation3] sm:$0x1]
        %v4059 = vsel %vm4057, 0, %v4058
        %4060 = vst [vmem:[#allocation3] sm:$0x1] %v4059
        %v4061 = vld [vmem:[#allocation3 + $0xc] sm:$0x1]
        %v4062 = vsel %vm4057, 0, %v4061
        %4063 = vst [vmem:[#allocation3 + $0xc] sm:$0x1] %v4062
        %v4064 = vld [vmem:[#allocation3 + $0x18] sm:$0x1]
        %v4065 = vsel %vm4057, 0, %v4064
        %4066 = vst [vmem:[#allocation3 + $0x18] sm:$0x1] %v4065
        %v4067 = vld [vmem:[#allocation3 + $0x24] sm:$0x1]
        %v4068 = vsel %vm4057, 0, %v4067
        %4069 = vst [vmem:[#allocation3 + $0x24] sm:$0x1] %v4068
        %v4070 = vld [vmem:[#allocation3 + $0x30] sm:$0x1]
        %v4071 = vsel %vm4057, 0, %v4070
        %4072 = vst [vmem:[#allocation3 + $0x30] sm:$0x1] %v4071
        %v4073 = vld [vmem:[#allocation3 + $0x3c] sm:$0x1]
        %v4074 = vsel %vm4057, 0, %v4073
        %4075 = vst [vmem:[#allocation3 + $0x3c] sm:$0x1] %v4074
        %v4076 = vld [vmem:[#allocation3 + $0x48] sm:$0x1]
        %v4077 = vsel %vm4057, 0, %v4076
        %4078 = vst [vmem:[#allocation3 + $0x48] sm:$0x1] %v4077
        %v4079 = vld [vmem:[#allocation3 + $0x54] sm:$0x1]
        %v4080 = vsel %vm4057, 0, %v4079
        %4081 = vst [vmem:[#allocation3 + $0x54] sm:$0x1] %v4080
        %v4082 = vld [vmem:[#allocation3 + $0x60] sm:$0x1]
        %v4083 = vsel %vm4057, 0, %v4082
        %4084 = vst [vmem:[#allocation3 + $0x60] sm:$0x1] %v4083
        %v4085 = vld [vmem:[#allocation3 + $0x6c] sm:$0x1]
        %v4086 = vsel %vm4057, 0, %v4085
        %4087 = vst [vmem:[#allocation3 + $0x6c] sm:$0x1] %v4086
        %v4088 = vld [vmem:[#allocation3 + $0x78] sm:$0x1]
        %v4089 = vsel %vm4057, 0, %v4088
        %4090 = vst [vmem:[#allocation3 + $0x78] sm:$0x1] %v4089
        %v4091 = vld [vmem:[#allocation3 + $0x84] sm:$0x1]
        %v4092 = vsel %vm4057, 0, %v4091
        %4093 = vst [vmem:[#allocation3 + $0x84] sm:$0x1] %v4092
        %v4094 = vld [vmem:[#allocation3 + $0x90] sm:$0x1]
        %v4095 = vsel %vm4057, 0, %v4094
        %4096 = vst [vmem:[#allocation3 + $0x90] sm:$0x1] %v4095
        %v4097 = vld [vmem:[#allocation3 + $0x9c] sm:$0x1]
        %v4098 = vsel %vm4057, 0, %v4097
        %4099 = vst [vmem:[#allocation3 + $0x9c] sm:$0x1] %v4098
        %v4100 = vld [vmem:[#allocation3 + $0xa8] sm:$0x1]
        %v4101 = vsel %vm4057, 0, %v4100
        %4102 = vst [vmem:[#allocation3 + $0xa8] sm:$0x1] %v4101
        %v4103 = vld [vmem:[#allocation3 + $0xb4] sm:$0x1]
        %v4104 = vsel %vm4057, 0, %v4103
        %4105 = vst [vmem:[#allocation3 + $0xb4] sm:$0x1] %v4104
        %v4106 = vld [vmem:[#allocation3 + $0xc0] sm:$0x1]
        %v4107 = vsel %vm4057, 0, %v4106
        %4108 = vst [vmem:[#allocation3 + $0xc0] sm:$0x1] %v4107
        %v4109 = vld [vmem:[#allocation3 + $0xcc] sm:$0x1]
        %v4110 = vsel %vm4057, 0, %v4109
        %4111 = vst [vmem:[#allocation3 + $0xcc] sm:$0x1] %v4110
        %vm4112 = vmand %vm4056, %vm425
        %v4113 = vld [vmem:[#allocation3 + $0x8] sm:$0x1]
        %v4114 = vsel %vm4112, 0, %v4113
        %4115 = vst [vmem:[#allocation3 + $0x8] sm:$0x1] %v4114
        %v4116 = vld [vmem:[#allocation3 + $0x14] sm:$0x1]
        %v4117 = vsel %vm4112, 0, %v4116
        %4118 = vst [vmem:[#allocation3 + $0x14] sm:$0x1] %v4117
        %v4119 = vld [vmem:[#allocation3 + $0x20] sm:$0x1]
        %v4120 = vsel %vm4112, 0, %v4119
        %4121 = vst [vmem:[#allocation3 + $0x20] sm:$0x1] %v4120
        %v4122 = vld [vmem:[#allocation3 + $0x2c] sm:$0x1]
        %v4123 = vsel %vm4112, 0, %v4122
        %4124 = vst [vmem:[#allocation3 + $0x2c] sm:$0x1] %v4123
        %v4125 = vld [vmem:[#allocation3 + $0x38] sm:$0x1]
        %v4126 = vsel %vm4112, 0, %v4125
        %4127 = vst [vmem:[#allocation3 + $0x38] sm:$0x1] %v4126
        %v4128 = vld [vmem:[#allocation3 + $0x44] sm:$0x1]
        %v4129 = vsel %vm4112, 0, %v4128
        %4130 = vst [vmem:[#allocation3 + $0x44] sm:$0x1] %v4129
        %v4131 = vld [vmem:[#allocation3 + $0x50] sm:$0x1]
        %v4132 = vsel %vm4112, 0, %v4131
        %4133 = vst [vmem:[#allocation3 + $0x50] sm:$0x1] %v4132
        %v4134 = vld [vmem:[#allocation3 + $0x5c] sm:$0x1]
        %v4135 = vsel %vm4112, 0, %v4134
        %4136 = vst [vmem:[#allocation3 + $0x5c] sm:$0x1] %v4135
        %v4137 = vld [vmem:[#allocation3 + $0x68] sm:$0x1]
        %v4138 = vsel %vm4112, 0, %v4137
        %4139 = vst [vmem:[#allocation3 + $0x68] sm:$0x1] %v4138
        %v4140 = vld [vmem:[#allocation3 + $0x74] sm:$0x1]
        %v4141 = vsel %vm4112, 0, %v4140
        %4142 = vst [vmem:[#allocation3 + $0x74] sm:$0x1] %v4141
        %v4143 = vld [vmem:[#allocation3 + $0x80] sm:$0x1]
        %v4144 = vsel %vm4112, 0, %v4143
        %4145 = vst [vmem:[#allocation3 + $0x80] sm:$0x1] %v4144
        %v4146 = vld [vmem:[#allocation3 + $0x8c] sm:$0x1]
        %v4147 = vsel %vm4112, 0, %v4146
        %4148 = vst [vmem:[#allocation3 + $0x8c] sm:$0x1] %v4147
        %v4149 = vld [vmem:[#allocation3 + $0x98] sm:$0x1]
        %v4150 = vsel %vm4112, 0, %v4149
        %4151 = vst [vmem:[#allocation3 + $0x98] sm:$0x1] %v4150
        %v4152 = vld [vmem:[#allocation3 + $0xa4] sm:$0x1]
        %v4153 = vsel %vm4112, 0, %v4152
        %4154 = vst [vmem:[#allocation3 + $0xa4] sm:$0x1] %v4153
        %v4155 = vld [vmem:[#allocation3 + $0xb0] sm:$0x1]
        %v4156 = vsel %vm4112, 0, %v4155
        %4157 = vst [vmem:[#allocation3 + $0xb0] sm:$0x1] %v4156
        %v4158 = vld [vmem:[#allocation3 + $0xbc] sm:$0x1]
        %v4159 = vsel %vm4112, 0, %v4158
        %4160 = vst [vmem:[#allocation3 + $0xbc] sm:$0x1] %v4159
        %v4161 = vld [vmem:[#allocation3 + $0xc8] sm:$0x1]
        %v4162 = vsel %vm4112, 0, %v4161
        %4163 = vst [vmem:[#allocation3 + $0xc8] sm:$0x1] %v4162
        %v4164 = vld [vmem:[#allocation3 + $0xd4] sm:$0x1]
        %v4165 = vsel %vm4112, 0, %v4164
        %4166 = vst [vmem:[#allocation3 + $0xd4] sm:$0x1] %v4165
        %v4167 = vpack.c.bf16 %v4015, %v4015
        %v4168 = vpack.c.bf16 %v4016, %v4016
        %v4169 = vpack.c.bf16 %v4017, %v4017
        %v4170 = vpack.c.bf16 %v4018, %v4018
        %v4171 = vpack.c.bf16 %v4019, %v4019
        %v4172 = vpack.c.bf16 %v4020, %v4020
        %v4173 = vpack.c.bf16 %v4021, %v4021
        %v4174 = vpack.c.bf16 %v4022, %v4022
        %v4175 = vpack.c.bf16 %v4023, %v4023
        %v4176 = vpack.c.bf16 %v4024, %v4024
        %v4177 = vpack.c.bf16 %v4025, %v4025
        %v4178 = vpack.c.bf16 %v4026, %v4026
        %v4179 = vpack.c.bf16 %v4027, %v4027
        %v4180 = vpack.c.bf16 %v4028, %v4028
        %v4181 = vpack.c.bf16 %v4029, %v4029
        %v4182 = vpack.c.bf16 %v4030, %v4030
        %v4183 = vpack.c.bf16 %v4031, %v4031
        %v4184 = vpack.c.bf16 %v4032, %v4032
        %v4185 = vpack.c.bf16 %v4033, %v4033
        %v4186 = vpack.c.bf16 %v4034, %v4034
        %v4187 = vpack.c.bf16 %v4035, %v4035
        %v4188 = vpack.c.bf16 %v4036, %v4036
        %v4189 = vpack.c.bf16 %v4037, %v4037
        %v4190 = vpack.c.bf16 %v4038, %v4038
        %v4191 = vpack.c.bf16 %v4039, %v4039
        %v4192 = vpack.c.bf16 %v4040, %v4040
        %v4193 = vpack.c.bf16 %v4041, %v4041
        %v4194 = vpack.c.bf16 %v4042, %v4042
        %v4195 = vpack.c.bf16 %v4043, %v4043
        %v4196 = vpack.c.bf16 %v4044, %v4044
        %v4197 = vpack.c.bf16 %v4045, %v4045
        %v4198 = vpack.c.bf16 %v4046, %v4046
        %v4200 = vshrl.u32 %v4167, 16
        %v4202 = vrot.slane %v4200, 7
        %v4203 = vshll.u32 %v4167, 16
        %v4205 = vor.u32 %v4202, %v4203
        %v4206 = vrot.slane %v4202, 4
        %v4208 = vshrl.u32 %v4168, 16
        %v4210 = vrot.slane %v4208, 7
        %v4211 = vshll.u32 %v4168, 16
        %v4213 = vor.u32 %v4210, %v4211
        %v4214 = vsel %vm514, %v4206, %v4213
        %v4215 = vrot.slane %v4210, 4
        %v4217 = vshrl.u32 %v4169, 16
        %v4219 = vrot.slane %v4217, 7
        %v4220 = vshll.u32 %v4169, 16
        %v4222 = vor.u32 %v4219, %v4220
        %v4223 = vrot.slane %v4219, 4
        %v4225 = vshrl.u32 %v4170, 16
        %v4227 = vrot.slane %v4225, 7
        %v4228 = vshll.u32 %v4170, 16
        %v4230 = vor.u32 %v4227, %v4228
        %v4231 = vsel %vm514, %v4223, %v4230
        %v4232 = vrot.slane %v4227, 4
        %v4234 = vshrl.u32 %v4171, 16
        %v4236 = vrot.slane %v4234, 7
        %v4237 = vshll.u32 %v4171, 16
        %v4239 = vor.u32 %v4236, %v4237
        %v4240 = vrot.slane %v4236, 4
        %v4242 = vshrl.u32 %v4172, 16
        %v4244 = vrot.slane %v4242, 7
        %v4245 = vshll.u32 %v4172, 16
        %v4247 = vor.u32 %v4244, %v4245
        %v4248 = vsel %vm514, %v4240, %v4247
        %v4249 = vrot.slane %v4244, 4
        %v4251 = vshrl.u32 %v4173, 16
        %v4253 = vrot.slane %v4251, 7
        %v4254 = vshll.u32 %v4173, 16
        %v4256 = vor.u32 %v4253, %v4254
        %v4257 = vrot.slane %v4253, 4
        %v4259 = vshrl.u32 %v4174, 16
        %v4261 = vrot.slane %v4259, 7
        %v4262 = vshll.u32 %v4174, 16
        %v4264 = vor.u32 %v4261, %v4262
        %v4265 = vsel %vm514, %v4257, %v4264
        %v4266 = vrot.slane %v4261, 4
        %v4268 = vshrl.u32 %v4175, 16
        %v4270 = vrot.slane %v4268, 7
        %v4271 = vshll.u32 %v4175, 16
        %v4273 = vor.u32 %v4270, %v4271
        %v4274 = vrot.slane %v4270, 4
        %v4276 = vshrl.u32 %v4176, 16
        %v4278 = vrot.slane %v4276, 7
        %v4279 = vshll.u32 %v4176, 16
        %v4281 = vor.u32 %v4278, %v4279
        %v4282 = vsel %vm514, %v4274, %v4281
        %v4283 = vrot.slane %v4278, 4
        %v4285 = vshrl.u32 %v4177, 16
        %v4287 = vrot.slane %v4285, 7
        %v4288 = vshll.u32 %v4177, 16
        %v4290 = vor.u32 %v4287, %v4288
        %v4291 = vrot.slane %v4287, 4
        %v4293 = vshrl.u32 %v4178, 16
        %v4295 = vrot.slane %v4293, 7
        %v4296 = vshll.u32 %v4178, 16
        %v4298 = vor.u32 %v4295, %v4296
        %v4299 = vsel %vm514, %v4291, %v4298
        %v4300 = vrot.slane %v4295, 4
        %v4302 = vshrl.u32 %v4179, 16
        %v4304 = vrot.slane %v4302, 7
        %v4305 = vshll.u32 %v4179, 16
        %v4307 = vor.u32 %v4304, %v4305
        %v4308 = vrot.slane %v4304, 4
        %v4310 = vshrl.u32 %v4180, 16
        %v4312 = vrot.slane %v4310, 7
        %v4313 = vshll.u32 %v4180, 16
        %v4315 = vor.u32 %v4312, %v4313
        %v4316 = vsel %vm514, %v4308, %v4315
        %v4317 = vrot.slane %v4312, 4
        %v4319 = vshrl.u32 %v4181, 16
        %v4321 = vrot.slane %v4319, 7
        %v4322 = vshll.u32 %v4181, 16
        %v4324 = vor.u32 %v4321, %v4322
        %v4325 = vrot.slane %v4321, 4
        %v4327 = vshrl.u32 %v4182, 16
        %v4329 = vrot.slane %v4327, 7
        %v4330 = vshll.u32 %v4182, 16
        %v4332 = vor.u32 %v4329, %v4330
        %v4333 = vsel %vm514, %v4325, %v4332
        %v4334 = vrot.slane %v4329, 4
        %v4336 = vshrl.u32 %v4183, 16
        %v4338 = vrot.slane %v4336, 7
        %v4339 = vshll.u32 %v4183, 16
        %v4341 = vor.u32 %v4338, %v4339
        %v4342 = vrot.slane %v4338, 4
        %v4344 = vshrl.u32 %v4184, 16
        %v4346 = vrot.slane %v4344, 7
        %v4347 = vshll.u32 %v4184, 16
        %v4349 = vor.u32 %v4346, %v4347
        %v4350 = vsel %vm514, %v4342, %v4349
        %v4351 = vrot.slane %v4346, 4
        %v4353 = vshrl.u32 %v4185, 16
        %v4355 = vrot.slane %v4353, 7
        %v4356 = vshll.u32 %v4185, 16
        %v4358 = vor.u32 %v4355, %v4356
        %v4359 = vrot.slane %v4355, 4
        %v4361 = vshrl.u32 %v4186, 16
        %v4363 = vrot.slane %v4361, 7
        %v4364 = vshll.u32 %v4186, 16
        %v4366 = vor.u32 %v4363, %v4364
        %v4367 = vsel %vm514, %v4359, %v4366
        %v4368 = vrot.slane %v4363, 4
        %v4370 = vshrl.u32 %v4187, 16
        %v4372 = vrot.slane %v4370, 7
        %v4373 = vshll.u32 %v4187, 16
        %v4375 = vor.u32 %v4372, %v4373
        %v4376 = vrot.slane %v4372, 4
        %v4378 = vshrl.u32 %v4188, 16
        %v4380 = vrot.slane %v4378, 7
        %v4381 = vshll.u32 %v4188, 16
        %v4383 = vor.u32 %v4380, %v4381
        %v4384 = vsel %vm514, %v4376, %v4383
        %v4385 = vrot.slane %v4380, 4
        %v4387 = vshrl.u32 %v4189, 16
        %v4389 = vrot.slane %v4387, 7
        %v4390 = vshll.u32 %v4189, 16
        %v4392 = vor.u32 %v4389, %v4390
        %v4393 = vrot.slane %v4389, 4
        %v4395 = vshrl.u32 %v4190, 16
        %v4397 = vrot.slane %v4395, 7
        %v4398 = vshll.u32 %v4190, 16
        %v4400 = vor.u32 %v4397, %v4398
        %v4401 = vsel %vm514, %v4393, %v4400
        %v4402 = vrot.slane %v4397, 4
        %v4404 = vshrl.u32 %v4191, 16
        %v4406 = vrot.slane %v4404, 7
        %v4407 = vshll.u32 %v4191, 16
        %v4409 = vor.u32 %v4406, %v4407
        %v4410 = vrot.slane %v4406, 4
        %v4412 = vshrl.u32 %v4192, 16
        %v4414 = vrot.slane %v4412, 7
        %v4415 = vshll.u32 %v4192, 16
        %v4417 = vor.u32 %v4414, %v4415
        %v4418 = vsel %vm514, %v4410, %v4417
        %v4419 = vrot.slane %v4414, 4
        %v4421 = vshrl.u32 %v4193, 16
        %v4423 = vrot.slane %v4421, 7
        %v4424 = vshll.u32 %v4193, 16
        %v4426 = vor.u32 %v4423, %v4424
        %v4427 = vrot.slane %v4423, 4
        %v4429 = vshrl.u32 %v4194, 16
        %v4431 = vrot.slane %v4429, 7
        %v4432 = vshll.u32 %v4194, 16
        %v4434 = vor.u32 %v4431, %v4432
        %v4435 = vsel %vm514, %v4427, %v4434
        %v4436 = vrot.slane %v4431, 4
        %v4438 = vshrl.u32 %v4195, 16
        %v4440 = vrot.slane %v4438, 7
        %v4441 = vshll.u32 %v4195, 16
        %v4443 = vor.u32 %v4440, %v4441
        %v4444 = vrot.slane %v4440, 4
        %v4446 = vshrl.u32 %v4196, 16
        %v4448 = vrot.slane %v4446, 7
        %v4449 = vshll.u32 %v4196, 16
        %v4451 = vor.u32 %v4448, %v4449
        %v4452 = vsel %vm514, %v4444, %v4451
        %v4453 = vrot.slane %v4448, 4
        %v4455 = vshrl.u32 %v4197, 16
        %v4457 = vrot.slane %v4455, 7
        %v4458 = vshll.u32 %v4197, 16
        %v4460 = vor.u32 %v4457, %v4458
        %v4461 = vrot.slane %v4457, 4
        %v4463 = vshrl.u32 %v4198, 16
        %v4465 = vrot.slane %v4463, 7
        %v4466 = vshll.u32 %v4198, 16
        %v4468 = vor.u32 %v4465, %v4466
        %v4469 = vsel %vm514, %v4461, %v4468
        %v4470 = vrot.slane %v4465, 4
        %s4519 = scalar_lea.vmem [#allocation3], 12
        %vm4520 = vcmask 60416
        %vm4521 = vmand %vm4520, %vm425
        %v4522 = vld [vmem:[%s4519] sm:$0xf]
        %v4523 = vsel %vm4521, %v4205, %v4522
        %4524 = vst [vmem:[%s4519] sm:$0xf] %v4523
        %4525 = vst.msk [vmem:[%s4519 + $0x4] sm:$0xf] %vm4047, %v4214
        %v4526 = vld [vmem:[%s4519 + $0x8] sm:$0x1]
        %v4527 = vsel %vm4057, %v4215, %v4526
        %4528 = vst [vmem:[%s4519 + $0x8] sm:$0x1] %v4527
        %v4529 = vld [vmem:[%s4519 + $0xc] sm:$0xf]
        %v4530 = vsel %vm4521, %v4222, %v4529
        %4531 = vst [vmem:[%s4519 + $0xc] sm:$0xf] %v4530
        %4532 = vst.msk [vmem:[%s4519 + $0x10] sm:$0xf] %vm4047, %v4231
        %v4533 = vld [vmem:[%s4519 + $0x14] sm:$0x1]
        %v4534 = vsel %vm4057, %v4232, %v4533
        %4535 = vst [vmem:[%s4519 + $0x14] sm:$0x1] %v4534
        %v4536 = vld [vmem:[%s4519 + $0x18] sm:$0xf]
        %v4537 = vsel %vm4521, %v4239, %v4536
        %4538 = vst [vmem:[%s4519 + $0x18] sm:$0xf] %v4537
        %4539 = vst.msk [vmem:[%s4519 + $0x1c] sm:$0xf] %vm4047, %v4248
        %v4540 = vld [vmem:[%s4519 + $0x20] sm:$0x1]
        %v4541 = vsel %vm4057, %v4249, %v4540
        %4542 = vst [vmem:[%s4519 + $0x20] sm:$0x1] %v4541
        %v4543 = vld [vmem:[%s4519 + $0x24] sm:$0xf]
        %v4544 = vsel %vm4521, %v4256, %v4543
        %4545 = vst [vmem:[%s4519 + $0x24] sm:$0xf] %v4544
        %4546 = vst.msk [vmem:[%s4519 + $0x28] sm:$0xf] %vm4047, %v4265
        %v4547 = vld [vmem:[%s4519 + $0x2c] sm:$0x1]
        %v4548 = vsel %vm4057, %v4266, %v4547
        %4549 = vst [vmem:[%s4519 + $0x2c] sm:$0x1] %v4548
        %v4550 = vld [vmem:[%s4519 + $0x30] sm:$0xf]
        %v4551 = vsel %vm4521, %v4273, %v4550
        %4552 = vst [vmem:[%s4519 + $0x30] sm:$0xf] %v4551
        %4553 = vst.msk [vmem:[%s4519 + $0x34] sm:$0xf] %vm4047, %v4282
        %v4554 = vld [vmem:[%s4519 + $0x38] sm:$0x1]
        %v4555 = vsel %vm4057, %v4283, %v4554
        %4556 = vst [vmem:[%s4519 + $0x38] sm:$0x1] %v4555
        %v4557 = vld [vmem:[%s4519 + $0x3c] sm:$0xf]
        %v4558 = vsel %vm4521, %v4290, %v4557
        %4559 = vst [vmem:[%s4519 + $0x3c] sm:$0xf] %v4558
        %4560 = vst.msk [vmem:[%s4519 + $0x40] sm:$0xf] %vm4047, %v4299
        %v4561 = vld [vmem:[%s4519 + $0x44] sm:$0x1]
        %v4562 = vsel %vm4057, %v4300, %v4561
        %4563 = vst [vmem:[%s4519 + $0x44] sm:$0x1] %v4562
        %v4564 = vld [vmem:[%s4519 + $0x48] sm:$0xf]
        %v4565 = vsel %vm4521, %v4307, %v4564
        %4566 = vst [vmem:[%s4519 + $0x48] sm:$0xf] %v4565
        %4567 = vst.msk [vmem:[%s4519 + $0x4c] sm:$0xf] %vm4047, %v4316
        %v4568 = vld [vmem:[%s4519 + $0x50] sm:$0x1]
        %v4569 = vsel %vm4057, %v4317, %v4568
        %4570 = vst [vmem:[%s4519 + $0x50] sm:$0x1] %v4569
        %v4571 = vld [vmem:[%s4519 + $0x54] sm:$0xf]
        %v4572 = vsel %vm4521, %v4324, %v4571
        %4573 = vst [vmem:[%s4519 + $0x54] sm:$0xf] %v4572
        %4574 = vst.msk [vmem:[%s4519 + $0x58] sm:$0xf] %vm4047, %v4333
        %v4575 = vld [vmem:[%s4519 + $0x5c] sm:$0x1]
        %v4576 = vsel %vm4057, %v4334, %v4575
        %4577 = vst [vmem:[%s4519 + $0x5c] sm:$0x1] %v4576
        %v4578 = vld [vmem:[%s4519 + $0x60] sm:$0xf]
        %v4579 = vsel %vm4521, %v4341, %v4578
        %4580 = vst [vmem:[%s4519 + $0x60] sm:$0xf] %v4579
        %4581 = vst.msk [vmem:[%s4519 + $0x64] sm:$0xf] %vm4047, %v4350
        %v4582 = vld [vmem:[%s4519 + $0x68] sm:$0x1]
        %v4583 = vsel %vm4057, %v4351, %v4582
        %4584 = vst [vmem:[%s4519 + $0x68] sm:$0x1] %v4583
        %v4585 = vld [vmem:[%s4519 + $0x6c] sm:$0xf]
        %v4586 = vsel %vm4521, %v4358, %v4585
        %4587 = vst [vmem:[%s4519 + $0x6c] sm:$0xf] %v4586
        %4588 = vst.msk [vmem:[%s4519 + $0x70] sm:$0xf] %vm4047, %v4367
        %v4589 = vld [vmem:[%s4519 + $0x74] sm:$0x1]
        %v4590 = vsel %vm4057, %v4368, %v4589
        %4591 = vst [vmem:[%s4519 + $0x74] sm:$0x1] %v4590
        %v4592 = vld [vmem:[%s4519 + $0x78] sm:$0xf]
        %v4593 = vsel %vm4521, %v4375, %v4592
        %4594 = vst [vmem:[%s4519 + $0x78] sm:$0xf] %v4593
        %4595 = vst.msk [vmem:[%s4519 + $0x7c] sm:$0xf] %vm4047, %v4384
        %v4596 = vld [vmem:[%s4519 + $0x80] sm:$0x1]
        %v4597 = vsel %vm4057, %v4385, %v4596
        %4598 = vst [vmem:[%s4519 + $0x80] sm:$0x1] %v4597
        %v4599 = vld [vmem:[%s4519 + $0x84] sm:$0xf]
        %v4600 = vsel %vm4521, %v4392, %v4599
        %4601 = vst [vmem:[%s4519 + $0x84] sm:$0xf] %v4600
        %4602 = vst.msk [vmem:[%s4519 + $0x88] sm:$0xf] %vm4047, %v4401
        %v4603 = vld [vmem:[%s4519 + $0x8c] sm:$0x1]
        %v4604 = vsel %vm4057, %v4402, %v4603
        %4605 = vst [vmem:[%s4519 + $0x8c] sm:$0x1] %v4604
        %v4606 = vld [vmem:[%s4519 + $0x90] sm:$0xf]
        %v4607 = vsel %vm4521, %v4409, %v4606
        %4608 = vst [vmem:[%s4519 + $0x90] sm:$0xf] %v4607
        %4609 = vst.msk [vmem:[%s4519 + $0x94] sm:$0xf] %vm4047, %v4418
        %v4610 = vld [vmem:[%s4519 + $0x98] sm:$0x1]
        %v4611 = vsel %vm4057, %v4419, %v4610
        %4612 = vst [vmem:[%s4519 + $0x98] sm:$0x1] %v4611
        %v4613 = vld [vmem:[%s4519 + $0x9c] sm:$0xf]
        %v4614 = vsel %vm4521, %v4426, %v4613
        %4615 = vst [vmem:[%s4519 + $0x9c] sm:$0xf] %v4614
        %4616 = vst.msk [vmem:[%s4519 + $0xa0] sm:$0xf] %vm4047, %v4435
        %v4617 = vld [vmem:[%s4519 + $0xa4] sm:$0x1]
        %v4618 = vsel %vm4057, %v4436, %v4617
        %4619 = vst [vmem:[%s4519 + $0xa4] sm:$0x1] %v4618
        %v4620 = vld [vmem:[%s4519 + $0xa8] sm:$0xf]
        %v4621 = vsel %vm4521, %v4443, %v4620
        %4622 = vst [vmem:[%s4519 + $0xa8] sm:$0xf] %v4621
        %4623 = vst.msk [vmem:[%s4519 + $0xac] sm:$0xf] %vm4047, %v4452
        %v4624 = vld [vmem:[%s4519 + $0xb0] sm:$0x1]
        %v4625 = vsel %vm4057, %v4453, %v4624
        %4626 = vst [vmem:[%s4519 + $0xb0] sm:$0x1] %v4625
        %v4627 = vld [vmem:[%s4519 + $0xb4] sm:$0xf]
        %v4628 = vsel %vm4521, %v4460, %v4627
        %4629 = vst [vmem:[%s4519 + $0xb4] sm:$0xf] %v4628
        %4630 = vst.msk [vmem:[%s4519 + $0xb8] sm:$0xf] %vm4047, %v4469
        %v4631 = vld [vmem:[%s4519 + $0xbc] sm:$0x1]
        %v4632 = vsel %vm4057, %v4470, %v4631
        %4633 = vst [vmem:[%s4519 + $0xbc] sm:$0x1] %v4632
        %v4634 = vld [vmem:[#allocation3] sm:$0xf]
        %v4635 = vld [vmem:[#allocation3 + $0x4] sm:$0xf]
        %v4636 = vld [vmem:[#allocation3 + $0xc] sm:$0xf]
        %v4637 = vld [vmem:[#allocation3 + $0x10] sm:$0xf]
        %v4638 = vld [vmem:[#allocation3 + $0x18] sm:$0xf]
        %v4639 = vld [vmem:[#allocation3 + $0x1c] sm:$0xf]
        %v4640 = vld [vmem:[#allocation3 + $0x24] sm:$0xf]
        %v4641 = vld [vmem:[#allocation3 + $0x28] sm:$0xf]
        %v4642 = vld [vmem:[#allocation3 + $0x30] sm:$0xf]
        %v4643 = vld [vmem:[#allocation3 + $0x34] sm:$0xf]
        %v4644 = vld [vmem:[#allocation3 + $0x3c] sm:$0xf]
        %v4645 = vld [vmem:[#allocation3 + $0x40] sm:$0xf]
        %v4646 = vld [vmem:[#allocation3 + $0x48] sm:$0xf]
        %v4647 = vld [vmem:[#allocation3 + $0x4c] sm:$0xf]
        %v4648 = vld [vmem:[#allocation3 + $0x54] sm:$0xf]
        %v4649 = vld [vmem:[#allocation3 + $0x58] sm:$0xf]
        %v4650 = vld [vmem:[#allocation3 + $0x60] sm:$0xf]
        %v4651 = vld [vmem:[#allocation3 + $0x64] sm:$0xf]
        %v4652 = vld [vmem:[#allocation3 + $0x6c] sm:$0xf]
        %v4653 = vld [vmem:[#allocation3 + $0x70] sm:$0xf]
        %v4654 = vld [vmem:[#allocation3 + $0x78] sm:$0xf]
        %v4655 = vld [vmem:[#allocation3 + $0x7c] sm:$0xf]
        %v4656 = vld [vmem:[#allocation3 + $0x84] sm:$0xf]
        %v4657 = vld [vmem:[#allocation3 + $0x88] sm:$0xf]
        %v4658 = vld [vmem:[#allocation3 + $0x90] sm:$0xf]
        %v4659 = vld [vmem:[#allocation3 + $0x94] sm:$0xf]
        %v4660 = vld [vmem:[#allocation3 + $0x9c] sm:$0xf]
        %v4661 = vld [vmem:[#allocation3 + $0xa0] sm:$0xf]
        %v4662 = vld [vmem:[#allocation3 + $0xa8] sm:$0xf]
        %v4663 = vld [vmem:[#allocation3 + $0xac] sm:$0xf]
        %v4664 = vld [vmem:[#allocation3 + $0xb4] sm:$0xf]
        %v4665 = vld [vmem:[#allocation3 + $0xb8] sm:$0xf]
        %v4666 = vld [vmem:[#allocation3 + $0x8] sm:$0x1]
        %v4667 = vld [vmem:[#allocation3 + $0x14] sm:$0x1]
        %v4668 = vld [vmem:[#allocation3 + $0x20] sm:$0x1]
        %v4669 = vld [vmem:[#allocation3 + $0x2c] sm:$0x1]
        %v4670 = vld [vmem:[#allocation3 + $0x38] sm:$0x1]
        %v4671 = vld [vmem:[#allocation3 + $0x44] sm:$0x1]
        %v4672 = vld [vmem:[#allocation3 + $0x50] sm:$0x1]
        %v4673 = vld [vmem:[#allocation3 + $0x5c] sm:$0x1]
        %v4674 = vld [vmem:[#allocation3 + $0x68] sm:$0x1]
        %v4675 = vld [vmem:[#allocation3 + $0x74] sm:$0x1]
        %v4676 = vld [vmem:[#allocation3 + $0x80] sm:$0x1]
        %v4677 = vld [vmem:[#allocation3 + $0x8c] sm:$0x1]
        %v4678 = vld [vmem:[#allocation3 + $0x98] sm:$0x1]
        %v4679 = vld [vmem:[#allocation3 + $0xa4] sm:$0x1]
        %v4680 = vld [vmem:[#allocation3 + $0xb0] sm:$0x1]
        %v4681 = vld [vmem:[#allocation3 + $0xbc] sm:$0x1]
        %v4683 = vshrl.u32 %v4634, 16
        %v4685 = vrot.slane %v4683, 4
        %v4686 = vshll.u32 %v4634, 16
        %v4688 = vrot.slane %v4686, 5
        %v4689 = vor.u32 %v4685, %v4688
        %v4690 = vrot.slane %v4689, 4
        %v4692 = vshll.u32 %v4635, 16
        %v4694 = vrot.slane %v4692, 5
        %v4695 = vsel %vm1000, %v4690, %v4694
        %v4696 = vshrl.u32 %v4635, 16
        %v4698 = vrot.slane %v4696, 4
        %v4699 = vor.u32 %v4698, %v4694
        %v4700 = vrot.slane %v4699, 4
        %v4702 = vshll.u32 %v4666, 16
        %v4704 = vrot.slane %v4702, 5
        %v4705 = vsel %vm1000, %v4700, %v4704
        %v4707 = vshrl.u32 %v4636, 16
        %v4709 = vrot.slane %v4707, 4
        %v4710 = vshll.u32 %v4636, 16
        %v4712 = vrot.slane %v4710, 5
        %v4713 = vor.u32 %v4709, %v4712
        %v4714 = vrot.slane %v4713, 4
        %v4716 = vshll.u32 %v4637, 16
        %v4718 = vrot.slane %v4716, 5
        %v4719 = vsel %vm1000, %v4714, %v4718
        %v4720 = vshrl.u32 %v4637, 16
        %v4722 = vrot.slane %v4720, 4
        %v4723 = vor.u32 %v4722, %v4718
        %v4724 = vrot.slane %v4723, 4
        %v4726 = vshll.u32 %v4667, 16
        %v4728 = vrot.slane %v4726, 5
        %v4729 = vsel %vm1000, %v4724, %v4728
        %v4731 = vshrl.u32 %v4638, 16
        %v4733 = vrot.slane %v4731, 4
        %v4734 = vshll.u32 %v4638, 16
        %v4736 = vrot.slane %v4734, 5
        %v4737 = vor.u32 %v4733, %v4736
        %v4738 = vrot.slane %v4737, 4
        %v4740 = vshll.u32 %v4639, 16
        %v4742 = vrot.slane %v4740, 5
        %v4743 = vsel %vm1000, %v4738, %v4742
        %v4744 = vshrl.u32 %v4639, 16
        %v4746 = vrot.slane %v4744, 4
        %v4747 = vor.u32 %v4746, %v4742
        %v4748 = vrot.slane %v4747, 4
        %v4750 = vshll.u32 %v4668, 16
        %v4752 = vrot.slane %v4750, 5
        %v4753 = vsel %vm1000, %v4748, %v4752
        %v4755 = vshrl.u32 %v4640, 16
        %v4757 = vrot.slane %v4755, 4
        %v4758 = vshll.u32 %v4640, 16
        %v4760 = vrot.slane %v4758, 5
        %v4761 = vor.u32 %v4757, %v4760
        %v4762 = vrot.slane %v4761, 4
        %v4764 = vshll.u32 %v4641, 16
        %v4766 = vrot.slane %v4764, 5
        %v4767 = vsel %vm1000, %v4762, %v4766
        %v4768 = vshrl.u32 %v4641, 16
        %v4770 = vrot.slane %v4768, 4
        %v4771 = vor.u32 %v4770, %v4766
        %v4772 = vrot.slane %v4771, 4
        %v4774 = vshll.u32 %v4669, 16
        %v4776 = vrot.slane %v4774, 5
        %v4777 = vsel %vm1000, %v4772, %v4776
        %v4779 = vshrl.u32 %v4642, 16
        %v4781 = vrot.slane %v4779, 4
        %v4782 = vshll.u32 %v4642, 16
        %v4784 = vrot.slane %v4782, 5
        %v4785 = vor.u32 %v4781, %v4784
        %v4786 = vrot.slane %v4785, 4
        %v4788 = vshll.u32 %v4643, 16
        %v4790 = vrot.slane %v4788, 5
        %v4791 = vsel %vm1000, %v4786, %v4790
        %v4792 = vshrl.u32 %v4643, 16
        %v4794 = vrot.slane %v4792, 4
        %v4795 = vor.u32 %v4794, %v4790
        %v4796 = vrot.slane %v4795, 4
        %v4798 = vshll.u32 %v4670, 16
        %v4800 = vrot.slane %v4798, 5
        %v4801 = vsel %vm1000, %v4796, %v4800
        %v4803 = vshrl.u32 %v4644, 16
        %v4805 = vrot.slane %v4803, 4
        %v4806 = vshll.u32 %v4644, 16
        %v4808 = vrot.slane %v4806, 5
        %v4809 = vor.u32 %v4805, %v4808
        %v4810 = vrot.slane %v4809, 4
        %v4812 = vshll.u32 %v4645, 16
        %v4814 = vrot.slane %v4812, 5
        %v4815 = vsel %vm1000, %v4810, %v4814
        %v4816 = vshrl.u32 %v4645, 16
        %v4818 = vrot.slane %v4816, 4
        %v4819 = vor.u32 %v4818, %v4814
        %v4820 = vrot.slane %v4819, 4
        %v4822 = vshll.u32 %v4671, 16
        %v4824 = vrot.slane %v4822, 5
        %v4825 = vsel %vm1000, %v4820, %v4824
        %v4827 = vshrl.u32 %v4646, 16
        %v4829 = vrot.slane %v4827, 4
        %v4830 = vshll.u32 %v4646, 16
        %v4832 = vrot.slane %v4830, 5
        %v4833 = vor.u32 %v4829, %v4832
        %v4834 = vrot.slane %v4833, 4
        %v4836 = vshll.u32 %v4647, 16
        %v4838 = vrot.slane %v4836, 5
        %v4839 = vsel %vm1000, %v4834, %v4838
        %v4840 = vshrl.u32 %v4647, 16
        %v4842 = vrot.slane %v4840, 4
        %v4843 = vor.u32 %v4842, %v4838
        %v4844 = vrot.slane %v4843, 4
        %v4846 = vshll.u32 %v4672, 16
        %v4848 = vrot.slane %v4846, 5
        %v4849 = vsel %vm1000, %v4844, %v4848
        %v4851 = vshrl.u32 %v4648, 16
        %v4853 = vrot.slane %v4851, 4
        %v4854 = vshll.u32 %v4648, 16
        %v4856 = vrot.slane %v4854, 5
        %v4857 = vor.u32 %v4853, %v4856
        %v4858 = vrot.slane %v4857, 4
        %v4860 = vshll.u32 %v4649, 16
        %v4862 = vrot.slane %v4860, 5
        %v4863 = vsel %vm1000, %v4858, %v4862
        %v4864 = vshrl.u32 %v4649, 16
        %v4866 = vrot.slane %v4864, 4
        %v4867 = vor.u32 %v4866, %v4862
        %v4868 = vrot.slane %v4867, 4
        %v4870 = vshll.u32 %v4673, 16
        %v4872 = vrot.slane %v4870, 5
        %v4873 = vsel %vm1000, %v4868, %v4872
        %v4875 = vshrl.u32 %v4650, 16
        %v4877 = vrot.slane %v4875, 4
        %v4878 = vshll.u32 %v4650, 16
        %v4880 = vrot.slane %v4878, 5
        %v4881 = vor.u32 %v4877, %v4880
        %v4882 = vrot.slane %v4881, 4
        %v4884 = vshll.u32 %v4651, 16
        %v4886 = vrot.slane %v4884, 5
        %v4887 = vsel %vm1000, %v4882, %v4886
        %v4888 = vshrl.u32 %v4651, 16
        %v4890 = vrot.slane %v4888, 4
        %v4891 = vor.u32 %v4890, %v4886
        %v4892 = vrot.slane %v4891, 4
        %v4894 = vshll.u32 %v4674, 16
        %v4896 = vrot.slane %v4894, 5
        %v4897 = vsel %vm1000, %v4892, %v4896
        %v4899 = vshrl.u32 %v4652, 16
        %v4901 = vrot.slane %v4899, 4
        %v4902 = vshll.u32 %v4652, 16
        %v4904 = vrot.slane %v4902, 5
        %v4905 = vor.u32 %v4901, %v4904
        %v4906 = vrot.slane %v4905, 4
        %v4908 = vshll.u32 %v4653, 16
        %v4910 = vrot.slane %v4908, 5
        %v4911 = vsel %vm1000, %v4906, %v4910
        %v4912 = vshrl.u32 %v4653, 16
        %v4914 = vrot.slane %v4912, 4
        %v4915 = vor.u32 %v4914, %v4910
        %v4916 = vrot.slane %v4915, 4
        %v4918 = vshll.u32 %v4675, 16
        %v4920 = vrot.slane %v4918, 5
        %v4921 = vsel %vm1000, %v4916, %v4920
        %v4923 = vshrl.u32 %v4654, 16
        %v4925 = vrot.slane %v4923, 4
        %v4926 = vshll.u32 %v4654, 16
        %v4928 = vrot.slane %v4926, 5
        %v4929 = vor.u32 %v4925, %v4928
        %v4930 = vrot.slane %v4929, 4
        %v4932 = vshll.u32 %v4655, 16
        %v4934 = vrot.slane %v4932, 5
        %v4935 = vsel %vm1000, %v4930, %v4934
        %v4936 = vshrl.u32 %v4655, 16
        %v4938 = vrot.slane %v4936, 4
        %v4939 = vor.u32 %v4938, %v4934
        %v4940 = vrot.slane %v4939, 4
        %v4942 = vshll.u32 %v4676, 16
        %v4944 = vrot.slane %v4942, 5
        %v4945 = vsel %vm1000, %v4940, %v4944
        %v4947 = vshrl.u32 %v4656, 16
        %v4949 = vrot.slane %v4947, 4
        %v4950 = vshll.u32 %v4656, 16
        %v4952 = vrot.slane %v4950, 5
        %v4953 = vor.u32 %v4949, %v4952
        %v4954 = vrot.slane %v4953, 4
        %v4956 = vshll.u32 %v4657, 16
        %v4958 = vrot.slane %v4956, 5
        %v4959 = vsel %vm1000, %v4954, %v4958
        %v4960 = vshrl.u32 %v4657, 16
        %v4962 = vrot.slane %v4960, 4
        %v4963 = vor.u32 %v4962, %v4958
        %v4964 = vrot.slane %v4963, 4
        %v4966 = vshll.u32 %v4677, 16
        %v4968 = vrot.slane %v4966, 5
        %v4969 = vsel %vm1000, %v4964, %v4968
        %v4971 = vshrl.u32 %v4658, 16
        %v4973 = vrot.slane %v4971, 4
        %v4974 = vshll.u32 %v4658, 16
        %v4976 = vrot.slane %v4974, 5
        %v4977 = vor.u32 %v4973, %v4976
        %v4978 = vrot.slane %v4977, 4
        %v4980 = vshll.u32 %v4659, 16
        %v4982 = vrot.slane %v4980, 5
        %v4983 = vsel %vm1000, %v4978, %v4982
        %v4984 = vshrl.u32 %v4659, 16
        %v4986 = vrot.slane %v4984, 4
        %v4987 = vor.u32 %v4986, %v4982
        %v4988 = vrot.slane %v4987, 4
        %v4990 = vshll.u32 %v4678, 16
        %v4992 = vrot.slane %v4990, 5
        %v4993 = vsel %vm1000, %v4988, %v4992
        %v4995 = vshrl.u32 %v4660, 16
        %v4997 = vrot.slane %v4995, 4
        %v4998 = vshll.u32 %v4660, 16
        %v5000 = vrot.slane %v4998, 5
        %v5001 = vor.u32 %v4997, %v5000
        %v5002 = vrot.slane %v5001, 4
        %v5004 = vshll.u32 %v4661, 16
        %v5006 = vrot.slane %v5004, 5
        %v5007 = vsel %vm1000, %v5002, %v5006
        %v5008 = vshrl.u32 %v4661, 16
        %v5010 = vrot.slane %v5008, 4
        %v5011 = vor.u32 %v5010, %v5006
        %v5012 = vrot.slane %v5011, 4
        %v5014 = vshll.u32 %v4679, 16
        %v5016 = vrot.slane %v5014, 5
        %v5017 = vsel %vm1000, %v5012, %v5016
        %v5019 = vshrl.u32 %v4662, 16
        %v5021 = vrot.slane %v5019, 4
        %v5022 = vshll.u32 %v4662, 16
        %v5024 = vrot.slane %v5022, 5
        %v5025 = vor.u32 %v5021, %v5024
        %v5026 = vrot.slane %v5025, 4
        %v5028 = vshll.u32 %v4663, 16
        %v5030 = vrot.slane %v5028, 5
        %v5031 = vsel %vm1000, %v5026, %v5030
        %v5032 = vshrl.u32 %v4663, 16
        %v5034 = vrot.slane %v5032, 4
        %v5035 = vor.u32 %v5034, %v5030
        %v5036 = vrot.slane %v5035, 4
        %v5038 = vshll.u32 %v4680, 16
        %v5040 = vrot.slane %v5038, 5
        %v5041 = vsel %vm1000, %v5036, %v5040
        %v5043 = vshrl.u32 %v4664, 16
        %v5045 = vrot.slane %v5043, 4
        %v5046 = vshll.u32 %v4664, 16
        %v5048 = vrot.slane %v5046, 5
        %v5049 = vor.u32 %v5045, %v5048
        %v5050 = vrot.slane %v5049, 4
        %v5052 = vshll.u32 %v4665, 16
        %v5054 = vrot.slane %v5052, 5
        %v5055 = vsel %vm1000, %v5050, %v5054
        %v5056 = vshrl.u32 %v4665, 16
        %v5058 = vrot.slane %v5056, 4
        %v5059 = vor.u32 %v5058, %v5054
        %v5060 = vrot.slane %v5059, 4
        %v5062 = vshll.u32 %v4681, 16
        %v5064 = vrot.slane %v5062, 5
        %v5065 = vsel %vm1000, %v5060, %v5064
        %v5066 = vld [vmem:[#allocation3] sm:$0xe]
        %v5067 = vld [vmem:[#allocation3 + $0xc] sm:$0xe]
        %v5068 = vld [vmem:[#allocation3 + $0x18] sm:$0xe]
        %v5069 = vld [vmem:[#allocation3 + $0x24] sm:$0xe]
        %v5070 = vld [vmem:[#allocation3 + $0x30] sm:$0xe]
        %v5071 = vld [vmem:[#allocation3 + $0x3c] sm:$0xe]
        %v5072 = vld [vmem:[#allocation3 + $0x48] sm:$0xe]
        %v5073 = vld [vmem:[#allocation3 + $0x54] sm:$0xe]
        %v5074 = vld [vmem:[#allocation3 + $0x60] sm:$0xe]
        %v5075 = vld [vmem:[#allocation3 + $0x6c] sm:$0xe]
        %v5076 = vld [vmem:[#allocation3 + $0x78] sm:$0xe]
        %v5077 = vld [vmem:[#allocation3 + $0x84] sm:$0xe]
        %v5078 = vld [vmem:[#allocation3 + $0x90] sm:$0xe]
        %v5079 = vld [vmem:[#allocation3 + $0x9c] sm:$0xe]
        %v5080 = vld [vmem:[#allocation3 + $0xa8] sm:$0xe]
        %v5081 = vld [vmem:[#allocation3 + $0xb4] sm:$0xe]
        %v5130 = vrot.slane %v5066, 5
        %v5131 = vrot.slane %v5130, 4
        %v5132 = vrot.slane %v4635, 5
        %v5133 = vsel %vm1451, %v5131, %v5132
        %v5134 = vrot.slane %v5132, 4
        %v5135 = vrot.slane %v4666, 5
        %v5136 = vsel %vm1451, %v5134, %v5135
        %v5137 = vrot.slane %v5067, 5
        %v5138 = vrot.slane %v5137, 4
        %v5139 = vrot.slane %v4637, 5
        %v5140 = vsel %vm1451, %v5138, %v5139
        %v5141 = vrot.slane %v5139, 4
        %v5142 = vrot.slane %v4667, 5
        %v5143 = vsel %vm1451, %v5141, %v5142
        %v5144 = vrot.slane %v5068, 5
        %v5145 = vrot.slane %v5144, 4
        %v5146 = vrot.slane %v4639, 5
        %v5147 = vsel %vm1451, %v5145, %v5146
        %v5148 = vrot.slane %v5146, 4
        %v5149 = vrot.slane %v4668, 5
        %v5150 = vsel %vm1451, %v5148, %v5149
        %v5151 = vrot.slane %v5069, 5
        %v5152 = vrot.slane %v5151, 4
        %v5153 = vrot.slane %v4641, 5
        %v5154 = vsel %vm1451, %v5152, %v5153
        %v5155 = vrot.slane %v5153, 4
        %v5156 = vrot.slane %v4669, 5
        %v5157 = vsel %vm1451, %v5155, %v5156
        %v5158 = vrot.slane %v5070, 5
        %v5159 = vrot.slane %v5158, 4
        %v5160 = vrot.slane %v4643, 5
        %v5161 = vsel %vm1451, %v5159, %v5160
        %v5162 = vrot.slane %v5160, 4
        %v5163 = vrot.slane %v4670, 5
        %v5164 = vsel %vm1451, %v5162, %v5163
        %v5165 = vrot.slane %v5071, 5
        %v5166 = vrot.slane %v5165, 4
        %v5167 = vrot.slane %v4645, 5
        %v5168 = vsel %vm1451, %v5166, %v5167
        %v5169 = vrot.slane %v5167, 4
        %v5170 = vrot.slane %v4671, 5
        %v5171 = vsel %vm1451, %v5169, %v5170
        %v5172 = vrot.slane %v5072, 5
        %v5173 = vrot.slane %v5172, 4
        %v5174 = vrot.slane %v4647, 5
        %v5175 = vsel %vm1451, %v5173, %v5174
        %v5176 = vrot.slane %v5174, 4
        %v5177 = vrot.slane %v4672, 5
        %v5178 = vsel %vm1451, %v5176, %v5177
        %v5179 = vrot.slane %v5073, 5
        %v5180 = vrot.slane %v5179, 4
        %v5181 = vrot.slane %v4649, 5
        %v5182 = vsel %vm1451, %v5180, %v5181
        %v5183 = vrot.slane %v5181, 4
        %v5184 = vrot.slane %v4673, 5
        %v5185 = vsel %vm1451, %v5183, %v5184
        %v5186 = vrot.slane %v5074, 5
        %v5187 = vrot.slane %v5186, 4
        %v5188 = vrot.slane %v4651, 5
        %v5189 = vsel %vm1451, %v5187, %v5188
        %v5190 = vrot.slane %v5188, 4
        %v5191 = vrot.slane %v4674, 5
        %v5192 = vsel %vm1451, %v5190, %v5191
        %v5193 = vrot.slane %v5075, 5
        %v5194 = vrot.slane %v5193, 4
        %v5195 = vrot.slane %v4653, 5
        %v5196 = vsel %vm1451, %v5194, %v5195
        %v5197 = vrot.slane %v5195, 4
        %v5198 = vrot.slane %v4675, 5
        %v5199 = vsel %vm1451, %v5197, %v5198
        %v5200 = vrot.slane %v5076, 5
        %v5201 = vrot.slane %v5200, 4
        %v5202 = vrot.slane %v4655, 5
        %v5203 = vsel %vm1451, %v5201, %v5202
        %v5204 = vrot.slane %v5202, 4
        %v5205 = vrot.slane %v4676, 5
        %v5206 = vsel %vm1451, %v5204, %v5205
        %v5207 = vrot.slane %v5077, 5
        %v5208 = vrot.slane %v5207, 4
        %v5209 = vrot.slane %v4657, 5
        %v5210 = vsel %vm1451, %v5208, %v5209
        %v5211 = vrot.slane %v5209, 4
        %v5212 = vrot.slane %v4677, 5
        %v5213 = vsel %vm1451, %v5211, %v5212
        %v5214 = vrot.slane %v5078, 5
        %v5215 = vrot.slane %v5214, 4
        %v5216 = vrot.slane %v4659, 5
        %v5217 = vsel %vm1451, %v5215, %v5216
        %v5218 = vrot.slane %v5216, 4
        %v5219 = vrot.slane %v4678, 5
        %v5220 = vsel %vm1451, %v5218, %v5219
        %v5221 = vrot.slane %v5079, 5
        %v5222 = vrot.slane %v5221, 4
        %v5223 = vrot.slane %v4661, 5
        %v5224 = vsel %vm1451, %v5222, %v5223
        %v5225 = vrot.slane %v5223, 4
        %v5226 = vrot.slane %v4679, 5
        %v5227 = vsel %vm1451, %v5225, %v5226
        %v5228 = vrot.slane %v5080, 5
        %v5229 = vrot.slane %v5228, 4
        %v5230 = vrot.slane %v4663, 5
        %v5231 = vsel %vm1451, %v5229, %v5230
        %v5232 = vrot.slane %v5230, 4
        %v5233 = vrot.slane %v4680, 5
        %v5234 = vsel %vm1451, %v5232, %v5233
        %v5235 = vrot.slane %v5081, 5
        %v5236 = vrot.slane %v5235, 4
        %v5237 = vrot.slane %v4665, 5
        %v5238 = vsel %vm1451, %v5236, %v5237
        %v5239 = vrot.slane %v5237, 4
        %v5240 = vrot.slane %v4681, 5
        %v5241 = vsel %vm1451, %v5239, %v5240
        %v5242 = vld [vmem:[%s4519] sm:$0xf]
        %v5243 = vld [vmem:[%s4519 + $0x4] sm:$0xf]
        %v5244 = vld [vmem:[%s4519 + $0xc] sm:$0xf]
        %v5245 = vld [vmem:[%s4519 + $0x10] sm:$0xf]
        %v5246 = vld [vmem:[%s4519 + $0x18] sm:$0xf]
        %v5247 = vld [vmem:[%s4519 + $0x1c] sm:$0xf]
        %v5248 = vld [vmem:[%s4519 + $0x24] sm:$0xf]
        %v5249 = vld [vmem:[%s4519 + $0x28] sm:$0xf]
        %v5250 = vld [vmem:[%s4519 + $0x30] sm:$0xf]
        %v5251 = vld [vmem:[%s4519 + $0x34] sm:$0xf]
        %v5252 = vld [vmem:[%s4519 + $0x3c] sm:$0xf]
        %v5253 = vld [vmem:[%s4519 + $0x40] sm:$0xf]
        %v5254 = vld [vmem:[%s4519 + $0x48] sm:$0xf]
        %v5255 = vld [vmem:[%s4519 + $0x4c] sm:$0xf]
        %v5256 = vld [vmem:[%s4519 + $0x54] sm:$0xf]
        %v5257 = vld [vmem:[%s4519 + $0x58] sm:$0xf]
        %v5258 = vld [vmem:[%s4519 + $0x60] sm:$0xf]
        %v5259 = vld [vmem:[%s4519 + $0x64] sm:$0xf]
        %v5260 = vld [vmem:[%s4519 + $0x6c] sm:$0xf]
        %v5261 = vld [vmem:[%s4519 + $0x70] sm:$0xf]
        %v5262 = vld [vmem:[%s4519 + $0x78] sm:$0xf]
        %v5263 = vld [vmem:[%s4519 + $0x7c] sm:$0xf]
        %v5264 = vld [vmem:[%s4519 + $0x84] sm:$0xf]
        %v5265 = vld [vmem:[%s4519 + $0x88] sm:$0xf]
        %v5266 = vld [vmem:[%s4519 + $0x90] sm:$0xf]
        %v5267 = vld [vmem:[%s4519 + $0x94] sm:$0xf]
        %v5268 = vld [vmem:[%s4519 + $0x9c] sm:$0xf]
        %v5269 = vld [vmem:[%s4519 + $0xa0] sm:$0xf]
        %v5270 = vld [vmem:[%s4519 + $0xa8] sm:$0xf]
        %v5271 = vld [vmem:[%s4519 + $0xac] sm:$0xf]
        %v5272 = vld [vmem:[%s4519 + $0xb4] sm:$0xf]
        %v5273 = vld [vmem:[%s4519 + $0xb8] sm:$0xf]
        %v5274 = vld [vmem:[%s4519 + $0x8] sm:$0x1]
        %v5275 = vld [vmem:[%s4519 + $0x14] sm:$0x1]
        %v5276 = vld [vmem:[%s4519 + $0x20] sm:$0x1]
        %v5277 = vld [vmem:[%s4519 + $0x2c] sm:$0x1]
        %v5278 = vld [vmem:[%s4519 + $0x38] sm:$0x1]
        %v5279 = vld [vmem:[%s4519 + $0x44] sm:$0x1]
        %v5280 = vld [vmem:[%s4519 + $0x50] sm:$0x1]
        %v5281 = vld [vmem:[%s4519 + $0x5c] sm:$0x1]
        %v5282 = vld [vmem:[%s4519 + $0x68] sm:$0x1]
        %v5283 = vld [vmem:[%s4519 + $0x74] sm:$0x1]
        %v5284 = vld [vmem:[%s4519 + $0x80] sm:$0x1]
        %v5285 = vld [vmem:[%s4519 + $0x8c] sm:$0x1]
        %v5286 = vld [vmem:[%s4519 + $0x98] sm:$0x1]
        %v5287 = vld [vmem:[%s4519 + $0xa4] sm:$0x1]
        %v5288 = vld [vmem:[%s4519 + $0xb0] sm:$0x1]
        %v5289 = vld [vmem:[%s4519 + $0xbc] sm:$0x1]
        %v5291 = vshrl.u32 %v5242, 16
        %v5293 = vrot.slane %v5291, 4
        %v5294 = vshll.u32 %v5242, 16
        %v5296 = vrot.slane %v5294, 5
        %v5297 = vor.u32 %v5293, %v5296
        %v5298 = vrot.slane %v5297, 4
        %v5300 = vshll.u32 %v5243, 16
        %v5302 = vrot.slane %v5300, 5
        %v5303 = vsel %vm1000, %v5298, %v5302
        %v5304 = vshrl.u32 %v5243, 16
        %v5306 = vrot.slane %v5304, 4
        %v5307 = vor.u32 %v5306, %v5302
        %v5308 = vrot.slane %v5307, 4
        %v5310 = vshll.u32 %v5274, 16
        %v5312 = vrot.slane %v5310, 5
        %v5313 = vsel %vm1000, %v5308, %v5312
        %v5315 = vshrl.u32 %v5244, 16
        %v5317 = vrot.slane %v5315, 4
        %v5318 = vshll.u32 %v5244, 16
        %v5320 = vrot.slane %v5318, 5
        %v5321 = vor.u32 %v5317, %v5320
        %v5322 = vrot.slane %v5321, 4
        %v5324 = vshll.u32 %v5245, 16
        %v5326 = vrot.slane %v5324, 5
        %v5327 = vsel %vm1000, %v5322, %v5326
        %v5328 = vshrl.u32 %v5245, 16
        %v5330 = vrot.slane %v5328, 4
        %v5331 = vor.u32 %v5330, %v5326
        %v5332 = vrot.slane %v5331, 4
        %v5334 = vshll.u32 %v5275, 16
        %v5336 = vrot.slane %v5334, 5
        %v5337 = vsel %vm1000, %v5332, %v5336
        %v5339 = vshrl.u32 %v5246, 16
        %v5341 = vrot.slane %v5339, 4
        %v5342 = vshll.u32 %v5246, 16
        %v5344 = vrot.slane %v5342, 5
        %v5345 = vor.u32 %v5341, %v5344
        %v5346 = vrot.slane %v5345, 4
        %v5348 = vshll.u32 %v5247, 16
        %v5350 = vrot.slane %v5348, 5
        %v5351 = vsel %vm1000, %v5346, %v5350
        %v5352 = vshrl.u32 %v5247, 16
        %v5354 = vrot.slane %v5352, 4
        %v5355 = vor.u32 %v5354, %v5350
        %v5356 = vrot.slane %v5355, 4
        %v5358 = vshll.u32 %v5276, 16
        %v5360 = vrot.slane %v5358, 5
        %v5361 = vsel %vm1000, %v5356, %v5360
        %v5363 = vshrl.u32 %v5248, 16
        %v5365 = vrot.slane %v5363, 4
        %v5366 = vshll.u32 %v5248, 16
        %v5368 = vrot.slane %v5366, 5
        %v5369 = vor.u32 %v5365, %v5368
        %v5370 = vrot.slane %v5369, 4
        %v5372 = vshll.u32 %v5249, 16
        %v5374 = vrot.slane %v5372, 5
        %v5375 = vsel %vm1000, %v5370, %v5374
        %v5376 = vshrl.u32 %v5249, 16
        %v5378 = vrot.slane %v5376, 4
        %v5379 = vor.u32 %v5378, %v5374
        %v5380 = vrot.slane %v5379, 4
        %v5382 = vshll.u32 %v5277, 16
        %v5384 = vrot.slane %v5382, 5
        %v5385 = vsel %vm1000, %v5380, %v5384
        %v5387 = vshrl.u32 %v5250, 16
        %v5389 = vrot.slane %v5387, 4
        %v5390 = vshll.u32 %v5250, 16
        %v5392 = vrot.slane %v5390, 5
        %v5393 = vor.u32 %v5389, %v5392
        %v5394 = vrot.slane %v5393, 4
        %v5396 = vshll.u32 %v5251, 16
        %v5398 = vrot.slane %v5396, 5
        %v5399 = vsel %vm1000, %v5394, %v5398
        %v5400 = vshrl.u32 %v5251, 16
        %v5402 = vrot.slane %v5400, 4
        %v5403 = vor.u32 %v5402, %v5398
        %v5404 = vrot.slane %v5403, 4
        %v5406 = vshll.u32 %v5278, 16
        %v5408 = vrot.slane %v5406, 5
        %v5409 = vsel %vm1000, %v5404, %v5408
        %v5411 = vshrl.u32 %v5252, 16
        %v5413 = vrot.slane %v5411, 4
        %v5414 = vshll.u32 %v5252, 16
        %v5416 = vrot.slane %v5414, 5
        %v5417 = vor.u32 %v5413, %v5416
        %v5418 = vrot.slane %v5417, 4
        %v5420 = vshll.u32 %v5253, 16
        %v5422 = vrot.slane %v5420, 5
        %v5423 = vsel %vm1000, %v5418, %v5422
        %v5424 = vshrl.u32 %v5253, 16
        %v5426 = vrot.slane %v5424, 4
        %v5427 = vor.u32 %v5426, %v5422
        %v5428 = vrot.slane %v5427, 4
        %v5430 = vshll.u32 %v5279, 16
        %v5432 = vrot.slane %v5430, 5
        %v5433 = vsel %vm1000, %v5428, %v5432
        %v5435 = vshrl.u32 %v5254, 16
        %v5437 = vrot.slane %v5435, 4
        %v5438 = vshll.u32 %v5254, 16
        %v5440 = vrot.slane %v5438, 5
        %v5441 = vor.u32 %v5437, %v5440
        %v5442 = vrot.slane %v5441, 4
        %v5444 = vshll.u32 %v5255, 16
        %v5446 = vrot.slane %v5444, 5
        %v5447 = vsel %vm1000, %v5442, %v5446
        %v5448 = vshrl.u32 %v5255, 16
        %v5450 = vrot.slane %v5448, 4
        %v5451 = vor.u32 %v5450, %v5446
        %v5452 = vrot.slane %v5451, 4
        %v5454 = vshll.u32 %v5280, 16
        %v5456 = vrot.slane %v5454, 5
        %v5457 = vsel %vm1000, %v5452, %v5456
        %v5459 = vshrl.u32 %v5256, 16
        %v5461 = vrot.slane %v5459, 4
        %v5462 = vshll.u32 %v5256, 16
        %v5464 = vrot.slane %v5462, 5
        %v5465 = vor.u32 %v5461, %v5464
        %v5466 = vrot.slane %v5465, 4
        %v5468 = vshll.u32 %v5257, 16
        %v5470 = vrot.slane %v5468, 5
        %v5471 = vsel %vm1000, %v5466, %v5470
        %v5472 = vshrl.u32 %v5257, 16
        %v5474 = vrot.slane %v5472, 4
        %v5475 = vor.u32 %v5474, %v5470
        %v5476 = vrot.slane %v5475, 4
        %v5478 = vshll.u32 %v5281, 16
        %v5480 = vrot.slane %v5478, 5
        %v5481 = vsel %vm1000, %v5476, %v5480
        %v5483 = vshrl.u32 %v5258, 16
        %v5485 = vrot.slane %v5483, 4
        %v5486 = vshll.u32 %v5258, 16
        %v5488 = vrot.slane %v5486, 5
        %v5489 = vor.u32 %v5485, %v5488
        %v5490 = vrot.slane %v5489, 4
        %v5492 = vshll.u32 %v5259, 16
        %v5494 = vrot.slane %v5492, 5
        %v5495 = vsel %vm1000, %v5490, %v5494
        %v5496 = vshrl.u32 %v5259, 16
        %v5498 = vrot.slane %v5496, 4
        %v5499 = vor.u32 %v5498, %v5494
        %v5500 = vrot.slane %v5499, 4
        %v5502 = vshll.u32 %v5282, 16
        %v5504 = vrot.slane %v5502, 5
        %v5505 = vsel %vm1000, %v5500, %v5504
        %v5507 = vshrl.u32 %v5260, 16
        %v5509 = vrot.slane %v5507, 4
        %v5510 = vshll.u32 %v5260, 16
        %v5512 = vrot.slane %v5510, 5
        %v5513 = vor.u32 %v5509, %v5512
        %v5514 = vrot.slane %v5513, 4
        %v5516 = vshll.u32 %v5261, 16
        %v5518 = vrot.slane %v5516, 5
        %v5519 = vsel %vm1000, %v5514, %v5518
        %v5520 = vshrl.u32 %v5261, 16
        %v5522 = vrot.slane %v5520, 4
        %v5523 = vor.u32 %v5522, %v5518
        %v5524 = vrot.slane %v5523, 4
        %v5526 = vshll.u32 %v5283, 16
        %v5528 = vrot.slane %v5526, 5
        %v5529 = vsel %vm1000, %v5524, %v5528
        %v5531 = vshrl.u32 %v5262, 16
        %v5533 = vrot.slane %v5531, 4
        %v5534 = vshll.u32 %v5262, 16
        %v5536 = vrot.slane %v5534, 5
        %v5537 = vor.u32 %v5533, %v5536
        %v5538 = vrot.slane %v5537, 4
        %v5540 = vshll.u32 %v5263, 16
        %v5542 = vrot.slane %v5540, 5
        %v5543 = vsel %vm1000, %v5538, %v5542
        %v5544 = vshrl.u32 %v5263, 16
        %v5546 = vrot.slane %v5544, 4
        %v5547 = vor.u32 %v5546, %v5542
        %v5548 = vrot.slane %v5547, 4
        %v5550 = vshll.u32 %v5284, 16
        %v5552 = vrot.slane %v5550, 5
        %v5553 = vsel %vm1000, %v5548, %v5552
        %v5555 = vshrl.u32 %v5264, 16
        %v5557 = vrot.slane %v5555, 4
        %v5558 = vshll.u32 %v5264, 16
        %v5560 = vrot.slane %v5558, 5
        %v5561 = vor.u32 %v5557, %v5560
        %v5562 = vrot.slane %v5561, 4
        %v5564 = vshll.u32 %v5265, 16
        %v5566 = vrot.slane %v5564, 5
        %v5567 = vsel %vm1000, %v5562, %v5566
        %v5568 = vshrl.u32 %v5265, 16
        %v5570 = vrot.slane %v5568, 4
        %v5571 = vor.u32 %v5570, %v5566
        %v5572 = vrot.slane %v5571, 4
        %v5574 = vshll.u32 %v5285, 16
        %v5576 = vrot.slane %v5574, 5
        %v5577 = vsel %vm1000, %v5572, %v5576
        %v5579 = vshrl.u32 %v5266, 16
        %v5581 = vrot.slane %v5579, 4
        %v5582 = vshll.u32 %v5266, 16
        %v5584 = vrot.slane %v5582, 5
        %v5585 = vor.u32 %v5581, %v5584
        %v5586 = vrot.slane %v5585, 4
        %v5588 = vshll.u32 %v5267, 16
        %v5590 = vrot.slane %v5588, 5
        %v5591 = vsel %vm1000, %v5586, %v5590
        %v5592 = vshrl.u32 %v5267, 16
        %v5594 = vrot.slane %v5592, 4
        %v5595 = vor.u32 %v5594, %v5590
        %v5596 = vrot.slane %v5595, 4
        %v5598 = vshll.u32 %v5286, 16
        %v5600 = vrot.slane %v5598, 5
        %v5601 = vsel %vm1000, %v5596, %v5600
        %v5603 = vshrl.u32 %v5268, 16
        %v5605 = vrot.slane %v5603, 4
        %v5606 = vshll.u32 %v5268, 16
        %v5608 = vrot.slane %v5606, 5
        %v5609 = vor.u32 %v5605, %v5608
        %v5610 = vrot.slane %v5609, 4
        %v5612 = vshll.u32 %v5269, 16
        %v5614 = vrot.slane %v5612, 5
        %v5615 = vsel %vm1000, %v5610, %v5614
        %v5616 = vshrl.u32 %v5269, 16
        %v5618 = vrot.slane %v5616, 4
        %v5619 = vor.u32 %v5618, %v5614
        %v5620 = vrot.slane %v5619, 4
        %v5622 = vshll.u32 %v5287, 16
        %v5624 = vrot.slane %v5622, 5
        %v5625 = vsel %vm1000, %v5620, %v5624
        %v5627 = vshrl.u32 %v5270, 16
        %v5629 = vrot.slane %v5627, 4
        %v5630 = vshll.u32 %v5270, 16
        %v5632 = vrot.slane %v5630, 5
        %v5633 = vor.u32 %v5629, %v5632
        %v5634 = vrot.slane %v5633, 4
        %v5636 = vshll.u32 %v5271, 16
        %v5638 = vrot.slane %v5636, 5
        %v5639 = vsel %vm1000, %v5634, %v5638
        %v5640 = vshrl.u32 %v5271, 16
        %v5642 = vrot.slane %v5640, 4
        %v5643 = vor.u32 %v5642, %v5638
        %v5644 = vrot.slane %v5643, 4
        %v5646 = vshll.u32 %v5288, 16
        %v5648 = vrot.slane %v5646, 5
        %v5649 = vsel %vm1000, %v5644, %v5648
        %v5651 = vshrl.u32 %v5272, 16
        %v5653 = vrot.slane %v5651, 4
        %v5654 = vshll.u32 %v5272, 16
        %v5656 = vrot.slane %v5654, 5
        %v5657 = vor.u32 %v5653, %v5656
        %v5658 = vrot.slane %v5657, 4
        %v5660 = vshll.u32 %v5273, 16
        %v5662 = vrot.slane %v5660, 5
        %v5663 = vsel %vm1000, %v5658, %v5662
        %v5664 = vshrl.u32 %v5273, 16
        %v5666 = vrot.slane %v5664, 4
        %v5667 = vor.u32 %v5666, %v5662
        %v5668 = vrot.slane %v5667, 4
        %v5670 = vshll.u32 %v5289, 16
        %v5672 = vrot.slane %v5670, 5
        %v5673 = vsel %vm1000, %v5668, %v5672
        %v5674 = vld [vmem:[%s4519] sm:$0xe]
        %v5675 = vld [vmem:[%s4519 + $0xc] sm:$0xe]
        %v5676 = vld [vmem:[%s4519 + $0x18] sm:$0xe]
        %v5677 = vld [vmem:[%s4519 + $0x24] sm:$0xe]
        %v5678 = vld [vmem:[%s4519 + $0x30] sm:$0xe]
        %v5679 = vld [vmem:[%s4519 + $0x3c] sm:$0xe]
        %v5680 = vld [vmem:[%s4519 + $0x48] sm:$0xe]
        %v5681 = vld [vmem:[%s4519 + $0x54] sm:$0xe]
        %v5682 = vld [vmem:[%s4519 + $0x60] sm:$0xe]
        %v5683 = vld [vmem:[%s4519 + $0x6c] sm:$0xe]
        %v5684 = vld [vmem:[%s4519 + $0x78] sm:$0xe]
        %v5685 = vld [vmem:[%s4519 + $0x84] sm:$0xe]
        %v5686 = vld [vmem:[%s4519 + $0x90] sm:$0xe]
        %v5687 = vld [vmem:[%s4519 + $0x9c] sm:$0xe]
        %v5688 = vld [vmem:[%s4519 + $0xa8] sm:$0xe]
        %v5689 = vld [vmem:[%s4519 + $0xb4] sm:$0xe]
        %v5738 = vrot.slane %v5674, 5
        %v5739 = vrot.slane %v5738, 4
        %v5740 = vrot.slane %v5243, 5
        %v5741 = vsel %vm1451, %v5739, %v5740
        %v5742 = vrot.slane %v5740, 4
        %v5743 = vrot.slane %v5274, 5
        %v5744 = vsel %vm1451, %v5742, %v5743
        %v5745 = vrot.slane %v5675, 5
        %v5746 = vrot.slane %v5745, 4
        %v5747 = vrot.slane %v5245, 5
        %v5748 = vsel %vm1451, %v5746, %v5747
        %v5749 = vrot.slane %v5747, 4
        %v5750 = vrot.slane %v5275, 5
        %v5751 = vsel %vm1451, %v5749, %v5750
        %v5752 = vrot.slane %v5676, 5
        %v5753 = vrot.slane %v5752, 4
        %v5754 = vrot.slane %v5247, 5
        %v5755 = vsel %vm1451, %v5753, %v5754
        %v5756 = vrot.slane %v5754, 4
        %v5757 = vrot.slane %v5276, 5
        %v5758 = vsel %vm1451, %v5756, %v5757
        %v5759 = vrot.slane %v5677, 5
        %v5760 = vrot.slane %v5759, 4
        %v5761 = vrot.slane %v5249, 5
        %v5762 = vsel %vm1451, %v5760, %v5761
        %v5763 = vrot.slane %v5761, 4
        %v5764 = vrot.slane %v5277, 5
        %v5765 = vsel %vm1451, %v5763, %v5764
        %v5766 = vrot.slane %v5678, 5
        %v5767 = vrot.slane %v5766, 4
        %v5768 = vrot.slane %v5251, 5
        %v5769 = vsel %vm1451, %v5767, %v5768
        %v5770 = vrot.slane %v5768, 4
        %v5771 = vrot.slane %v5278, 5
        %v5772 = vsel %vm1451, %v5770, %v5771
        %v5773 = vrot.slane %v5679, 5
        %v5774 = vrot.slane %v5773, 4
        %v5775 = vrot.slane %v5253, 5
        %v5776 = vsel %vm1451, %v5774, %v5775
        %v5777 = vrot.slane %v5775, 4
        %v5778 = vrot.slane %v5279, 5
        %v5779 = vsel %vm1451, %v5777, %v5778
        %v5780 = vrot.slane %v5680, 5
        %v5781 = vrot.slane %v5780, 4
        %v5782 = vrot.slane %v5255, 5
        %v5783 = vsel %vm1451, %v5781, %v5782
        %v5784 = vrot.slane %v5782, 4
        %v5785 = vrot.slane %v5280, 5
        %v5786 = vsel %vm1451, %v5784, %v5785
        %v5787 = vrot.slane %v5681, 5
        %v5788 = vrot.slane %v5787, 4
        %v5789 = vrot.slane %v5257, 5
        %v5790 = vsel %vm1451, %v5788, %v5789
        %v5791 = vrot.slane %v5789, 4
        %v5792 = vrot.slane %v5281, 5
        %v5793 = vsel %vm1451, %v5791, %v5792
        %v5794 = vrot.slane %v5682, 5
        %v5795 = vrot.slane %v5794, 4
        %v5796 = vrot.slane %v5259, 5
        %v5797 = vsel %vm1451, %v5795, %v5796
        %v5798 = vrot.slane %v5796, 4
        %v5799 = vrot.slane %v5282, 5
        %v5800 = vsel %vm1451, %v5798, %v5799
        %v5801 = vrot.slane %v5683, 5
        %v5802 = vrot.slane %v5801, 4
        %v5803 = vrot.slane %v5261, 5
        %v5804 = vsel %vm1451, %v5802, %v5803
        %v5805 = vrot.slane %v5803, 4
        %v5806 = vrot.slane %v5283, 5
        %v5807 = vsel %vm1451, %v5805, %v5806
        %v5808 = vrot.slane %v5684, 5
        %v5809 = vrot.slane %v5808, 4
        %v5810 = vrot.slane %v5263, 5
        %v5811 = vsel %vm1451, %v5809, %v5810
        %v5812 = vrot.slane %v5810, 4
        %v5813 = vrot.slane %v5284, 5
        %v5814 = vsel %vm1451, %v5812, %v5813
        %v5815 = vrot.slane %v5685, 5
        %v5816 = vrot.slane %v5815, 4
        %v5817 = vrot.slane %v5265, 5
        %v5818 = vsel %vm1451, %v5816, %v5817
        %v5819 = vrot.slane %v5817, 4
        %v5820 = vrot.slane %v5285, 5
        %v5821 = vsel %vm1451, %v5819, %v5820
        %v5822 = vrot.slane %v5686, 5
        %v5823 = vrot.slane %v5822, 4
        %v5824 = vrot.slane %v5267, 5
        %v5825 = vsel %vm1451, %v5823, %v5824
        %v5826 = vrot.slane %v5824, 4
        %v5827 = vrot.slane %v5286, 5
        %v5828 = vsel %vm1451, %v5826, %v5827
        %v5829 = vrot.slane %v5687, 5
        %v5830 = vrot.slane %v5829, 4
        %v5831 = vrot.slane %v5269, 5
        %v5832 = vsel %vm1451, %v5830, %v5831
        %v5833 = vrot.slane %v5831, 4
        %v5834 = vrot.slane %v5287, 5
        %v5835 = vsel %vm1451, %v5833, %v5834
        %v5836 = vrot.slane %v5688, 5
        %v5837 = vrot.slane %v5836, 4
        %v5838 = vrot.slane %v5271, 5
        %v5839 = vsel %vm1451, %v5837, %v5838
        %v5840 = vrot.slane %v5838, 4
        %v5841 = vrot.slane %v5288, 5
        %v5842 = vsel %vm1451, %v5840, %v5841
        %v5843 = vrot.slane %v5689, 5
        %v5844 = vrot.slane %v5843, 4
        %v5845 = vrot.slane %v5273, 5
        %v5846 = vsel %vm1451, %v5844, %v5845
        %v5847 = vrot.slane %v5845, 4
        %v5848 = vrot.slane %v5289, 5
        %v5849 = vsel %vm1451, %v5847, %v5848
        %s5850 = scalar_lea.vmem [#allocation3], 24
        %v5851 = vld [vmem:[%s5850] sm:$0xf]
        %v5852 = vld [vmem:[%s5850 + $0x4] sm:$0xf]
        %v5853 = vld [vmem:[%s5850 + $0xc] sm:$0xf]
        %v5854 = vld [vmem:[%s5850 + $0x10] sm:$0xf]
        %v5855 = vld [vmem:[%s5850 + $0x18] sm:$0xf]
        %v5856 = vld [vmem:[%s5850 + $0x1c] sm:$0xf]
        %v5857 = vld [vmem:[%s5850 + $0x24] sm:$0xf]
        %v5858 = vld [vmem:[%s5850 + $0x28] sm:$0xf]
        %v5859 = vld [vmem:[%s5850 + $0x30] sm:$0xf]
        %v5860 = vld [vmem:[%s5850 + $0x34] sm:$0xf]
        %v5861 = vld [vmem:[%s5850 + $0x3c] sm:$0xf]
        %v5862 = vld [vmem:[%s5850 + $0x40] sm:$0xf]
        %v5863 = vld [vmem:[%s5850 + $0x48] sm:$0xf]
        %v5864 = vld [vmem:[%s5850 + $0x4c] sm:$0xf]
        %v5865 = vld [vmem:[%s5850 + $0x54] sm:$0xf]
        %v5866 = vld [vmem:[%s5850 + $0x58] sm:$0xf]
        %v5867 = vld [vmem:[%s5850 + $0x60] sm:$0xf]
        %v5868 = vld [vmem:[%s5850 + $0x64] sm:$0xf]
        %v5869 = vld [vmem:[%s5850 + $0x6c] sm:$0xf]
        %v5870 = vld [vmem:[%s5850 + $0x70] sm:$0xf]
        %v5871 = vld [vmem:[%s5850 + $0x78] sm:$0xf]
        %v5872 = vld [vmem:[%s5850 + $0x7c] sm:$0xf]
        %v5873 = vld [vmem:[%s5850 + $0x84] sm:$0xf]
        %v5874 = vld [vmem:[%s5850 + $0x88] sm:$0xf]
        %v5875 = vld [vmem:[%s5850 + $0x90] sm:$0xf]
        %v5876 = vld [vmem:[%s5850 + $0x94] sm:$0xf]
        %v5877 = vld [vmem:[%s5850 + $0x9c] sm:$0xf]
        %v5878 = vld [vmem:[%s5850 + $0xa0] sm:$0xf]
        %v5879 = vld [vmem:[%s5850 + $0xa8] sm:$0xf]
        %v5880 = vld [vmem:[%s5850 + $0xac] sm:$0xf]
        %v5881 = vld [vmem:[%s5850 + $0xb4] sm:$0xf]
        %v5882 = vld [vmem:[%s5850 + $0xb8] sm:$0xf]
        %v5883 = vld [vmem:[%s5850 + $0x8] sm:$0x1]
        %v5884 = vld [vmem:[%s5850 + $0x14] sm:$0x1]
        %v5885 = vld [vmem:[%s5850 + $0x20] sm:$0x1]
        %v5886 = vld [vmem:[%s5850 + $0x2c] sm:$0x1]
        %v5887 = vld [vmem:[%s5850 + $0x38] sm:$0x1]
        %v5888 = vld [vmem:[%s5850 + $0x44] sm:$0x1]
        %v5889 = vld [vmem:[%s5850 + $0x50] sm:$0x1]
        %v5890 = vld [vmem:[%s5850 + $0x5c] sm:$0x1]
        %v5891 = vld [vmem:[%s5850 + $0x68] sm:$0x1]
        %v5892 = vld [vmem:[%s5850 + $0x74] sm:$0x1]
        %v5893 = vld [vmem:[%s5850 + $0x80] sm:$0x1]
        %v5894 = vld [vmem:[%s5850 + $0x8c] sm:$0x1]
        %v5895 = vld [vmem:[%s5850 + $0x98] sm:$0x1]
        %v5896 = vld [vmem:[%s5850 + $0xa4] sm:$0x1]
        %v5897 = vld [vmem:[%s5850 + $0xb0] sm:$0x1]
        %v5898 = vld [vmem:[%s5850 + $0xbc] sm:$0x1]
        %v5900 = vshrl.u32 %v5851, 16
        %v5902 = vrot.slane %v5900, 4
        %v5903 = vshll.u32 %v5851, 16
        %v5905 = vrot.slane %v5903, 5
        %v5906 = vor.u32 %v5902, %v5905
        %v5907 = vrot.slane %v5906, 4
        %v5909 = vshll.u32 %v5852, 16
        %v5911 = vrot.slane %v5909, 5
        %v5912 = vsel %vm1000, %v5907, %v5911
        %v5913 = vshrl.u32 %v5852, 16
        %v5915 = vrot.slane %v5913, 4
        %v5916 = vor.u32 %v5915, %v5911
        %v5917 = vrot.slane %v5916, 4
        %v5919 = vshll.u32 %v5883, 16
        %v5921 = vrot.slane %v5919, 5
        %v5922 = vsel %vm1000, %v5917, %v5921
        %v5924 = vshrl.u32 %v5853, 16
        %v5926 = vrot.slane %v5924, 4
        %v5927 = vshll.u32 %v5853, 16
        %v5929 = vrot.slane %v5927, 5
        %v5930 = vor.u32 %v5926, %v5929
        %v5931 = vrot.slane %v5930, 4
        %v5933 = vshll.u32 %v5854, 16
        %v5935 = vrot.slane %v5933, 5
        %v5936 = vsel %vm1000, %v5931, %v5935
        %v5937 = vshrl.u32 %v5854, 16
        %v5939 = vrot.slane %v5937, 4
        %v5940 = vor.u32 %v5939, %v5935
        %v5941 = vrot.slane %v5940, 4
        %v5943 = vshll.u32 %v5884, 16
        %v5945 = vrot.slane %v5943, 5
        %v5946 = vsel %vm1000, %v5941, %v5945
        %v5948 = vshrl.u32 %v5855, 16
        %v5950 = vrot.slane %v5948, 4
        %v5951 = vshll.u32 %v5855, 16
        %v5953 = vrot.slane %v5951, 5
        %v5954 = vor.u32 %v5950, %v5953
        %v5955 = vrot.slane %v5954, 4
        %v5957 = vshll.u32 %v5856, 16
        %v5959 = vrot.slane %v5957, 5
        %v5960 = vsel %vm1000, %v5955, %v5959
        %v5961 = vshrl.u32 %v5856, 16
        %v5963 = vrot.slane %v5961, 4
        %v5964 = vor.u32 %v5963, %v5959
        %v5965 = vrot.slane %v5964, 4
        %v5967 = vshll.u32 %v5885, 16
        %v5969 = vrot.slane %v5967, 5
        %v5970 = vsel %vm1000, %v5965, %v5969
        %v5972 = vshrl.u32 %v5857, 16
        %v5974 = vrot.slane %v5972, 4
        %v5975 = vshll.u32 %v5857, 16
        %v5977 = vrot.slane %v5975, 5
        %v5978 = vor.u32 %v5974, %v5977
        %v5979 = vrot.slane %v5978, 4
        %v5981 = vshll.u32 %v5858, 16
        %v5983 = vrot.slane %v5981, 5
        %v5984 = vsel %vm1000, %v5979, %v5983
        %v5985 = vshrl.u32 %v5858, 16
        %v5987 = vrot.slane %v5985, 4
        %v5988 = vor.u32 %v5987, %v5983
        %v5989 = vrot.slane %v5988, 4
        %v5991 = vshll.u32 %v5886, 16
        %v5993 = vrot.slane %v5991, 5
        %v5994 = vsel %vm1000, %v5989, %v5993
        %v5996 = vshrl.u32 %v5859, 16
        %v5998 = vrot.slane %v5996, 4
        %v5999 = vshll.u32 %v5859, 16
        %v6001 = vrot.slane %v5999, 5
        %v6002 = vor.u32 %v5998, %v6001
        %v6003 = vrot.slane %v6002, 4
        %v6005 = vshll.u32 %v5860, 16
        %v6007 = vrot.slane %v6005, 5
        %v6008 = vsel %vm1000, %v6003, %v6007
        %v6009 = vshrl.u32 %v5860, 16
        %v6011 = vrot.slane %v6009, 4
        %v6012 = vor.u32 %v6011, %v6007
        %v6013 = vrot.slane %v6012, 4
        %v6015 = vshll.u32 %v5887, 16
        %v6017 = vrot.slane %v6015, 5
        %v6018 = vsel %vm1000, %v6013, %v6017
        %v6020 = vshrl.u32 %v5861, 16
        %v6022 = vrot.slane %v6020, 4
        %v6023 = vshll.u32 %v5861, 16
        %v6025 = vrot.slane %v6023, 5
        %v6026 = vor.u32 %v6022, %v6025
        %v6027 = vrot.slane %v6026, 4
        %v6029 = vshll.u32 %v5862, 16
        %v6031 = vrot.slane %v6029, 5
        %v6032 = vsel %vm1000, %v6027, %v6031
        %v6033 = vshrl.u32 %v5862, 16
        %v6035 = vrot.slane %v6033, 4
        %v6036 = vor.u32 %v6035, %v6031
        %v6037 = vrot.slane %v6036, 4
        %v6039 = vshll.u32 %v5888, 16
        %v6041 = vrot.slane %v6039, 5
        %v6042 = vsel %vm1000, %v6037, %v6041
        %v6044 = vshrl.u32 %v5863, 16
        %v6046 = vrot.slane %v6044, 4
        %v6047 = vshll.u32 %v5863, 16
        %v6049 = vrot.slane %v6047, 5
        %v6050 = vor.u32 %v6046, %v6049
        %v6051 = vrot.slane %v6050, 4
        %v6053 = vshll.u32 %v5864, 16
        %v6055 = vrot.slane %v6053, 5
        %v6056 = vsel %vm1000, %v6051, %v6055
        %v6057 = vshrl.u32 %v5864, 16
        %v6059 = vrot.slane %v6057, 4
        %v6060 = vor.u32 %v6059, %v6055
        %v6061 = vrot.slane %v6060, 4
        %v6063 = vshll.u32 %v5889, 16
        %v6065 = vrot.slane %v6063, 5
        %v6066 = vsel %vm1000, %v6061, %v6065
        %v6068 = vshrl.u32 %v5865, 16
        %v6070 = vrot.slane %v6068, 4
        %v6071 = vshll.u32 %v5865, 16
        %v6073 = vrot.slane %v6071, 5
        %v6074 = vor.u32 %v6070, %v6073
        %v6075 = vrot.slane %v6074, 4
        %v6077 = vshll.u32 %v5866, 16
        %v6079 = vrot.slane %v6077, 5
        %v6080 = vsel %vm1000, %v6075, %v6079
        %v6081 = vshrl.u32 %v5866, 16
        %v6083 = vrot.slane %v6081, 4
        %v6084 = vor.u32 %v6083, %v6079
        %v6085 = vrot.slane %v6084, 4
        %v6087 = vshll.u32 %v5890, 16
        %v6089 = vrot.slane %v6087, 5
        %v6090 = vsel %vm1000, %v6085, %v6089
        %v6092 = vshrl.u32 %v5867, 16
        %v6094 = vrot.slane %v6092, 4
        %v6095 = vshll.u32 %v5867, 16
        %v6097 = vrot.slane %v6095, 5
        %v6098 = vor.u32 %v6094, %v6097
        %v6099 = vrot.slane %v6098, 4
        %v6101 = vshll.u32 %v5868, 16
        %v6103 = vrot.slane %v6101, 5
        %v6104 = vsel %vm1000, %v6099, %v6103
        %v6105 = vshrl.u32 %v5868, 16
        %v6107 = vrot.slane %v6105, 4
        %v6108 = vor.u32 %v6107, %v6103
        %v6109 = vrot.slane %v6108, 4
        %v6111 = vshll.u32 %v5891, 16
        %v6113 = vrot.slane %v6111, 5
        %v6114 = vsel %vm1000, %v6109, %v6113
        %v6116 = vshrl.u32 %v5869, 16
        %v6118 = vrot.slane %v6116, 4
        %v6119 = vshll.u32 %v5869, 16
        %v6121 = vrot.slane %v6119, 5
        %v6122 = vor.u32 %v6118, %v6121
        %v6123 = vrot.slane %v6122, 4
        %v6125 = vshll.u32 %v5870, 16
        %v6127 = vrot.slane %v6125, 5
        %v6128 = vsel %vm1000, %v6123, %v6127
        %v6129 = vshrl.u32 %v5870, 16
        %v6131 = vrot.slane %v6129, 4
        %v6132 = vor.u32 %v6131, %v6127
        %v6133 = vrot.slane %v6132, 4
        %v6135 = vshll.u32 %v5892, 16
        %v6137 = vrot.slane %v6135, 5
        %v6138 = vsel %vm1000, %v6133, %v6137
        %v6140 = vshrl.u32 %v5871, 16
        %v6142 = vrot.slane %v6140, 4
        %v6143 = vshll.u32 %v5871, 16
        %v6145 = vrot.slane %v6143, 5
        %v6146 = vor.u32 %v6142, %v6145
        %v6147 = vrot.slane %v6146, 4
        %v6149 = vshll.u32 %v5872, 16
        %v6151 = vrot.slane %v6149, 5
        %v6152 = vsel %vm1000, %v6147, %v6151
        %v6153 = vshrl.u32 %v5872, 16
        %v6155 = vrot.slane %v6153, 4
        %v6156 = vor.u32 %v6155, %v6151
        %v6157 = vrot.slane %v6156, 4
        %v6159 = vshll.u32 %v5893, 16
        %v6161 = vrot.slane %v6159, 5
        %v6162 = vsel %vm1000, %v6157, %v6161
        %v6164 = vshrl.u32 %v5873, 16
        %v6166 = vrot.slane %v6164, 4
        %v6167 = vshll.u32 %v5873, 16
        %v6169 = vrot.slane %v6167, 5
        %v6170 = vor.u32 %v6166, %v6169
        %v6171 = vrot.slane %v6170, 4
        %v6173 = vshll.u32 %v5874, 16
        %v6175 = vrot.slane %v6173, 5
        %v6176 = vsel %vm1000, %v6171, %v6175
        %v6177 = vshrl.u32 %v5874, 16
        %v6179 = vrot.slane %v6177, 4
        %v6180 = vor.u32 %v6179, %v6175
        %v6181 = vrot.slane %v6180, 4
        %v6183 = vshll.u32 %v5894, 16
        %v6185 = vrot.slane %v6183, 5
        %v6186 = vsel %vm1000, %v6181, %v6185
        %v6188 = vshrl.u32 %v5875, 16
        %v6190 = vrot.slane %v6188, 4
        %v6191 = vshll.u32 %v5875, 16
        %v6193 = vrot.slane %v6191, 5
        %v6194 = vor.u32 %v6190, %v6193
        %v6195 = vrot.slane %v6194, 4
        %v6197 = vshll.u32 %v5876, 16
        %v6199 = vrot.slane %v6197, 5
        %v6200 = vsel %vm1000, %v6195, %v6199
        %v6201 = vshrl.u32 %v5876, 16
        %v6203 = vrot.slane %v6201, 4
        %v6204 = vor.u32 %v6203, %v6199
        %v6205 = vrot.slane %v6204, 4
        %v6207 = vshll.u32 %v5895, 16
        %v6209 = vrot.slane %v6207, 5
        %v6210 = vsel %vm1000, %v6205, %v6209
        %v6212 = vshrl.u32 %v5877, 16
        %v6214 = vrot.slane %v6212, 4
        %v6215 = vshll.u32 %v5877, 16
        %v6217 = vrot.slane %v6215, 5
        %v6218 = vor.u32 %v6214, %v6217
        %v6219 = vrot.slane %v6218, 4
        %v6221 = vshll.u32 %v5878, 16
        %v6223 = vrot.slane %v6221, 5
        %v6224 = vsel %vm1000, %v6219, %v6223
        %v6225 = vshrl.u32 %v5878, 16
        %v6227 = vrot.slane %v6225, 4
        %v6228 = vor.u32 %v6227, %v6223
        %v6229 = vrot.slane %v6228, 4
        %v6231 = vshll.u32 %v5896, 16
        %v6233 = vrot.slane %v6231, 5
        %v6234 = vsel %vm1000, %v6229, %v6233
        %v6236 = vshrl.u32 %v5879, 16
        %v6238 = vrot.slane %v6236, 4
        %v6239 = vshll.u32 %v5879, 16
        %v6241 = vrot.slane %v6239, 5
        %v6242 = vor.u32 %v6238, %v6241
        %v6243 = vrot.slane %v6242, 4
        %v6245 = vshll.u32 %v5880, 16
        %v6247 = vrot.slane %v6245, 5
        %v6248 = vsel %vm1000, %v6243, %v6247
        %v6249 = vshrl.u32 %v5880, 16
        %v6251 = vrot.slane %v6249, 4
        %v6252 = vor.u32 %v6251, %v6247
        %v6253 = vrot.slane %v6252, 4
        %v6255 = vshll.u32 %v5897, 16
        %v6257 = vrot.slane %v6255, 5
        %v6258 = vsel %vm1000, %v6253, %v6257
        %v6260 = vshrl.u32 %v5881, 16
        %v6262 = vrot.slane %v6260, 4
        %v6263 = vshll.u32 %v5881, 16
        %v6265 = vrot.slane %v6263, 5
        %v6266 = vor.u32 %v6262, %v6265
        %v6267 = vrot.slane %v6266, 4
        %v6269 = vshll.u32 %v5882, 16
        %v6271 = vrot.slane %v6269, 5
        %v6272 = vsel %vm1000, %v6267, %v6271
        %v6273 = vshrl.u32 %v5882, 16
        %v6275 = vrot.slane %v6273, 4
        %v6276 = vor.u32 %v6275, %v6271
        %v6277 = vrot.slane %v6276, 4
        %v6279 = vshll.u32 %v5898, 16
        %v6281 = vrot.slane %v6279, 5
        %v6282 = vsel %vm1000, %v6277, %v6281
        %v6283 = vld [vmem:[%s5850] sm:$0xe]
        %v6284 = vld [vmem:[%s5850 + $0xc] sm:$0xe]
        %v6285 = vld [vmem:[%s5850 + $0x18] sm:$0xe]
        %v6286 = vld [vmem:[%s5850 + $0x24] sm:$0xe]
        %v6287 = vld [vmem:[%s5850 + $0x30] sm:$0xe]
        %v6288 = vld [vmem:[%s5850 + $0x3c] sm:$0xe]
        %v6289 = vld [vmem:[%s5850 + $0x48] sm:$0xe]
        %v6290 = vld [vmem:[%s5850 + $0x54] sm:$0xe]
        %v6291 = vld [vmem:[%s5850 + $0x60] sm:$0xe]
        %v6292 = vld [vmem:[%s5850 + $0x6c] sm:$0xe]
        %v6293 = vld [vmem:[%s5850 + $0x78] sm:$0xe]
        %v6294 = vld [vmem:[%s5850 + $0x84] sm:$0xe]
        %v6295 = vld [vmem:[%s5850 + $0x90] sm:$0xe]
        %v6296 = vld [vmem:[%s5850 + $0x9c] sm:$0xe]
        %v6297 = vld [vmem:[%s5850 + $0xa8] sm:$0xe]
        %v6298 = vld [vmem:[%s5850 + $0xb4] sm:$0xe]
        %v6347 = vrot.slane %v6283, 5
        %v6348 = vrot.slane %v6347, 4
        %v6349 = vrot.slane %v5852, 5
        %v6350 = vsel %vm1451, %v6348, %v6349
        %v6351 = vrot.slane %v6349, 4
        %v6352 = vrot.slane %v5883, 5
        %v6353 = vsel %vm1451, %v6351, %v6352
        %v6354 = vrot.slane %v6284, 5
        %v6355 = vrot.slane %v6354, 4
        %v6356 = vrot.slane %v5854, 5
        %v6357 = vsel %vm1451, %v6355, %v6356
        %v6358 = vrot.slane %v6356, 4
        %v6359 = vrot.slane %v5884, 5
        %v6360 = vsel %vm1451, %v6358, %v6359
        %v6361 = vrot.slane %v6285, 5
        %v6362 = vrot.slane %v6361, 4
        %v6363 = vrot.slane %v5856, 5
        %v6364 = vsel %vm1451, %v6362, %v6363
        %v6365 = vrot.slane %v6363, 4
        %v6366 = vrot.slane %v5885, 5
        %v6367 = vsel %vm1451, %v6365, %v6366
        %v6368 = vrot.slane %v6286, 5
        %v6369 = vrot.slane %v6368, 4
        %v6370 = vrot.slane %v5858, 5
        %v6371 = vsel %vm1451, %v6369, %v6370
        %v6372 = vrot.slane %v6370, 4
        %v6373 = vrot.slane %v5886, 5
        %v6374 = vsel %vm1451, %v6372, %v6373
        %v6375 = vrot.slane %v6287, 5
        %v6376 = vrot.slane %v6375, 4
        %v6377 = vrot.slane %v5860, 5
        %v6378 = vsel %vm1451, %v6376, %v6377
        %v6379 = vrot.slane %v6377, 4
        %v6380 = vrot.slane %v5887, 5
        %v6381 = vsel %vm1451, %v6379, %v6380
        %v6382 = vrot.slane %v6288, 5
        %v6383 = vrot.slane %v6382, 4
        %v6384 = vrot.slane %v5862, 5
        %v6385 = vsel %vm1451, %v6383, %v6384
        %v6386 = vrot.slane %v6384, 4
        %v6387 = vrot.slane %v5888, 5
        %v6388 = vsel %vm1451, %v6386, %v6387
        %v6389 = vrot.slane %v6289, 5
        %v6390 = vrot.slane %v6389, 4
        %v6391 = vrot.slane %v5864, 5
        %v6392 = vsel %vm1451, %v6390, %v6391
        %v6393 = vrot.slane %v6391, 4
        %v6394 = vrot.slane %v5889, 5
        %v6395 = vsel %vm1451, %v6393, %v6394
        %v6396 = vrot.slane %v6290, 5
        %v6397 = vrot.slane %v6396, 4
        %v6398 = vrot.slane %v5866, 5
        %v6399 = vsel %vm1451, %v6397, %v6398
        %v6400 = vrot.slane %v6398, 4
        %v6401 = vrot.slane %v5890, 5
        %v6402 = vsel %vm1451, %v6400, %v6401
        %v6403 = vrot.slane %v6291, 5
        %v6404 = vrot.slane %v6403, 4
        %v6405 = vrot.slane %v5868, 5
        %v6406 = vsel %vm1451, %v6404, %v6405
        %v6407 = vrot.slane %v6405, 4
        %v6408 = vrot.slane %v5891, 5
        %v6409 = vsel %vm1451, %v6407, %v6408
        %v6410 = vrot.slane %v6292, 5
        %v6411 = vrot.slane %v6410, 4
        %v6412 = vrot.slane %v5870, 5
        %v6413 = vsel %vm1451, %v6411, %v6412
        %v6414 = vrot.slane %v6412, 4
        %v6415 = vrot.slane %v5892, 5
        %v6416 = vsel %vm1451, %v6414, %v6415
        %v6417 = vrot.slane %v6293, 5
        %v6418 = vrot.slane %v6417, 4
        %v6419 = vrot.slane %v5872, 5
        %v6420 = vsel %vm1451, %v6418, %v6419
        %v6421 = vrot.slane %v6419, 4
        %v6422 = vrot.slane %v5893, 5
        %v6423 = vsel %vm1451, %v6421, %v6422
        %v6424 = vrot.slane %v6294, 5
        %v6425 = vrot.slane %v6424, 4
        %v6426 = vrot.slane %v5874, 5
        %v6427 = vsel %vm1451, %v6425, %v6426
        %v6428 = vrot.slane %v6426, 4
        %v6429 = vrot.slane %v5894, 5
        %v6430 = vsel %vm1451, %v6428, %v6429
        %v6431 = vrot.slane %v6295, 5
        %v6432 = vrot.slane %v6431, 4
        %v6433 = vrot.slane %v5876, 5
        %v6434 = vsel %vm1451, %v6432, %v6433
        %v6435 = vrot.slane %v6433, 4
        %v6436 = vrot.slane %v5895, 5
        %v6437 = vsel %vm1451, %v6435, %v6436
        %v6438 = vrot.slane %v6296, 5
        %v6439 = vrot.slane %v6438, 4
        %v6440 = vrot.slane %v5878, 5
        %v6441 = vsel %vm1451, %v6439, %v6440
        %v6442 = vrot.slane %v6440, 4
        %v6443 = vrot.slane %v5896, 5
        %v6444 = vsel %vm1451, %v6442, %v6443
        %v6445 = vrot.slane %v6297, 5
        %v6446 = vrot.slane %v6445, 4
        %v6447 = vrot.slane %v5880, 5
        %v6448 = vsel %vm1451, %v6446, %v6447
        %v6449 = vrot.slane %v6447, 4
        %v6450 = vrot.slane %v5897, 5
        %v6451 = vsel %vm1451, %v6449, %v6450
        %v6452 = vrot.slane %v6298, 5
        %v6453 = vrot.slane %v6452, 4
        %v6454 = vrot.slane %v5882, 5
        %v6455 = vsel %vm1451, %v6453, %v6454
        %v6456 = vrot.slane %v6454, 4
        %v6457 = vrot.slane %v5898, 5
        %v6458 = vsel %vm1451, %v6456, %v6457
        %v6475 = vunpack.c.l.b16 %v4634
        %v6476 = vunpack.c.l.b16 %v4635
        %v6477 = vunpack.c.l.b16 %v4636
        %v6478 = vunpack.c.l.b16 %v4637
        %v6479 = vunpack.c.l.b16 %v4638
        %v6480 = vunpack.c.l.b16 %v4639
        %v6481 = vunpack.c.l.b16 %v4640
        %v6482 = vunpack.c.l.b16 %v4641
        %v6483 = vunpack.c.l.b16 %v4642
        %v6484 = vunpack.c.l.b16 %v4643
        %v6485 = vunpack.c.l.b16 %v4644
        %v6486 = vunpack.c.l.b16 %v4645
        %v6487 = vunpack.c.l.b16 %v4646
        %v6488 = vunpack.c.l.b16 %v4647
        %v6489 = vunpack.c.l.b16 %v4648
        %v6490 = vunpack.c.l.b16 %v4649
        %v6491 = vunpack.c.l.b16 %v4650
        %v6492 = vunpack.c.l.b16 %v4651
        %v6493 = vunpack.c.l.b16 %v4652
        %v6494 = vunpack.c.l.b16 %v4653
        %v6495 = vunpack.c.l.b16 %v4654
        %v6496 = vunpack.c.l.b16 %v4655
        %v6497 = vunpack.c.l.b16 %v4656
        %v6498 = vunpack.c.l.b16 %v4657
        %v6499 = vunpack.c.l.b16 %v4658
        %v6500 = vunpack.c.l.b16 %v4659
        %v6501 = vunpack.c.l.b16 %v4660
        %v6502 = vunpack.c.l.b16 %v4661
        %v6503 = vunpack.c.l.b16 %v4662
        %v6504 = vunpack.c.l.b16 %v4663
        %v6505 = vunpack.c.l.b16 %v4664
        %v6506 = vunpack.c.l.b16 %v4665
        %v6507 = vpack.c.b16 %v6476, %v6475
        %v6508 = vpack.c.b16 %v6478, %v6477
        %v6509 = vpack.c.b16 %v6480, %v6479
        %v6510 = vpack.c.b16 %v6482, %v6481
        %v6511 = vpack.c.b16 %v6484, %v6483
        %v6512 = vpack.c.b16 %v6486, %v6485
        %v6513 = vpack.c.b16 %v6488, %v6487
        %v6514 = vpack.c.b16 %v6490, %v6489
        %v6515 = vpack.c.b16 %v6492, %v6491
        %v6516 = vpack.c.b16 %v6494, %v6493
        %v6517 = vpack.c.b16 %v6496, %v6495
        %v6518 = vpack.c.b16 %v6498, %v6497
        %v6519 = vpack.c.b16 %v6500, %v6499
        %v6520 = vpack.c.b16 %v6502, %v6501
        %v6521 = vpack.c.b16 %v6504, %v6503
        %v6522 = vpack.c.b16 %v6506, %v6505
        %v6523 = vunpack.c.l.b16 %v4695
        %v6524 = vunpack.c.l.b16 %v4705
        %v6525 = vunpack.c.l.b16 %v4719
        %v6526 = vunpack.c.l.b16 %v4729
        %v6527 = vunpack.c.l.b16 %v4743
        %v6528 = vunpack.c.l.b16 %v4753
        %v6529 = vunpack.c.l.b16 %v4767
        %v6530 = vunpack.c.l.b16 %v4777
        %v6531 = vunpack.c.l.b16 %v4791
        %v6532 = vunpack.c.l.b16 %v4801
        %v6533 = vunpack.c.l.b16 %v4815
        %v6534 = vunpack.c.l.b16 %v4825
        %v6535 = vunpack.c.l.b16 %v4839
        %v6536 = vunpack.c.l.b16 %v4849
        %v6537 = vunpack.c.l.b16 %v4863
        %v6538 = vunpack.c.l.b16 %v4873
        %v6539 = vunpack.c.l.b16 %v4887
        %v6540 = vunpack.c.l.b16 %v4897
        %v6541 = vunpack.c.l.b16 %v4911
        %v6542 = vunpack.c.l.b16 %v4921
        %v6543 = vunpack.c.l.b16 %v4935
        %v6544 = vunpack.c.l.b16 %v4945
        %v6545 = vunpack.c.l.b16 %v4959
        %v6546 = vunpack.c.l.b16 %v4969
        %v6547 = vunpack.c.l.b16 %v4983
        %v6548 = vunpack.c.l.b16 %v4993
        %v6549 = vunpack.c.l.b16 %v5007
        %v6550 = vunpack.c.l.b16 %v5017
        %v6551 = vunpack.c.l.b16 %v5031
        %v6552 = vunpack.c.l.b16 %v5041
        %v6553 = vunpack.c.l.b16 %v5055
        %v6554 = vunpack.c.l.b16 %v5065
        %v6555 = vpack.c.b16 %v6524, %v6523
        %v6556 = vpack.c.b16 %v6526, %v6525
        %v6557 = vpack.c.b16 %v6528, %v6527
        %v6558 = vpack.c.b16 %v6530, %v6529
        %v6559 = vpack.c.b16 %v6532, %v6531
        %v6560 = vpack.c.b16 %v6534, %v6533
        %v6561 = vpack.c.b16 %v6536, %v6535
        %v6562 = vpack.c.b16 %v6538, %v6537
        %v6563 = vpack.c.b16 %v6540, %v6539
        %v6564 = vpack.c.b16 %v6542, %v6541
        %v6565 = vpack.c.b16 %v6544, %v6543
        %v6566 = vpack.c.b16 %v6546, %v6545
        %v6567 = vpack.c.b16 %v6548, %v6547
        %v6568 = vpack.c.b16 %v6550, %v6549
        %v6569 = vpack.c.b16 %v6552, %v6551
        %v6570 = vpack.c.b16 %v6554, %v6553
        %6571 = vrot.lane.b32.xlu0 %v6555, 8
        %v6572 = vpop.permute.xlu0 %6571
        %6573 = vrot.lane.b32.xlu0 %v6556, 8
        %v6574 = vpop.permute.xlu0 %6573
        %6575 = vrot.lane.b32.xlu0 %v6557, 8
        %v6576 = vpop.permute.xlu0 %6575
        %6577 = vrot.lane.b32.xlu0 %v6558, 8
        %v6578 = vpop.permute.xlu0 %6577
        %6579 = vrot.lane.b32.xlu0 %v6559, 8
        %v6580 = vpop.permute.xlu0 %6579
        %6581 = vrot.lane.b32.xlu0 %v6560, 8
        %v6582 = vpop.permute.xlu0 %6581
        %6583 = vrot.lane.b32.xlu0 %v6561, 8
        %v6584 = vpop.permute.xlu0 %6583
        %6585 = vrot.lane.b32.xlu0 %v6562, 8
        %v6586 = vpop.permute.xlu0 %6585
        %6587 = vrot.lane.b32.xlu0 %v6563, 8
        %v6588 = vpop.permute.xlu0 %6587
        %6589 = vrot.lane.b32.xlu0 %v6564, 8
        %v6590 = vpop.permute.xlu0 %6589
        %6591 = vrot.lane.b32.xlu0 %v6565, 8
        %v6592 = vpop.permute.xlu0 %6591
        %6593 = vrot.lane.b32.xlu0 %v6566, 8
        %v6594 = vpop.permute.xlu0 %6593
        %6595 = vrot.lane.b32.xlu0 %v6567, 8
        %v6596 = vpop.permute.xlu0 %6595
        %6597 = vrot.lane.b32.xlu0 %v6568, 8
        %v6598 = vpop.permute.xlu0 %6597
        %6599 = vrot.lane.b32.xlu0 %v6569, 8
        %v6600 = vpop.permute.xlu0 %6599
        %6601 = vrot.lane.b32.xlu0 %v6570, 8
        %v6602 = vpop.permute.xlu0 %6601
        %v6603 = vunpack.c.l.b16 %v5133
        %v6604 = vunpack.c.l.b16 %v5136
        %v6605 = vunpack.c.l.b16 %v5140
        %v6606 = vunpack.c.l.b16 %v5143
        %v6607 = vunpack.c.l.b16 %v5147
        %v6608 = vunpack.c.l.b16 %v5150
        %v6609 = vunpack.c.l.b16 %v5154
        %v6610 = vunpack.c.l.b16 %v5157
        %v6611 = vunpack.c.l.b16 %v5161
        %v6612 = vunpack.c.l.b16 %v5164
        %v6613 = vunpack.c.l.b16 %v5168
        %v6614 = vunpack.c.l.b16 %v5171
        %v6615 = vunpack.c.l.b16 %v5175
        %v6616 = vunpack.c.l.b16 %v5178
        %v6617 = vunpack.c.l.b16 %v5182
        %v6618 = vunpack.c.l.b16 %v5185
        %v6619 = vunpack.c.l.b16 %v5189
        %v6620 = vunpack.c.l.b16 %v5192
        %v6621 = vunpack.c.l.b16 %v5196
        %v6622 = vunpack.c.l.b16 %v5199
        %v6623 = vunpack.c.l.b16 %v5203
        %v6624 = vunpack.c.l.b16 %v5206
        %v6625 = vunpack.c.l.b16 %v5210
        %v6626 = vunpack.c.l.b16 %v5213
        %v6627 = vunpack.c.l.b16 %v5217
        %v6628 = vunpack.c.l.b16 %v5220
        %v6629 = vunpack.c.l.b16 %v5224
        %v6630 = vunpack.c.l.b16 %v5227
        %v6631 = vunpack.c.l.b16 %v5231
        %v6632 = vunpack.c.l.b16 %v5234
        %v6633 = vunpack.c.l.b16 %v5238
        %v6634 = vunpack.c.l.b16 %v5241
        %v6635 = vpack.c.b16 %v6604, %v6603
        %v6636 = vpack.c.b16 %v6606, %v6605
        %v6637 = vpack.c.b16 %v6608, %v6607
        %v6638 = vpack.c.b16 %v6610, %v6609
        %v6639 = vpack.c.b16 %v6612, %v6611
        %v6640 = vpack.c.b16 %v6614, %v6613
        %v6641 = vpack.c.b16 %v6616, %v6615
        %v6642 = vpack.c.b16 %v6618, %v6617
        %v6643 = vpack.c.b16 %v6620, %v6619
        %v6644 = vpack.c.b16 %v6622, %v6621
        %v6645 = vpack.c.b16 %v6624, %v6623
        %v6646 = vpack.c.b16 %v6626, %v6625
        %v6647 = vpack.c.b16 %v6628, %v6627
        %v6648 = vpack.c.b16 %v6630, %v6629
        %v6649 = vpack.c.b16 %v6632, %v6631
        %v6650 = vpack.c.b16 %v6634, %v6633
        %6651 = vrot.lane.b32.xlu0 %v6635, 16
        %v6652 = vpop.permute.xlu0 %6651
        %6653 = vrot.lane.b32.xlu0 %v6636, 16
        %v6654 = vpop.permute.xlu0 %6653
        %6655 = vrot.lane.b32.xlu0 %v6637, 16
        %v6656 = vpop.permute.xlu0 %6655
        %6657 = vrot.lane.b32.xlu0 %v6638, 16
        %v6658 = vpop.permute.xlu0 %6657
        %6659 = vrot.lane.b32.xlu0 %v6639, 16
        %v6660 = vpop.permute.xlu0 %6659
        %6661 = vrot.lane.b32.xlu0 %v6640, 16
        %v6662 = vpop.permute.xlu0 %6661
        %6663 = vrot.lane.b32.xlu0 %v6641, 16
        %v6664 = vpop.permute.xlu0 %6663
        %6665 = vrot.lane.b32.xlu0 %v6642, 16
        %v6666 = vpop.permute.xlu0 %6665
        %6667 = vrot.lane.b32.xlu0 %v6643, 16
        %v6668 = vpop.permute.xlu0 %6667
        %6669 = vrot.lane.b32.xlu0 %v6644, 16
        %v6670 = vpop.permute.xlu0 %6669
        %6671 = vrot.lane.b32.xlu0 %v6645, 16
        %v6672 = vpop.permute.xlu0 %6671
        %6673 = vrot.lane.b32.xlu0 %v6646, 16
        %v6674 = vpop.permute.xlu0 %6673
        %6675 = vrot.lane.b32.xlu0 %v6647, 16
        %v6676 = vpop.permute.xlu0 %6675
        %6677 = vrot.lane.b32.xlu0 %v6648, 16
        %v6678 = vpop.permute.xlu0 %6677
        %6679 = vrot.lane.b32.xlu0 %v6649, 16
        %v6680 = vpop.permute.xlu0 %6679
        %6681 = vrot.lane.b32.xlu0 %v6650, 16
        %v6682 = vpop.permute.xlu0 %6681
        %v6699 = vunpack.c.l.b16 %v5242
        %v6700 = vunpack.c.l.b16 %v5243
        %v6701 = vunpack.c.l.b16 %v5244
        %v6702 = vunpack.c.l.b16 %v5245
        %v6703 = vunpack.c.l.b16 %v5246
        %v6704 = vunpack.c.l.b16 %v5247
        %v6705 = vunpack.c.l.b16 %v5248
        %v6706 = vunpack.c.l.b16 %v5249
        %v6707 = vunpack.c.l.b16 %v5250
        %v6708 = vunpack.c.l.b16 %v5251
        %v6709 = vunpack.c.l.b16 %v5252
        %v6710 = vunpack.c.l.b16 %v5253
        %v6711 = vunpack.c.l.b16 %v5254
        %v6712 = vunpack.c.l.b16 %v5255
        %v6713 = vunpack.c.l.b16 %v5256
        %v6714 = vunpack.c.l.b16 %v5257
        %v6715 = vunpack.c.l.b16 %v5258
        %v6716 = vunpack.c.l.b16 %v5259
        %v6717 = vunpack.c.l.b16 %v5260
        %v6718 = vunpack.c.l.b16 %v5261
        %v6719 = vunpack.c.l.b16 %v5262
        %v6720 = vunpack.c.l.b16 %v5263
        %v6721 = vunpack.c.l.b16 %v5264
        %v6722 = vunpack.c.l.b16 %v5265
        %v6723 = vunpack.c.l.b16 %v5266
        %v6724 = vunpack.c.l.b16 %v5267
        %v6725 = vunpack.c.l.b16 %v5268
        %v6726 = vunpack.c.l.b16 %v5269
        %v6727 = vunpack.c.l.b16 %v5270
        %v6728 = vunpack.c.l.b16 %v5271
        %v6729 = vunpack.c.l.b16 %v5272
        %v6730 = vunpack.c.l.b16 %v5273
        %v6731 = vpack.c.b16 %v6700, %v6699
        %v6732 = vpack.c.b16 %v6702, %v6701
        %v6733 = vpack.c.b16 %v6704, %v6703
        %v6734 = vpack.c.b16 %v6706, %v6705
        %v6735 = vpack.c.b16 %v6708, %v6707
        %v6736 = vpack.c.b16 %v6710, %v6709
        %v6737 = vpack.c.b16 %v6712, %v6711
        %v6738 = vpack.c.b16 %v6714, %v6713
        %v6739 = vpack.c.b16 %v6716, %v6715
        %v6740 = vpack.c.b16 %v6718, %v6717
        %v6741 = vpack.c.b16 %v6720, %v6719
        %v6742 = vpack.c.b16 %v6722, %v6721
        %v6743 = vpack.c.b16 %v6724, %v6723
        %v6744 = vpack.c.b16 %v6726, %v6725
        %v6745 = vpack.c.b16 %v6728, %v6727
        %v6746 = vpack.c.b16 %v6730, %v6729
        %6747 = vrot.lane.b32.xlu0 %v6731, 24
        %v6748 = vpop.permute.xlu0 %6747
        %6749 = vrot.lane.b32.xlu0 %v6732, 24
        %v6750 = vpop.permute.xlu0 %6749
        %6751 = vrot.lane.b32.xlu0 %v6733, 24
        %v6752 = vpop.permute.xlu0 %6751
        %6753 = vrot.lane.b32.xlu0 %v6734, 24
        %v6754 = vpop.permute.xlu0 %6753
        %6755 = vrot.lane.b32.xlu0 %v6735, 24
        %v6756 = vpop.permute.xlu0 %6755
        %6757 = vrot.lane.b32.xlu0 %v6736, 24
        %v6758 = vpop.permute.xlu0 %6757
        %6759 = vrot.lane.b32.xlu0 %v6737, 24
        %v6760 = vpop.permute.xlu0 %6759
        %6761 = vrot.lane.b32.xlu0 %v6738, 24
        %v6762 = vpop.permute.xlu0 %6761
        %6763 = vrot.lane.b32.xlu0 %v6739, 24
        %v6764 = vpop.permute.xlu0 %6763
        %6765 = vrot.lane.b32.xlu0 %v6740, 24
        %v6766 = vpop.permute.xlu0 %6765
        %6767 = vrot.lane.b32.xlu0 %v6741, 24
        %v6768 = vpop.permute.xlu0 %6767
        %6769 = vrot.lane.b32.xlu0 %v6742, 24
        %v6770 = vpop.permute.xlu0 %6769
        %6771 = vrot.lane.b32.xlu0 %v6743, 24
        %v6772 = vpop.permute.xlu0 %6771
        %6773 = vrot.lane.b32.xlu0 %v6744, 24
        %v6774 = vpop.permute.xlu0 %6773
        %6775 = vrot.lane.b32.xlu0 %v6745, 24
        %v6776 = vpop.permute.xlu0 %6775
        %6777 = vrot.lane.b32.xlu0 %v6746, 24
        %v6778 = vpop.permute.xlu0 %6777
        %v6779 = vunpack.c.l.b16 %v5303
        %v6780 = vunpack.c.l.b16 %v5313
        %v6781 = vunpack.c.l.b16 %v5327
        %v6782 = vunpack.c.l.b16 %v5337
        %v6783 = vunpack.c.l.b16 %v5351
        %v6784 = vunpack.c.l.b16 %v5361
        %v6785 = vunpack.c.l.b16 %v5375
        %v6786 = vunpack.c.l.b16 %v5385
        %v6787 = vunpack.c.l.b16 %v5399
        %v6788 = vunpack.c.l.b16 %v5409
        %v6789 = vunpack.c.l.b16 %v5423
        %v6790 = vunpack.c.l.b16 %v5433
        %v6791 = vunpack.c.l.b16 %v5447
        %v6792 = vunpack.c.l.b16 %v5457
        %v6793 = vunpack.c.l.b16 %v5471
        %v6794 = vunpack.c.l.b16 %v5481
        %v6795 = vunpack.c.l.b16 %v5495
        %v6796 = vunpack.c.l.b16 %v5505
        %v6797 = vunpack.c.l.b16 %v5519
        %v6798 = vunpack.c.l.b16 %v5529
        %v6799 = vunpack.c.l.b16 %v5543
        %v6800 = vunpack.c.l.b16 %v5553
        %v6801 = vunpack.c.l.b16 %v5567
        %v6802 = vunpack.c.l.b16 %v5577
        %v6803 = vunpack.c.l.b16 %v5591
        %v6804 = vunpack.c.l.b16 %v5601
        %v6805 = vunpack.c.l.b16 %v5615
        %v6806 = vunpack.c.l.b16 %v5625
        %v6807 = vunpack.c.l.b16 %v5639
        %v6808 = vunpack.c.l.b16 %v5649
        %v6809 = vunpack.c.l.b16 %v5663
        %v6810 = vunpack.c.l.b16 %v5673
        %v6811 = vpack.c.b16 %v6780, %v6779
        %v6812 = vpack.c.b16 %v6782, %v6781
        %v6813 = vpack.c.b16 %v6784, %v6783
        %v6814 = vpack.c.b16 %v6786, %v6785
        %v6815 = vpack.c.b16 %v6788, %v6787
        %v6816 = vpack.c.b16 %v6790, %v6789
        %v6817 = vpack.c.b16 %v6792, %v6791
        %v6818 = vpack.c.b16 %v6794, %v6793
        %v6819 = vpack.c.b16 %v6796, %v6795
        %v6820 = vpack.c.b16 %v6798, %v6797
        %v6821 = vpack.c.b16 %v6800, %v6799
        %v6822 = vpack.c.b16 %v6802, %v6801
        %v6823 = vpack.c.b16 %v6804, %v6803
        %v6824 = vpack.c.b16 %v6806, %v6805
        %v6825 = vpack.c.b16 %v6808, %v6807
        %v6826 = vpack.c.b16 %v6810, %v6809
        %6827 = vrot.lane.b32.xlu0 %v6811, 32
        %v6828 = vpop.permute.xlu0 %6827
        %6829 = vrot.lane.b32.xlu0 %v6812, 32
        %v6830 = vpop.permute.xlu0 %6829
        %6831 = vrot.lane.b32.xlu0 %v6813, 32
        %v6832 = vpop.permute.xlu0 %6831
        %6833 = vrot.lane.b32.xlu0 %v6814, 32
        %v6834 = vpop.permute.xlu0 %6833
        %6835 = vrot.lane.b32.xlu0 %v6815, 32
        %v6836 = vpop.permute.xlu0 %6835
        %6837 = vrot.lane.b32.xlu0 %v6816, 32
        %v6838 = vpop.permute.xlu0 %6837
        %6839 = vrot.lane.b32.xlu0 %v6817, 32
        %v6840 = vpop.permute.xlu0 %6839
        %6841 = vrot.lane.b32.xlu0 %v6818, 32
        %v6842 = vpop.permute.xlu0 %6841
        %6843 = vrot.lane.b32.xlu0 %v6819, 32
        %v6844 = vpop.permute.xlu0 %6843
        %6845 = vrot.lane.b32.xlu0 %v6820, 32
        %v6846 = vpop.permute.xlu0 %6845
        %6847 = vrot.lane.b32.xlu0 %v6821, 32
        %v6848 = vpop.permute.xlu0 %6847
        %6849 = vrot.lane.b32.xlu0 %v6822, 32
        %v6850 = vpop.permute.xlu0 %6849
        %6851 = vrot.lane.b32.xlu0 %v6823, 32
        %v6852 = vpop.permute.xlu0 %6851
        %6853 = vrot.lane.b32.xlu0 %v6824, 32
        %v6854 = vpop.permute.xlu0 %6853
        %6855 = vrot.lane.b32.xlu0 %v6825, 32
        %v6856 = vpop.permute.xlu0 %6855
        %6857 = vrot.lane.b32.xlu0 %v6826, 32
        %v6858 = vpop.permute.xlu0 %6857
        %v6859 = vunpack.c.l.b16 %v5741
        %v6860 = vunpack.c.l.b16 %v5744
        %v6861 = vunpack.c.l.b16 %v5748
        %v6862 = vunpack.c.l.b16 %v5751
        %v6863 = vunpack.c.l.b16 %v5755
        %v6864 = vunpack.c.l.b16 %v5758
        %v6865 = vunpack.c.l.b16 %v5762
        %v6866 = vunpack.c.l.b16 %v5765
        %v6867 = vunpack.c.l.b16 %v5769
        %v6868 = vunpack.c.l.b16 %v5772
        %v6869 = vunpack.c.l.b16 %v5776
        %v6870 = vunpack.c.l.b16 %v5779
        %v6871 = vunpack.c.l.b16 %v5783
        %v6872 = vunpack.c.l.b16 %v5786
        %v6873 = vunpack.c.l.b16 %v5790
        %v6874 = vunpack.c.l.b16 %v5793
        %v6875 = vunpack.c.l.b16 %v5797
        %v6876 = vunpack.c.l.b16 %v5800
        %v6877 = vunpack.c.l.b16 %v5804
        %v6878 = vunpack.c.l.b16 %v5807
        %v6879 = vunpack.c.l.b16 %v5811
        %v6880 = vunpack.c.l.b16 %v5814
        %v6881 = vunpack.c.l.b16 %v5818
        %v6882 = vunpack.c.l.b16 %v5821
        %v6883 = vunpack.c.l.b16 %v5825
        %v6884 = vunpack.c.l.b16 %v5828
        %v6885 = vunpack.c.l.b16 %v5832
        %v6886 = vunpack.c.l.b16 %v5835
        %v6887 = vunpack.c.l.b16 %v5839
        %v6888 = vunpack.c.l.b16 %v5842
        %v6889 = vunpack.c.l.b16 %v5846
        %v6890 = vunpack.c.l.b16 %v5849
        %v6891 = vpack.c.b16 %v6860, %v6859
        %v6892 = vpack.c.b16 %v6862, %v6861
        %v6893 = vpack.c.b16 %v6864, %v6863
        %v6894 = vpack.c.b16 %v6866, %v6865
        %v6895 = vpack.c.b16 %v6868, %v6867
        %v6896 = vpack.c.b16 %v6870, %v6869
        %v6897 = vpack.c.b16 %v6872, %v6871
        %v6898 = vpack.c.b16 %v6874, %v6873
        %v6899 = vpack.c.b16 %v6876, %v6875
        %v6900 = vpack.c.b16 %v6878, %v6877
        %v6901 = vpack.c.b16 %v6880, %v6879
        %v6902 = vpack.c.b16 %v6882, %v6881
        %v6903 = vpack.c.b16 %v6884, %v6883
        %v6904 = vpack.c.b16 %v6886, %v6885
        %v6905 = vpack.c.b16 %v6888, %v6887
        %v6906 = vpack.c.b16 %v6890, %v6889
        %6907 = vrot.lane.b32.xlu0 %v6891, 40
        %v6908 = vpop.permute.xlu0 %6907
        %6909 = vrot.lane.b32.xlu0 %v6892, 40
        %v6910 = vpop.permute.xlu0 %6909
        %6911 = vrot.lane.b32.xlu0 %v6893, 40
        %v6912 = vpop.permute.xlu0 %6911
        %6913 = vrot.lane.b32.xlu0 %v6894, 40
        %v6914 = vpop.permute.xlu0 %6913
        %6915 = vrot.lane.b32.xlu0 %v6895, 40
        %v6916 = vpop.permute.xlu0 %6915
        %6917 = vrot.lane.b32.xlu0 %v6896, 40
        %v6918 = vpop.permute.xlu0 %6917
        %6919 = vrot.lane.b32.xlu0 %v6897, 40
        %v6920 = vpop.permute.xlu0 %6919
        %6921 = vrot.lane.b32.xlu0 %v6898, 40
        %v6922 = vpop.permute.xlu0 %6921
        %6923 = vrot.lane.b32.xlu0 %v6899, 40
        %v6924 = vpop.permute.xlu0 %6923
        %6925 = vrot.lane.b32.xlu0 %v6900, 40
        %v6926 = vpop.permute.xlu0 %6925
        %6927 = vrot.lane.b32.xlu0 %v6901, 40
        %v6928 = vpop.permute.xlu0 %6927
        %6929 = vrot.lane.b32.xlu0 %v6902, 40
        %v6930 = vpop.permute.xlu0 %6929
        %6931 = vrot.lane.b32.xlu0 %v6903, 40
        %v6932 = vpop.permute.xlu0 %6931
        %6933 = vrot.lane.b32.xlu0 %v6904, 40
        %v6934 = vpop.permute.xlu0 %6933
        %6935 = vrot.lane.b32.xlu0 %v6905, 40
        %v6936 = vpop.permute.xlu0 %6935
        %6937 = vrot.lane.b32.xlu0 %v6906, 40
        %v6938 = vpop.permute.xlu0 %6937
        %v6955 = vunpack.c.l.b16 %v5851
        %v6956 = vunpack.c.l.b16 %v5852
        %v6957 = vunpack.c.l.b16 %v5853
        %v6958 = vunpack.c.l.b16 %v5854
        %v6959 = vunpack.c.l.b16 %v5855
        %v6960 = vunpack.c.l.b16 %v5856
        %v6961 = vunpack.c.l.b16 %v5857
        %v6962 = vunpack.c.l.b16 %v5858
        %v6963 = vunpack.c.l.b16 %v5859
        %v6964 = vunpack.c.l.b16 %v5860
        %v6965 = vunpack.c.l.b16 %v5861
        %v6966 = vunpack.c.l.b16 %v5862
        %v6967 = vunpack.c.l.b16 %v5863
        %v6968 = vunpack.c.l.b16 %v5864
        %v6969 = vunpack.c.l.b16 %v5865
        %v6970 = vunpack.c.l.b16 %v5866
        %v6971 = vunpack.c.l.b16 %v5867
        %v6972 = vunpack.c.l.b16 %v5868
        %v6973 = vunpack.c.l.b16 %v5869
        %v6974 = vunpack.c.l.b16 %v5870
        %v6975 = vunpack.c.l.b16 %v5871
        %v6976 = vunpack.c.l.b16 %v5872
        %v6977 = vunpack.c.l.b16 %v5873
        %v6978 = vunpack.c.l.b16 %v5874
        %v6979 = vunpack.c.l.b16 %v5875
        %v6980 = vunpack.c.l.b16 %v5876
        %v6981 = vunpack.c.l.b16 %v5877
        %v6982 = vunpack.c.l.b16 %v5878
        %v6983 = vunpack.c.l.b16 %v5879
        %v6984 = vunpack.c.l.b16 %v5880
        %v6985 = vunpack.c.l.b16 %v5881
        %v6986 = vunpack.c.l.b16 %v5882
        %v6987 = vpack.c.b16 %v6956, %v6955
        %v6988 = vpack.c.b16 %v6958, %v6957
        %v6989 = vpack.c.b16 %v6960, %v6959
        %v6990 = vpack.c.b16 %v6962, %v6961
        %v6991 = vpack.c.b16 %v6964, %v6963
        %v6992 = vpack.c.b16 %v6966, %v6965
        %v6993 = vpack.c.b16 %v6968, %v6967
        %v6994 = vpack.c.b16 %v6970, %v6969
        %v6995 = vpack.c.b16 %v6972, %v6971
        %v6996 = vpack.c.b16 %v6974, %v6973
        %v6997 = vpack.c.b16 %v6976, %v6975
        %v6998 = vpack.c.b16 %v6978, %v6977
        %v6999 = vpack.c.b16 %v6980, %v6979
        %v7000 = vpack.c.b16 %v6982, %v6981
        %v7001 = vpack.c.b16 %v6984, %v6983
        %v7002 = vpack.c.b16 %v6986, %v6985
        %7003 = vrot.lane.b32.xlu0 %v6987, 48
        %v7004 = vpop.permute.xlu0 %7003
        %7005 = vrot.lane.b32.xlu0 %v6988, 48
        %v7006 = vpop.permute.xlu0 %7005
        %7007 = vrot.lane.b32.xlu0 %v6989, 48
        %v7008 = vpop.permute.xlu0 %7007
        %7009 = vrot.lane.b32.xlu0 %v6990, 48
        %v7010 = vpop.permute.xlu0 %7009
        %7011 = vrot.lane.b32.xlu0 %v6991, 48
        %v7012 = vpop.permute.xlu0 %7011
        %7013 = vrot.lane.b32.xlu0 %v6992, 48
        %v7014 = vpop.permute.xlu0 %7013
        %7015 = vrot.lane.b32.xlu0 %v6993, 48
        %v7016 = vpop.permute.xlu0 %7015
        %7017 = vrot.lane.b32.xlu0 %v6994, 48
        %v7018 = vpop.permute.xlu0 %7017
        %7019 = vrot.lane.b32.xlu0 %v6995, 48
        %v7020 = vpop.permute.xlu0 %7019
        %7021 = vrot.lane.b32.xlu0 %v6996, 48
        %v7022 = vpop.permute.xlu0 %7021
        %7023 = vrot.lane.b32.xlu0 %v6997, 48
        %v7024 = vpop.permute.xlu0 %7023
        %7025 = vrot.lane.b32.xlu0 %v6998, 48
        %v7026 = vpop.permute.xlu0 %7025
        %7027 = vrot.lane.b32.xlu0 %v6999, 48
        %v7028 = vpop.permute.xlu0 %7027
        %7029 = vrot.lane.b32.xlu0 %v7000, 48
        %v7030 = vpop.permute.xlu0 %7029
        %7031 = vrot.lane.b32.xlu0 %v7001, 48
        %v7032 = vpop.permute.xlu0 %7031
        %7033 = vrot.lane.b32.xlu0 %v7002, 48
        %v7034 = vpop.permute.xlu0 %7033
        %v7035 = vunpack.c.l.b16 %v5912
        %v7036 = vunpack.c.l.b16 %v5922
        %v7037 = vunpack.c.l.b16 %v5936
        %v7038 = vunpack.c.l.b16 %v5946
        %v7039 = vunpack.c.l.b16 %v5960
        %v7040 = vunpack.c.l.b16 %v5970
        %v7041 = vunpack.c.l.b16 %v5984
        %v7042 = vunpack.c.l.b16 %v5994
        %v7043 = vunpack.c.l.b16 %v6008
        %v7044 = vunpack.c.l.b16 %v6018
        %v7045 = vunpack.c.l.b16 %v6032
        %v7046 = vunpack.c.l.b16 %v6042
        %v7047 = vunpack.c.l.b16 %v6056
        %v7048 = vunpack.c.l.b16 %v6066
        %v7049 = vunpack.c.l.b16 %v6080
        %v7050 = vunpack.c.l.b16 %v6090
        %v7051 = vunpack.c.l.b16 %v6104
        %v7052 = vunpack.c.l.b16 %v6114
        %v7053 = vunpack.c.l.b16 %v6128
        %v7054 = vunpack.c.l.b16 %v6138
        %v7055 = vunpack.c.l.b16 %v6152
        %v7056 = vunpack.c.l.b16 %v6162
        %v7057 = vunpack.c.l.b16 %v6176
        %v7058 = vunpack.c.l.b16 %v6186
        %v7059 = vunpack.c.l.b16 %v6200
        %v7060 = vunpack.c.l.b16 %v6210
        %v7061 = vunpack.c.l.b16 %v6224
        %v7062 = vunpack.c.l.b16 %v6234
        %v7063 = vunpack.c.l.b16 %v6248
        %v7064 = vunpack.c.l.b16 %v6258
        %v7065 = vunpack.c.l.b16 %v6272
        %v7066 = vunpack.c.l.b16 %v6282
        %v7067 = vpack.c.b16 %v7036, %v7035
        %v7068 = vpack.c.b16 %v7038, %v7037
        %v7069 = vpack.c.b16 %v7040, %v7039
        %v7070 = vpack.c.b16 %v7042, %v7041
        %v7071 = vpack.c.b16 %v7044, %v7043
        %v7072 = vpack.c.b16 %v7046, %v7045
        %v7073 = vpack.c.b16 %v7048, %v7047
        %v7074 = vpack.c.b16 %v7050, %v7049
        %v7075 = vpack.c.b16 %v7052, %v7051
        %v7076 = vpack.c.b16 %v7054, %v7053
        %v7077 = vpack.c.b16 %v7056, %v7055
        %v7078 = vpack.c.b16 %v7058, %v7057
        %v7079 = vpack.c.b16 %v7060, %v7059
        %v7080 = vpack.c.b16 %v7062, %v7061
        %v7081 = vpack.c.b16 %v7064, %v7063
        %v7082 = vpack.c.b16 %v7066, %v7065
        %7083 = vrot.lane.b32.xlu0 %v7067, 56
        %v7084 = vpop.permute.xlu0 %7083
        %7085 = vrot.lane.b32.xlu0 %v7068, 56
        %v7086 = vpop.permute.xlu0 %7085
        %7087 = vrot.lane.b32.xlu0 %v7069, 56
        %v7088 = vpop.permute.xlu0 %7087
        %7089 = vrot.lane.b32.xlu0 %v7070, 56
        %v7090 = vpop.permute.xlu0 %7089
        %7091 = vrot.lane.b32.xlu0 %v7071, 56
        %v7092 = vpop.permute.xlu0 %7091
        %7093 = vrot.lane.b32.xlu0 %v7072, 56
        %v7094 = vpop.permute.xlu0 %7093
        %7095 = vrot.lane.b32.xlu0 %v7073, 56
        %v7096 = vpop.permute.xlu0 %7095
        %7097 = vrot.lane.b32.xlu0 %v7074, 56
        %v7098 = vpop.permute.xlu0 %7097
        %7099 = vrot.lane.b32.xlu0 %v7075, 56
        %v7100 = vpop.permute.xlu0 %7099
        %7101 = vrot.lane.b32.xlu0 %v7076, 56
        %v7102 = vpop.permute.xlu0 %7101
        %7103 = vrot.lane.b32.xlu0 %v7077, 56
        %v7104 = vpop.permute.xlu0 %7103
        %7105 = vrot.lane.b32.xlu0 %v7078, 56
        %v7106 = vpop.permute.xlu0 %7105
        %7107 = vrot.lane.b32.xlu0 %v7079, 56
        %v7108 = vpop.permute.xlu0 %7107
        %7109 = vrot.lane.b32.xlu0 %v7080, 56
        %v7110 = vpop.permute.xlu0 %7109
        %7111 = vrot.lane.b32.xlu0 %v7081, 56
        %v7112 = vpop.permute.xlu0 %7111
        %7113 = vrot.lane.b32.xlu0 %v7082, 56
        %v7114 = vpop.permute.xlu0 %7113
        %v7115 = vunpack.c.l.b16 %v6350
        %v7116 = vunpack.c.l.b16 %v6353
        %v7117 = vunpack.c.l.b16 %v6357
        %v7118 = vunpack.c.l.b16 %v6360
        %v7119 = vunpack.c.l.b16 %v6364
        %v7120 = vunpack.c.l.b16 %v6367
        %v7121 = vunpack.c.l.b16 %v6371
        %v7122 = vunpack.c.l.b16 %v6374
        %v7123 = vunpack.c.l.b16 %v6378
        %v7124 = vunpack.c.l.b16 %v6381
        %v7125 = vunpack.c.l.b16 %v6385
        %v7126 = vunpack.c.l.b16 %v6388
        %v7127 = vunpack.c.l.b16 %v6392
        %v7128 = vunpack.c.l.b16 %v6395
        %v7129 = vunpack.c.l.b16 %v6399
        %v7130 = vunpack.c.l.b16 %v6402
        %v7131 = vunpack.c.l.b16 %v6406
        %v7132 = vunpack.c.l.b16 %v6409
        %v7133 = vunpack.c.l.b16 %v6413
        %v7134 = vunpack.c.l.b16 %v6416
        %v7135 = vunpack.c.l.b16 %v6420
        %v7136 = vunpack.c.l.b16 %v6423
        %v7137 = vunpack.c.l.b16 %v6427
        %v7138 = vunpack.c.l.b16 %v6430
        %v7139 = vunpack.c.l.b16 %v6434
        %v7140 = vunpack.c.l.b16 %v6437
        %v7141 = vunpack.c.l.b16 %v6441
        %v7142 = vunpack.c.l.b16 %v6444
        %v7143 = vunpack.c.l.b16 %v6448
        %v7144 = vunpack.c.l.b16 %v6451
        %v7145 = vunpack.c.l.b16 %v6455
        %v7146 = vunpack.c.l.b16 %v6458
        %v7147 = vpack.c.b16 %v7116, %v7115
        %v7148 = vpack.c.b16 %v7118, %v7117
        %v7149 = vpack.c.b16 %v7120, %v7119
        %v7150 = vpack.c.b16 %v7122, %v7121
        %v7151 = vpack.c.b16 %v7124, %v7123
        %v7152 = vpack.c.b16 %v7126, %v7125
        %v7153 = vpack.c.b16 %v7128, %v7127
        %v7154 = vpack.c.b16 %v7130, %v7129
        %v7155 = vpack.c.b16 %v7132, %v7131
        %v7156 = vpack.c.b16 %v7134, %v7133
        %v7157 = vpack.c.b16 %v7136, %v7135
        %v7158 = vpack.c.b16 %v7138, %v7137
        %v7159 = vpack.c.b16 %v7140, %v7139
        %v7160 = vpack.c.b16 %v7142, %v7141
        %v7161 = vpack.c.b16 %v7144, %v7143
        %v7162 = vpack.c.b16 %v7146, %v7145
        %7163 = vrot.lane.b32.xlu0 %v7147, 64
        %v7164 = vpop.permute.xlu0 %7163
        %7165 = vrot.lane.b32.xlu0 %v7148, 64
        %v7166 = vpop.permute.xlu0 %7165
        %7167 = vrot.lane.b32.xlu0 %v7149, 64
        %v7168 = vpop.permute.xlu0 %7167
        %7169 = vrot.lane.b32.xlu0 %v7150, 64
        %v7170 = vpop.permute.xlu0 %7169
        %7171 = vrot.lane.b32.xlu0 %v7151, 64
        %v7172 = vpop.permute.xlu0 %7171
        %7173 = vrot.lane.b32.xlu0 %v7152, 64
        %v7174 = vpop.permute.xlu0 %7173
        %7175 = vrot.lane.b32.xlu0 %v7153, 64
        %v7176 = vpop.permute.xlu0 %7175
        %7177 = vrot.lane.b32.xlu0 %v7154, 64
        %v7178 = vpop.permute.xlu0 %7177
        %7179 = vrot.lane.b32.xlu0 %v7155, 64
        %v7180 = vpop.permute.xlu0 %7179
        %7181 = vrot.lane.b32.xlu0 %v7156, 64
        %v7182 = vpop.permute.xlu0 %7181
        %7183 = vrot.lane.b32.xlu0 %v7157, 64
        %v7184 = vpop.permute.xlu0 %7183
        %7185 = vrot.lane.b32.xlu0 %v7158, 64
        %v7186 = vpop.permute.xlu0 %7185
        %7187 = vrot.lane.b32.xlu0 %v7159, 64
        %v7188 = vpop.permute.xlu0 %7187
        %7189 = vrot.lane.b32.xlu0 %v7160, 64
        %v7190 = vpop.permute.xlu0 %7189
        %7191 = vrot.lane.b32.xlu0 %v7161, 64
        %v7192 = vpop.permute.xlu0 %7191
        %7193 = vrot.lane.b32.xlu0 %v7162, 64
        %v7194 = vpop.permute.xlu0 %7193
        %v7197 = vsel %vm3566, %v6507, %v6572
        %v7200 = vsel %vm3566, %v6508, %v6574
        %v7203 = vsel %vm3566, %v6509, %v6576
        %v7206 = vsel %vm3566, %v6510, %v6578
        %v7209 = vsel %vm3566, %v6511, %v6580
        %v7212 = vsel %vm3566, %v6512, %v6582
        %v7215 = vsel %vm3566, %v6513, %v6584
        %v7218 = vsel %vm3566, %v6514, %v6586
        %v7221 = vsel %vm3566, %v6515, %v6588
        %v7224 = vsel %vm3566, %v6516, %v6590
        %v7227 = vsel %vm3566, %v6517, %v6592
        %v7230 = vsel %vm3566, %v6518, %v6594
        %v7233 = vsel %vm3566, %v6519, %v6596
        %v7236 = vsel %vm3566, %v6520, %v6598
        %v7239 = vsel %vm3566, %v6521, %v6600
        %v7242 = vsel %vm3566, %v6522, %v6602
        %v7244 = vsel %vm3632, %v7197, %v6652
        %v7246 = vsel %vm3632, %v7200, %v6654
        %v7248 = vsel %vm3632, %v7203, %v6656
        %v7250 = vsel %vm3632, %v7206, %v6658
        %v7252 = vsel %vm3632, %v7209, %v6660
        %v7254 = vsel %vm3632, %v7212, %v6662
        %v7256 = vsel %vm3632, %v7215, %v6664
        %v7258 = vsel %vm3632, %v7218, %v6666
        %v7260 = vsel %vm3632, %v7221, %v6668
        %v7262 = vsel %vm3632, %v7224, %v6670
        %v7264 = vsel %vm3632, %v7227, %v6672
        %v7266 = vsel %vm3632, %v7230, %v6674
        %v7268 = vsel %vm3632, %v7233, %v6676
        %v7270 = vsel %vm3632, %v7236, %v6678
        %v7272 = vsel %vm3632, %v7239, %v6680
        %v7274 = vsel %vm3632, %v7242, %v6682
        %v7276 = vsel %vm3698, %v7244, %v6748
        %v7278 = vsel %vm3698, %v7246, %v6750
        %v7280 = vsel %vm3698, %v7248, %v6752
        %v7282 = vsel %vm3698, %v7250, %v6754
        %v7284 = vsel %vm3698, %v7252, %v6756
        %v7286 = vsel %vm3698, %v7254, %v6758
        %v7288 = vsel %vm3698, %v7256, %v6760
        %v7290 = vsel %vm3698, %v7258, %v6762
        %v7292 = vsel %vm3698, %v7260, %v6764
        %v7294 = vsel %vm3698, %v7262, %v6766
        %v7296 = vsel %vm3698, %v7264, %v6768
        %v7298 = vsel %vm3698, %v7266, %v6770
        %v7300 = vsel %vm3698, %v7268, %v6772
        %v7302 = vsel %vm3698, %v7270, %v6774
        %v7304 = vsel %vm3698, %v7272, %v6776
        %v7306 = vsel %vm3698, %v7274, %v6778
        %v7308 = vsel %vm3764, %v7276, %v6828
        %v7310 = vsel %vm3764, %v7278, %v6830
        %v7312 = vsel %vm3764, %v7280, %v6832
        %v7314 = vsel %vm3764, %v7282, %v6834
        %v7316 = vsel %vm3764, %v7284, %v6836
        %v7318 = vsel %vm3764, %v7286, %v6838
        %v7320 = vsel %vm3764, %v7288, %v6840
        %v7322 = vsel %vm3764, %v7290, %v6842
        %v7324 = vsel %vm3764, %v7292, %v6844
        %v7326 = vsel %vm3764, %v7294, %v6846
        %v7328 = vsel %vm3764, %v7296, %v6848
        %v7330 = vsel %vm3764, %v7298, %v6850
        %v7332 = vsel %vm3764, %v7300, %v6852
        %v7334 = vsel %vm3764, %v7302, %v6854
        %v7336 = vsel %vm3764, %v7304, %v6856
        %v7338 = vsel %vm3764, %v7306, %v6858
        %vm7339 = vcmask 326656
        %v7341 = vsel %vm7339, %v7308, %v6908
        %v7343 = vsel %vm7339, %v7310, %v6910
        %v7345 = vsel %vm7339, %v7312, %v6912
        %v7347 = vsel %vm7339, %v7314, %v6914
        %v7349 = vsel %vm7339, %v7316, %v6916
        %v7351 = vsel %vm7339, %v7318, %v6918
        %v7353 = vsel %vm7339, %v7320, %v6920
        %v7355 = vsel %vm7339, %v7322, %v6922
        %v7357 = vsel %vm7339, %v7324, %v6924
        %v7359 = vsel %vm7339, %v7326, %v6926
        %v7361 = vsel %vm7339, %v7328, %v6928
        %v7363 = vsel %vm7339, %v7330, %v6930
        %v7365 = vsel %vm7339, %v7332, %v6932
        %v7367 = vsel %vm7339, %v7334, %v6934
        %v7369 = vsel %vm7339, %v7336, %v6936
        %v7371 = vsel %vm7339, %v7338, %v6938
        %vm7372 = vcmask 392192
        %v7374 = vsel %vm7372, %v7341, %v7004
        %v7376 = vsel %vm7372, %v7343, %v7006
        %v7378 = vsel %vm7372, %v7345, %v7008
        %v7380 = vsel %vm7372, %v7347, %v7010
        %v7382 = vsel %vm7372, %v7349, %v7012
        %v7384 = vsel %vm7372, %v7351, %v7014
        %v7386 = vsel %vm7372, %v7353, %v7016
        %v7388 = vsel %vm7372, %v7355, %v7018
        %v7390 = vsel %vm7372, %v7357, %v7020
        %v7392 = vsel %vm7372, %v7359, %v7022
        %v7394 = vsel %vm7372, %v7361, %v7024
        %v7396 = vsel %vm7372, %v7363, %v7026
        %v7398 = vsel %vm7372, %v7365, %v7028
        %v7400 = vsel %vm7372, %v7367, %v7030
        %v7402 = vsel %vm7372, %v7369, %v7032
        %v7404 = vsel %vm7372, %v7371, %v7034
        %vm7405 = vcmask 457728
        %v7407 = vsel %vm7405, %v7374, %v7084
        %v7409 = vsel %vm7405, %v7376, %v7086
        %v7411 = vsel %vm7405, %v7378, %v7088
        %v7413 = vsel %vm7405, %v7380, %v7090
        %v7415 = vsel %vm7405, %v7382, %v7092
        %v7417 = vsel %vm7405, %v7384, %v7094
        %v7419 = vsel %vm7405, %v7386, %v7096
        %v7421 = vsel %vm7405, %v7388, %v7098
        %v7423 = vsel %vm7405, %v7390, %v7100
        %v7425 = vsel %vm7405, %v7392, %v7102
        %v7427 = vsel %vm7405, %v7394, %v7104
        %v7429 = vsel %vm7405, %v7396, %v7106
        %v7431 = vsel %vm7405, %v7398, %v7108
        %v7433 = vsel %vm7405, %v7400, %v7110
        %v7435 = vsel %vm7405, %v7402, %v7112
        %v7437 = vsel %vm7405, %v7404, %v7114
        %vm7438 = vcmask 523264
        %v7440 = vsel %vm7438, %v7407, %v7164
        %v7442 = vsel %vm7438, %v7409, %v7166
        %v7444 = vsel %vm7438, %v7411, %v7168
        %v7446 = vsel %vm7438, %v7413, %v7170
        %v7448 = vsel %vm7438, %v7415, %v7172
        %v7450 = vsel %vm7438, %v7417, %v7174
        %v7452 = vsel %vm7438, %v7419, %v7176
        %v7454 = vsel %vm7438, %v7421, %v7178
        %v7456 = vsel %vm7438, %v7423, %v7180
        %v7458 = vsel %vm7438, %v7425, %v7182
        %v7460 = vsel %vm7438, %v7427, %v7184
        %v7462 = vsel %vm7438, %v7429, %v7186
        %v7464 = vsel %vm7438, %v7431, %v7188
        %v7466 = vsel %vm7438, %v7433, %v7190
        %v7468 = vsel %vm7438, %v7435, %v7192
        %v7470 = vsel %vm7438, %v7437, %v7194
        %v7471 = vld [vmem:[%s4] sm:$0xf]
        %v7472 = vld [vmem:[%s4 + $0x4] sm:$0xf]
        %v7473 = vld [vmem:[%s4 + $0x8] sm:$0xf]
        %v7474 = vld [vmem:[%s4 + $0xc] sm:$0xf]
        %v7475 = vld [vmem:[%s4 + $0x10] sm:$0xf]
        %v7476 = vld [vmem:[%s4 + $0x14] sm:$0xf]
        %v7477 = vld [vmem:[%s4 + $0x18] sm:$0xf]
        %v7478 = vld [vmem:[%s4 + $0x1c] sm:$0xf]
        %v7479 = vld [vmem:[%s4 + $0x20] sm:$0xf]
        %v7489 = vunpack.c.l.b16 %v7471
        %v7490 = vunpack.c.l.b16 %v7472
        %v7491 = vunpack.c.l.b16 %v7473
        %v7492 = vunpack.c.l.b16 %v7474
        %v7493 = vunpack.c.l.b16 %v7475
        %v7494 = vunpack.c.l.b16 %v7476
        %v7495 = vunpack.c.l.b16 %v7477
        %v7496 = vunpack.c.l.b16 %v7478
        %v7497 = vunpack.c.l.b16 %v7479
        %v7498 = vpack.c.b16 %v7490, %v7489
        %v7499 = vpack.c.b16 %v7492, %v7491
        %v7500 = vpack.c.b16 %v7494, %v7493
        %v7501 = vpack.c.b16 %v7496, %v7495
        %v7502 = vpack.c.b16 %v7497, %v7497
        %vm7507 = vcmask 588800
        %v7508 = vsel %vm7507, %v7440, 0
        %v7510 = vsel %vm7507, %v7442, 0
        %v7512 = vsel %vm7507, %v7444, 0
        %v7514 = vsel %vm7507, %v7446, 0
        %v7516 = vsel %vm7507, %v7448, 0
        %v7518 = vsel %vm7507, %v7450, 0
        %v7520 = vsel %vm7507, %v7452, 0
        %v7522 = vsel %vm7507, %v7454, 0
        %v7524 = vsel %vm7507, %v7456, 0
        %v7526 = vsel %vm7507, %v7458, 0
        %v7528 = vsel %vm7507, %v7460, 0
        %v7530 = vsel %vm7507, %v7462, 0
        %v7532 = vsel %vm7507, %v7464, 0
        %v7534 = vsel %vm7507, %v7466, 0
        %v7536 = vsel %vm7507, %v7468, 0
        %v7538 = vsel %vm7507, %v7470, 0
        %vm7540 = vcmask 1043456
        %v7542 = vsel %vm7540, %v7502, 0
        %7544 = vmatpush.bf16.msra.mxu0 0
        %7545 = vmatpush.bf16.msra.mxu0 0
        %7546 = vmatpush.bf16.msra.mxu0 0
        %7547 = vmatpush.bf16.msra.mxu0 %v7542
        %7548 = vmatpush.bf16.msra.mxu0 %v7501
        %7549 = vmatpush.bf16.msra.mxu0 %v7500
        %7550 = vmatpush.bf16.msra.mxu0 %v7499
        %7551 = vmatpush.bf16.msra.mxu0 %v7498
        %7552 = vmatmul.bf16.gmra.mxu0 %v7508
        %v7553 = vpop.f32.mrf.mxu0
        %v7554 = vadd.f32 0.0, %v7553
        %v7555 = vpop.f32.mrf.mxu0
        %v7556 = vadd.f32 0.0, %v7555
        %7557 = vmatmul.bf16.gmra.mxu0 %v7510
        %v7558 = vpop.f32.mrf.mxu0
        %v7559 = vadd.f32 0.0, %v7558
        %v7560 = vpop.f32.mrf.mxu0
        %v7561 = vadd.f32 0.0, %v7560
        %7562 = vmatmul.bf16.gmra.mxu0 %v7512
        %v7563 = vpop.f32.mrf.mxu0
        %v7564 = vadd.f32 0.0, %v7563
        %v7565 = vpop.f32.mrf.mxu0
        %v7566 = vadd.f32 0.0, %v7565
        %7567 = vmatmul.bf16.gmra.mxu0 %v7514
        %v7568 = vpop.f32.mrf.mxu0
        %v7569 = vadd.f32 0.0, %v7568
        %v7570 = vpop.f32.mrf.mxu0
        %v7571 = vadd.f32 0.0, %v7570
        %7572 = vmatmul.bf16.gmra.mxu0 %v7516
        %v7573 = vpop.f32.mrf.mxu0
        %v7574 = vadd.f32 0.0, %v7573
        %v7575 = vpop.f32.mrf.mxu0
        %v7576 = vadd.f32 0.0, %v7575
        %7577 = vmatmul.bf16.gmra.mxu0 %v7518
        %v7578 = vpop.f32.mrf.mxu0
        %v7579 = vadd.f32 0.0, %v7578
        %v7580 = vpop.f32.mrf.mxu0
        %v7581 = vadd.f32 0.0, %v7580
        %7582 = vmatmul.bf16.gmra.mxu0 %v7520
        %v7583 = vpop.f32.mrf.mxu0
        %v7584 = vadd.f32 0.0, %v7583
        %v7585 = vpop.f32.mrf.mxu0
        %v7586 = vadd.f32 0.0, %v7585
        %7587 = vmatmul.bf16.gmra.mxu0 %v7522
        %v7588 = vpop.f32.mrf.mxu0
        %v7589 = vadd.f32 0.0, %v7588
        %v7590 = vpop.f32.mrf.mxu0
        %v7591 = vadd.f32 0.0, %v7590
        %7592 = vmatmul.bf16.gmra.mxu0 %v7524
        %v7593 = vpop.f32.mrf.mxu0
        %v7594 = vadd.f32 0.0, %v7593
        %v7595 = vpop.f32.mrf.mxu0
        %v7596 = vadd.f32 0.0, %v7595
        %7597 = vmatmul.bf16.gmra.mxu0 %v7526
        %v7598 = vpop.f32.mrf.mxu0
        %v7599 = vadd.f32 0.0, %v7598
        %v7600 = vpop.f32.mrf.mxu0
        %v7601 = vadd.f32 0.0, %v7600
        %7602 = vmatmul.bf16.gmra.mxu0 %v7528
        %v7603 = vpop.f32.mrf.mxu0
        %v7604 = vadd.f32 0.0, %v7603
        %v7605 = vpop.f32.mrf.mxu0
        %v7606 = vadd.f32 0.0, %v7605
        %7607 = vmatmul.bf16.gmra.mxu0 %v7530
        %v7608 = vpop.f32.mrf.mxu0
        %v7609 = vadd.f32 0.0, %v7608
        %v7610 = vpop.f32.mrf.mxu0
        %v7611 = vadd.f32 0.0, %v7610
        %7612 = vmatmul.bf16.gmra.mxu0 %v7532
        %v7613 = vpop.f32.mrf.mxu0
        %v7614 = vadd.f32 0.0, %v7613
        %v7615 = vpop.f32.mrf.mxu0
        %v7616 = vadd.f32 0.0, %v7615
        %7617 = vmatmul.bf16.gmra.mxu0 %v7534
        %v7618 = vpop.f32.mrf.mxu0
        %v7619 = vadd.f32 0.0, %v7618
        %v7620 = vpop.f32.mrf.mxu0
        %v7621 = vadd.f32 0.0, %v7620
        %7622 = vmatmul.bf16.gmra.mxu0 %v7536
        %v7623 = vpop.f32.mrf.mxu0
        %v7624 = vadd.f32 0.0, %v7623
        %v7625 = vpop.f32.mrf.mxu0
        %v7626 = vadd.f32 0.0, %v7625
        %7627 = vmatmul.bf16.gmra.mxu0 %v7538
        %v7628 = vpop.f32.mrf.mxu0
        %v7629 = vadd.f32 0.0, %v7628
        %v7630 = vpop.f32.mrf.mxu0
        %v7631 = vadd.f32 0.0, %v7630
        %7632 = vdwg.mxu0
        %v7633 = vld [vmem:[%s5] sm:$0x1]
        %v7635 = vperm.slane %v7633, 0
        %v7637 = vmul.f32 %v7554, %v7635
        %v7638 = vmul.f32 %v7556, %v7635
        %v7639 = vmul.f32 %v7559, %v7635
        %v7640 = vmul.f32 %v7561, %v7635
        %v7641 = vmul.f32 %v7564, %v7635
        %v7642 = vmul.f32 %v7566, %v7635
        %v7643 = vmul.f32 %v7569, %v7635
        %v7644 = vmul.f32 %v7571, %v7635
        %v7645 = vmul.f32 %v7574, %v7635
        %v7646 = vmul.f32 %v7576, %v7635
        %v7647 = vmul.f32 %v7579, %v7635
        %v7648 = vmul.f32 %v7581, %v7635
        %v7649 = vmul.f32 %v7584, %v7635
        %v7650 = vmul.f32 %v7586, %v7635
        %v7651 = vmul.f32 %v7589, %v7635
        %v7652 = vmul.f32 %v7591, %v7635
        %v7653 = vmul.f32 %v7594, %v7635
        %v7654 = vmul.f32 %v7596, %v7635
        %v7655 = vmul.f32 %v7599, %v7635
        %v7656 = vmul.f32 %v7601, %v7635
        %v7657 = vmul.f32 %v7604, %v7635
        %v7658 = vmul.f32 %v7606, %v7635
        %v7659 = vmul.f32 %v7609, %v7635
        %v7660 = vmul.f32 %v7611, %v7635
        %v7661 = vmul.f32 %v7614, %v7635
        %v7662 = vmul.f32 %v7616, %v7635
        %v7663 = vmul.f32 %v7619, %v7635
        %v7664 = vmul.f32 %v7621, %v7635
        %v7665 = vmul.f32 %v7624, %v7635
        %v7666 = vmul.f32 %v7626, %v7635
        %v7667 = vmul.f32 %v7629, %v7635
        %v7668 = vmul.f32 %v7631, %v7635
        %v7669 = vld [vmem:[%s6] sm:$0x1]
        %v7671 = vperm.slane %v7669, 0
        %v7673 = vadd.f32 %v7637, %v7671
        %v7674 = vadd.f32 %v7638, %v7671
        %v7675 = vadd.f32 %v7639, %v7671
        %v7676 = vadd.f32 %v7640, %v7671
        %v7677 = vadd.f32 %v7641, %v7671
        %v7678 = vadd.f32 %v7642, %v7671
        %v7679 = vadd.f32 %v7643, %v7671
        %v7680 = vadd.f32 %v7644, %v7671
        %v7681 = vadd.f32 %v7645, %v7671
        %v7682 = vadd.f32 %v7646, %v7671
        %v7683 = vadd.f32 %v7647, %v7671
        %v7684 = vadd.f32 %v7648, %v7671
        %v7685 = vadd.f32 %v7649, %v7671
        %v7686 = vadd.f32 %v7650, %v7671
        %v7687 = vadd.f32 %v7651, %v7671
        %v7688 = vadd.f32 %v7652, %v7671
        %v7689 = vadd.f32 %v7653, %v7671
        %v7690 = vadd.f32 %v7654, %v7671
        %v7691 = vadd.f32 %v7655, %v7671
        %v7692 = vadd.f32 %v7656, %v7671
        %v7693 = vadd.f32 %v7657, %v7671
        %v7694 = vadd.f32 %v7658, %v7671
        %v7695 = vadd.f32 %v7659, %v7671
        %v7696 = vadd.f32 %v7660, %v7671
        %v7697 = vadd.f32 %v7661, %v7671
        %v7698 = vadd.f32 %v7662, %v7671
        %v7699 = vadd.f32 %v7663, %v7671
        %v7700 = vadd.f32 %v7664, %v7671
        %v7701 = vadd.f32 %v7665, %v7671
        %v7702 = vadd.f32 %v7666, %v7671
        %v7703 = vadd.f32 %v7667, %v7671
        %v7704 = vadd.f32 %v7668, %v7671
        %v7705 = vld [vmem:[%s835] sm:$0xf]
        %v7706 = vld [vmem:[%s835 + $0x4] sm:$0xf]
        %v7707 = vld [vmem:[%s835 + $0x8] sm:$0x1]
        %v7708 = vld [vmem:[%s835 + $0xc] sm:$0xf]
        %v7709 = vld [vmem:[%s835 + $0x10] sm:$0xf]
        %v7710 = vld [vmem:[%s835 + $0x14] sm:$0x1]
        %v7711 = vld [vmem:[%s835 + $0x18] sm:$0xf]
        %v7712 = vld [vmem:[%s835 + $0x1c] sm:$0xf]
        %v7713 = vld [vmem:[%s835 + $0x20] sm:$0x1]
        %v7714 = vld [vmem:[%s835 + $0x24] sm:$0xf]
        %v7715 = vld [vmem:[%s835 + $0x28] sm:$0xf]
        %v7716 = vld [vmem:[%s835 + $0x2c] sm:$0x1]
        %v7717 = vld [vmem:[%s835 + $0x30] sm:$0xf]
        %v7718 = vld [vmem:[%s835 + $0x34] sm:$0xf]
        %v7719 = vld [vmem:[%s835 + $0x38] sm:$0x1]
        %v7720 = vld [vmem:[%s835 + $0x3c] sm:$0xf]
        %v7721 = vld [vmem:[%s835 + $0x40] sm:$0xf]
        %v7722 = vld [vmem:[%s835 + $0x44] sm:$0x1]
        %v7723 = vld [vmem:[%s835 + $0x48] sm:$0xf]
        %v7724 = vld [vmem:[%s835 + $0x4c] sm:$0xf]
        %v7725 = vld [vmem:[%s835 + $0x50] sm:$0x1]
        %v7726 = vld [vmem:[%s835 + $0x54] sm:$0xf]
        %v7727 = vld [vmem:[%s835 + $0x58] sm:$0xf]
        %v7728 = vld [vmem:[%s835 + $0x5c] sm:$0x1]
        %v7729 = vld [vmem:[%s835 + $0x60] sm:$0xf]
        %v7730 = vld [vmem:[%s835 + $0x64] sm:$0xf]
        %v7731 = vld [vmem:[%s835 + $0x68] sm:$0x1]
        %v7732 = vld [vmem:[%s835 + $0x6c] sm:$0xf]
        %v7733 = vld [vmem:[%s835 + $0x70] sm:$0xf]
        %v7734 = vld [vmem:[%s835 + $0x74] sm:$0x1]
        %v7735 = vld [vmem:[%s835 + $0x78] sm:$0xf]
        %v7736 = vld [vmem:[%s835 + $0x7c] sm:$0xf]
        %v7737 = vld [vmem:[%s835 + $0x80] sm:$0x1]
        %v7738 = vld [vmem:[%s835 + $0x84] sm:$0xf]
        %v7739 = vld [vmem:[%s835 + $0x88] sm:$0xf]
        %v7740 = vld [vmem:[%s835 + $0x8c] sm:$0x1]
        %v7741 = vld [vmem:[%s835 + $0x90] sm:$0xf]
        %v7742 = vld [vmem:[%s835 + $0x94] sm:$0xf]
        %v7743 = vld [vmem:[%s835 + $0x98] sm:$0x1]
        %v7744 = vld [vmem:[%s835 + $0x9c] sm:$0xf]
        %v7745 = vld [vmem:[%s835 + $0xa0] sm:$0xf]
        %v7746 = vld [vmem:[%s835 + $0xa4] sm:$0x1]
        %v7747 = vld [vmem:[%s835 + $0xa8] sm:$0xf]
        %v7748 = vld [vmem:[%s835 + $0xac] sm:$0xf]
        %v7749 = vld [vmem:[%s835 + $0xb0] sm:$0x1]
        %v7750 = vld [vmem:[%s835 + $0xb4] sm:$0xf]
        %v7751 = vld [vmem:[%s835 + $0xb8] sm:$0xf]
        %v7752 = vld [vmem:[%s835 + $0xbc] sm:$0x1]
        %v7754 = vshrl.u32 %v7705, 16
        %v7756 = vrot.slane %v7754, 4
        %v7757 = vshll.u32 %v7705, 16
        %v7759 = vrot.slane %v7757, 5
        %v7760 = vor.u32 %v7756, %v7759
        %v7761 = vrot.slane %v7760, 4
        %v7763 = vshll.u32 %v7706, 16
        %v7765 = vrot.slane %v7763, 5
        %v7766 = vsel %vm1000, %v7761, %v7765
        %v7767 = vshrl.u32 %v7706, 16
        %v7769 = vrot.slane %v7767, 4
        %v7770 = vor.u32 %v7769, %v7765
        %v7771 = vrot.slane %v7770, 4
        %v7773 = vshll.u32 %v7707, 16
        %v7775 = vrot.slane %v7773, 5
        %v7776 = vsel %vm1000, %v7771, %v7775
        %v7778 = vshrl.u32 %v7708, 16
        %v7780 = vrot.slane %v7778, 4
        %v7781 = vshll.u32 %v7708, 16
        %v7783 = vrot.slane %v7781, 5
        %v7784 = vor.u32 %v7780, %v7783
        %v7785 = vrot.slane %v7784, 4
        %v7787 = vshll.u32 %v7709, 16
        %v7789 = vrot.slane %v7787, 5
        %v7790 = vsel %vm1000, %v7785, %v7789
        %v7791 = vshrl.u32 %v7709, 16
        %v7793 = vrot.slane %v7791, 4
        %v7794 = vor.u32 %v7793, %v7789
        %v7795 = vrot.slane %v7794, 4
        %v7797 = vshll.u32 %v7710, 16
        %v7799 = vrot.slane %v7797, 5
        %v7800 = vsel %vm1000, %v7795, %v7799
        %v7802 = vshrl.u32 %v7711, 16
        %v7804 = vrot.slane %v7802, 4
        %v7805 = vshll.u32 %v7711, 16
        %v7807 = vrot.slane %v7805, 5
        %v7808 = vor.u32 %v7804, %v7807
        %v7809 = vrot.slane %v7808, 4
        %v7811 = vshll.u32 %v7712, 16
        %v7813 = vrot.slane %v7811, 5
        %v7814 = vsel %vm1000, %v7809, %v7813
        %v7815 = vshrl.u32 %v7712, 16
        %v7817 = vrot.slane %v7815, 4
        %v7818 = vor.u32 %v7817, %v7813
        %v7819 = vrot.slane %v7818, 4
        %v7821 = vshll.u32 %v7713, 16
        %v7823 = vrot.slane %v7821, 5
        %v7824 = vsel %vm1000, %v7819, %v7823
        %v7826 = vshrl.u32 %v7714, 16
        %v7828 = vrot.slane %v7826, 4
        %v7829 = vshll.u32 %v7714, 16
        %v7831 = vrot.slane %v7829, 5
        %v7832 = vor.u32 %v7828, %v7831
        %v7833 = vrot.slane %v7832, 4
        %v7835 = vshll.u32 %v7715, 16
        %v7837 = vrot.slane %v7835, 5
        %v7838 = vsel %vm1000, %v7833, %v7837
        %v7839 = vshrl.u32 %v7715, 16
        %v7841 = vrot.slane %v7839, 4
        %v7842 = vor.u32 %v7841, %v7837
        %v7843 = vrot.slane %v7842, 4
        %v7845 = vshll.u32 %v7716, 16
        %v7847 = vrot.slane %v7845, 5
        %v7848 = vsel %vm1000, %v7843, %v7847
        %v7850 = vshrl.u32 %v7717, 16
        %v7852 = vrot.slane %v7850, 4
        %v7853 = vshll.u32 %v7717, 16
        %v7855 = vrot.slane %v7853, 5
        %v7856 = vor.u32 %v7852, %v7855
        %v7857 = vrot.slane %v7856, 4
        %v7859 = vshll.u32 %v7718, 16
        %v7861 = vrot.slane %v7859, 5
        %v7862 = vsel %vm1000, %v7857, %v7861
        %v7863 = vshrl.u32 %v7718, 16
        %v7865 = vrot.slane %v7863, 4
        %v7866 = vor.u32 %v7865, %v7861
        %v7867 = vrot.slane %v7866, 4
        %v7869 = vshll.u32 %v7719, 16
        %v7871 = vrot.slane %v7869, 5
        %v7872 = vsel %vm1000, %v7867, %v7871
        %v7874 = vshrl.u32 %v7720, 16
        %v7876 = vrot.slane %v7874, 4
        %v7877 = vshll.u32 %v7720, 16
        %v7879 = vrot.slane %v7877, 5
        %v7880 = vor.u32 %v7876, %v7879
        %v7881 = vrot.slane %v7880, 4
        %v7883 = vshll.u32 %v7721, 16
        %v7885 = vrot.slane %v7883, 5
        %v7886 = vsel %vm1000, %v7881, %v7885
        %v7887 = vshrl.u32 %v7721, 16
        %v7889 = vrot.slane %v7887, 4
        %v7890 = vor.u32 %v7889, %v7885
        %v7891 = vrot.slane %v7890, 4
        %v7893 = vshll.u32 %v7722, 16
        %v7895 = vrot.slane %v7893, 5
        %v7896 = vsel %vm1000, %v7891, %v7895
        %v7898 = vshrl.u32 %v7723, 16
        %v7900 = vrot.slane %v7898, 4
        %v7901 = vshll.u32 %v7723, 16
        %v7903 = vrot.slane %v7901, 5
        %v7904 = vor.u32 %v7900, %v7903
        %v7905 = vrot.slane %v7904, 4
        %v7907 = vshll.u32 %v7724, 16
        %v7909 = vrot.slane %v7907, 5
        %v7910 = vsel %vm1000, %v7905, %v7909
        %v7911 = vshrl.u32 %v7724, 16
        %v7913 = vrot.slane %v7911, 4
        %v7914 = vor.u32 %v7913, %v7909
        %v7915 = vrot.slane %v7914, 4
        %v7917 = vshll.u32 %v7725, 16
        %v7919 = vrot.slane %v7917, 5
        %v7920 = vsel %vm1000, %v7915, %v7919
        %v7922 = vshrl.u32 %v7726, 16
        %v7924 = vrot.slane %v7922, 4
        %v7925 = vshll.u32 %v7726, 16
        %v7927 = vrot.slane %v7925, 5
        %v7928 = vor.u32 %v7924, %v7927
        %v7929 = vrot.slane %v7928, 4
        %v7931 = vshll.u32 %v7727, 16
        %v7933 = vrot.slane %v7931, 5
        %v7934 = vsel %vm1000, %v7929, %v7933
        %v7935 = vshrl.u32 %v7727, 16
        %v7937 = vrot.slane %v7935, 4
        %v7938 = vor.u32 %v7937, %v7933
        %v7939 = vrot.slane %v7938, 4
        %v7941 = vshll.u32 %v7728, 16
        %v7943 = vrot.slane %v7941, 5
        %v7944 = vsel %vm1000, %v7939, %v7943
        %v7946 = vshrl.u32 %v7729, 16
        %v7948 = vrot.slane %v7946, 4
        %v7949 = vshll.u32 %v7729, 16
        %v7951 = vrot.slane %v7949, 5
        %v7952 = vor.u32 %v7948, %v7951
        %v7953 = vrot.slane %v7952, 4
        %v7955 = vshll.u32 %v7730, 16
        %v7957 = vrot.slane %v7955, 5
        %v7958 = vsel %vm1000, %v7953, %v7957
        %v7959 = vshrl.u32 %v7730, 16
        %v7961 = vrot.slane %v7959, 4
        %v7962 = vor.u32 %v7961, %v7957
        %v7963 = vrot.slane %v7962, 4
        %v7965 = vshll.u32 %v7731, 16
        %v7967 = vrot.slane %v7965, 5
        %v7968 = vsel %vm1000, %v7963, %v7967
        %v7970 = vshrl.u32 %v7732, 16
        %v7972 = vrot.slane %v7970, 4
        %v7973 = vshll.u32 %v7732, 16
        %v7975 = vrot.slane %v7973, 5
        %v7976 = vor.u32 %v7972, %v7975
        %v7977 = vrot.slane %v7976, 4
        %v7979 = vshll.u32 %v7733, 16
        %v7981 = vrot.slane %v7979, 5
        %v7982 = vsel %vm1000, %v7977, %v7981
        %v7983 = vshrl.u32 %v7733, 16
        %v7985 = vrot.slane %v7983, 4
        %v7986 = vor.u32 %v7985, %v7981
        %v7987 = vrot.slane %v7986, 4
        %v7989 = vshll.u32 %v7734, 16
        %v7991 = vrot.slane %v7989, 5
        %v7992 = vsel %vm1000, %v7987, %v7991
        %v7994 = vshrl.u32 %v7735, 16
        %v7996 = vrot.slane %v7994, 4
        %v7997 = vshll.u32 %v7735, 16
        %v7999 = vrot.slane %v7997, 5
        %v8000 = vor.u32 %v7996, %v7999
        %v8001 = vrot.slane %v8000, 4
        %v8003 = vshll.u32 %v7736, 16
        %v8005 = vrot.slane %v8003, 5
        %v8006 = vsel %vm1000, %v8001, %v8005
        %v8007 = vshrl.u32 %v7736, 16
        %v8009 = vrot.slane %v8007, 4
        %v8010 = vor.u32 %v8009, %v8005
        %v8011 = vrot.slane %v8010, 4
        %v8013 = vshll.u32 %v7737, 16
        %v8015 = vrot.slane %v8013, 5
        %v8016 = vsel %vm1000, %v8011, %v8015
        %v8018 = vshrl.u32 %v7738, 16
        %v8020 = vrot.slane %v8018, 4
        %v8021 = vshll.u32 %v7738, 16
        %v8023 = vrot.slane %v8021, 5
        %v8024 = vor.u32 %v8020, %v8023
        %v8025 = vrot.slane %v8024, 4
        %v8027 = vshll.u32 %v7739, 16
        %v8029 = vrot.slane %v8027, 5
        %v8030 = vsel %vm1000, %v8025, %v8029
        %v8031 = vshrl.u32 %v7739, 16
        %v8033 = vrot.slane %v8031, 4
        %v8034 = vor.u32 %v8033, %v8029
        %v8035 = vrot.slane %v8034, 4
        %v8037 = vshll.u32 %v7740, 16
        %v8039 = vrot.slane %v8037, 5
        %v8040 = vsel %vm1000, %v8035, %v8039
        %v8042 = vshrl.u32 %v7741, 16
        %v8044 = vrot.slane %v8042, 4
        %v8045 = vshll.u32 %v7741, 16
        %v8047 = vrot.slane %v8045, 5
        %v8048 = vor.u32 %v8044, %v8047
        %v8049 = vrot.slane %v8048, 4
        %v8051 = vshll.u32 %v7742, 16
        %v8053 = vrot.slane %v8051, 5
        %v8054 = vsel %vm1000, %v8049, %v8053
        %v8055 = vshrl.u32 %v7742, 16
        %v8057 = vrot.slane %v8055, 4
        %v8058 = vor.u32 %v8057, %v8053
        %v8059 = vrot.slane %v8058, 4
        %v8061 = vshll.u32 %v7743, 16
        %v8063 = vrot.slane %v8061, 5
        %v8064 = vsel %vm1000, %v8059, %v8063
        %v8066 = vshrl.u32 %v7744, 16
        %v8068 = vrot.slane %v8066, 4
        %v8069 = vshll.u32 %v7744, 16
        %v8071 = vrot.slane %v8069, 5
        %v8072 = vor.u32 %v8068, %v8071
        %v8073 = vrot.slane %v8072, 4
        %v8075 = vshll.u32 %v7745, 16
        %v8077 = vrot.slane %v8075, 5
        %v8078 = vsel %vm1000, %v8073, %v8077
        %v8079 = vshrl.u32 %v7745, 16
        %v8081 = vrot.slane %v8079, 4
        %v8082 = vor.u32 %v8081, %v8077
        %v8083 = vrot.slane %v8082, 4
        %v8085 = vshll.u32 %v7746, 16
        %v8087 = vrot.slane %v8085, 5
        %v8088 = vsel %vm1000, %v8083, %v8087
        %v8090 = vshrl.u32 %v7747, 16
        %v8092 = vrot.slane %v8090, 4
        %v8093 = vshll.u32 %v7747, 16
        %v8095 = vrot.slane %v8093, 5
        %v8096 = vor.u32 %v8092, %v8095
        %v8097 = vrot.slane %v8096, 4
        %v8099 = vshll.u32 %v7748, 16
        %v8101 = vrot.slane %v8099, 5
        %v8102 = vsel %vm1000, %v8097, %v8101
        %v8103 = vshrl.u32 %v7748, 16
        %v8105 = vrot.slane %v8103, 4
        %v8106 = vor.u32 %v8105, %v8101
        %v8107 = vrot.slane %v8106, 4
        %v8109 = vshll.u32 %v7749, 16
        %v8111 = vrot.slane %v8109, 5
        %v8112 = vsel %vm1000, %v8107, %v8111
        %v8114 = vshrl.u32 %v7750, 16
        %v8116 = vrot.slane %v8114, 4
        %v8117 = vshll.u32 %v7750, 16
        %v8119 = vrot.slane %v8117, 5
        %v8120 = vor.u32 %v8116, %v8119
        %v8121 = vrot.slane %v8120, 4
        %v8123 = vshll.u32 %v7751, 16
        %v8125 = vrot.slane %v8123, 5
        %v8126 = vsel %vm1000, %v8121, %v8125
        %v8127 = vshrl.u32 %v7751, 16
        %v8129 = vrot.slane %v8127, 4
        %v8130 = vor.u32 %v8129, %v8125
        %v8131 = vrot.slane %v8130, 4
        %v8133 = vshll.u32 %v7752, 16
        %v8135 = vrot.slane %v8133, 5
        %v8136 = vsel %vm1000, %v8131, %v8135
        %v8137 = vld [vmem:[%s7] sm:$0x3]
        %v8138 = vunpack.c.l.b16 %v7766
        %v8139 = vunpack.c.l.b16 %v7776
        %v8140 = vunpack.c.l.b16 %v7790
        %v8141 = vunpack.c.l.b16 %v7800
        %v8142 = vunpack.c.l.b16 %v7814
        %v8143 = vunpack.c.l.b16 %v7824
        %v8144 = vunpack.c.l.b16 %v7838
        %v8145 = vunpack.c.l.b16 %v7848
        %v8146 = vunpack.c.l.b16 %v7862
        %v8147 = vunpack.c.l.b16 %v7872
        %v8148 = vunpack.c.l.b16 %v7886
        %v8149 = vunpack.c.l.b16 %v7896
        %v8150 = vunpack.c.l.b16 %v7910
        %v8151 = vunpack.c.l.b16 %v7920
        %v8152 = vunpack.c.l.b16 %v7934
        %v8153 = vunpack.c.l.b16 %v7944
        %v8154 = vunpack.c.l.b16 %v7958
        %v8155 = vunpack.c.l.b16 %v7968
        %v8156 = vunpack.c.l.b16 %v7982
        %v8157 = vunpack.c.l.b16 %v7992
        %v8158 = vunpack.c.l.b16 %v8006
        %v8159 = vunpack.c.l.b16 %v8016
        %v8160 = vunpack.c.l.b16 %v8030
        %v8161 = vunpack.c.l.b16 %v8040
        %v8162 = vunpack.c.l.b16 %v8054
        %v8163 = vunpack.c.l.b16 %v8064
        %v8164 = vunpack.c.l.b16 %v8078
        %v8165 = vunpack.c.l.b16 %v8088
        %v8166 = vunpack.c.l.b16 %v8102
        %v8167 = vunpack.c.l.b16 %v8112
        %v8168 = vunpack.c.l.b16 %v8126
        %v8169 = vunpack.c.l.b16 %v8136
        %v8170 = vpack.c.b16 %v8139, %v8138
        %v8171 = vpack.c.b16 %v8141, %v8140
        %v8172 = vpack.c.b16 %v8143, %v8142
        %v8173 = vpack.c.b16 %v8145, %v8144
        %v8174 = vpack.c.b16 %v8147, %v8146
        %v8175 = vpack.c.b16 %v8149, %v8148
        %v8176 = vpack.c.b16 %v8151, %v8150
        %v8177 = vpack.c.b16 %v8153, %v8152
        %v8178 = vpack.c.b16 %v8155, %v8154
        %v8179 = vpack.c.b16 %v8157, %v8156
        %v8180 = vpack.c.b16 %v8159, %v8158
        %v8181 = vpack.c.b16 %v8161, %v8160
        %v8182 = vpack.c.b16 %v8163, %v8162
        %v8183 = vpack.c.b16 %v8165, %v8164
        %v8184 = vpack.c.b16 %v8167, %v8166
        %v8185 = vpack.c.b16 %v8169, %v8168
        %v8187 = vsel %vm3517, %v8170, 0
        %v8190 = vsel %vm3517, %v8171, 0
        %v8193 = vsel %vm3517, %v8172, 0
        %v8196 = vsel %vm3517, %v8173, 0
        %v8199 = vsel %vm3517, %v8174, 0
        %v8202 = vsel %vm3517, %v8175, 0
        %v8205 = vsel %vm3517, %v8176, 0
        %v8208 = vsel %vm3517, %v8177, 0
        %v8211 = vsel %vm3517, %v8178, 0
        %v8214 = vsel %vm3517, %v8179, 0
        %v8217 = vsel %vm3517, %v8180, 0
        %v8220 = vsel %vm3517, %v8181, 0
        %v8223 = vsel %vm3517, %v8182, 0
        %v8226 = vsel %vm3517, %v8183, 0
        %v8229 = vsel %vm3517, %v8184, 0
        %v8232 = vsel %vm3517, %v8185, 0
        %v8235 = vsel %vm3850, %v8137, 0
        %8237 = vmatpush.bf16.msra.mxu0 0
        %8238 = vmatpush.bf16.msra.mxu0 0
        %8239 = vmatpush.bf16.msra.mxu0 0
        %8240 = vmatpush.bf16.msra.mxu0 0
        %8241 = vmatpush.bf16.msra.mxu0 0
        %8242 = vmatpush.bf16.msra.mxu0 0
        %8243 = vmatpush.bf16.msra.mxu0 0
        %8244 = vmatpush.bf16.msra.mxu0 %v8235
        %8245 = vmatmul.bf16.gmra.mxu0 %v8187
        %v8246 = vpop.f32.mrf.mxu0
        %v8247 = vadd.f32 0.0, %v8246
        %v8248 = vpop.f32.mrf.mxu0
        %v8249 = vadd.f32 0.0, %v8248
        %8250 = vmatmul.bf16.gmra.mxu0 %v8190
        %v8251 = vpop.f32.mrf.mxu0
        %v8252 = vadd.f32 0.0, %v8251
        %v8253 = vpop.f32.mrf.mxu0
        %v8254 = vadd.f32 0.0, %v8253
        %8255 = vmatmul.bf16.gmra.mxu0 %v8193
        %v8256 = vpop.f32.mrf.mxu0
        %v8257 = vadd.f32 0.0, %v8256
        %v8258 = vpop.f32.mrf.mxu0
        %v8259 = vadd.f32 0.0, %v8258
        %8260 = vmatmul.bf16.gmra.mxu0 %v8196
        %v8261 = vpop.f32.mrf.mxu0
        %v8262 = vadd.f32 0.0, %v8261
        %v8263 = vpop.f32.mrf.mxu0
        %v8264 = vadd.f32 0.0, %v8263
        %8265 = vmatmul.bf16.gmra.mxu0 %v8199
        %v8266 = vpop.f32.mrf.mxu0
        %v8267 = vadd.f32 0.0, %v8266
        %v8268 = vpop.f32.mrf.mxu0
        %v8269 = vadd.f32 0.0, %v8268
        %8270 = vmatmul.bf16.gmra.mxu0 %v8202
        %v8271 = vpop.f32.mrf.mxu0
        %v8272 = vadd.f32 0.0, %v8271
        %v8273 = vpop.f32.mrf.mxu0
        %v8274 = vadd.f32 0.0, %v8273
        %8275 = vmatmul.bf16.gmra.mxu0 %v8205
        %v8276 = vpop.f32.mrf.mxu0
        %v8277 = vadd.f32 0.0, %v8276
        %v8278 = vpop.f32.mrf.mxu0
        %v8279 = vadd.f32 0.0, %v8278
        %8280 = vmatmul.bf16.gmra.mxu0 %v8208
        %v8281 = vpop.f32.mrf.mxu0
        %v8282 = vadd.f32 0.0, %v8281
        %v8283 = vpop.f32.mrf.mxu0
        %v8284 = vadd.f32 0.0, %v8283
        %8285 = vmatmul.bf16.gmra.mxu0 %v8211
        %v8286 = vpop.f32.mrf.mxu0
        %v8287 = vadd.f32 0.0, %v8286
        %v8288 = vpop.f32.mrf.mxu0
        %v8289 = vadd.f32 0.0, %v8288
        %8290 = vmatmul.bf16.gmra.mxu0 %v8214
        %v8291 = vpop.f32.mrf.mxu0
        %v8292 = vadd.f32 0.0, %v8291
        %v8293 = vpop.f32.mrf.mxu0
        %v8294 = vadd.f32 0.0, %v8293
        %8295 = vmatmul.bf16.gmra.mxu0 %v8217
        %v8296 = vpop.f32.mrf.mxu0
        %v8297 = vadd.f32 0.0, %v8296
        %v8298 = vpop.f32.mrf.mxu0
        %v8299 = vadd.f32 0.0, %v8298
        %8300 = vmatmul.bf16.gmra.mxu0 %v8220
        %v8301 = vpop.f32.mrf.mxu0
        %v8302 = vadd.f32 0.0, %v8301
        %v8303 = vpop.f32.mrf.mxu0
        %v8304 = vadd.f32 0.0, %v8303
        %8305 = vmatmul.bf16.gmra.mxu0 %v8223
        %v8306 = vpop.f32.mrf.mxu0
        %v8307 = vadd.f32 0.0, %v8306
        %v8308 = vpop.f32.mrf.mxu0
        %v8309 = vadd.f32 0.0, %v8308
        %8310 = vmatmul.bf16.gmra.mxu0 %v8226
        %v8311 = vpop.f32.mrf.mxu0
        %v8312 = vadd.f32 0.0, %v8311
        %v8313 = vpop.f32.mrf.mxu0
        %v8314 = vadd.f32 0.0, %v8313
        %8315 = vmatmul.bf16.gmra.mxu0 %v8229
        %v8316 = vpop.f32.mrf.mxu0
        %v8317 = vadd.f32 0.0, %v8316
        %v8318 = vpop.f32.mrf.mxu0
        %v8319 = vadd.f32 0.0, %v8318
        %8320 = vmatmul.bf16.gmra.mxu0 %v8232
        %v8321 = vpop.f32.mrf.mxu0
        %v8322 = vadd.f32 0.0, %v8321
        %v8323 = vpop.f32.mrf.mxu0
        %v8324 = vadd.f32 0.0, %v8323
        %8325 = vdwg.mxu0
        %v8326 = vld [vmem:[%s8] sm:$0x1]
        %v8328 = vperm.slane %v8326, 0
        %v8330 = vmul.f32 %v8247, %v8328
        %v8331 = vmul.f32 %v8249, %v8328
        %v8332 = vmul.f32 %v8252, %v8328
        %v8333 = vmul.f32 %v8254, %v8328
        %v8334 = vmul.f32 %v8257, %v8328
        %v8335 = vmul.f32 %v8259, %v8328
        %v8336 = vmul.f32 %v8262, %v8328
        %v8337 = vmul.f32 %v8264, %v8328
        %v8338 = vmul.f32 %v8267, %v8328
        %v8339 = vmul.f32 %v8269, %v8328
        %v8340 = vmul.f32 %v8272, %v8328
        %v8341 = vmul.f32 %v8274, %v8328
        %v8342 = vmul.f32 %v8277, %v8328
        %v8343 = vmul.f32 %v8279, %v8328
        %v8344 = vmul.f32 %v8282, %v8328
        %v8345 = vmul.f32 %v8284, %v8328
        %v8346 = vmul.f32 %v8287, %v8328
        %v8347 = vmul.f32 %v8289, %v8328
        %v8348 = vmul.f32 %v8292, %v8328
        %v8349 = vmul.f32 %v8294, %v8328
        %v8350 = vmul.f32 %v8297, %v8328
        %v8351 = vmul.f32 %v8299, %v8328
        %v8352 = vmul.f32 %v8302, %v8328
        %v8353 = vmul.f32 %v8304, %v8328
        %v8354 = vmul.f32 %v8307, %v8328
        %v8355 = vmul.f32 %v8309, %v8328
        %v8356 = vmul.f32 %v8312, %v8328
        %v8357 = vmul.f32 %v8314, %v8328
        %v8358 = vmul.f32 %v8317, %v8328
        %v8359 = vmul.f32 %v8319, %v8328
        %v8360 = vmul.f32 %v8322, %v8328
        %v8361 = vmul.f32 %v8324, %v8328
        %v8362 = vld [vmem:[%s9] sm:$0x1]
        %v8364 = vperm.slane %v8362, 0
        %v8366 = vadd.f32 %v8330, %v8364
        %v8367 = vadd.f32 %v8331, %v8364
        %v8368 = vadd.f32 %v8332, %v8364
        %v8369 = vadd.f32 %v8333, %v8364
        %v8370 = vadd.f32 %v8334, %v8364
        %v8371 = vadd.f32 %v8335, %v8364
        %v8372 = vadd.f32 %v8336, %v8364
        %v8373 = vadd.f32 %v8337, %v8364
        %v8374 = vadd.f32 %v8338, %v8364
        %v8375 = vadd.f32 %v8339, %v8364
        %v8376 = vadd.f32 %v8340, %v8364
        %v8377 = vadd.f32 %v8341, %v8364
        %v8378 = vadd.f32 %v8342, %v8364
        %v8379 = vadd.f32 %v8343, %v8364
        %v8380 = vadd.f32 %v8344, %v8364
        %v8381 = vadd.f32 %v8345, %v8364
        %v8382 = vadd.f32 %v8346, %v8364
        %v8383 = vadd.f32 %v8347, %v8364
        %v8384 = vadd.f32 %v8348, %v8364
        %v8385 = vadd.f32 %v8349, %v8364
        %v8386 = vadd.f32 %v8350, %v8364
        %v8387 = vadd.f32 %v8351, %v8364
        %v8388 = vadd.f32 %v8352, %v8364
        %v8389 = vadd.f32 %v8353, %v8364
        %v8390 = vadd.f32 %v8354, %v8364
        %v8391 = vadd.f32 %v8355, %v8364
        %v8392 = vadd.f32 %v8356, %v8364
        %v8393 = vadd.f32 %v8357, %v8364
        %v8394 = vadd.f32 %v8358, %v8364
        %v8395 = vadd.f32 %v8359, %v8364
        %v8396 = vadd.f32 %v8360, %v8364
        %v8397 = vadd.f32 %v8361, %v8364
        %v8398 = vadd.f32 %v7673, %v8366
        %v8399 = vadd.f32 %v7674, %v8367
        %v8400 = vadd.f32 %v7675, %v8368
        %v8401 = vadd.f32 %v7676, %v8369
        %v8402 = vadd.f32 %v7677, %v8370
        %v8403 = vadd.f32 %v7678, %v8371
        %v8404 = vadd.f32 %v7679, %v8372
        %v8405 = vadd.f32 %v7680, %v8373
        %v8406 = vadd.f32 %v7681, %v8374
        %v8407 = vadd.f32 %v7682, %v8375
        %v8408 = vadd.f32 %v7683, %v8376
        %v8409 = vadd.f32 %v7684, %v8377
        %v8410 = vadd.f32 %v7685, %v8378
        %v8411 = vadd.f32 %v7686, %v8379
        %v8412 = vadd.f32 %v7687, %v8380
        %v8413 = vadd.f32 %v7688, %v8381
        %v8414 = vadd.f32 %v7689, %v8382
        %v8415 = vadd.f32 %v7690, %v8383
        %v8416 = vadd.f32 %v7691, %v8384
        %v8417 = vadd.f32 %v7692, %v8385
        %v8418 = vadd.f32 %v7693, %v8386
        %v8419 = vadd.f32 %v7694, %v8387
        %v8420 = vadd.f32 %v7695, %v8388
        %v8421 = vadd.f32 %v7696, %v8389
        %v8422 = vadd.f32 %v7697, %v8390
        %v8423 = vadd.f32 %v7698, %v8391
        %v8424 = vadd.f32 %v7699, %v8392
        %v8425 = vadd.f32 %v7700, %v8393
        %v8426 = vadd.f32 %v7701, %v8394
        %v8427 = vadd.f32 %v7702, %v8395
        %v8428 = vadd.f32 %v7703, %v8396
        %v8429 = vadd.f32 %v7704, %v8397
        %v8430 = vmax.f32 %v8398, 0.0
        %v8431 = vmax.f32 %v8399, 0.0
        %v8432 = vmax.f32 %v8400, 0.0
        %v8433 = vmax.f32 %v8401, 0.0
        %v8434 = vmax.f32 %v8402, 0.0
        %v8435 = vmax.f32 %v8403, 0.0
        %v8436 = vmax.f32 %v8404, 0.0
        %v8437 = vmax.f32 %v8405, 0.0
        %v8438 = vmax.f32 %v8406, 0.0
        %v8439 = vmax.f32 %v8407, 0.0
        %v8440 = vmax.f32 %v8408, 0.0
        %v8441 = vmax.f32 %v8409, 0.0
        %v8442 = vmax.f32 %v8410, 0.0
        %v8443 = vmax.f32 %v8411, 0.0
        %v8444 = vmax.f32 %v8412, 0.0
        %v8445 = vmax.f32 %v8413, 0.0
        %v8446 = vmax.f32 %v8414, 0.0
        %v8447 = vmax.f32 %v8415, 0.0
        %v8448 = vmax.f32 %v8416, 0.0
        %v8449 = vmax.f32 %v8417, 0.0
        %v8450 = vmax.f32 %v8418, 0.0
        %v8451 = vmax.f32 %v8419, 0.0
        %v8452 = vmax.f32 %v8420, 0.0
        %v8453 = vmax.f32 %v8421, 0.0
        %v8454 = vmax.f32 %v8422, 0.0
        %v8455 = vmax.f32 %v8423, 0.0
        %v8456 = vmax.f32 %v8424, 0.0
        %v8457 = vmax.f32 %v8425, 0.0
        %v8458 = vmax.f32 %v8426, 0.0
        %v8459 = vmax.f32 %v8427, 0.0
        %v8460 = vmax.f32 %v8428, 0.0
        %v8461 = vmax.f32 %v8429, 0.0
        %v8478 = vrot.slane %v8432, 7
        %vm8479 = vcmask 1041409
        %v8480 = vsel %vm8479, %v8478, %v8430
        %v8481 = vrot.slane %v8434, 6
        %vm8482 = vcmask 1042434
        %v8483 = vsel %vm8482, %v8481, %v8480
        %v8484 = vrot.slane %v8436, 5
        %vm8485 = vcmask 1043459
        %v8486 = vsel %vm8485, %v8484, %v8483
        %v8487 = vrot.slane %v8438, 4
        %vm8488 = vcmask 1044484
        %v8489 = vsel %vm8488, %v8487, %v8486
        %v8490 = vrot.slane %v8440, 3
        %vm8491 = vcmask 1045509
        %v8492 = vsel %vm8491, %v8490, %v8489
        %v8493 = vrot.slane %v8442, 2
        %vm8494 = vcmask 1046534
        %v8495 = vsel %vm8494, %v8493, %v8492
        %v8496 = vrot.slane %v8444, 1
        %vm8497 = vcmask 1047559
        %v8498 = vsel %vm8497, %v8496, %v8495
        %v8499 = vrot.slane %v8448, 7
        %v8500 = vsel %vm8479, %v8499, %v8446
        %v8501 = vrot.slane %v8450, 6
        %v8502 = vsel %vm8482, %v8501, %v8500
        %v8503 = vrot.slane %v8452, 5
        %v8504 = vsel %vm8485, %v8503, %v8502
        %v8505 = vrot.slane %v8454, 4
        %v8506 = vsel %vm8488, %v8505, %v8504
        %v8507 = vrot.slane %v8456, 3
        %v8508 = vsel %vm8491, %v8507, %v8506
        %v8509 = vrot.slane %v8458, 2
        %v8510 = vsel %vm8494, %v8509, %v8508
        %v8511 = vrot.slane %v8460, 1
        %v8512 = vsel %vm8497, %v8511, %v8510
        %v8515 = vrot.slane %v8430, 1
        %v8516 = vsel %vm8479, %v8432, %v8515
        %v8517 = vrot.slane %v8434, 7
        %v8518 = vsel %vm8482, %v8517, %v8516
        %v8519 = vrot.slane %v8436, 6
        %v8520 = vsel %vm8485, %v8519, %v8518
        %v8521 = vrot.slane %v8438, 5
        %v8522 = vsel %vm8488, %v8521, %v8520
        %v8523 = vrot.slane %v8440, 4
        %v8524 = vsel %vm8491, %v8523, %v8522
        %v8525 = vrot.slane %v8442, 3
        %v8526 = vsel %vm8494, %v8525, %v8524
        %v8527 = vrot.slane %v8444, 2
        %v8528 = vsel %vm8497, %v8527, %v8526
        %v8529 = vrot.slane %v8446, 1
        %v8530 = vsel %vm8479, %v8448, %v8529
        %v8531 = vrot.slane %v8450, 7
        %v8532 = vsel %vm8482, %v8531, %v8530
        %v8533 = vrot.slane %v8452, 6
        %v8534 = vsel %vm8485, %v8533, %v8532
        %v8535 = vrot.slane %v8454, 5
        %v8536 = vsel %vm8488, %v8535, %v8534
        %v8537 = vrot.slane %v8456, 4
        %v8538 = vsel %vm8491, %v8537, %v8536
        %v8539 = vrot.slane %v8458, 3
        %v8540 = vsel %vm8494, %v8539, %v8538
        %v8541 = vrot.slane %v8460, 2
        %v8542 = vsel %vm8497, %v8541, %v8540
        %8543 = vrot.lane.b32.xlu0 %v8528, 8
        %v8544 = vpop.permute.xlu0 %8543
        %8545 = vrot.lane.b32.xlu0 %v8542, 8
        %v8546 = vpop.permute.xlu0 %8545
        %v8549 = vrot.slane %v8430, 2
        %v8550 = vrot.slane %v8432, 1
        %v8551 = vsel %vm8479, %v8550, %v8549
        %v8552 = vsel %vm8482, %v8434, %v8551
        %v8553 = vrot.slane %v8436, 7
        %v8554 = vsel %vm8485, %v8553, %v8552
        %v8555 = vrot.slane %v8438, 6
        %v8556 = vsel %vm8488, %v8555, %v8554
        %v8557 = vrot.slane %v8440, 5
        %v8558 = vsel %vm8491, %v8557, %v8556
        %v8559 = vrot.slane %v8442, 4
        %v8560 = vsel %vm8494, %v8559, %v8558
        %v8561 = vrot.slane %v8444, 3
        %v8562 = vsel %vm8497, %v8561, %v8560
        %v8563 = vrot.slane %v8446, 2
        %v8564 = vrot.slane %v8448, 1
        %v8565 = vsel %vm8479, %v8564, %v8563
        %v8566 = vsel %vm8482, %v8450, %v8565
        %v8567 = vrot.slane %v8452, 7
        %v8568 = vsel %vm8485, %v8567, %v8566
        %v8569 = vrot.slane %v8454, 6
        %v8570 = vsel %vm8488, %v8569, %v8568
        %v8571 = vrot.slane %v8456, 5
        %v8572 = vsel %vm8491, %v8571, %v8570
        %v8573 = vrot.slane %v8458, 4
        %v8574 = vsel %vm8494, %v8573, %v8572
        %v8575 = vrot.slane %v8460, 3
        %v8576 = vsel %vm8497, %v8575, %v8574
        %8577 = vrot.lane.b32.xlu0 %v8562, 16
        %v8578 = vpop.permute.xlu0 %8577
        %8579 = vrot.lane.b32.xlu0 %v8576, 16
        %v8580 = vpop.permute.xlu0 %8579
        %v8583 = vrot.slane %v8430, 3
        %v8584 = vrot.slane %v8432, 2
        %v8585 = vsel %vm8479, %v8584, %v8583
        %v8586 = vrot.slane %v8434, 1
        %v8587 = vsel %vm8482, %v8586, %v8585
        %v8588 = vsel %vm8485, %v8436, %v8587
        %v8589 = vrot.slane %v8438, 7
        %v8590 = vsel %vm8488, %v8589, %v8588
        %v8591 = vrot.slane %v8440, 6
        %v8592 = vsel %vm8491, %v8591, %v8590
        %v8593 = vrot.slane %v8442, 5
        %v8594 = vsel %vm8494, %v8593, %v8592
        %v8595 = vrot.slane %v8444, 4
        %v8596 = vsel %vm8497, %v8595, %v8594
        %v8597 = vrot.slane %v8446, 3
        %v8598 = vrot.slane %v8448, 2
        %v8599 = vsel %vm8479, %v8598, %v8597
        %v8600 = vrot.slane %v8450, 1
        %v8601 = vsel %vm8482, %v8600, %v8599
        %v8602 = vsel %vm8485, %v8452, %v8601
        %v8603 = vrot.slane %v8454, 7
        %v8604 = vsel %vm8488, %v8603, %v8602
        %v8605 = vrot.slane %v8456, 6
        %v8606 = vsel %vm8491, %v8605, %v8604
        %v8607 = vrot.slane %v8458, 5
        %v8608 = vsel %vm8494, %v8607, %v8606
        %v8609 = vrot.slane %v8460, 4
        %v8610 = vsel %vm8497, %v8609, %v8608
        %8611 = vrot.lane.b32.xlu0 %v8596, 24
        %v8612 = vpop.permute.xlu0 %8611
        %8613 = vrot.lane.b32.xlu0 %v8610, 24
        %v8614 = vpop.permute.xlu0 %8613
        %v8617 = vrot.slane %v8430, 4
        %v8618 = vrot.slane %v8432, 3
        %v8619 = vsel %vm8479, %v8618, %v8617
        %v8620 = vrot.slane %v8434, 2
        %v8621 = vsel %vm8482, %v8620, %v8619
        %v8622 = vrot.slane %v8436, 1
        %v8623 = vsel %vm8485, %v8622, %v8621
        %v8624 = vsel %vm8488, %v8438, %v8623
        %v8625 = vrot.slane %v8440, 7
        %v8626 = vsel %vm8491, %v8625, %v8624
        %v8627 = vrot.slane %v8442, 6
        %v8628 = vsel %vm8494, %v8627, %v8626
        %v8629 = vrot.slane %v8444, 5
        %v8630 = vsel %vm8497, %v8629, %v8628
        %v8631 = vrot.slane %v8446, 4
        %v8632 = vrot.slane %v8448, 3
        %v8633 = vsel %vm8479, %v8632, %v8631
        %v8634 = vrot.slane %v8450, 2
        %v8635 = vsel %vm8482, %v8634, %v8633
        %v8636 = vrot.slane %v8452, 1
        %v8637 = vsel %vm8485, %v8636, %v8635
        %v8638 = vsel %vm8488, %v8454, %v8637
        %v8639 = vrot.slane %v8456, 7
        %v8640 = vsel %vm8491, %v8639, %v8638
        %v8641 = vrot.slane %v8458, 6
        %v8642 = vsel %vm8494, %v8641, %v8640
        %v8643 = vrot.slane %v8460, 5
        %v8644 = vsel %vm8497, %v8643, %v8642
        %8645 = vrot.lane.b32.xlu0 %v8630, 32
        %v8646 = vpop.permute.xlu0 %8645
        %8647 = vrot.lane.b32.xlu0 %v8644, 32
        %v8648 = vpop.permute.xlu0 %8647
        %v8651 = vrot.slane %v8430, 5
        %v8652 = vrot.slane %v8432, 4
        %v8653 = vsel %vm8479, %v8652, %v8651
        %v8654 = vrot.slane %v8434, 3
        %v8655 = vsel %vm8482, %v8654, %v8653
        %v8656 = vrot.slane %v8436, 2
        %v8657 = vsel %vm8485, %v8656, %v8655
        %v8658 = vrot.slane %v8438, 1
        %v8659 = vsel %vm8488, %v8658, %v8657
        %v8660 = vsel %vm8491, %v8440, %v8659
        %v8661 = vrot.slane %v8442, 7
        %v8662 = vsel %vm8494, %v8661, %v8660
        %v8663 = vrot.slane %v8444, 6
        %v8664 = vsel %vm8497, %v8663, %v8662
        %v8665 = vrot.slane %v8446, 5
        %v8666 = vrot.slane %v8448, 4
        %v8667 = vsel %vm8479, %v8666, %v8665
        %v8668 = vrot.slane %v8450, 3
        %v8669 = vsel %vm8482, %v8668, %v8667
        %v8670 = vrot.slane %v8452, 2
        %v8671 = vsel %vm8485, %v8670, %v8669
        %v8672 = vrot.slane %v8454, 1
        %v8673 = vsel %vm8488, %v8672, %v8671
        %v8674 = vsel %vm8491, %v8456, %v8673
        %v8675 = vrot.slane %v8458, 7
        %v8676 = vsel %vm8494, %v8675, %v8674
        %v8677 = vrot.slane %v8460, 6
        %v8678 = vsel %vm8497, %v8677, %v8676
        %8679 = vrot.lane.b32.xlu0 %v8664, 40
        %v8680 = vpop.permute.xlu0 %8679
        %8681 = vrot.lane.b32.xlu0 %v8678, 40
        %v8682 = vpop.permute.xlu0 %8681
        %v8685 = vrot.slane %v8430, 6
        %v8686 = vrot.slane %v8432, 5
        %v8687 = vsel %vm8479, %v8686, %v8685
        %v8688 = vrot.slane %v8434, 4
        %v8689 = vsel %vm8482, %v8688, %v8687
        %v8690 = vrot.slane %v8436, 3
        %v8691 = vsel %vm8485, %v8690, %v8689
        %v8692 = vrot.slane %v8438, 2
        %v8693 = vsel %vm8488, %v8692, %v8691
        %v8694 = vrot.slane %v8440, 1
        %v8695 = vsel %vm8491, %v8694, %v8693
        %v8696 = vsel %vm8494, %v8442, %v8695
        %v8697 = vrot.slane %v8444, 7
        %v8698 = vsel %vm8497, %v8697, %v8696
        %v8699 = vrot.slane %v8446, 6
        %v8700 = vrot.slane %v8448, 5
        %v8701 = vsel %vm8479, %v8700, %v8699
        %v8702 = vrot.slane %v8450, 4
        %v8703 = vsel %vm8482, %v8702, %v8701
        %v8704 = vrot.slane %v8452, 3
        %v8705 = vsel %vm8485, %v8704, %v8703
        %v8706 = vrot.slane %v8454, 2
        %v8707 = vsel %vm8488, %v8706, %v8705
        %v8708 = vrot.slane %v8456, 1
        %v8709 = vsel %vm8491, %v8708, %v8707
        %v8710 = vsel %vm8494, %v8458, %v8709
        %v8711 = vrot.slane %v8460, 7
        %v8712 = vsel %vm8497, %v8711, %v8710
        %8713 = vrot.lane.b32.xlu0 %v8698, 48
        %v8714 = vpop.permute.xlu0 %8713
        %8715 = vrot.lane.b32.xlu0 %v8712, 48
        %v8716 = vpop.permute.xlu0 %8715
        %v8719 = vrot.slane %v8430, 7
        %v8720 = vrot.slane %v8432, 6
        %v8721 = vsel %vm8479, %v8720, %v8719
        %v8722 = vrot.slane %v8434, 5
        %v8723 = vsel %vm8482, %v8722, %v8721
        %v8724 = vrot.slane %v8436, 4
        %v8725 = vsel %vm8485, %v8724, %v8723
        %v8726 = vrot.slane %v8438, 3
        %v8727 = vsel %vm8488, %v8726, %v8725
        %v8728 = vrot.slane %v8440, 2
        %v8729 = vsel %vm8491, %v8728, %v8727
        %v8730 = vrot.slane %v8442, 1
        %v8731 = vsel %vm8494, %v8730, %v8729
        %v8732 = vsel %vm8497, %v8444, %v8731
        %v8733 = vrot.slane %v8446, 7
        %v8734 = vrot.slane %v8448, 6
        %v8735 = vsel %vm8479, %v8734, %v8733
        %v8736 = vrot.slane %v8450, 5
        %v8737 = vsel %vm8482, %v8736, %v8735
        %v8738 = vrot.slane %v8452, 4
        %v8739 = vsel %vm8485, %v8738, %v8737
        %v8740 = vrot.slane %v8454, 3
        %v8741 = vsel %vm8488, %v8740, %v8739
        %v8742 = vrot.slane %v8456, 2
        %v8743 = vsel %vm8491, %v8742, %v8741
        %v8744 = vrot.slane %v8458, 1
        %v8745 = vsel %vm8494, %v8744, %v8743
        %v8746 = vsel %vm8497, %v8460, %v8745
        %8747 = vrot.lane.b32.xlu0 %v8732, 56
        %v8748 = vpop.permute.xlu0 %8747
        %8749 = vrot.lane.b32.xlu0 %v8746, 56
        %v8750 = vpop.permute.xlu0 %8749
        %v8769 = vrot.slane %v8433, 7
        %v8770 = vsel %vm8479, %v8769, %v8431
        %v8771 = vrot.slane %v8435, 6
        %v8772 = vsel %vm8482, %v8771, %v8770
        %v8773 = vrot.slane %v8437, 5
        %v8774 = vsel %vm8485, %v8773, %v8772
        %v8775 = vrot.slane %v8439, 4
        %v8776 = vsel %vm8488, %v8775, %v8774
        %v8777 = vrot.slane %v8441, 3
        %v8778 = vsel %vm8491, %v8777, %v8776
        %v8779 = vrot.slane %v8443, 2
        %v8780 = vsel %vm8494, %v8779, %v8778
        %v8781 = vrot.slane %v8445, 1
        %v8782 = vsel %vm8497, %v8781, %v8780
        %v8783 = vrot.slane %v8449, 7
        %v8784 = vsel %vm8479, %v8783, %v8447
        %v8785 = vrot.slane %v8451, 6
        %v8786 = vsel %vm8482, %v8785, %v8784
        %v8787 = vrot.slane %v8453, 5
        %v8788 = vsel %vm8485, %v8787, %v8786
        %v8789 = vrot.slane %v8455, 4
        %v8790 = vsel %vm8488, %v8789, %v8788
        %v8791 = vrot.slane %v8457, 3
        %v8792 = vsel %vm8491, %v8791, %v8790
        %v8793 = vrot.slane %v8459, 2
        %v8794 = vsel %vm8494, %v8793, %v8792
        %v8795 = vrot.slane %v8461, 1
        %v8796 = vsel %vm8497, %v8795, %v8794
        %8797 = vrot.lane.b32.xlu0 %v8782, 64
        %v8798 = vpop.permute.xlu0 %8797
        %8799 = vrot.lane.b32.xlu0 %v8796, 64
        %v8800 = vpop.permute.xlu0 %8799
        %v8803 = vrot.slane %v8431, 1
        %v8804 = vsel %vm8479, %v8433, %v8803
        %v8805 = vrot.slane %v8435, 7
        %v8806 = vsel %vm8482, %v8805, %v8804
        %v8807 = vrot.slane %v8437, 6
        %v8808 = vsel %vm8485, %v8807, %v8806
        %v8809 = vrot.slane %v8439, 5
        %v8810 = vsel %vm8488, %v8809, %v8808
        %v8811 = vrot.slane %v8441, 4
        %v8812 = vsel %vm8491, %v8811, %v8810
        %v8813 = vrot.slane %v8443, 3
        %v8814 = vsel %vm8494, %v8813, %v8812
        %v8815 = vrot.slane %v8445, 2
        %v8816 = vsel %vm8497, %v8815, %v8814
        %v8817 = vrot.slane %v8447, 1
        %v8818 = vsel %vm8479, %v8449, %v8817
        %v8819 = vrot.slane %v8451, 7
        %v8820 = vsel %vm8482, %v8819, %v8818
        %v8821 = vrot.slane %v8453, 6
        %v8822 = vsel %vm8485, %v8821, %v8820
        %v8823 = vrot.slane %v8455, 5
        %v8824 = vsel %vm8488, %v8823, %v8822
        %v8825 = vrot.slane %v8457, 4
        %v8826 = vsel %vm8491, %v8825, %v8824
        %v8827 = vrot.slane %v8459, 3
        %v8828 = vsel %vm8494, %v8827, %v8826
        %v8829 = vrot.slane %v8461, 2
        %v8830 = vsel %vm8497, %v8829, %v8828
        %8831 = vrot.lane.b32.xlu0 %v8816, 72
        %v8832 = vpop.permute.xlu0 %8831
        %8833 = vrot.lane.b32.xlu0 %v8830, 72
        %v8834 = vpop.permute.xlu0 %8833
        %v8837 = vrot.slane %v8431, 2
        %v8838 = vrot.slane %v8433, 1
        %v8839 = vsel %vm8479, %v8838, %v8837
        %v8840 = vsel %vm8482, %v8435, %v8839
        %v8841 = vrot.slane %v8437, 7
        %v8842 = vsel %vm8485, %v8841, %v8840
        %v8843 = vrot.slane %v8439, 6
        %v8844 = vsel %vm8488, %v8843, %v8842
        %v8845 = vrot.slane %v8441, 5
        %v8846 = vsel %vm8491, %v8845, %v8844
        %v8847 = vrot.slane %v8443, 4
        %v8848 = vsel %vm8494, %v8847, %v8846
        %v8849 = vrot.slane %v8445, 3
        %v8850 = vsel %vm8497, %v8849, %v8848
        %v8851 = vrot.slane %v8447, 2
        %v8852 = vrot.slane %v8449, 1
        %v8853 = vsel %vm8479, %v8852, %v8851
        %v8854 = vsel %vm8482, %v8451, %v8853
        %v8855 = vrot.slane %v8453, 7
        %v8856 = vsel %vm8485, %v8855, %v8854
        %v8857 = vrot.slane %v8455, 6
        %v8858 = vsel %vm8488, %v8857, %v8856
        %v8859 = vrot.slane %v8457, 5
        %v8860 = vsel %vm8491, %v8859, %v8858
        %v8861 = vrot.slane %v8459, 4
        %v8862 = vsel %vm8494, %v8861, %v8860
        %v8863 = vrot.slane %v8461, 3
        %v8864 = vsel %vm8497, %v8863, %v8862
        %8865 = vrot.lane.b32.xlu0 %v8850, 80
        %v8866 = vpop.permute.xlu0 %8865
        %8867 = vrot.lane.b32.xlu0 %v8864, 80
        %v8868 = vpop.permute.xlu0 %8867
        %v8871 = vrot.slane %v8431, 3
        %v8872 = vrot.slane %v8433, 2
        %v8873 = vsel %vm8479, %v8872, %v8871
        %v8874 = vrot.slane %v8435, 1
        %v8875 = vsel %vm8482, %v8874, %v8873
        %v8876 = vsel %vm8485, %v8437, %v8875
        %v8877 = vrot.slane %v8439, 7
        %v8878 = vsel %vm8488, %v8877, %v8876
        %v8879 = vrot.slane %v8441, 6
        %v8880 = vsel %vm8491, %v8879, %v8878
        %v8881 = vrot.slane %v8443, 5
        %v8882 = vsel %vm8494, %v8881, %v8880
        %v8883 = vrot.slane %v8445, 4
        %v8884 = vsel %vm8497, %v8883, %v8882
        %v8885 = vrot.slane %v8447, 3
        %v8886 = vrot.slane %v8449, 2
        %v8887 = vsel %vm8479, %v8886, %v8885
        %v8888 = vrot.slane %v8451, 1
        %v8889 = vsel %vm8482, %v8888, %v8887
        %v8890 = vsel %vm8485, %v8453, %v8889
        %v8891 = vrot.slane %v8455, 7
        %v8892 = vsel %vm8488, %v8891, %v8890
        %v8893 = vrot.slane %v8457, 6
        %v8894 = vsel %vm8491, %v8893, %v8892
        %v8895 = vrot.slane %v8459, 5
        %v8896 = vsel %vm8494, %v8895, %v8894
        %v8897 = vrot.slane %v8461, 4
        %v8898 = vsel %vm8497, %v8897, %v8896
        %8899 = vrot.lane.b32.xlu0 %v8884, 88
        %v8900 = vpop.permute.xlu0 %8899
        %8901 = vrot.lane.b32.xlu0 %v8898, 88
        %v8902 = vpop.permute.xlu0 %8901
        %v8905 = vrot.slane %v8431, 4
        %v8906 = vrot.slane %v8433, 3
        %v8907 = vsel %vm8479, %v8906, %v8905
        %v8908 = vrot.slane %v8435, 2
        %v8909 = vsel %vm8482, %v8908, %v8907
        %v8910 = vrot.slane %v8437, 1
        %v8911 = vsel %vm8485, %v8910, %v8909
        %v8912 = vsel %vm8488, %v8439, %v8911
        %v8913 = vrot.slane %v8441, 7
        %v8914 = vsel %vm8491, %v8913, %v8912
        %v8915 = vrot.slane %v8443, 6
        %v8916 = vsel %vm8494, %v8915, %v8914
        %v8917 = vrot.slane %v8445, 5
        %v8918 = vsel %vm8497, %v8917, %v8916
        %v8919 = vrot.slane %v8447, 4
        %v8920 = vrot.slane %v8449, 3
        %v8921 = vsel %vm8479, %v8920, %v8919
        %v8922 = vrot.slane %v8451, 2
        %v8923 = vsel %vm8482, %v8922, %v8921
        %v8924 = vrot.slane %v8453, 1
        %v8925 = vsel %vm8485, %v8924, %v8923
        %v8926 = vsel %vm8488, %v8455, %v8925
        %v8927 = vrot.slane %v8457, 7
        %v8928 = vsel %vm8491, %v8927, %v8926
        %v8929 = vrot.slane %v8459, 6
        %v8930 = vsel %vm8494, %v8929, %v8928
        %v8931 = vrot.slane %v8461, 5
        %v8932 = vsel %vm8497, %v8931, %v8930
        %8933 = vrot.lane.b32.xlu0 %v8918, 96
        %v8934 = vpop.permute.xlu0 %8933
        %8935 = vrot.lane.b32.xlu0 %v8932, 96
        %v8936 = vpop.permute.xlu0 %8935
        %v8939 = vrot.slane %v8431, 5
        %v8940 = vrot.slane %v8433, 4
        %v8941 = vsel %vm8479, %v8940, %v8939
        %v8942 = vrot.slane %v8435, 3
        %v8943 = vsel %vm8482, %v8942, %v8941
        %v8944 = vrot.slane %v8437, 2
        %v8945 = vsel %vm8485, %v8944, %v8943
        %v8946 = vrot.slane %v8439, 1
        %v8947 = vsel %vm8488, %v8946, %v8945
        %v8948 = vsel %vm8491, %v8441, %v8947
        %v8949 = vrot.slane %v8443, 7
        %v8950 = vsel %vm8494, %v8949, %v8948
        %v8951 = vrot.slane %v8445, 6
        %v8952 = vsel %vm8497, %v8951, %v8950
        %v8953 = vrot.slane %v8447, 5
        %v8954 = vrot.slane %v8449, 4
        %v8955 = vsel %vm8479, %v8954, %v8953
        %v8956 = vrot.slane %v8451, 3
        %v8957 = vsel %vm8482, %v8956, %v8955
        %v8958 = vrot.slane %v8453, 2
        %v8959 = vsel %vm8485, %v8958, %v8957
        %v8960 = vrot.slane %v8455, 1
        %v8961 = vsel %vm8488, %v8960, %v8959
        %v8962 = vsel %vm8491, %v8457, %v8961
        %v8963 = vrot.slane %v8459, 7
        %v8964 = vsel %vm8494, %v8963, %v8962
        %v8965 = vrot.slane %v8461, 6
        %v8966 = vsel %vm8497, %v8965, %v8964
        %8967 = vrot.lane.b32.xlu0 %v8952, 104
        %v8968 = vpop.permute.xlu0 %8967
        %8969 = vrot.lane.b32.xlu0 %v8966, 104
        %v8970 = vpop.permute.xlu0 %8969
        %v8973 = vrot.slane %v8431, 6
        %v8974 = vrot.slane %v8433, 5
        %v8975 = vsel %vm8479, %v8974, %v8973
        %v8976 = vrot.slane %v8435, 4
        %v8977 = vsel %vm8482, %v8976, %v8975
        %v8978 = vrot.slane %v8437, 3
        %v8979 = vsel %vm8485, %v8978, %v8977
        %v8980 = vrot.slane %v8439, 2
        %v8981 = vsel %vm8488, %v8980, %v8979
        %v8982 = vrot.slane %v8441, 1
        %v8983 = vsel %vm8491, %v8982, %v8981
        %v8984 = vsel %vm8494, %v8443, %v8983
        %v8985 = vrot.slane %v8445, 7
        %v8986 = vsel %vm8497, %v8985, %v8984
        %v8987 = vrot.slane %v8447, 6
        %v8988 = vrot.slane %v8449, 5
        %v8989 = vsel %vm8479, %v8988, %v8987
        %v8990 = vrot.slane %v8451, 4
        %v8991 = vsel %vm8482, %v8990, %v8989
        %v8992 = vrot.slane %v8453, 3
        %v8993 = vsel %vm8485, %v8992, %v8991
        %v8994 = vrot.slane %v8455, 2
        %v8995 = vsel %vm8488, %v8994, %v8993
        %v8996 = vrot.slane %v8457, 1
        %v8997 = vsel %vm8491, %v8996, %v8995
        %v8998 = vsel %vm8494, %v8459, %v8997
        %v8999 = vrot.slane %v8461, 7
        %v9000 = vsel %vm8497, %v8999, %v8998
        %9001 = vrot.lane.b32.xlu0 %v8986, 112
        %v9002 = vpop.permute.xlu0 %9001
        %9003 = vrot.lane.b32.xlu0 %v9000, 112
        %v9004 = vpop.permute.xlu0 %9003
        %v9007 = vrot.slane %v8431, 7
        %v9008 = vrot.slane %v8433, 6
        %v9009 = vsel %vm8479, %v9008, %v9007
        %v9010 = vrot.slane %v8435, 5
        %v9011 = vsel %vm8482, %v9010, %v9009
        %v9012 = vrot.slane %v8437, 4
        %v9013 = vsel %vm8485, %v9012, %v9011
        %v9014 = vrot.slane %v8439, 3
        %v9015 = vsel %vm8488, %v9014, %v9013
        %v9016 = vrot.slane %v8441, 2
        %v9017 = vsel %vm8491, %v9016, %v9015
        %v9018 = vrot.slane %v8443, 1
        %v9019 = vsel %vm8494, %v9018, %v9017
        %v9020 = vsel %vm8497, %v8445, %v9019
        %v9021 = vrot.slane %v8447, 7
        %v9022 = vrot.slane %v8449, 6
        %v9023 = vsel %vm8479, %v9022, %v9021
        %v9024 = vrot.slane %v8451, 5
        %v9025 = vsel %vm8482, %v9024, %v9023
        %v9026 = vrot.slane %v8453, 4
        %v9027 = vsel %vm8485, %v9026, %v9025
        %v9028 = vrot.slane %v8455, 3
        %v9029 = vsel %vm8488, %v9028, %v9027
        %v9030 = vrot.slane %v8457, 2
        %v9031 = vsel %vm8491, %v9030, %v9029
        %v9032 = vrot.slane %v8459, 1
        %v9033 = vsel %vm8494, %v9032, %v9031
        %v9034 = vsel %vm8497, %v8461, %v9033
        %9035 = vrot.lane.b32.xlu0 %v9020, 120
        %v9036 = vpop.permute.xlu0 %9035
        %9037 = vrot.lane.b32.xlu0 %v9034, 120
        %v9038 = vpop.permute.xlu0 %9037
        %v9041 = vsel %vm3566, %v8498, %v8544
        %v9042 = vsel %vm3566, %v8512, %v8546
        %v9043 = vsel %vm3632, %v9041, %v8578
        %v9044 = vsel %vm3632, %v9042, %v8580
        %v9045 = vsel %vm3698, %v9043, %v8612
        %v9046 = vsel %vm3698, %v9044, %v8614
        %v9047 = vsel %vm3764, %v9045, %v8646
        %v9048 = vsel %vm3764, %v9046, %v8648
        %v9049 = vsel %vm7339, %v9047, %v8680
        %v9050 = vsel %vm7339, %v9048, %v8682
        %v9051 = vsel %vm7372, %v9049, %v8714
        %v9052 = vsel %vm7372, %v9050, %v8716
        %v9053 = vsel %vm7405, %v9051, %v8748
        %v9054 = vsel %vm7405, %v9052, %v8750
        %v9055 = vsel %vm7438, %v9053, %v8798
        %v9056 = vsel %vm7438, %v9054, %v8800
        %v9057 = vsel %vm7507, %v9055, %v8832
        %v9058 = vsel %vm7507, %v9056, %v8834
        %vm9059 = vcmask 654336
        %v9060 = vsel %vm9059, %v9057, %v8866
        %v9061 = vsel %vm9059, %v9058, %v8868
        %vm9062 = vcmask 719872
        %v9063 = vsel %vm9062, %v9060, %v8900
        %v9064 = vsel %vm9062, %v9061, %v8902
        %vm9065 = vcmask 785408
        %v9066 = vsel %vm9065, %v9063, %v8934
        %v9067 = vsel %vm9065, %v9064, %v8936
        %vm9068 = vcmask 850944
        %v9069 = vsel %vm9068, %v9066, %v8968
        %v9070 = vsel %vm9068, %v9067, %v8970
        %vm9071 = vcmask 916480
        %v9072 = vsel %vm9071, %v9069, %v9002
        %v9073 = vsel %vm9071, %v9070, %v9004
        %vm9074 = vcmask 982016
        %v9075 = vsel %vm9074, %v9072, %v9036
        %v9076 = vsel %vm9074, %v9073, %v9038
        %9077 = vst [vmem:[%s352] sm:$0xff] %v9075
        %9078 = vst [vmem:[%s352 + $0x8] sm:$0xff] %v9076
        %s9079 = sand.u32 %s247, 1
        %s9080 = scalar_lea.sflag [#allocation5], %s9079
        %s9081 = sand.u32 %s247, 1
        %s9082 = smul.addr %s9081, 16
        %s9083 = scalar_lea.vmem [#allocation4], %s9082
        // Predicated region
        $region61: #{tpu_custom_call.1} parent=59 // pred_check
          %p9084 = pneg %p257
        $region62: #{tpu_custom_call.1} parent=59 // pred_check_branch
          %9086 = sbr.rel (%p9084) target = $region64
        $region63: #{tpu_custom_call.1} parent=59 // pred_region
          %9088 = vsyncadd %s9080, 0
          %s9089 = smul.addr %s24, 2
          %s9090 = smul.addr %s9089, 8
          %s9091 = scalar_lea.hbm %s10, %s9090
          %s9092 = sshll.u32 %s9083, 4
          %s9093 = int_to_ptr.vmem [resolvable:$true] %s9092
          %s9094 = sshll.u32 %s9091, 4
          %s9095 = int_to_ptr.hbm [resolvable:$true] %s9094
          %9100 = dma.vmem_to_hbm [thread:$0]  %s9093, 256, %s9095, %s9080, 128, 128, 8
        $region64: #{tpu_custom_call.1} parent=59 // pred_fallthru
          _
      $region60: #{tpu_custom_call.1} parent=5 // pred_fallthru
        _
      %p9101 = scmp.le.s32.totalorder 2, %s19
      // Predicated region
      $region65: #{tpu_custom_call.1} parent=5 // pred_check
        %p9102 = pneg %p9101
      $region66: #{tpu_custom_call.1} parent=5 // pred_check_branch
        %9104 = sbr.rel (%p9102) target = $region68
      $region67: #{tpu_custom_call.1} parent=5 // pred_region
        %s9105 = ssub.s32 %s19, 2
        // Predicated region
        $region69: #{tpu_custom_call.1} parent=67 // pred_check
          %p9106 = pneg %p263
        $region70: #{tpu_custom_call.1} parent=67 // pred_check_branch
          %9108 = sbr.rel (%p9106) target = $region72
        $region71: #{tpu_custom_call.1} parent=67 // pred_region
          %s9109 = sand.u32 %s248, 1
          %s9110 = scalar_lea.sflag [#allocation5], %s9109
          %s9111 = sand.u32 %s248, 1
          %s9112 = smul.addr %s9111, 16
          %s9113 = scalar_lea.vmem [#allocation4], %s9112
          %9115 = dma.done %s9110, 256
        $region72: #{tpu_custom_call.1} parent=67 // pred_fallthru
          _
      $region68: #{tpu_custom_call.1} parent=5 // pred_fallthru
        _
    $region6: #{tpu_custom_call.1} parent=1 // loop_footer
      %s23 = sadd.s32 1, %s19
    $region7: #{tpu_custom_call.1} parent=1 // loop_footer_branch
      %18 = sbr.rel target = $region3
    $region8: #{tpu_custom_call.1} parent=1 // loop_exit
      _
    %9116 = vsyncpa [#allocation5], 1
    %s9117 = scalar_lea.sflag [#allocation5], 1
    %9118 = vsyncpa %s9117, 1

</llo_original>
